<compile_context>
chip_gen: v7x
topology: tpu7x:2x2x1
jax: 0.10.0
libtpu: 0.0.40
codegen_flags: <defaults>
</compile_context>

<pallas_src>
import functools

import jax
import jax.numpy as jnp
from jax.experimental import pallas as pl
from jax.experimental.pallas import tpu as pltpu


# ----------------------------- kernel ---------------------------------------


def _layer_norm(x, gamma, beta, eps=1e-5):
    mean = jnp.mean(x, axis=-1, keepdims=True)
    var = jnp.mean((x - mean) ** 2, axis=-1, keepdims=True)
    return (x - mean) * jax.lax.rsqrt(var + eps) * gamma + beta


def fused_encoder_kernel(
    x_ref,      # (S, C)              f32   input tokens (pos already added)
    wqkv_ref,   # (Lb, 3*nh, C, hd)   bf16  q/k/v head weights (scale folded into q)
    bqkv_ref,   # (Lb, 3*nh, 1, hd)   f32
    wo_ref,     # (Lb, nh, hd, C)     bf16  per-head out-proj weights
    bo_ref,     # (Lb, 1, C)          f32
    w1_ref,     # (Lb, C, F)          bf16
    b1_ref,     # (Lb, 1, F)          f32
    w2_ref,     # (Lb, F, C)          bf16
    b2_ref,     # (Lb, 1, C)          f32
    ln_ref,     # (Lb, 4, 1, C)       f32   [gamma1, beta1, gamma2, beta2]
    o_ref,      # (S, C)              f32   output = resident token state
    *,
    num_head,
    ffn_tile,
    layers_in_grid,
):
    rows, c = o_ref.shape
    nh = num_head
    n_layers_in_block = wqkv_ref.shape[0]     # 1 (layer-grid path) or num_layer
    n_ffn_tiles = rows // ffn_tile

    if layers_in_grid:
        # layer axis is a grid dimension: o_ref is the cross-step token state
        @pl.when(pl.program_id(1) == 0)
        def _seed():
            o_ref[...] = x_ref[...]
        x = o_ref[...]
    else:
        x = x_ref[...]

    for l in range(n_layers_in_block):
        # ---- multi-head self-attention: per-head 2-D MXU matmuls ----
        # (no broadcast of the activation slab, no (nh, S, C) intermediate;
        #  head merge is accumulated straight into the output projection)
        x_bf = x.astype(jnp.bfloat16)
        attn = jnp.zeros((rows, c), jnp.float32)
        for h in range(nh):
            q = jnp.dot(x_bf, wqkv_ref[l, h],
                        preferred_element_type=jnp.float32) + bqkv_ref[l, h]
            k = jnp.dot(x_bf, wqkv_ref[l, nh + h],
                        preferred_element_type=jnp.float32) + bqkv_ref[l, nh + h]
            v = jnp.dot(x_bf, wqkv_ref[l, 2 * nh + h],
                        preferred_element_type=jnp.float32) + bqkv_ref[l, 2 * nh + h]
            # scores = q @ k^T  (1/sqrt(hd) already folded into wq/bq on the host)
            s = jax.lax.dot_general(q, k, (((1,), (1,)), ((), ())),
                                    preferred_element_type=jnp.float32)
            s = s - jnp.max(s, axis=-1, keepdims=True)
            p = jnp.exp(s)
            p = p * pl.reciprocal(jnp.sum(p, axis=-1, keepdims=True))   # exact EUP
            ctx = jnp.dot(p, v, preferred_element_type=jnp.float32)     # (rows, hd)
            attn = attn + jnp.dot(ctx.astype(jnp.bfloat16), wo_ref[l, h],
                                  preferred_element_type=jnp.float32)
        attn = attn + bo_ref[l]

        g1, be1 = ln_ref[l, 0], ln_ref[l, 1]
        g2, be2 = ln_ref[l, 2], ln_ref[l, 3]

        # ---- residual + norm1 (post-norm) ----
        y = _layer_norm(x + attn, g1, be1)

        # ---- feed-forward: linear1 -> relu -> linear2, residual + norm2 ----
        if n_ffn_tiles == 1:
            hdn = jnp.maximum(
                jnp.dot(y.astype(jnp.bfloat16), w1_ref[l],
                        preferred_element_type=jnp.float32) + b1_ref[l], 0.0)
            ff = jnp.dot(hdn.astype(jnp.bfloat16), w2_ref[l],
                         preferred_element_type=jnp.float32) + b2_ref[l]
            x = _layer_norm(y + ff, g2, be2)
        else:
            # M-tiled FFN: bound the (tile, F) f32 intermediate; y is staged in
            # o_ref (x is dead at this point) and updated tile by tile in place.
            o_ref[...] = y

            @pl.loop(0, n_ffn_tiles)
            def _ffn(t):
                r0 = pl.multiple_of(t * ffn_tile, 8)
                yt = o_ref[pl.ds(r0, ffn_tile), :]
                hdn = jnp.maximum(
                    jnp.dot(yt.astype(jnp.bfloat16), w1_ref[l],
                            preferred_element_type=jnp.float32) + b1_ref[l], 0.0)
                ff = jnp.dot(hdn.astype(jnp.bfloat16), w2_ref[l],
                             preferred_element_type=jnp.float32) + b2_ref[l]
                o_ref[pl.ds(r0, ffn_tile), :] = _layer_norm(yt + ff, g2, be2)

            if l + 1 < n_layers_in_block:
                x = o_ref[...]          # next layer reads the updated state

    # In the tiled-FFN path the final state already lives in o_ref.
    if n_ffn_tiles == 1:
        o_ref[...] = x


# ----------------------------- wrappers --------------------------------------


def _pick_ffn_tile(rows, dim_ff, max_bytes=2 << 20):
    """Largest row tile (multiple of 8, dividing `rows`) whose f32 (tile, dim_ff)
    FFN intermediate stays under `max_bytes`; falls back to the full row count."""
    max_tile = max(8, max_bytes // (4 * dim_ff))
    if rows <= max_tile:
        return rows
    cands = [t for t in range(8, int(max_tile) + 1, 8) if rows % t == 0]
    return max(cands) if cands else rows


def fused_trans_encoder(tokens_btc, params, *, num_head,
                        fused_weight_budget_bytes=4 << 20):
    b, s, c = tokens_btc.shape
    num_layer = params["w1"].shape[0]
    dim_ff = params["w1"].shape[-1]

    weight_args = (params["wqkv"], params["bqkv"], params["wo"], params["bo"],
                   params["w1"], params["b1"], params["w2"], params["b2"],
                   params["ln"])
    total_weight_bytes = sum(int(w.size) * w.dtype.itemsize for w in weight_args)

    # Small weight footprint -> loop all layers inside one grid point (no per-layer
    # grid-step overhead); otherwise pipeline per-layer weight DMA over an
    # "arbitrary" inner grid axis.
    layers_in_grid = total_weight_bytes > fused_weight_budget_bytes
    ffn_tile = _pick_ffn_tile(s, dim_ff)

    kernel = functools.partial(
        fused_encoder_kernel, num_head=num_head, ffn_tile=ffn_tile,
        layers_in_grid=layers_in_grid)

    tok_block = (None, s, c)   # leading batch dim squeezed inside the kernel
    if layers_in_grid:
        grid = (b, num_layer)
        tok_spec = pl.BlockSpec(tok_block, lambda bi, li: (bi, 0, 0))

        def w_spec(w):
            nd = w.ndim
            return pl.BlockSpec((1,) + w.shape[1:],
                                lambda bi, li, _nd=nd: (li,) + (0,) * (_nd - 1))

        semantics = ("parallel", "arbitrary")
    else:
        grid = (b,)
        tok_spec = pl.BlockSpec(tok_block, lambda bi: (bi, 0, 0))

        def w_spec(w):
            nd = w.ndim
            return pl.BlockSpec(w.shape, lambda bi, _nd=nd: (0,) * _nd)

        semantics = ("parallel",)

    return pl.pallas_call(
        kernel,
        out_shape=jax.ShapeDtypeStruct((b, s, c), jnp.float32),
        grid=grid,
        in_specs=[tok_spec] + [w_spec(w) for w in weight_args],
        out_specs=tok_spec,
        compiler_params=pltpu.CompilerParams(dimension_semantics=semantics),
    )(tokens_btc, *weight_args)


def trans_encoder_forward(x_nchw, params, *, num_head, use_pos_embed):
    b, c, h, w = x_nchw.shape
    s = h * w
    # glue (plain JAX, fused by XLA): NCHW -> (B, S, C) == flatten(2).transpose(1,2)
    tokens = jnp.transpose(x_nchw.reshape(b, c, s), (0, 2, 1)).astype(jnp.float32)
    if use_pos_embed:
        tokens = tokens + params["pos_embed"]
    out = fused_trans_encoder(tokens, params, num_head=num_head)
    # glue: (B, S, C) -> NCHW
    return jnp.transpose(out, (0, 2, 1)).reshape(b, c, h, w)


# ----------------------------- parameter init --------------------------------


def init_params(key, channel, num_head, num_layer, num_patches, dim_ff,
                use_pos_embed):
    C, F, nh = channel, dim_ff, num_head
    hd = C // nh
    scale = hd ** -0.5
    params = {}
    if use_pos_embed:
        key, k = jax.random.split(key)
        params["pos_embed"] = (
            0.02 * jax.random.truncated_normal(k, -2.0, 2.0, (1, num_patches, C))
        ).astype(jnp.float32)

    wqkv, bqkv, wo, bo, w1, b1, w2, b2, ln = ([] for _ in range(9))
    for _ in range(num_layer):
        key, *ks = jax.random.split(key, 9)
        # weights generated in PyTorch layout, then converted to the kernel layout
        in_proj_w = jax.random.normal(ks[0], (3 * C, C)) * (C ** -0.5)   # in_proj_weight
        in_proj_b = 0.01 * jax.random.normal(ks[1], (3 * C,))            # in_proj_bias
        out_w = jax.random.normal(ks[2], (C, C)) * (C ** -0.5)           # out_proj.weight
        out_b = 0.01 * jax.random.normal(ks[3], (C,))
        lin1_w = jax.random.normal(ks[4], (F, C)) * (C ** -0.5)          # linear1.weight
        lin1_b = 0.01 * jax.random.normal(ks[5], (F,))
        lin2_w = jax.random.normal(ks[6], (C, F)) * (F ** -0.5)          # linear2.weight
        lin2_b = 0.01 * jax.random.normal(ks[7], (C,))

        w_qkv = in_proj_w.reshape(3, nh, hd, C).transpose(0, 1, 3, 2)    # (3,nh,C,hd)
        b_qkv = in_proj_b.reshape(3, nh, 1, hd)
        # fold the 1/sqrt(hd) attention scale into the Q projection (one-time)
        w_qkv = w_qkv.at[0].multiply(scale)
        b_qkv = b_qkv.at[0].multiply(scale)

        wqkv.append(w_qkv.reshape(3 * nh, C, hd))
        bqkv.append(b_qkv.reshape(3 * nh, 1, hd))
        wo.append(out_w.T.reshape(nh, hd, C))                            # (nh,hd,C)
        bo.append(out_b.reshape(1, C))
        w1.append(lin1_w.T)                                              # (C,F)
        b1.append(lin1_b.reshape(1, F))
        w2.append(lin2_w.T)                                              # (F,C)
        b2.append(lin2_b.reshape(1, C))
        ln.append(jnp.stack([jnp.ones((1, C)), jnp.zeros((1, C)),
                             jnp.ones((1, C)), jnp.zeros((1, C))], axis=0))  # (4,1,C)

    params.update(
        wqkv=jnp.stack(wqkv).astype(jnp.bfloat16),
        bqkv=jnp.stack(bqkv).astype(jnp.float32),
        wo=jnp.stack(wo).astype(jnp.bfloat16),
        bo=jnp.stack(bo).astype(jnp.float32),
        w1=jnp.stack(w1).astype(jnp.bfloat16),
        b1=jnp.stack(b1).astype(jnp.float32),
        w2=jnp.stack(w2).astype(jnp.bfloat16),
        b2=jnp.stack(b2).astype(jnp.float32),
        ln=jnp.stack(ln).astype(jnp.float32),
    )
    return params


# ----------------------------- pure-JAX reference ----------------------------


def reference_forward(x_nchw, params, *, num_head, use_pos_embed):
    b, c, h, w = x_nchw.shape
    s = h * w
    nh = num_head
    t = jnp.transpose(x_nchw.reshape(b, c, s), (0, 2, 1)).astype(jnp.float32)
    if use_pos_embed:
        t = t + params["pos_embed"]

    def ln_fn(x, g, be):
        m = x.mean(-1, keepdims=True)
        v = ((x - m) ** 2).mean(-1, keepdims=True)
        return (x - m) * jax.lax.rsqrt(v + 1e-5) * g + be

    num_layer = params["w1"].shape[0]
    for l in range(num_layer):
        wqkv = params["wqkv"][l].astype(jnp.float32)        # (3nh, C, hd)
        bqkv = params["bqkv"][l]                            # (3nh, 1, hd)
        qkv = jnp.einsum("bsc,gcd->gbsd", t, wqkv) + bqkv[:, None]
        q, k, v = qkv[:nh], qkv[nh:2 * nh], qkv[2 * nh:]
        sc = jnp.einsum("hbqd,hbkd->hbqk", q, k)            # scale already folded
        p = jax.nn.softmax(sc, axis=-1)
        ctx = jnp.einsum("hbqk,hbkd->hbqd", p, v)
        attn = jnp.einsum("hbsd,hdj->bsj", ctx,
                          params["wo"][l].astype(jnp.float32)) + params["bo"][l]
        t = ln_fn(t + attn, params["ln"][l, 0], params["ln"][l, 1])
        hdn = jnp.maximum(t @ params["w1"][l].astype(jnp.float32) + params["b1"][l], 0.0)
        ff = hdn @ params["w2"][l].astype(jnp.float32) + params["b2"][l]
        t = ln_fn(t + ff, params["ln"][l, 2], params["ln"][l, 3])
    return jnp.transpose(t, (0, 2, 1)).reshape(b, c, h, w)


# ----------------------------- main -------------------------------------------


if __name__ == "__main__":
    # small config consistent with the module (S = H*W tokens of width C)
    B, C, H, W = 2, 32, 4, 4
    NUM_HEAD = 4
    NUM_LAYER = 2
    NUM_PATCHES = H * W
    DIM_FF = 2048            # nn.TransformerEncoderLayer default
    USE_POS_EMBED = True

    key = jax.random.PRNGKey(0)
    key, kx, kp = jax.random.split(key, 3)
    x = jax.random.normal(kx, (B, C, H, W), dtype=jnp.float32)
    params = init_params(kp, C, NUM_HEAD, NUM_LAYER, NUM_PATCHES, DIM_FF,
                         USE_POS_EMBED)

    fwd = jax.jit(functools.partial(
        trans_encoder_forward, num_head=NUM_HEAD, use_pos_embed=USE_POS_EMBED))
    out = fwd(x, params)
    jax.block_until_ready(out)

    assert out.shape == (B, C, H, W), out.shape
    assert bool(jnp.all(jnp.isfinite(out)))

    ref = reference_forward(x, params, num_head=NUM_HEAD, use_pos_embed=USE_POS_EMBED)
    max_err = float(jnp.max(jnp.abs(out - ref)))
    assert max_err < 1e-1, f"max abs error vs reference: {max_err}"

    print("KERNEL_OK")
</pallas_src>

<mosaic_0001>
module attributes {stable_mosaic.version = 11 : i64} {
  func.func @fused_encoder_kernel(%arg0: i32, %arg1: memref<1x16x32xf32, #tpu.memory_space<vmem>>, %arg2: memref<2x12x32x8xbf16, #tpu.memory_space<vmem>>, %arg3: memref<2x12x1x8xf32, #tpu.memory_space<vmem>>, %arg4: memref<2x4x8x32xbf16, #tpu.memory_space<vmem>>, %arg5: memref<2x1x32xf32, #tpu.memory_space<vmem>>, %arg6: memref<2x32x2048xbf16, #tpu.memory_space<vmem>>, %arg7: memref<2x1x2048xf32, #tpu.memory_space<vmem>>, %arg8: memref<2x2048x32xbf16, #tpu.memory_space<vmem>>, %arg9: memref<2x1x32xf32, #tpu.memory_space<vmem>>, %arg10: memref<2x4x1x32xf32, #tpu.memory_space<vmem>>, %arg11: memref<1x16x32xf32, #tpu.memory_space<vmem>>) attributes {dimension_semantics = [#tpu.dimension_semantics<parallel>], iteration_bounds = array<i64: 2>, scalar_prefetch = 0 : i64, scratch_operands = 0 : i64, tpu.core_type = #tpu.core_type<tc>, window_params = [{transform_indices = @transform_0, window_bounds = array<i64: 1, 16, 32>}, {pipeline_mode = #tpu.pipeline_mode<synchronous>, transform_indices = @transform_1, window_bounds = array<i64: 2, 12, 32, 8>}, {pipeline_mode = #tpu.pipeline_mode<synchronous>, transform_indices = @transform_2, window_bounds = array<i64: 2, 12, 1, 8>}, {pipeline_mode = #tpu.pipeline_mode<synchronous>, transform_indices = @transform_3, window_bounds = array<i64: 2, 4, 8, 32>}, {pipeline_mode = #tpu.pipeline_mode<synchronous>, transform_indices = @transform_4, window_bounds = array<i64: 2, 1, 32>}, {pipeline_mode = #tpu.pipeline_mode<synchronous>, transform_indices = @transform_5, window_bounds = array<i64: 2, 32, 2048>}, {pipeline_mode = #tpu.pipeline_mode<synchronous>, transform_indices = @transform_6, window_bounds = array<i64: 2, 1, 2048>}, {pipeline_mode = #tpu.pipeline_mode<synchronous>, transform_indices = @transform_7, window_bounds = array<i64: 2, 2048, 32>}, {pipeline_mode = #tpu.pipeline_mode<synchronous>, transform_indices = @transform_8, window_bounds = array<i64: 2, 1, 32>}, {pipeline_mode = #tpu.pipeline_mode<synchronous>, transform_indices = @transform_9, window_bounds = array<i64: 2, 4, 1, 32>}, {transform_indices = @transform_10, window_bounds = array<i64: 1, 16, 32>}]} {
    %c0 = arith.constant 0 : index
    %c0_0 = arith.constant 0 : index
    %c0_1 = arith.constant 0 : index
    %0 = vector.load %arg1[%c0, %c0_0, %c0_1] : memref<1x16x32xf32, #tpu.memory_space<vmem>>, vector<1x16x32xf32>
    %1 = vector.shape_cast %0 : vector<1x16x32xf32> to vector<16x32xf32>
    %2 = arith.truncf %1 : vector<16x32xf32> to vector<16x32xbf16>
    %cst = arith.constant 0.000000e+00 : f32
    %3 = vector.broadcast %cst : f32 to vector<16x32xf32>
    %c0_2 = arith.constant 0 : index
    %c0_3 = arith.constant 0 : index
    %c0_4 = arith.constant 0 : index
    %c0_5 = arith.constant 0 : index
    %4 = vector.load %arg2[%c0_2, %c0_3, %c0_4, %c0_5] : memref<2x12x32x8xbf16, #tpu.memory_space<vmem>>, vector<1x1x32x8xbf16>
    %5 = vector.shape_cast %4 : vector<1x1x32x8xbf16> to vector<32x8xbf16>
    %cst_6 = arith.constant dense<0.000000e+00> : vector<16x8xf32>
    %6 = tpu.matmul %2, %5, %cst_6 {dimension_numbers = #tpu.dot_dimension_numbers<[1], [0], [0], [1], [0, 0, 1, 1], [], []>} : vector<16x32xbf16>, vector<32x8xbf16>, vector<16x8xf32> -> vector<16x8xf32>
    %c0_7 = arith.constant 0 : index
    %c0_8 = arith.constant 0 : index
    %c0_9 = arith.constant 0 : index
    %c0_10 = arith.constant 0 : index
    %7 = vector.load %arg3[%c0_7, %c0_8, %c0_9, %c0_10] : memref<2x12x1x8xf32, #tpu.memory_space<vmem>>, vector<1x1x1x8xf32>
    %8 = vector.shape_cast %7 : vector<1x1x1x8xf32> to vector<1x8xf32>
    %9 = vector.broadcast %8 : vector<1x8xf32> to vector<16x8xf32>
    %10 = arith.addf %6, %9 : vector<16x8xf32>
    %c0_11 = arith.constant 0 : index
    %c4 = arith.constant 4 : index
    %c0_12 = arith.constant 0 : index
    %c0_13 = arith.constant 0 : index
    %11 = vector.load %arg2[%c0_11, %c4, %c0_12, %c0_13] : memref<2x12x32x8xbf16, #tpu.memory_space<vmem>>, vector<1x1x32x8xbf16>
    %12 = vector.shape_cast %11 : vector<1x1x32x8xbf16> to vector<32x8xbf16>
    %cst_14 = arith.constant dense<0.000000e+00> : vector<16x8xf32>
    %13 = tpu.matmul %2, %12, %cst_14 {dimension_numbers = #tpu.dot_dimension_numbers<[1], [0], [0], [1], [0, 0, 1, 1], [], []>} : vector<16x32xbf16>, vector<32x8xbf16>, vector<16x8xf32> -> vector<16x8xf32>
    %c0_15 = arith.constant 0 : index
    %c4_16 = arith.constant 4 : index
    %c0_17 = arith.constant 0 : index
    %c0_18 = arith.constant 0 : index
    %14 = vector.load %arg3[%c0_15, %c4_16, %c0_17, %c0_18] : memref<2x12x1x8xf32, #tpu.memory_space<vmem>>, vector<1x1x1x8xf32>
    %15 = vector.shape_cast %14 : vector<1x1x1x8xf32> to vector<1x8xf32>
    %16 = vector.broadcast %15 : vector<1x8xf32> to vector<16x8xf32>
    %17 = arith.addf %13, %16 : vector<16x8xf32>
    %c0_19 = arith.constant 0 : index
    %c8 = arith.constant 8 : index
    %c0_20 = arith.constant 0 : index
    %c0_21 = arith.constant 0 : index
    %18 = vector.load %arg2[%c0_19, %c8, %c0_20, %c0_21] : memref<2x12x32x8xbf16, #tpu.memory_space<vmem>>, vector<1x1x32x8xbf16>
    %19 = vector.shape_cast %18 : vector<1x1x32x8xbf16> to vector<32x8xbf16>
    %cst_22 = arith.constant dense<0.000000e+00> : vector<16x8xf32>
    %20 = tpu.matmul %2, %19, %cst_22 {dimension_numbers = #tpu.dot_dimension_numbers<[1], [0], [0], [1], [0, 0, 1, 1], [], []>} : vector<16x32xbf16>, vector<32x8xbf16>, vector<16x8xf32> -> vector<16x8xf32>
    %c0_23 = arith.constant 0 : index
    %c8_24 = arith.constant 8 : index
    %c0_25 = arith.constant 0 : index
    %c0_26 = arith.constant 0 : index
    %21 = vector.load %arg3[%c0_23, %c8_24, %c0_25, %c0_26] : memref<2x12x1x8xf32, #tpu.memory_space<vmem>>, vector<1x1x1x8xf32>
    %22 = vector.shape_cast %21 : vector<1x1x1x8xf32> to vector<1x8xf32>
    %23 = vector.broadcast %22 : vector<1x8xf32> to vector<16x8xf32>
    %24 = arith.addf %20, %23 : vector<16x8xf32>
    %cst_27 = arith.constant dense<0.000000e+00> : vector<16x16xf32>
    %25 = tpu.matmul %10, %17, %cst_27 {dimension_numbers = #tpu.dot_dimension_numbers<[1], [1], [0], [0], [0, 0, 1, 0], [], []>} : vector<16x8xf32>, vector<16x8xf32>, vector<16x16xf32> -> vector<16x16xf32>
    %cst_28 = arith.constant dense<0xFF800000> : vector<16xf32>
    %26 = vector.multi_reduction <maximumf>, %25, %cst_28 [1] : vector<16x16xf32> to vector<16xf32>
    %27 = vector.shape_cast %26 : vector<16xf32> to vector<16x1xf32>
    %28 = vector.broadcast %27 : vector<16x1xf32> to vector<16x16xf32>
    %29 = arith.subf %25, %28 : vector<16x16xf32>
    %30 = math.exp %29 : vector<16x16xf32>
    %cst_29 = arith.constant dense<0.000000e+00> : vector<16xf32>
    %31 = vector.multi_reduction <add>, %30, %cst_29 [1] : vector<16x16xf32> to vector<16xf32>
    %32 = vector.shape_cast %31 : vector<16xf32> to vector<16x1xf32>
    %33 = tpu.reciprocal %32 : vector<16x1xf32> -> vector<16x1xf32>
    %34 = vector.broadcast %33 : vector<16x1xf32> to vector<16x16xf32>
    %35 = arith.mulf %30, %34 : vector<16x16xf32>
    %cst_30 = arith.constant dense<0.000000e+00> : vector<16x8xf32>
    %36 = tpu.matmul %35, %24, %cst_30 {dimension_numbers = #tpu.dot_dimension_numbers<[1], [0], [0], [1], [0, 0, 1, 1], [], []>} : vector<16x16xf32>, vector<16x8xf32>, vector<16x8xf32> -> vector<16x8xf32>
    %37 = arith.truncf %36 : vector<16x8xf32> to vector<16x8xbf16>
    %c0_31 = arith.constant 0 : index
    %c0_32 = arith.constant 0 : index
    %c0_33 = arith.constant 0 : index
    %c0_34 = arith.constant 0 : index
    %38 = vector.load %arg4[%c0_31, %c0_32, %c0_33, %c0_34] : memref<2x4x8x32xbf16, #tpu.memory_space<vmem>>, vector<1x1x8x32xbf16>
    %39 = vector.shape_cast %38 : vector<1x1x8x32xbf16> to vector<8x32xbf16>
    %cst_35 = arith.constant dense<0.000000e+00> : vector<16x32xf32>
    %40 = tpu.matmul %37, %39, %cst_35 {dimension_numbers = #tpu.dot_dimension_numbers<[1], [0], [0], [1], [0, 0, 1, 1], [], []>} : vector<16x8xbf16>, vector<8x32xbf16>, vector<16x32xf32> -> vector<16x32xf32>
    %41 = arith.addf %3, %40 : vector<16x32xf32>
    %c0_36 = arith.constant 0 : index
    %c1 = arith.constant 1 : index
    %c0_37 = arith.constant 0 : index
    %c0_38 = arith.constant 0 : index
    %42 = vector.load %arg2[%c0_36, %c1, %c0_37, %c0_38] : memref<2x12x32x8xbf16, #tpu.memory_space<vmem>>, vector<1x1x32x8xbf16>
    %43 = vector.shape_cast %42 : vector<1x1x32x8xbf16> to vector<32x8xbf16>
    %cst_39 = arith.constant dense<0.000000e+00> : vector<16x8xf32>
    %44 = tpu.matmul %2, %43, %cst_39 {dimension_numbers = #tpu.dot_dimension_numbers<[1], [0], [0], [1], [0, 0, 1, 1], [], []>} : vector<16x32xbf16>, vector<32x8xbf16>, vector<16x8xf32> -> vector<16x8xf32>
    %c0_40 = arith.constant 0 : index
    %c1_41 = arith.constant 1 : index
    %c0_42 = arith.constant 0 : index
    %c0_43 = arith.constant 0 : index
    %45 = vector.load %arg3[%c0_40, %c1_41, %c0_42, %c0_43] : memref<2x12x1x8xf32, #tpu.memory_space<vmem>>, vector<1x1x1x8xf32>
    %46 = vector.shape_cast %45 : vector<1x1x1x8xf32> to vector<1x8xf32>
    %47 = vector.broadcast %46 : vector<1x8xf32> to vector<16x8xf32>
    %48 = arith.addf %44, %47 : vector<16x8xf32>
    %c0_44 = arith.constant 0 : index
    %c5 = arith.constant 5 : index
    %c0_45 = arith.constant 0 : index
    %c0_46 = arith.constant 0 : index
    %49 = vector.load %arg2[%c0_44, %c5, %c0_45, %c0_46] : memref<2x12x32x8xbf16, #tpu.memory_space<vmem>>, vector<1x1x32x8xbf16>
    %50 = vector.shape_cast %49 : vector<1x1x32x8xbf16> to vector<32x8xbf16>
    %cst_47 = arith.constant dense<0.000000e+00> : vector<16x8xf32>
    %51 = tpu.matmul %2, %50, %cst_47 {dimension_numbers = #tpu.dot_dimension_numbers<[1], [0], [0], [1], [0, 0, 1, 1], [], []>} : vector<16x32xbf16>, vector<32x8xbf16>, vector<16x8xf32> -> vector<16x8xf32>
    %c0_48 = arith.constant 0 : index
    %c5_49 = arith.constant 5 : index
    %c0_50 = arith.constant 0 : index
    %c0_51 = arith.constant 0 : index
    %52 = vector.load %arg3[%c0_48, %c5_49, %c0_50, %c0_51] : memref<2x12x1x8xf32, #tpu.memory_space<vmem>>, vector<1x1x1x8xf32>
    %53 = vector.shape_cast %52 : vector<1x1x1x8xf32> to vector<1x8xf32>
    %54 = vector.broadcast %53 : vector<1x8xf32> to vector<16x8xf32>
    %55 = arith.addf %51, %54 : vector<16x8xf32>
    %c0_52 = arith.constant 0 : index
    %c9 = arith.constant 9 : index
    %c0_53 = arith.constant 0 : index
    %c0_54 = arith.constant 0 : index
    %56 = vector.load %arg2[%c0_52, %c9, %c0_53, %c0_54] : memref<2x12x32x8xbf16, #tpu.memory_space<vmem>>, vector<1x1x32x8xbf16>
    %57 = vector.shape_cast %56 : vector<1x1x32x8xbf16> to vector<32x8xbf16>
    %cst_55 = arith.constant dense<0.000000e+00> : vector<16x8xf32>
    %58 = tpu.matmul %2, %57, %cst_55 {dimension_numbers = #tpu.dot_dimension_numbers<[1], [0], [0], [1], [0, 0, 1, 1], [], []>} : vector<16x32xbf16>, vector<32x8xbf16>, vector<16x8xf32> -> vector<16x8xf32>
    %c0_56 = arith.constant 0 : index
    %c9_57 = arith.constant 9 : index
    %c0_58 = arith.constant 0 : index
    %c0_59 = arith.constant 0 : index
    %59 = vector.load %arg3[%c0_56, %c9_57, %c0_58, %c0_59] : memref<2x12x1x8xf32, #tpu.memory_space<vmem>>, vector<1x1x1x8xf32>
    %60 = vector.shape_cast %59 : vector<1x1x1x8xf32> to vector<1x8xf32>
    %61 = vector.broadcast %60 : vector<1x8xf32> to vector<16x8xf32>
    %62 = arith.addf %58, %61 : vector<16x8xf32>
    %cst_60 = arith.constant dense<0.000000e+00> : vector<16x16xf32>
    %63 = tpu.matmul %48, %55, %cst_60 {dimension_numbers = #tpu.dot_dimension_numbers<[1], [1], [0], [0], [0, 0, 1, 0], [], []>} : vector<16x8xf32>, vector<16x8xf32>, vector<16x16xf32> -> vector<16x16xf32>
    %cst_61 = arith.constant dense<0xFF800000> : vector<16xf32>
    %64 = vector.multi_reduction <maximumf>, %63, %cst_61 [1] : vector<16x16xf32> to vector<16xf32>
    %65 = vector.shape_cast %64 : vector<16xf32> to vector<16x1xf32>
    %66 = vector.broadcast %65 : vector<16x1xf32> to vector<16x16xf32>
    %67 = arith.subf %63, %66 : vector<16x16xf32>
    %68 = math.exp %67 : vector<16x16xf32>
    %cst_62 = arith.constant dense<0.000000e+00> : vector<16xf32>
    %69 = vector.multi_reduction <add>, %68, %cst_62 [1] : vector<16x16xf32> to vector<16xf32>
    %70 = vector.shape_cast %69 : vector<16xf32> to vector<16x1xf32>
    %71 = tpu.reciprocal %70 : vector<16x1xf32> -> vector<16x1xf32>
    %72 = vector.broadcast %71 : vector<16x1xf32> to vector<16x16xf32>
    %73 = arith.mulf %68, %72 : vector<16x16xf32>
    %cst_63 = arith.constant dense<0.000000e+00> : vector<16x8xf32>
    %74 = tpu.matmul %73, %62, %cst_63 {dimension_numbers = #tpu.dot_dimension_numbers<[1], [0], [0], [1], [0, 0, 1, 1], [], []>} : vector<16x16xf32>, vector<16x8xf32>, vector<16x8xf32> -> vector<16x8xf32>
    %75 = arith.truncf %74 : vector<16x8xf32> to vector<16x8xbf16>
    %c0_64 = arith.constant 0 : index
    %c1_65 = arith.constant 1 : index
    %c0_66 = arith.constant 0 : index
    %c0_67 = arith.constant 0 : index
    %76 = vector.load %arg4[%c0_64, %c1_65, %c0_66, %c0_67] : memref<2x4x8x32xbf16, #tpu.memory_space<vmem>>, vector<1x1x8x32xbf16>
    %77 = vector.shape_cast %76 : vector<1x1x8x32xbf16> to vector<8x32xbf16>
    %cst_68 = arith.constant dense<0.000000e+00> : vector<16x32xf32>
    %78 = tpu.matmul %75, %77, %cst_68 {dimension_numbers = #tpu.dot_dimension_numbers<[1], [0], [0], [1], [0, 0, 1, 1], [], []>} : vector<16x8xbf16>, vector<8x32xbf16>, vector<16x32xf32> -> vector<16x32xf32>
    %79 = arith.addf %41, %78 : vector<16x32xf32>
    %c0_69 = arith.constant 0 : index
    %c2 = arith.constant 2 : index
    %c0_70 = arith.constant 0 : index
    %c0_71 = arith.constant 0 : index
    %80 = vector.load %arg2[%c0_69, %c2, %c0_70, %c0_71] : memref<2x12x32x8xbf16, #tpu.memory_space<vmem>>, vector<1x1x32x8xbf16>
    %81 = vector.shape_cast %80 : vector<1x1x32x8xbf16> to vector<32x8xbf16>
    %cst_72 = arith.constant dense<0.000000e+00> : vector<16x8xf32>
    %82 = tpu.matmul %2, %81, %cst_72 {dimension_numbers = #tpu.dot_dimension_numbers<[1], [0], [0], [1], [0, 0, 1, 1], [], []>} : vector<16x32xbf16>, vector<32x8xbf16>, vector<16x8xf32> -> vector<16x8xf32>
    %c0_73 = arith.constant 0 : index
    %c2_74 = arith.constant 2 : index
    %c0_75 = arith.constant 0 : index
    %c0_76 = arith.constant 0 : index
    %83 = vector.load %arg3[%c0_73, %c2_74, %c0_75, %c0_76] : memref<2x12x1x8xf32, #tpu.memory_space<vmem>>, vector<1x1x1x8xf32>
    %84 = vector.shape_cast %83 : vector<1x1x1x8xf32> to vector<1x8xf32>
    %85 = vector.broadcast %84 : vector<1x8xf32> to vector<16x8xf32>
    %86 = arith.addf %82, %85 : vector<16x8xf32>
    %c0_77 = arith.constant 0 : index
    %c6 = arith.constant 6 : index
    %c0_78 = arith.constant 0 : index
    %c0_79 = arith.constant 0 : index
    %87 = vector.load %arg2[%c0_77, %c6, %c0_78, %c0_79] : memref<2x12x32x8xbf16, #tpu.memory_space<vmem>>, vector<1x1x32x8xbf16>
    %88 = vector.shape_cast %87 : vector<1x1x32x8xbf16> to vector<32x8xbf16>
    %cst_80 = arith.constant dense<0.000000e+00> : vector<16x8xf32>
    %89 = tpu.matmul %2, %88, %cst_80 {dimension_numbers = #tpu.dot_dimension_numbers<[1], [0], [0], [1], [0, 0, 1, 1], [], []>} : vector<16x32xbf16>, vector<32x8xbf16>, vector<16x8xf32> -> vector<16x8xf32>
    %c0_81 = arith.constant 0 : index
    %c6_82 = arith.constant 6 : index
    %c0_83 = arith.constant 0 : index
    %c0_84 = arith.constant 0 : index
    %90 = vector.load %arg3[%c0_81, %c6_82, %c0_83, %c0_84] : memref<2x12x1x8xf32, #tpu.memory_space<vmem>>, vector<1x1x1x8xf32>
    %91 = vector.shape_cast %90 : vector<1x1x1x8xf32> to vector<1x8xf32>
    %92 = vector.broadcast %91 : vector<1x8xf32> to vector<16x8xf32>
    %93 = arith.addf %89, %92 : vector<16x8xf32>
    %c0_85 = arith.constant 0 : index
    %c10 = arith.constant 10 : index
    %c0_86 = arith.constant 0 : index
    %c0_87 = arith.constant 0 : index
    %94 = vector.load %arg2[%c0_85, %c10, %c0_86, %c0_87] : memref<2x12x32x8xbf16, #tpu.memory_space<vmem>>, vector<1x1x32x8xbf16>
    %95 = vector.shape_cast %94 : vector<1x1x32x8xbf16> to vector<32x8xbf16>
    %cst_88 = arith.constant dense<0.000000e+00> : vector<16x8xf32>
    %96 = tpu.matmul %2, %95, %cst_88 {dimension_numbers = #tpu.dot_dimension_numbers<[1], [0], [0], [1], [0, 0, 1, 1], [], []>} : vector<16x32xbf16>, vector<32x8xbf16>, vector<16x8xf32> -> vector<16x8xf32>
    %c0_89 = arith.constant 0 : index
    %c10_90 = arith.constant 10 : index
    %c0_91 = arith.constant 0 : index
    %c0_92 = arith.constant 0 : index
    %97 = vector.load %arg3[%c0_89, %c10_90, %c0_91, %c0_92] : memref<2x12x1x8xf32, #tpu.memory_space<vmem>>, vector<1x1x1x8xf32>
    %98 = vector.shape_cast %97 : vector<1x1x1x8xf32> to vector<1x8xf32>
    %99 = vector.broadcast %98 : vector<1x8xf32> to vector<16x8xf32>
    %100 = arith.addf %96, %99 : vector<16x8xf32>
    %cst_93 = arith.constant dense<0.000000e+00> : vector<16x16xf32>
    %101 = tpu.matmul %86, %93, %cst_93 {dimension_numbers = #tpu.dot_dimension_numbers<[1], [1], [0], [0], [0, 0, 1, 0], [], []>} : vector<16x8xf32>, vector<16x8xf32>, vector<16x16xf32> -> vector<16x16xf32>
    %cst_94 = arith.constant dense<0xFF800000> : vector<16xf32>
    %102 = vector.multi_reduction <maximumf>, %101, %cst_94 [1] : vector<16x16xf32> to vector<16xf32>
    %103 = vector.shape_cast %102 : vector<16xf32> to vector<16x1xf32>
    %104 = vector.broadcast %103 : vector<16x1xf32> to vector<16x16xf32>
    %105 = arith.subf %101, %104 : vector<16x16xf32>
    %106 = math.exp %105 : vector<16x16xf32>
    %cst_95 = arith.constant dense<0.000000e+00> : vector<16xf32>
    %107 = vector.multi_reduction <add>, %106, %cst_95 [1] : vector<16x16xf32> to vector<16xf32>
    %108 = vector.shape_cast %107 : vector<16xf32> to vector<16x1xf32>
    %109 = tpu.reciprocal %108 : vector<16x1xf32> -> vector<16x1xf32>
    %110 = vector.broadcast %109 : vector<16x1xf32> to vector<16x16xf32>
    %111 = arith.mulf %106, %110 : vector<16x16xf32>
    %cst_96 = arith.constant dense<0.000000e+00> : vector<16x8xf32>
    %112 = tpu.matmul %111, %100, %cst_96 {dimension_numbers = #tpu.dot_dimension_numbers<[1], [0], [0], [1], [0, 0, 1, 1], [], []>} : vector<16x16xf32>, vector<16x8xf32>, vector<16x8xf32> -> vector<16x8xf32>
    %113 = arith.truncf %112 : vector<16x8xf32> to vector<16x8xbf16>
    %c0_97 = arith.constant 0 : index
    %c2_98 = arith.constant 2 : index
    %c0_99 = arith.constant 0 : index
    %c0_100 = arith.constant 0 : index
    %114 = vector.load %arg4[%c0_97, %c2_98, %c0_99, %c0_100] : memref<2x4x8x32xbf16, #tpu.memory_space<vmem>>, vector<1x1x8x32xbf16>
    %115 = vector.shape_cast %114 : vector<1x1x8x32xbf16> to vector<8x32xbf16>
    %cst_101 = arith.constant dense<0.000000e+00> : vector<16x32xf32>
    %116 = tpu.matmul %113, %115, %cst_101 {dimension_numbers = #tpu.dot_dimension_numbers<[1], [0], [0], [1], [0, 0, 1, 1], [], []>} : vector<16x8xbf16>, vector<8x32xbf16>, vector<16x32xf32> -> vector<16x32xf32>
    %117 = arith.addf %79, %116 : vector<16x32xf32>
    %c0_102 = arith.constant 0 : index
    %c3 = arith.constant 3 : index
    %c0_103 = arith.constant 0 : index
    %c0_104 = arith.constant 0 : index
    %118 = vector.load %arg2[%c0_102, %c3, %c0_103, %c0_104] : memref<2x12x32x8xbf16, #tpu.memory_space<vmem>>, vector<1x1x32x8xbf16>
    %119 = vector.shape_cast %118 : vector<1x1x32x8xbf16> to vector<32x8xbf16>
    %cst_105 = arith.constant dense<0.000000e+00> : vector<16x8xf32>
    %120 = tpu.matmul %2, %119, %cst_105 {dimension_numbers = #tpu.dot_dimension_numbers<[1], [0], [0], [1], [0, 0, 1, 1], [], []>} : vector<16x32xbf16>, vector<32x8xbf16>, vector<16x8xf32> -> vector<16x8xf32>
    %c0_106 = arith.constant 0 : index
    %c3_107 = arith.constant 3 : index
    %c0_108 = arith.constant 0 : index
    %c0_109 = arith.constant 0 : index
    %121 = vector.load %arg3[%c0_106, %c3_107, %c0_108, %c0_109] : memref<2x12x1x8xf32, #tpu.memory_space<vmem>>, vector<1x1x1x8xf32>
    %122 = vector.shape_cast %121 : vector<1x1x1x8xf32> to vector<1x8xf32>
    %123 = vector.broadcast %122 : vector<1x8xf32> to vector<16x8xf32>
    %124 = arith.addf %120, %123 : vector<16x8xf32>
    %c0_110 = arith.constant 0 : index
    %c7 = arith.constant 7 : index
    %c0_111 = arith.constant 0 : index
    %c0_112 = arith.constant 0 : index
    %125 = vector.load %arg2[%c0_110, %c7, %c0_111, %c0_112] : memref<2x12x32x8xbf16, #tpu.memory_space<vmem>>, vector<1x1x32x8xbf16>
    %126 = vector.shape_cast %125 : vector<1x1x32x8xbf16> to vector<32x8xbf16>
    %cst_113 = arith.constant dense<0.000000e+00> : vector<16x8xf32>
    %127 = tpu.matmul %2, %126, %cst_113 {dimension_numbers = #tpu.dot_dimension_numbers<[1], [0], [0], [1], [0, 0, 1, 1], [], []>} : vector<16x32xbf16>, vector<32x8xbf16>, vector<16x8xf32> -> vector<16x8xf32>
    %c0_114 = arith.constant 0 : index
    %c7_115 = arith.constant 7 : index
    %c0_116 = arith.constant 0 : index
    %c0_117 = arith.constant 0 : index
    %128 = vector.load %arg3[%c0_114, %c7_115, %c0_116, %c0_117] : memref<2x12x1x8xf32, #tpu.memory_space<vmem>>, vector<1x1x1x8xf32>
    %129 = vector.shape_cast %128 : vector<1x1x1x8xf32> to vector<1x8xf32>
    %130 = vector.broadcast %129 : vector<1x8xf32> to vector<16x8xf32>
    %131 = arith.addf %127, %130 : vector<16x8xf32>
    %c0_118 = arith.constant 0 : index
    %c11 = arith.constant 11 : index
    %c0_119 = arith.constant 0 : index
    %c0_120 = arith.constant 0 : index
    %132 = vector.load %arg2[%c0_118, %c11, %c0_119, %c0_120] : memref<2x12x32x8xbf16, #tpu.memory_space<vmem>>, vector<1x1x32x8xbf16>
    %133 = vector.shape_cast %132 : vector<1x1x32x8xbf16> to vector<32x8xbf16>
    %cst_121 = arith.constant dense<0.000000e+00> : vector<16x8xf32>
    %134 = tpu.matmul %2, %133, %cst_121 {dimension_numbers = #tpu.dot_dimension_numbers<[1], [0], [0], [1], [0, 0, 1, 1], [], []>} : vector<16x32xbf16>, vector<32x8xbf16>, vector<16x8xf32> -> vector<16x8xf32>
    %c0_122 = arith.constant 0 : index
    %c11_123 = arith.constant 11 : index
    %c0_124 = arith.constant 0 : index
    %c0_125 = arith.constant 0 : index
    %135 = vector.load %arg3[%c0_122, %c11_123, %c0_124, %c0_125] : memref<2x12x1x8xf32, #tpu.memory_space<vmem>>, vector<1x1x1x8xf32>
    %136 = vector.shape_cast %135 : vector<1x1x1x8xf32> to vector<1x8xf32>
    %137 = vector.broadcast %136 : vector<1x8xf32> to vector<16x8xf32>
    %138 = arith.addf %134, %137 : vector<16x8xf32>
    %cst_126 = arith.constant dense<0.000000e+00> : vector<16x16xf32>
    %139 = tpu.matmul %124, %131, %cst_126 {dimension_numbers = #tpu.dot_dimension_numbers<[1], [1], [0], [0], [0, 0, 1, 0], [], []>} : vector<16x8xf32>, vector<16x8xf32>, vector<16x16xf32> -> vector<16x16xf32>
    %cst_127 = arith.constant dense<0xFF800000> : vector<16xf32>
    %140 = vector.multi_reduction <maximumf>, %139, %cst_127 [1] : vector<16x16xf32> to vector<16xf32>
    %141 = vector.shape_cast %140 : vector<16xf32> to vector<16x1xf32>
    %142 = vector.broadcast %141 : vector<16x1xf32> to vector<16x16xf32>
    %143 = arith.subf %139, %142 : vector<16x16xf32>
    %144 = math.exp %143 : vector<16x16xf32>
    %cst_128 = arith.constant dense<0.000000e+00> : vector<16xf32>
    %145 = vector.multi_reduction <add>, %144, %cst_128 [1] : vector<16x16xf32> to vector<16xf32>
    %146 = vector.shape_cast %145 : vector<16xf32> to vector<16x1xf32>
    %147 = tpu.reciprocal %146 : vector<16x1xf32> -> vector<16x1xf32>
    %148 = vector.broadcast %147 : vector<16x1xf32> to vector<16x16xf32>
    %149 = arith.mulf %144, %148 : vector<16x16xf32>
    %cst_129 = arith.constant dense<0.000000e+00> : vector<16x8xf32>
    %150 = tpu.matmul %149, %138, %cst_129 {dimension_numbers = #tpu.dot_dimension_numbers<[1], [0], [0], [1], [0, 0, 1, 1], [], []>} : vector<16x16xf32>, vector<16x8xf32>, vector<16x8xf32> -> vector<16x8xf32>
    %151 = arith.truncf %150 : vector<16x8xf32> to vector<16x8xbf16>
    %c0_130 = arith.constant 0 : index
    %c3_131 = arith.constant 3 : index
    %c0_132 = arith.constant 0 : index
    %c0_133 = arith.constant 0 : index
    %152 = vector.load %arg4[%c0_130, %c3_131, %c0_132, %c0_133] : memref<2x4x8x32xbf16, #tpu.memory_space<vmem>>, vector<1x1x8x32xbf16>
    %153 = vector.shape_cast %152 : vector<1x1x8x32xbf16> to vector<8x32xbf16>
    %cst_134 = arith.constant dense<0.000000e+00> : vector<16x32xf32>
    %154 = tpu.matmul %151, %153, %cst_134 {dimension_numbers = #tpu.dot_dimension_numbers<[1], [0], [0], [1], [0, 0, 1, 1], [], []>} : vector<16x8xbf16>, vector<8x32xbf16>, vector<16x32xf32> -> vector<16x32xf32>
    %155 = arith.addf %117, %154 : vector<16x32xf32>
    %c0_135 = arith.constant 0 : index
    %c0_136 = arith.constant 0 : index
    %c0_137 = arith.constant 0 : index
    %156 = vector.load %arg5[%c0_135, %c0_136, %c0_137] : memref<2x1x32xf32, #tpu.memory_space<vmem>>, vector<1x1x32xf32>
    %157 = vector.shape_cast %156 : vector<1x1x32xf32> to vector<1x32xf32>
    %158 = vector.broadcast %157 : vector<1x32xf32> to vector<16x32xf32>
    %159 = arith.addf %155, %158 : vector<16x32xf32>
    %c0_138 = arith.constant 0 : index
    %c0_139 = arith.constant 0 : index
    %c0_140 = arith.constant 0 : index
    %c0_141 = arith.constant 0 : index
    %160 = vector.load %arg10[%c0_138, %c0_139, %c0_140, %c0_141] : memref<2x4x1x32xf32, #tpu.memory_space<vmem>>, vector<1x1x1x32xf32>
    %161 = vector.shape_cast %160 : vector<1x1x1x32xf32> to vector<1x32xf32>
    %c0_142 = arith.constant 0 : index
    %c1_143 = arith.constant 1 : index
    %c0_144 = arith.constant 0 : index
    %c0_145 = arith.constant 0 : index
    %162 = vector.load %arg10[%c0_142, %c1_143, %c0_144, %c0_145] : memref<2x4x1x32xf32, #tpu.memory_space<vmem>>, vector<1x1x1x32xf32>
    %163 = vector.shape_cast %162 : vector<1x1x1x32xf32> to vector<1x32xf32>
    %c0_146 = arith.constant 0 : index
    %c2_147 = arith.constant 2 : index
    %c0_148 = arith.constant 0 : index
    %c0_149 = arith.constant 0 : index
    %164 = vector.load %arg10[%c0_146, %c2_147, %c0_148, %c0_149] : memref<2x4x1x32xf32, #tpu.memory_space<vmem>>, vector<1x1x1x32xf32>
    %165 = vector.shape_cast %164 : vector<1x1x1x32xf32> to vector<1x32xf32>
    %c0_150 = arith.constant 0 : index
    %c3_151 = arith.constant 3 : index
    %c0_152 = arith.constant 0 : index
    %c0_153 = arith.constant 0 : index
    %166 = vector.load %arg10[%c0_150, %c3_151, %c0_152, %c0_153] : memref<2x4x1x32xf32, #tpu.memory_space<vmem>>, vector<1x1x1x32xf32>
    %167 = vector.shape_cast %166 : vector<1x1x1x32xf32> to vector<1x32xf32>
    %168 = arith.addf %1, %159 : vector<16x32xf32>
    %cst_154 = arith.constant dense<0.000000e+00> : vector<16xf32>
    %169 = vector.multi_reduction <add>, %168, %cst_154 [1] : vector<16x32xf32> to vector<16xf32>
    %170 = vector.shape_cast %169 : vector<16xf32> to vector<16x1xf32>
    %cst_155 = arith.constant 3.200000e+01 : f32
    %171 = vector.broadcast %cst_155 : f32 to vector<16x1xf32>
    %172 = arith.divf %170, %171 : vector<16x1xf32>
    %173 = vector.broadcast %172 : vector<16x1xf32> to vector<16x32xf32>
    %174 = arith.subf %168, %173 : vector<16x32xf32>
    %175 = arith.mulf %174, %174 : vector<16x32xf32>
    %cst_156 = arith.constant dense<0.000000e+00> : vector<16xf32>
    %176 = vector.multi_reduction <add>, %175, %cst_156 [1] : vector<16x32xf32> to vector<16xf32>
    %177 = vector.shape_cast %176 : vector<16xf32> to vector<16x1xf32>
    %cst_157 = arith.constant 3.200000e+01 : f32
    %178 = vector.broadcast %cst_157 : f32 to vector<16x1xf32>
    %179 = arith.divf %177, %178 : vector<16x1xf32>
    %180 = vector.broadcast %172 : vector<16x1xf32> to vector<16x32xf32>
    %181 = arith.subf %168, %180 : vector<16x32xf32>
    %cst_158 = arith.constant 9.99999974E-6 : f32
    %182 = vector.broadcast %cst_158 : f32 to vector<16x1xf32>
    %183 = arith.addf %179, %182 : vector<16x1xf32>
    %184 = math.rsqrt %183 : vector<16x1xf32>
    %185 = vector.broadcast %184 : vector<16x1xf32> to vector<16x32xf32>
    %186 = arith.mulf %181, %185 : vector<16x32xf32>
    %187 = vector.broadcast %161 : vector<1x32xf32> to vector<16x32xf32>
    %188 = arith.mulf %186, %187 : vector<16x32xf32>
    %189 = vector.broadcast %163 : vector<1x32xf32> to vector<16x32xf32>
    %190 = arith.addf %188, %189 : vector<16x32xf32>
    %191 = arith.truncf %190 : vector<16x32xf32> to vector<16x32xbf16>
    %c0_159 = arith.constant 0 : index
    %c0_160 = arith.constant 0 : index
    %c0_161 = arith.constant 0 : index
    %192 = vector.load %arg6[%c0_159, %c0_160, %c0_161] : memref<2x32x2048xbf16, #tpu.memory_space<vmem>>, vector<1x32x2048xbf16>
    %193 = vector.shape_cast %192 : vector<1x32x2048xbf16> to vector<32x2048xbf16>
    %cst_162 = arith.constant dense<0.000000e+00> : vector<16x2048xf32>
    %194 = tpu.matmul %191, %193, %cst_162 {dimension_numbers = #tpu.dot_dimension_numbers<[1], [0], [0], [1], [0, 0, 1, 1], [], []>} : vector<16x32xbf16>, vector<32x2048xbf16>, vector<16x2048xf32> -> vector<16x2048xf32>
    %c0_163 = arith.constant 0 : index
    %c0_164 = arith.constant 0 : index
    %c0_165 = arith.constant 0 : index
    %195 = vector.load %arg7[%c0_163, %c0_164, %c0_165] : memref<2x1x2048xf32, #tpu.memory_space<vmem>>, vector<1x1x2048xf32>
    %196 = vector.shape_cast %195 : vector<1x1x2048xf32> to vector<1x2048xf32>
    %197 = vector.broadcast %196 : vector<1x2048xf32> to vector<16x2048xf32>
    %198 = arith.addf %194, %197 : vector<16x2048xf32>
    %cst_166 = arith.constant 0.000000e+00 : f32
    %199 = vector.broadcast %cst_166 : f32 to vector<16x2048xf32>
    %200 = arith.maximumf %198, %199 : vector<16x2048xf32>
    %201 = arith.truncf %200 : vector<16x2048xf32> to vector<16x2048xbf16>
    %c0_167 = arith.constant 0 : index
    %c0_168 = arith.constant 0 : index
    %c0_169 = arith.constant 0 : index
    %202 = vector.load %arg8[%c0_167, %c0_168, %c0_169] : memref<2x2048x32xbf16, #tpu.memory_space<vmem>>, vector<1x2048x32xbf16>
    %203 = vector.shape_cast %202 : vector<1x2048x32xbf16> to vector<2048x32xbf16>
    %cst_170 = arith.constant dense<0.000000e+00> : vector<16x32xf32>
    %204 = tpu.matmul %201, %203, %cst_170 {dimension_numbers = #tpu.dot_dimension_numbers<[1], [0], [0], [1], [0, 0, 1, 1], [], []>} : vector<16x2048xbf16>, vector<2048x32xbf16>, vector<16x32xf32> -> vector<16x32xf32>
    %c0_171 = arith.constant 0 : index
    %c0_172 = arith.constant 0 : index
    %c0_173 = arith.constant 0 : index
    %205 = vector.load %arg9[%c0_171, %c0_172, %c0_173] : memref<2x1x32xf32, #tpu.memory_space<vmem>>, vector<1x1x32xf32>
    %206 = vector.shape_cast %205 : vector<1x1x32xf32> to vector<1x32xf32>
    %207 = vector.broadcast %206 : vector<1x32xf32> to vector<16x32xf32>
    %208 = arith.addf %204, %207 : vector<16x32xf32>
    %209 = arith.addf %190, %208 : vector<16x32xf32>
    %cst_174 = arith.constant dense<0.000000e+00> : vector<16xf32>
    %210 = vector.multi_reduction <add>, %209, %cst_174 [1] : vector<16x32xf32> to vector<16xf32>
    %211 = vector.shape_cast %210 : vector<16xf32> to vector<16x1xf32>
    %cst_175 = arith.constant 3.200000e+01 : f32
    %212 = vector.broadcast %cst_175 : f32 to vector<16x1xf32>
    %213 = arith.divf %211, %212 : vector<16x1xf32>
    %214 = vector.broadcast %213 : vector<16x1xf32> to vector<16x32xf32>
    %215 = arith.subf %209, %214 : vector<16x32xf32>
    %216 = arith.mulf %215, %215 : vector<16x32xf32>
    %cst_176 = arith.constant dense<0.000000e+00> : vector<16xf32>
    %217 = vector.multi_reduction <add>, %216, %cst_176 [1] : vector<16x32xf32> to vector<16xf32>
    %218 = vector.shape_cast %217 : vector<16xf32> to vector<16x1xf32>
    %cst_177 = arith.constant 3.200000e+01 : f32
    %219 = vector.broadcast %cst_177 : f32 to vector<16x1xf32>
    %220 = arith.divf %218, %219 : vector<16x1xf32>
    %221 = vector.broadcast %213 : vector<16x1xf32> to vector<16x32xf32>
    %222 = arith.subf %209, %221 : vector<16x32xf32>
    %cst_178 = arith.constant 9.99999974E-6 : f32
    %223 = vector.broadcast %cst_178 : f32 to vector<16x1xf32>
    %224 = arith.addf %220, %223 : vector<16x1xf32>
    %225 = math.rsqrt %224 : vector<16x1xf32>
    %226 = vector.broadcast %225 : vector<16x1xf32> to vector<16x32xf32>
    %227 = arith.mulf %222, %226 : vector<16x32xf32>
    %228 = vector.broadcast %165 : vector<1x32xf32> to vector<16x32xf32>
    %229 = arith.mulf %227, %228 : vector<16x32xf32>
    %230 = vector.broadcast %167 : vector<1x32xf32> to vector<16x32xf32>
    %231 = arith.addf %229, %230 : vector<16x32xf32>
    %232 = arith.truncf %231 : vector<16x32xf32> to vector<16x32xbf16>
    %cst_179 = arith.constant 0.000000e+00 : f32
    %233 = vector.broadcast %cst_179 : f32 to vector<16x32xf32>
    %c1_180 = arith.constant 1 : index
    %c0_181 = arith.constant 0 : index
    %c0_182 = arith.constant 0 : index
    %c0_183 = arith.constant 0 : index
    %234 = vector.load %arg2[%c1_180, %c0_181, %c0_182, %c0_183] : memref<2x12x32x8xbf16, #tpu.memory_space<vmem>>, vector<1x1x32x8xbf16>
    %235 = vector.shape_cast %234 : vector<1x1x32x8xbf16> to vector<32x8xbf16>
    %cst_184 = arith.constant dense<0.000000e+00> : vector<16x8xf32>
    %236 = tpu.matmul %232, %235, %cst_184 {dimension_numbers = #tpu.dot_dimension_numbers<[1], [0], [0], [1], [0, 0, 1, 1], [], []>} : vector<16x32xbf16>, vector<32x8xbf16>, vector<16x8xf32> -> vector<16x8xf32>
    %c1_185 = arith.constant 1 : index
    %c0_186 = arith.constant 0 : index
    %c0_187 = arith.constant 0 : index
    %c0_188 = arith.constant 0 : index
    %237 = vector.load %arg3[%c1_185, %c0_186, %c0_187, %c0_188] : memref<2x12x1x8xf32, #tpu.memory_space<vmem>>, vector<1x1x1x8xf32>
    %238 = vector.shape_cast %237 : vector<1x1x1x8xf32> to vector<1x8xf32>
    %239 = vector.broadcast %238 : vector<1x8xf32> to vector<16x8xf32>
    %240 = arith.addf %236, %239 : vector<16x8xf32>
    %c1_189 = arith.constant 1 : index
    %c4_190 = arith.constant 4 : index
    %c0_191 = arith.constant 0 : index
    %c0_192 = arith.constant 0 : index
    %241 = vector.load %arg2[%c1_189, %c4_190, %c0_191, %c0_192] : memref<2x12x32x8xbf16, #tpu.memory_space<vmem>>, vector<1x1x32x8xbf16>
    %242 = vector.shape_cast %241 : vector<1x1x32x8xbf16> to vector<32x8xbf16>
    %cst_193 = arith.constant dense<0.000000e+00> : vector<16x8xf32>
    %243 = tpu.matmul %232, %242, %cst_193 {dimension_numbers = #tpu.dot_dimension_numbers<[1], [0], [0], [1], [0, 0, 1, 1], [], []>} : vector<16x32xbf16>, vector<32x8xbf16>, vector<16x8xf32> -> vector<16x8xf32>
    %c1_194 = arith.constant 1 : index
    %c4_195 = arith.constant 4 : index
    %c0_196 = arith.constant 0 : index
    %c0_197 = arith.constant 0 : index
    %244 = vector.load %arg3[%c1_194, %c4_195, %c0_196, %c0_197] : memref<2x12x1x8xf32, #tpu.memory_space<vmem>>, vector<1x1x1x8xf32>
    %245 = vector.shape_cast %244 : vector<1x1x1x8xf32> to vector<1x8xf32>
    %246 = vector.broadcast %245 : vector<1x8xf32> to vector<16x8xf32>
    %247 = arith.addf %243, %246 : vector<16x8xf32>
    %c1_198 = arith.constant 1 : index
    %c8_199 = arith.constant 8 : index
    %c0_200 = arith.constant 0 : index
    %c0_201 = arith.constant 0 : index
    %248 = vector.load %arg2[%c1_198, %c8_199, %c0_200, %c0_201] : memref<2x12x32x8xbf16, #tpu.memory_space<vmem>>, vector<1x1x32x8xbf16>
    %249 = vector.shape_cast %248 : vector<1x1x32x8xbf16> to vector<32x8xbf16>
    %cst_202 = arith.constant dense<0.000000e+00> : vector<16x8xf32>
    %250 = tpu.matmul %232, %249, %cst_202 {dimension_numbers = #tpu.dot_dimension_numbers<[1], [0], [0], [1], [0, 0, 1, 1], [], []>} : vector<16x32xbf16>, vector<32x8xbf16>, vector<16x8xf32> -> vector<16x8xf32>
    %c1_203 = arith.constant 1 : index
    %c8_204 = arith.constant 8 : index
    %c0_205 = arith.constant 0 : index
    %c0_206 = arith.constant 0 : index
    %251 = vector.load %arg3[%c1_203, %c8_204, %c0_205, %c0_206] : memref<2x12x1x8xf32, #tpu.memory_space<vmem>>, vector<1x1x1x8xf32>
    %252 = vector.shape_cast %251 : vector<1x1x1x8xf32> to vector<1x8xf32>
    %253 = vector.broadcast %252 : vector<1x8xf32> to vector<16x8xf32>
    %254 = arith.addf %250, %253 : vector<16x8xf32>
    %cst_207 = arith.constant dense<0.000000e+00> : vector<16x16xf32>
    %255 = tpu.matmul %240, %247, %cst_207 {dimension_numbers = #tpu.dot_dimension_numbers<[1], [1], [0], [0], [0, 0, 1, 0], [], []>} : vector<16x8xf32>, vector<16x8xf32>, vector<16x16xf32> -> vector<16x16xf32>
    %cst_208 = arith.constant dense<0xFF800000> : vector<16xf32>
    %256 = vector.multi_reduction <maximumf>, %255, %cst_208 [1] : vector<16x16xf32> to vector<16xf32>
    %257 = vector.shape_cast %256 : vector<16xf32> to vector<16x1xf32>
    %258 = vector.broadcast %257 : vector<16x1xf32> to vector<16x16xf32>
    %259 = arith.subf %255, %258 : vector<16x16xf32>
    %260 = math.exp %259 : vector<16x16xf32>
    %cst_209 = arith.constant dense<0.000000e+00> : vector<16xf32>
    %261 = vector.multi_reduction <add>, %260, %cst_209 [1] : vector<16x16xf32> to vector<16xf32>
    %262 = vector.shape_cast %261 : vector<16xf32> to vector<16x1xf32>
    %263 = tpu.reciprocal %262 : vector<16x1xf32> -> vector<16x1xf32>
    %264 = vector.broadcast %263 : vector<16x1xf32> to vector<16x16xf32>
    %265 = arith.mulf %260, %264 : vector<16x16xf32>
    %cst_210 = arith.constant dense<0.000000e+00> : vector<16x8xf32>
    %266 = tpu.matmul %265, %254, %cst_210 {dimension_numbers = #tpu.dot_dimension_numbers<[1], [0], [0], [1], [0, 0, 1, 1], [], []>} : vector<16x16xf32>, vector<16x8xf32>, vector<16x8xf32> -> vector<16x8xf32>
    %267 = arith.truncf %266 : vector<16x8xf32> to vector<16x8xbf16>
    %c1_211 = arith.constant 1 : index
    %c0_212 = arith.constant 0 : index
    %c0_213 = arith.constant 0 : index
    %c0_214 = arith.constant 0 : index
    %268 = vector.load %arg4[%c1_211, %c0_212, %c0_213, %c0_214] : memref<2x4x8x32xbf16, #tpu.memory_space<vmem>>, vector<1x1x8x32xbf16>
    %269 = vector.shape_cast %268 : vector<1x1x8x32xbf16> to vector<8x32xbf16>
    %cst_215 = arith.constant dense<0.000000e+00> : vector<16x32xf32>
    %270 = tpu.matmul %267, %269, %cst_215 {dimension_numbers = #tpu.dot_dimension_numbers<[1], [0], [0], [1], [0, 0, 1, 1], [], []>} : vector<16x8xbf16>, vector<8x32xbf16>, vector<16x32xf32> -> vector<16x32xf32>
    %271 = arith.addf %233, %270 : vector<16x32xf32>
    %c1_216 = arith.constant 1 : index
    %c1_217 = arith.constant 1 : index
    %c0_218 = arith.constant 0 : index
    %c0_219 = arith.constant 0 : index
    %272 = vector.load %arg2[%c1_216, %c1_217, %c0_218, %c0_219] : memref<2x12x32x8xbf16, #tpu.memory_space<vmem>>, vector<1x1x32x8xbf16>
    %273 = vector.shape_cast %272 : vector<1x1x32x8xbf16> to vector<32x8xbf16>
    %cst_220 = arith.constant dense<0.000000e+00> : vector<16x8xf32>
    %274 = tpu.matmul %232, %273, %cst_220 {dimension_numbers = #tpu.dot_dimension_numbers<[1], [0], [0], [1], [0, 0, 1, 1], [], []>} : vector<16x32xbf16>, vector<32x8xbf16>, vector<16x8xf32> -> vector<16x8xf32>
    %c1_221 = arith.constant 1 : index
    %c1_222 = arith.constant 1 : index
    %c0_223 = arith.constant 0 : index
    %c0_224 = arith.constant 0 : index
    %275 = vector.load %arg3[%c1_221, %c1_222, %c0_223, %c0_224] : memref<2x12x1x8xf32, #tpu.memory_space<vmem>>, vector<1x1x1x8xf32>
    %276 = vector.shape_cast %275 : vector<1x1x1x8xf32> to vector<1x8xf32>
    %277 = vector.broadcast %276 : vector<1x8xf32> to vector<16x8xf32>
    %278 = arith.addf %274, %277 : vector<16x8xf32>
    %c1_225 = arith.constant 1 : index
    %c5_226 = arith.constant 5 : index
    %c0_227 = arith.constant 0 : index
    %c0_228 = arith.constant 0 : index
    %279 = vector.load %arg2[%c1_225, %c5_226, %c0_227, %c0_228] : memref<2x12x32x8xbf16, #tpu.memory_space<vmem>>, vector<1x1x32x8xbf16>
    %280 = vector.shape_cast %279 : vector<1x1x32x8xbf16> to vector<32x8xbf16>
    %cst_229 = arith.constant dense<0.000000e+00> : vector<16x8xf32>
    %281 = tpu.matmul %232, %280, %cst_229 {dimension_numbers = #tpu.dot_dimension_numbers<[1], [0], [0], [1], [0, 0, 1, 1], [], []>} : vector<16x32xbf16>, vector<32x8xbf16>, vector<16x8xf32> -> vector<16x8xf32>
    %c1_230 = arith.constant 1 : index
    %c5_231 = arith.constant 5 : index
    %c0_232 = arith.constant 0 : index
    %c0_233 = arith.constant 0 : index
    %282 = vector.load %arg3[%c1_230, %c5_231, %c0_232, %c0_233] : memref<2x12x1x8xf32, #tpu.memory_space<vmem>>, vector<1x1x1x8xf32>
    %283 = vector.shape_cast %282 : vector<1x1x1x8xf32> to vector<1x8xf32>
    %284 = vector.broadcast %283 : vector<1x8xf32> to vector<16x8xf32>
    %285 = arith.addf %281, %284 : vector<16x8xf32>
    %c1_234 = arith.constant 1 : index
    %c9_235 = arith.constant 9 : index
    %c0_236 = arith.constant 0 : index
    %c0_237 = arith.constant 0 : index
    %286 = vector.load %arg2[%c1_234, %c9_235, %c0_236, %c0_237] : memref<2x12x32x8xbf16, #tpu.memory_space<vmem>>, vector<1x1x32x8xbf16>
    %287 = vector.shape_cast %286 : vector<1x1x32x8xbf16> to vector<32x8xbf16>
    %cst_238 = arith.constant dense<0.000000e+00> : vector<16x8xf32>
    %288 = tpu.matmul %232, %287, %cst_238 {dimension_numbers = #tpu.dot_dimension_numbers<[1], [0], [0], [1], [0, 0, 1, 1], [], []>} : vector<16x32xbf16>, vector<32x8xbf16>, vector<16x8xf32> -> vector<16x8xf32>
    %c1_239 = arith.constant 1 : index
    %c9_240 = arith.constant 9 : index
    %c0_241 = arith.constant 0 : index
    %c0_242 = arith.constant 0 : index
    %289 = vector.load %arg3[%c1_239, %c9_240, %c0_241, %c0_242] : memref<2x12x1x8xf32, #tpu.memory_space<vmem>>, vector<1x1x1x8xf32>
    %290 = vector.shape_cast %289 : vector<1x1x1x8xf32> to vector<1x8xf32>
    %291 = vector.broadcast %290 : vector<1x8xf32> to vector<16x8xf32>
    %292 = arith.addf %288, %291 : vector<16x8xf32>
    %cst_243 = arith.constant dense<0.000000e+00> : vector<16x16xf32>
    %293 = tpu.matmul %278, %285, %cst_243 {dimension_numbers = #tpu.dot_dimension_numbers<[1], [1], [0], [0], [0, 0, 1, 0], [], []>} : vector<16x8xf32>, vector<16x8xf32>, vector<16x16xf32> -> vector<16x16xf32>
    %cst_244 = arith.constant dense<0xFF800000> : vector<16xf32>
    %294 = vector.multi_reduction <maximumf>, %293, %cst_244 [1] : vector<16x16xf32> to vector<16xf32>
    %295 = vector.shape_cast %294 : vector<16xf32> to vector<16x1xf32>
    %296 = vector.broadcast %295 : vector<16x1xf32> to vector<16x16xf32>
    %297 = arith.subf %293, %296 : vector<16x16xf32>
    %298 = math.exp %297 : vector<16x16xf32>
    %cst_245 = arith.constant dense<0.000000e+00> : vector<16xf32>
    %299 = vector.multi_reduction <add>, %298, %cst_245 [1] : vector<16x16xf32> to vector<16xf32>
    %300 = vector.shape_cast %299 : vector<16xf32> to vector<16x1xf32>
    %301 = tpu.reciprocal %300 : vector<16x1xf32> -> vector<16x1xf32>
    %302 = vector.broadcast %301 : vector<16x1xf32> to vector<16x16xf32>
    %303 = arith.mulf %298, %302 : vector<16x16xf32>
    %cst_246 = arith.constant dense<0.000000e+00> : vector<16x8xf32>
    %304 = tpu.matmul %303, %292, %cst_246 {dimension_numbers = #tpu.dot_dimension_numbers<[1], [0], [0], [1], [0, 0, 1, 1], [], []>} : vector<16x16xf32>, vector<16x8xf32>, vector<16x8xf32> -> vector<16x8xf32>
    %305 = arith.truncf %304 : vector<16x8xf32> to vector<16x8xbf16>
    %c1_247 = arith.constant 1 : index
    %c1_248 = arith.constant 1 : index
    %c0_249 = arith.constant 0 : index
    %c0_250 = arith.constant 0 : index
    %306 = vector.load %arg4[%c1_247, %c1_248, %c0_249, %c0_250] : memref<2x4x8x32xbf16, #tpu.memory_space<vmem>>, vector<1x1x8x32xbf16>
    %307 = vector.shape_cast %306 : vector<1x1x8x32xbf16> to vector<8x32xbf16>
    %cst_251 = arith.constant dense<0.000000e+00> : vector<16x32xf32>
    %308 = tpu.matmul %305, %307, %cst_251 {dimension_numbers = #tpu.dot_dimension_numbers<[1], [0], [0], [1], [0, 0, 1, 1], [], []>} : vector<16x8xbf16>, vector<8x32xbf16>, vector<16x32xf32> -> vector<16x32xf32>
    %309 = arith.addf %271, %308 : vector<16x32xf32>
    %c1_252 = arith.constant 1 : index
    %c2_253 = arith.constant 2 : index
    %c0_254 = arith.constant 0 : index
    %c0_255 = arith.constant 0 : index
    %310 = vector.load %arg2[%c1_252, %c2_253, %c0_254, %c0_255] : memref<2x12x32x8xbf16, #tpu.memory_space<vmem>>, vector<1x1x32x8xbf16>
    %311 = vector.shape_cast %310 : vector<1x1x32x8xbf16> to vector<32x8xbf16>
    %cst_256 = arith.constant dense<0.000000e+00> : vector<16x8xf32>
    %312 = tpu.matmul %232, %311, %cst_256 {dimension_numbers = #tpu.dot_dimension_numbers<[1], [0], [0], [1], [0, 0, 1, 1], [], []>} : vector<16x32xbf16>, vector<32x8xbf16>, vector<16x8xf32> -> vector<16x8xf32>
    %c1_257 = arith.constant 1 : index
    %c2_258 = arith.constant 2 : index
    %c0_259 = arith.constant 0 : index
    %c0_260 = arith.constant 0 : index
    %313 = vector.load %arg3[%c1_257, %c2_258, %c0_259, %c0_260] : memref<2x12x1x8xf32, #tpu.memory_space<vmem>>, vector<1x1x1x8xf32>
    %314 = vector.shape_cast %313 : vector<1x1x1x8xf32> to vector<1x8xf32>
    %315 = vector.broadcast %314 : vector<1x8xf32> to vector<16x8xf32>
    %316 = arith.addf %312, %315 : vector<16x8xf32>
    %c1_261 = arith.constant 1 : index
    %c6_262 = arith.constant 6 : index
    %c0_263 = arith.constant 0 : index
    %c0_264 = arith.constant 0 : index
    %317 = vector.load %arg2[%c1_261, %c6_262, %c0_263, %c0_264] : memref<2x12x32x8xbf16, #tpu.memory_space<vmem>>, vector<1x1x32x8xbf16>
    %318 = vector.shape_cast %317 : vector<1x1x32x8xbf16> to vector<32x8xbf16>
    %cst_265 = arith.constant dense<0.000000e+00> : vector<16x8xf32>
    %319 = tpu.matmul %232, %318, %cst_265 {dimension_numbers = #tpu.dot_dimension_numbers<[1], [0], [0], [1], [0, 0, 1, 1], [], []>} : vector<16x32xbf16>, vector<32x8xbf16>, vector<16x8xf32> -> vector<16x8xf32>
    %c1_266 = arith.constant 1 : index
    %c6_267 = arith.constant 6 : index
    %c0_268 = arith.constant 0 : index
    %c0_269 = arith.constant 0 : index
    %320 = vector.load %arg3[%c1_266, %c6_267, %c0_268, %c0_269] : memref<2x12x1x8xf32, #tpu.memory_space<vmem>>, vector<1x1x1x8xf32>
    %321 = vector.shape_cast %320 : vector<1x1x1x8xf32> to vector<1x8xf32>
    %322 = vector.broadcast %321 : vector<1x8xf32> to vector<16x8xf32>
    %323 = arith.addf %319, %322 : vector<16x8xf32>
    %c1_270 = arith.constant 1 : index
    %c10_271 = arith.constant 10 : index
    %c0_272 = arith.constant 0 : index
    %c0_273 = arith.constant 0 : index
    %324 = vector.load %arg2[%c1_270, %c10_271, %c0_272, %c0_273] : memref<2x12x32x8xbf16, #tpu.memory_space<vmem>>, vector<1x1x32x8xbf16>
    %325 = vector.shape_cast %324 : vector<1x1x32x8xbf16> to vector<32x8xbf16>
    %cst_274 = arith.constant dense<0.000000e+00> : vector<16x8xf32>
    %326 = tpu.matmul %232, %325, %cst_274 {dimension_numbers = #tpu.dot_dimension_numbers<[1], [0], [0], [1], [0, 0, 1, 1], [], []>} : vector<16x32xbf16>, vector<32x8xbf16>, vector<16x8xf32> -> vector<16x8xf32>
    %c1_275 = arith.constant 1 : index
    %c10_276 = arith.constant 10 : index
    %c0_277 = arith.constant 0 : index
    %c0_278 = arith.constant 0 : index
    %327 = vector.load %arg3[%c1_275, %c10_276, %c0_277, %c0_278] : memref<2x12x1x8xf32, #tpu.memory_space<vmem>>, vector<1x1x1x8xf32>
    %328 = vector.shape_cast %327 : vector<1x1x1x8xf32> to vector<1x8xf32>
    %329 = vector.broadcast %328 : vector<1x8xf32> to vector<16x8xf32>
    %330 = arith.addf %326, %329 : vector<16x8xf32>
    %cst_279 = arith.constant dense<0.000000e+00> : vector<16x16xf32>
    %331 = tpu.matmul %316, %323, %cst_279 {dimension_numbers = #tpu.dot_dimension_numbers<[1], [1], [0], [0], [0, 0, 1, 0], [], []>} : vector<16x8xf32>, vector<16x8xf32>, vector<16x16xf32> -> vector<16x16xf32>
    %cst_280 = arith.constant dense<0xFF800000> : vector<16xf32>
    %332 = vector.multi_reduction <maximumf>, %331, %cst_280 [1] : vector<16x16xf32> to vector<16xf32>
    %333 = vector.shape_cast %332 : vector<16xf32> to vector<16x1xf32>
    %334 = vector.broadcast %333 : vector<16x1xf32> to vector<16x16xf32>
    %335 = arith.subf %331, %334 : vector<16x16xf32>
    %336 = math.exp %335 : vector<16x16xf32>
    %cst_281 = arith.constant dense<0.000000e+00> : vector<16xf32>
    %337 = vector.multi_reduction <add>, %336, %cst_281 [1] : vector<16x16xf32> to vector<16xf32>
    %338 = vector.shape_cast %337 : vector<16xf32> to vector<16x1xf32>
    %339 = tpu.reciprocal %338 : vector<16x1xf32> -> vector<16x1xf32>
    %340 = vector.broadcast %339 : vector<16x1xf32> to vector<16x16xf32>
    %341 = arith.mulf %336, %340 : vector<16x16xf32>
    %cst_282 = arith.constant dense<0.000000e+00> : vector<16x8xf32>
    %342 = tpu.matmul %341, %330, %cst_282 {dimension_numbers = #tpu.dot_dimension_numbers<[1], [0], [0], [1], [0, 0, 1, 1], [], []>} : vector<16x16xf32>, vector<16x8xf32>, vector<16x8xf32> -> vector<16x8xf32>
    %343 = arith.truncf %342 : vector<16x8xf32> to vector<16x8xbf16>
    %c1_283 = arith.constant 1 : index
    %c2_284 = arith.constant 2 : index
    %c0_285 = arith.constant 0 : index
    %c0_286 = arith.constant 0 : index
    %344 = vector.load %arg4[%c1_283, %c2_284, %c0_285, %c0_286] : memref<2x4x8x32xbf16, #tpu.memory_space<vmem>>, vector<1x1x8x32xbf16>
    %345 = vector.shape_cast %344 : vector<1x1x8x32xbf16> to vector<8x32xbf16>
    %cst_287 = arith.constant dense<0.000000e+00> : vector<16x32xf32>
    %346 = tpu.matmul %343, %345, %cst_287 {dimension_numbers = #tpu.dot_dimension_numbers<[1], [0], [0], [1], [0, 0, 1, 1], [], []>} : vector<16x8xbf16>, vector<8x32xbf16>, vector<16x32xf32> -> vector<16x32xf32>
    %347 = arith.addf %309, %346 : vector<16x32xf32>
    %c1_288 = arith.constant 1 : index
    %c3_289 = arith.constant 3 : index
    %c0_290 = arith.constant 0 : index
    %c0_291 = arith.constant 0 : index
    %348 = vector.load %arg2[%c1_288, %c3_289, %c0_290, %c0_291] : memref<2x12x32x8xbf16, #tpu.memory_space<vmem>>, vector<1x1x32x8xbf16>
    %349 = vector.shape_cast %348 : vector<1x1x32x8xbf16> to vector<32x8xbf16>
    %cst_292 = arith.constant dense<0.000000e+00> : vector<16x8xf32>
    %350 = tpu.matmul %232, %349, %cst_292 {dimension_numbers = #tpu.dot_dimension_numbers<[1], [0], [0], [1], [0, 0, 1, 1], [], []>} : vector<16x32xbf16>, vector<32x8xbf16>, vector<16x8xf32> -> vector<16x8xf32>
    %c1_293 = arith.constant 1 : index
    %c3_294 = arith.constant 3 : index
    %c0_295 = arith.constant 0 : index
    %c0_296 = arith.constant 0 : index
    %351 = vector.load %arg3[%c1_293, %c3_294, %c0_295, %c0_296] : memref<2x12x1x8xf32, #tpu.memory_space<vmem>>, vector<1x1x1x8xf32>
    %352 = vector.shape_cast %351 : vector<1x1x1x8xf32> to vector<1x8xf32>
    %353 = vector.broadcast %352 : vector<1x8xf32> to vector<16x8xf32>
    %354 = arith.addf %350, %353 : vector<16x8xf32>
    %c1_297 = arith.constant 1 : index
    %c7_298 = arith.constant 7 : index
    %c0_299 = arith.constant 0 : index
    %c0_300 = arith.constant 0 : index
    %355 = vector.load %arg2[%c1_297, %c7_298, %c0_299, %c0_300] : memref<2x12x32x8xbf16, #tpu.memory_space<vmem>>, vector<1x1x32x8xbf16>
    %356 = vector.shape_cast %355 : vector<1x1x32x8xbf16> to vector<32x8xbf16>
    %cst_301 = arith.constant dense<0.000000e+00> : vector<16x8xf32>
    %357 = tpu.matmul %232, %356, %cst_301 {dimension_numbers = #tpu.dot_dimension_numbers<[1], [0], [0], [1], [0, 0, 1, 1], [], []>} : vector<16x32xbf16>, vector<32x8xbf16>, vector<16x8xf32> -> vector<16x8xf32>
    %c1_302 = arith.constant 1 : index
    %c7_303 = arith.constant 7 : index
    %c0_304 = arith.constant 0 : index
    %c0_305 = arith.constant 0 : index
    %358 = vector.load %arg3[%c1_302, %c7_303, %c0_304, %c0_305] : memref<2x12x1x8xf32, #tpu.memory_space<vmem>>, vector<1x1x1x8xf32>
    %359 = vector.shape_cast %358 : vector<1x1x1x8xf32> to vector<1x8xf32>
    %360 = vector.broadcast %359 : vector<1x8xf32> to vector<16x8xf32>
    %361 = arith.addf %357, %360 : vector<16x8xf32>
    %c1_306 = arith.constant 1 : index
    %c11_307 = arith.constant 11 : index
    %c0_308 = arith.constant 0 : index
    %c0_309 = arith.constant 0 : index
    %362 = vector.load %arg2[%c1_306, %c11_307, %c0_308, %c0_309] : memref<2x12x32x8xbf16, #tpu.memory_space<vmem>>, vector<1x1x32x8xbf16>
    %363 = vector.shape_cast %362 : vector<1x1x32x8xbf16> to vector<32x8xbf16>
    %cst_310 = arith.constant dense<0.000000e+00> : vector<16x8xf32>
    %364 = tpu.matmul %232, %363, %cst_310 {dimension_numbers = #tpu.dot_dimension_numbers<[1], [0], [0], [1], [0, 0, 1, 1], [], []>} : vector<16x32xbf16>, vector<32x8xbf16>, vector<16x8xf32> -> vector<16x8xf32>
    %c1_311 = arith.constant 1 : index
    %c11_312 = arith.constant 11 : index
    %c0_313 = arith.constant 0 : index
    %c0_314 = arith.constant 0 : index
    %365 = vector.load %arg3[%c1_311, %c11_312, %c0_313, %c0_314] : memref<2x12x1x8xf32, #tpu.memory_space<vmem>>, vector<1x1x1x8xf32>
    %366 = vector.shape_cast %365 : vector<1x1x1x8xf32> to vector<1x8xf32>
    %367 = vector.broadcast %366 : vector<1x8xf32> to vector<16x8xf32>
    %368 = arith.addf %364, %367 : vector<16x8xf32>
    %cst_315 = arith.constant dense<0.000000e+00> : vector<16x16xf32>
    %369 = tpu.matmul %354, %361, %cst_315 {dimension_numbers = #tpu.dot_dimension_numbers<[1], [1], [0], [0], [0, 0, 1, 0], [], []>} : vector<16x8xf32>, vector<16x8xf32>, vector<16x16xf32> -> vector<16x16xf32>
    %cst_316 = arith.constant dense<0xFF800000> : vector<16xf32>
    %370 = vector.multi_reduction <maximumf>, %369, %cst_316 [1] : vector<16x16xf32> to vector<16xf32>
    %371 = vector.shape_cast %370 : vector<16xf32> to vector<16x1xf32>
    %372 = vector.broadcast %371 : vector<16x1xf32> to vector<16x16xf32>
    %373 = arith.subf %369, %372 : vector<16x16xf32>
    %374 = math.exp %373 : vector<16x16xf32>
    %cst_317 = arith.constant dense<0.000000e+00> : vector<16xf32>
    %375 = vector.multi_reduction <add>, %374, %cst_317 [1] : vector<16x16xf32> to vector<16xf32>
    %376 = vector.shape_cast %375 : vector<16xf32> to vector<16x1xf32>
    %377 = tpu.reciprocal %376 : vector<16x1xf32> -> vector<16x1xf32>
    %378 = vector.broadcast %377 : vector<16x1xf32> to vector<16x16xf32>
    %379 = arith.mulf %374, %378 : vector<16x16xf32>
    %cst_318 = arith.constant dense<0.000000e+00> : vector<16x8xf32>
    %380 = tpu.matmul %379, %368, %cst_318 {dimension_numbers = #tpu.dot_dimension_numbers<[1], [0], [0], [1], [0, 0, 1, 1], [], []>} : vector<16x16xf32>, vector<16x8xf32>, vector<16x8xf32> -> vector<16x8xf32>
    %381 = arith.truncf %380 : vector<16x8xf32> to vector<16x8xbf16>
    %c1_319 = arith.constant 1 : index
    %c3_320 = arith.constant 3 : index
    %c0_321 = arith.constant 0 : index
    %c0_322 = arith.constant 0 : index
    %382 = vector.load %arg4[%c1_319, %c3_320, %c0_321, %c0_322] : memref<2x4x8x32xbf16, #tpu.memory_space<vmem>>, vector<1x1x8x32xbf16>
    %383 = vector.shape_cast %382 : vector<1x1x8x32xbf16> to vector<8x32xbf16>
    %cst_323 = arith.constant dense<0.000000e+00> : vector<16x32xf32>
    %384 = tpu.matmul %381, %383, %cst_323 {dimension_numbers = #tpu.dot_dimension_numbers<[1], [0], [0], [1], [0, 0, 1, 1], [], []>} : vector<16x8xbf16>, vector<8x32xbf16>, vector<16x32xf32> -> vector<16x32xf32>
    %385 = arith.addf %347, %384 : vector<16x32xf32>
    %c1_324 = arith.constant 1 : index
    %c0_325 = arith.constant 0 : index
    %c0_326 = arith.constant 0 : index
    %386 = vector.load %arg5[%c1_324, %c0_325, %c0_326] : memref<2x1x32xf32, #tpu.memory_space<vmem>>, vector<1x1x32xf32>
    %387 = vector.shape_cast %386 : vector<1x1x32xf32> to vector<1x32xf32>
    %388 = vector.broadcast %387 : vector<1x32xf32> to vector<16x32xf32>
    %389 = arith.addf %385, %388 : vector<16x32xf32>
    %c1_327 = arith.constant 1 : index
    %c0_328 = arith.constant 0 : index
    %c0_329 = arith.constant 0 : index
    %c0_330 = arith.constant 0 : index
    %390 = vector.load %arg10[%c1_327, %c0_328, %c0_329, %c0_330] : memref<2x4x1x32xf32, #tpu.memory_space<vmem>>, vector<1x1x1x32xf32>
    %391 = vector.shape_cast %390 : vector<1x1x1x32xf32> to vector<1x32xf32>
    %c1_331 = arith.constant 1 : index
    %c1_332 = arith.constant 1 : index
    %c0_333 = arith.constant 0 : index
    %c0_334 = arith.constant 0 : index
    %392 = vector.load %arg10[%c1_331, %c1_332, %c0_333, %c0_334] : memref<2x4x1x32xf32, #tpu.memory_space<vmem>>, vector<1x1x1x32xf32>
    %393 = vector.shape_cast %392 : vector<1x1x1x32xf32> to vector<1x32xf32>
    %c1_335 = arith.constant 1 : index
    %c2_336 = arith.constant 2 : index
    %c0_337 = arith.constant 0 : index
    %c0_338 = arith.constant 0 : index
    %394 = vector.load %arg10[%c1_335, %c2_336, %c0_337, %c0_338] : memref<2x4x1x32xf32, #tpu.memory_space<vmem>>, vector<1x1x1x32xf32>
    %395 = vector.shape_cast %394 : vector<1x1x1x32xf32> to vector<1x32xf32>
    %c1_339 = arith.constant 1 : index
    %c3_340 = arith.constant 3 : index
    %c0_341 = arith.constant 0 : index
    %c0_342 = arith.constant 0 : index
    %396 = vector.load %arg10[%c1_339, %c3_340, %c0_341, %c0_342] : memref<2x4x1x32xf32, #tpu.memory_space<vmem>>, vector<1x1x1x32xf32>
    %397 = vector.shape_cast %396 : vector<1x1x1x32xf32> to vector<1x32xf32>
    %398 = arith.addf %231, %389 : vector<16x32xf32>
    %cst_343 = arith.constant dense<0.000000e+00> : vector<16xf32>
    %399 = vector.multi_reduction <add>, %398, %cst_343 [1] : vector<16x32xf32> to vector<16xf32>
    %400 = vector.shape_cast %399 : vector<16xf32> to vector<16x1xf32>
    %cst_344 = arith.constant 3.200000e+01 : f32
    %401 = vector.broadcast %cst_344 : f32 to vector<16x1xf32>
    %402 = arith.divf %400, %401 : vector<16x1xf32>
    %403 = vector.broadcast %402 : vector<16x1xf32> to vector<16x32xf32>
    %404 = arith.subf %398, %403 : vector<16x32xf32>
    %405 = arith.mulf %404, %404 : vector<16x32xf32>
    %cst_345 = arith.constant dense<0.000000e+00> : vector<16xf32>
    %406 = vector.multi_reduction <add>, %405, %cst_345 [1] : vector<16x32xf32> to vector<16xf32>
    %407 = vector.shape_cast %406 : vector<16xf32> to vector<16x1xf32>
    %cst_346 = arith.constant 3.200000e+01 : f32
    %408 = vector.broadcast %cst_346 : f32 to vector<16x1xf32>
    %409 = arith.divf %407, %408 : vector<16x1xf32>
    %410 = vector.broadcast %402 : vector<16x1xf32> to vector<16x32xf32>
    %411 = arith.subf %398, %410 : vector<16x32xf32>
    %cst_347 = arith.constant 9.99999974E-6 : f32
    %412 = vector.broadcast %cst_347 : f32 to vector<16x1xf32>
    %413 = arith.addf %409, %412 : vector<16x1xf32>
    %414 = math.rsqrt %413 : vector<16x1xf32>
    %415 = vector.broadcast %414 : vector<16x1xf32> to vector<16x32xf32>
    %416 = arith.mulf %411, %415 : vector<16x32xf32>
    %417 = vector.broadcast %391 : vector<1x32xf32> to vector<16x32xf32>
    %418 = arith.mulf %416, %417 : vector<16x32xf32>
    %419 = vector.broadcast %393 : vector<1x32xf32> to vector<16x32xf32>
    %420 = arith.addf %418, %419 : vector<16x32xf32>
    %421 = arith.truncf %420 : vector<16x32xf32> to vector<16x32xbf16>
    %c1_348 = arith.constant 1 : index
    %c0_349 = arith.constant 0 : index
    %c0_350 = arith.constant 0 : index
    %422 = vector.load %arg6[%c1_348, %c0_349, %c0_350] : memref<2x32x2048xbf16, #tpu.memory_space<vmem>>, vector<1x32x2048xbf16>
    %423 = vector.shape_cast %422 : vector<1x32x2048xbf16> to vector<32x2048xbf16>
    %cst_351 = arith.constant dense<0.000000e+00> : vector<16x2048xf32>
    %424 = tpu.matmul %421, %423, %cst_351 {dimension_numbers = #tpu.dot_dimension_numbers<[1], [0], [0], [1], [0, 0, 1, 1], [], []>} : vector<16x32xbf16>, vector<32x2048xbf16>, vector<16x2048xf32> -> vector<16x2048xf32>
    %c1_352 = arith.constant 1 : index
    %c0_353 = arith.constant 0 : index
    %c0_354 = arith.constant 0 : index
    %425 = vector.load %arg7[%c1_352, %c0_353, %c0_354] : memref<2x1x2048xf32, #tpu.memory_space<vmem>>, vector<1x1x2048xf32>
    %426 = vector.shape_cast %425 : vector<1x1x2048xf32> to vector<1x2048xf32>
    %427 = vector.broadcast %426 : vector<1x2048xf32> to vector<16x2048xf32>
    %428 = arith.addf %424, %427 : vector<16x2048xf32>
    %cst_355 = arith.constant 0.000000e+00 : f32
    %429 = vector.broadcast %cst_355 : f32 to vector<16x2048xf32>
    %430 = arith.maximumf %428, %429 : vector<16x2048xf32>
    %431 = arith.truncf %430 : vector<16x2048xf32> to vector<16x2048xbf16>
    %c1_356 = arith.constant 1 : index
    %c0_357 = arith.constant 0 : index
    %c0_358 = arith.constant 0 : index
    %432 = vector.load %arg8[%c1_356, %c0_357, %c0_358] : memref<2x2048x32xbf16, #tpu.memory_space<vmem>>, vector<1x2048x32xbf16>
    %433 = vector.shape_cast %432 : vector<1x2048x32xbf16> to vector<2048x32xbf16>
    %cst_359 = arith.constant dense<0.000000e+00> : vector<16x32xf32>
    %434 = tpu.matmul %431, %433, %cst_359 {dimension_numbers = #tpu.dot_dimension_numbers<[1], [0], [0], [1], [0, 0, 1, 1], [], []>} : vector<16x2048xbf16>, vector<2048x32xbf16>, vector<16x32xf32> -> vector<16x32xf32>
    %c1_360 = arith.constant 1 : index
    %c0_361 = arith.constant 0 : index
    %c0_362 = arith.constant 0 : index
    %435 = vector.load %arg9[%c1_360, %c0_361, %c0_362] : memref<2x1x32xf32, #tpu.memory_space<vmem>>, vector<1x1x32xf32>
    %436 = vector.shape_cast %435 : vector<1x1x32xf32> to vector<1x32xf32>
    %437 = vector.broadcast %436 : vector<1x32xf32> to vector<16x32xf32>
    %438 = arith.addf %434, %437 : vector<16x32xf32>
    %439 = arith.addf %420, %438 : vector<16x32xf32>
    %cst_363 = arith.constant dense<0.000000e+00> : vector<16xf32>
    %440 = vector.multi_reduction <add>, %439, %cst_363 [1] : vector<16x32xf32> to vector<16xf32>
    %441 = vector.shape_cast %440 : vector<16xf32> to vector<16x1xf32>
    %cst_364 = arith.constant 3.200000e+01 : f32
    %442 = vector.broadcast %cst_364 : f32 to vector<16x1xf32>
    %443 = arith.divf %441, %442 : vector<16x1xf32>
    %444 = vector.broadcast %443 : vector<16x1xf32> to vector<16x32xf32>
    %445 = arith.subf %439, %444 : vector<16x32xf32>
    %446 = arith.mulf %445, %445 : vector<16x32xf32>
    %cst_365 = arith.constant dense<0.000000e+00> : vector<16xf32>
    %447 = vector.multi_reduction <add>, %446, %cst_365 [1] : vector<16x32xf32> to vector<16xf32>
    %448 = vector.shape_cast %447 : vector<16xf32> to vector<16x1xf32>
    %cst_366 = arith.constant 3.200000e+01 : f32
    %449 = vector.broadcast %cst_366 : f32 to vector<16x1xf32>
    %450 = arith.divf %448, %449 : vector<16x1xf32>
    %451 = vector.broadcast %443 : vector<16x1xf32> to vector<16x32xf32>
    %452 = arith.subf %439, %451 : vector<16x32xf32>
    %cst_367 = arith.constant 9.99999974E-6 : f32
    %453 = vector.broadcast %cst_367 : f32 to vector<16x1xf32>
    %454 = arith.addf %450, %453 : vector<16x1xf32>
    %455 = math.rsqrt %454 : vector<16x1xf32>
    %456 = vector.broadcast %455 : vector<16x1xf32> to vector<16x32xf32>
    %457 = arith.mulf %452, %456 : vector<16x32xf32>
    %458 = vector.broadcast %395 : vector<1x32xf32> to vector<16x32xf32>
    %459 = arith.mulf %457, %458 : vector<16x32xf32>
    %460 = vector.broadcast %397 : vector<1x32xf32> to vector<16x32xf32>
    %461 = arith.addf %459, %460 : vector<16x32xf32>
    %c0_368 = arith.constant 0 : index
    %c0_369 = arith.constant 0 : index
    %c0_370 = arith.constant 0 : index
    %462 = vector.load %arg11[%c0_368, %c0_369, %c0_370] : memref<1x16x32xf32, #tpu.memory_space<vmem>>, vector<1x16x32xf32>
    %463 = vector.shape_cast %462 : vector<1x16x32xf32> to vector<16x32xf32>
    %464 = vector.shape_cast %461 : vector<16x32xf32> to vector<1x16x32xf32>
    tpu.vector_store %arg11[%c0_368, %c0_369, %c0_370], %464 {strides = array<i32>} : memref<1x16x32xf32, #tpu.memory_space<vmem>>, vector<1x16x32xf32>,
    return
  }
  func.func @transform_0(%arg0: i32) -> (i32, i32, i32) {
    %c0_i32 = arith.constant 0 : i32
    %c0_i32_0 = arith.constant 0 : i32
    %c0_i32_1 = arith.constant 0 : i32
    return %arg0, %c0_i32, %c0_i32_0 : i32, i32, i32
  }
  func.func @transform_1(%arg0: i32) -> (i32, i32, i32, i32) {
    %c0_i32 = arith.constant 0 : i32
    %c0_i32_0 = arith.constant 0 : i32
    %c0_i32_1 = arith.constant 0 : i32
    %c0_i32_2 = arith.constant 0 : i32
    %c0_i32_3 = arith.constant 0 : i32
    return %c0_i32, %c0_i32_0, %c0_i32_1, %c0_i32_2 : i32, i32, i32, i32
  }
  func.func @transform_2(%arg0: i32) -> (i32, i32, i32, i32) {
    %c0_i32 = arith.constant 0 : i32
    %c0_i32_0 = arith.constant 0 : i32
    %c0_i32_1 = arith.constant 0 : i32
    %c0_i32_2 = arith.constant 0 : i32
    %c0_i32_3 = arith.constant 0 : i32
    return %c0_i32, %c0_i32_0, %c0_i32_1, %c0_i32_2 : i32, i32, i32, i32
  }
  func.func @transform_3(%arg0: i32) -> (i32, i32, i32, i32) {
    %c0_i32 = arith.constant 0 : i32
    %c0_i32_0 = arith.constant 0 : i32
    %c0_i32_1 = arith.constant 0 : i32
    %c0_i32_2 = arith.constant 0 : i32
    %c0_i32_3 = arith.constant 0 : i32
    return %c0_i32, %c0_i32_0, %c0_i32_1, %c0_i32_2 : i32, i32, i32, i32
  }
  func.func @transform_4(%arg0: i32) -> (i32, i32, i32) {
    %c0_i32 = arith.constant 0 : i32
    %c0_i32_0 = arith.constant 0 : i32
    %c0_i32_1 = arith.constant 0 : i32
    %c0_i32_2 = arith.constant 0 : i32
    return %c0_i32, %c0_i32_0, %c0_i32_1 : i32, i32, i32
  }
  func.func @transform_5(%arg0: i32) -> (i32, i32, i32) {
    %c0_i32 = arith.constant 0 : i32
    %c0_i32_0 = arith.constant 0 : i32
    %c0_i32_1 = arith.constant 0 : i32
    %c0_i32_2 = arith.constant 0 : i32
    return %c0_i32, %c0_i32_0, %c0_i32_1 : i32, i32, i32
  }
  func.func @transform_6(%arg0: i32) -> (i32, i32, i32) {
    %c0_i32 = arith.constant 0 : i32
    %c0_i32_0 = arith.constant 0 : i32
    %c0_i32_1 = arith.constant 0 : i32
    %c0_i32_2 = arith.constant 0 : i32
    return %c0_i32, %c0_i32_0, %c0_i32_1 : i32, i32, i32
  }
  func.func @transform_7(%arg0: i32) -> (i32, i32, i32) {
    %c0_i32 = arith.constant 0 : i32
    %c0_i32_0 = arith.constant 0 : i32
    %c0_i32_1 = arith.constant 0 : i32
    %c0_i32_2 = arith.constant 0 : i32
    return %c0_i32, %c0_i32_0, %c0_i32_1 : i32, i32, i32
  }
  func.func @transform_8(%arg0: i32) -> (i32, i32, i32) {
    %c0_i32 = arith.constant 0 : i32
    %c0_i32_0 = arith.constant 0 : i32
    %c0_i32_1 = arith.constant 0 : i32
    %c0_i32_2 = arith.constant 0 : i32
    return %c0_i32, %c0_i32_0, %c0_i32_1 : i32, i32, i32
  }
  func.func @transform_9(%arg0: i32) -> (i32, i32, i32, i32) {
    %c0_i32 = arith.constant 0 : i32
    %c0_i32_0 = arith.constant 0 : i32
    %c0_i32_1 = arith.constant 0 : i32
    %c0_i32_2 = arith.constant 0 : i32
    %c0_i32_3 = arith.constant 0 : i32
    return %c0_i32, %c0_i32_0, %c0_i32_1, %c0_i32_2 : i32, i32, i32, i32
  }
  func.func @transform_10(%arg0: i32) -> (i32, i32, i32) {
    %c0_i32 = arith.constant 0 : i32
    %c0_i32_0 = arith.constant 0 : i32
    %c0_i32_1 = arith.constant 0 : i32
    return %arg0, %c0_i32, %c0_i32_0 : i32, i32, i32
  }
}

</mosaic_0001>

<llo_original>
// kernel: trans_encoder_forward.1
$region0: #{trans_encoder_forward.1}
  #allocation0 [shape = 'u32[]', space=smem, size = 0x4, offset = 0x4, fixed_abs, tag = 'smem constant byte address 0x4 - core index']
  #allocation1 [shape = 'u32[144,128]{1,0:T(1,128)}', space=vmem, size = 0x12000, scoped, tag = 'internal scratch']
  %s0 = inlined_call_operand.vmem [shape: f32[2,16,32], index: 0, kind: input, shape index: {}]
  %s1 = inlined_call_operand.vmem [shape: bf16[2,12,32,8], index: 1, kind: input, shape index: {}]
  %s2 = inlined_call_operand.vmem [shape: f32[2,12,1,8], index: 2, kind: input, shape index: {}]
  %s3 = inlined_call_operand.vmem [shape: bf16[2,4,8,32], index: 3, kind: input, shape index: {}]
  %s4 = inlined_call_operand.vmem [shape: f32[2,1,32], index: 4, kind: input, shape index: {}]
  %s5 = inlined_call_operand.vmem [shape: bf16[2,32,2048], index: 5, kind: input, shape index: {}]
  %s6 = inlined_call_operand.vmem [shape: f32[2,1,2048], index: 6, kind: input, shape index: {}]
  %s7 = inlined_call_operand.vmem [shape: bf16[2,2048,32], index: 7, kind: input, shape index: {}]
  %s8 = inlined_call_operand.vmem [shape: f32[2,1,32], index: 8, kind: input, shape index: {}]
  %s9 = inlined_call_operand.vmem [shape: f32[2,4,1,32], index: 9, kind: input, shape index: {}]
  %s10 = inlined_call_operand.hbm [shape: f32[2,16,32], index: 10, kind: output, shape index: {}]
  %s11 = sld [smem:[#allocation0]]
  $region73: #{trans_encoder_forward.1} parent=0
    _
  %s13 = ssub.s32 1, %s11
  %s14 = scalar_select 0, %s13, %s11
  $region1: #{trans_encoder_forward.1} parent=0
    #allocation2 [shape = 'u8[16384]{0}', space=vmem, size = 0x4000, scoped, tag = 'output window, operand 0']
    #allocation3 [shape = 's32[2]{0}', space=sflag, size = 0x8, scoped, tag = 'scoped memory for trans_encoder_forward.1']
    %15 = vsyncpa [#allocation3], 0
    %s16 = scalar_lea.sflag [#allocation3], 1
    %17 = vsyncpa %s16, 0
    loop: start=0, step=1, limit=4
    $region2: #{trans_encoder_forward.1} parent=1 // loop_pre_header
      _
    $region3: #{trans_encoder_forward.1} parent=1 // loop_header
      %s19 = sphi 0, %s23
      %p20 = scmp.ge.s32.totalorder %s19, 4
      %s29 = sphi 0, %s31
      %s32 = sphi 0, %s29
      %s33 = sphi 0, %s32
      %s49 = sphi 0, %s33
      %s53 = sphi 0, %s53
      %s55 = sphi 0, %s53
      %s56 = sphi 0, %s55
      %s70 = sphi 0, %s56
      %s74 = sphi 0, %s74
      %s76 = sphi 0, %s74
      %s77 = sphi 0, %s76
      %s91 = sphi 0, %s77
      %s95 = sphi 0, %s95
      %s97 = sphi 0, %s95
      %s98 = sphi 0, %s97
      %s112 = sphi 0, %s98
      %s116 = sphi 0, %s116
      %s118 = sphi 0, %s116
      %s119 = sphi 0, %s118
      %s133 = sphi 0, %s119
      %s137 = sphi 0, %s137
      %s139 = sphi 0, %s137
      %s140 = sphi 0, %s139
      %s154 = sphi 0, %s140
      %s158 = sphi 0, %s158
      %s160 = sphi 0, %s158
      %s161 = sphi 0, %s160
      %s175 = sphi 0, %s161
      %s179 = sphi 0, %s179
      %s181 = sphi 0, %s179
      %s182 = sphi 0, %s181
      %s196 = sphi 0, %s182
      %s200 = sphi 0, %s200
      %s202 = sphi 0, %s200
      %s203 = sphi 0, %s202
      %s217 = sphi 0, %s203
      %s221 = sphi 0, %s221
      %s223 = sphi 0, %s221
      %s224 = sphi 0, %s223
      %s238 = sphi 0, %s224
      %s244 = sphi 0, %s246
      %s247 = sphi 0, %s244
      %s248 = sphi 0, %s247
      %s264 = sphi 0, %s248
    $region4: #{trans_encoder_forward.1} parent=1 // loop_header_branch
      %22 = sbr.rel (%p20) target = $region8
    $region5: #{trans_encoder_forward.1} parent=1 // loop_body
      %s24 = ssub.s32 %s19, 1
      %s25 = ssub.s32 %s19, 2
      %s26 = sadd.s32 %s19, 1
      %s27 = ssub.s32 %s19, %s26
      %p28 = scmp.eq.s32.totalorder %s27, 0
      %s30 = sadd.s32 %s29, 1
      %s31 = scalar_select %p28, %s29, %s30
      %p34 = pneg %p28
      %p35 = scmp.eq.s32.totalorder %s19, 1
      %p36 = por %p34, %p35
      %p37 = scmp.ne.s32.totalorder %s29, %s32
      %p38 = scmp.eq.s32.totalorder %s19, 0
      %p39 = por %p37, %p38
      %p40 = scmp.ne.s32.totalorder %s29, %s32
      %p41 = scmp.eq.s32.totalorder %s24, 1
      %p42 = por %p40, %p41
      %p43 = scmp.ne.s32.totalorder %s32, %s33
      %p44 = scmp.eq.s32.totalorder %s24, 0
      %p45 = por %p43, %p44
      %p46 = scmp.ne.s32.totalorder %s32, %s33
      %p47 = scmp.eq.s32.totalorder %s25, 1
      %p48 = por %p46, %p47
      %p50 = scmp.ne.s32.totalorder %s33, %s49
      %p51 = scmp.eq.s32.totalorder %s25, 0
      %p52 = por %p50, %p51
      %s54 = sadd.s32 %s53, 1
      %p57 = scmp.eq.s32.totalorder %s19, 1
      %p58 = scmp.ne.s32.totalorder %s53, %s55
      %p59 = scmp.eq.s32.totalorder %s19, 0
      %p60 = por %p58, %p59
      %p61 = scmp.ne.s32.totalorder %s53, %s55
      %p62 = scmp.eq.s32.totalorder %s24, 1
      %p63 = por %p61, %p62
      %p64 = scmp.ne.s32.totalorder %s55, %s56
      %p65 = scmp.eq.s32.totalorder %s24, 0
      %p66 = por %p64, %p65
      %p67 = scmp.ne.s32.totalorder %s55, %s56
      %p68 = scmp.eq.s32.totalorder %s25, 1
      %p69 = por %p67, %p68
      %p71 = scmp.ne.s32.totalorder %s56, %s70
      %p72 = scmp.eq.s32.totalorder %s25, 0
      %p73 = por %p71, %p72
      %s75 = sadd.s32 %s74, 1
      %p78 = scmp.eq.s32.totalorder %s19, 1
      %p79 = scmp.ne.s32.totalorder %s74, %s76
      %p80 = scmp.eq.s32.totalorder %s19, 0
      %p81 = por %p79, %p80
      %p82 = scmp.ne.s32.totalorder %s74, %s76
      %p83 = scmp.eq.s32.totalorder %s24, 1
      %p84 = por %p82, %p83
      %p85 = scmp.ne.s32.totalorder %s76, %s77
      %p86 = scmp.eq.s32.totalorder %s24, 0
      %p87 = por %p85, %p86
      %p88 = scmp.ne.s32.totalorder %s76, %s77
      %p89 = scmp.eq.s32.totalorder %s25, 1
      %p90 = por %p88, %p89
      %p92 = scmp.ne.s32.totalorder %s77, %s91
      %p93 = scmp.eq.s32.totalorder %s25, 0
      %p94 = por %p92, %p93
      %s96 = sadd.s32 %s95, 1
      %p99 = scmp.eq.s32.totalorder %s19, 1
      %p100 = scmp.ne.s32.totalorder %s95, %s97
      %p101 = scmp.eq.s32.totalorder %s19, 0
      %p102 = por %p100, %p101
      %p103 = scmp.ne.s32.totalorder %s95, %s97
      %p104 = scmp.eq.s32.totalorder %s24, 1
      %p105 = por %p103, %p104
      %p106 = scmp.ne.s32.totalorder %s97, %s98
      %p107 = scmp.eq.s32.totalorder %s24, 0
      %p108 = por %p106, %p107
      %p109 = scmp.ne.s32.totalorder %s97, %s98
      %p110 = scmp.eq.s32.totalorder %s25, 1
      %p111 = por %p109, %p110
      %p113 = scmp.ne.s32.totalorder %s98, %s112
      %p114 = scmp.eq.s32.totalorder %s25, 0
      %p115 = por %p113, %p114
      %s117 = sadd.s32 %s116, 1
      %p120 = scmp.eq.s32.totalorder %s19, 1
      %p121 = scmp.ne.s32.totalorder %s116, %s118
      %p122 = scmp.eq.s32.totalorder %s19, 0
      %p123 = por %p121, %p122
      %p124 = scmp.ne.s32.totalorder %s116, %s118
      %p125 = scmp.eq.s32.totalorder %s24, 1
      %p126 = por %p124, %p125
      %p127 = scmp.ne.s32.totalorder %s118, %s119
      %p128 = scmp.eq.s32.totalorder %s24, 0
      %p129 = por %p127, %p128
      %p130 = scmp.ne.s32.totalorder %s118, %s119
      %p131 = scmp.eq.s32.totalorder %s25, 1
      %p132 = por %p130, %p131
      %p134 = scmp.ne.s32.totalorder %s119, %s133
      %p135 = scmp.eq.s32.totalorder %s25, 0
      %p136 = por %p134, %p135
      %s138 = sadd.s32 %s137, 1
      %p141 = scmp.eq.s32.totalorder %s19, 1
      %p142 = scmp.ne.s32.totalorder %s137, %s139
      %p143 = scmp.eq.s32.totalorder %s19, 0
      %p144 = por %p142, %p143
      %p145 = scmp.ne.s32.totalorder %s137, %s139
      %p146 = scmp.eq.s32.totalorder %s24, 1
      %p147 = por %p145, %p146
      %p148 = scmp.ne.s32.totalorder %s139, %s140
      %p149 = scmp.eq.s32.totalorder %s24, 0
      %p150 = por %p148, %p149
      %p151 = scmp.ne.s32.totalorder %s139, %s140
      %p152 = scmp.eq.s32.totalorder %s25, 1
      %p153 = por %p151, %p152
      %p155 = scmp.ne.s32.totalorder %s140, %s154
      %p156 = scmp.eq.s32.totalorder %s25, 0
      %p157 = por %p155, %p156
      %s159 = sadd.s32 %s158, 1
      %p162 = scmp.eq.s32.totalorder %s19, 1
      %p163 = scmp.ne.s32.totalorder %s158, %s160
      %p164 = scmp.eq.s32.totalorder %s19, 0
      %p165 = por %p163, %p164
      %p166 = scmp.ne.s32.totalorder %s158, %s160
      %p167 = scmp.eq.s32.totalorder %s24, 1
      %p168 = por %p166, %p167
      %p169 = scmp.ne.s32.totalorder %s160, %s161
      %p170 = scmp.eq.s32.totalorder %s24, 0
      %p171 = por %p169, %p170
      %p172 = scmp.ne.s32.totalorder %s160, %s161
      %p173 = scmp.eq.s32.totalorder %s25, 1
      %p174 = por %p172, %p173
      %p176 = scmp.ne.s32.totalorder %s161, %s175
      %p177 = scmp.eq.s32.totalorder %s25, 0
      %p178 = por %p176, %p177
      %s180 = sadd.s32 %s179, 1
      %p183 = scmp.eq.s32.totalorder %s19, 1
      %p184 = scmp.ne.s32.totalorder %s179, %s181
      %p185 = scmp.eq.s32.totalorder %s19, 0
      %p186 = por %p184, %p185
      %p187 = scmp.ne.s32.totalorder %s179, %s181
      %p188 = scmp.eq.s32.totalorder %s24, 1
      %p189 = por %p187, %p188
      %p190 = scmp.ne.s32.totalorder %s181, %s182
      %p191 = scmp.eq.s32.totalorder %s24, 0
      %p192 = por %p190, %p191
      %p193 = scmp.ne.s32.totalorder %s181, %s182
      %p194 = scmp.eq.s32.totalorder %s25, 1
      %p195 = por %p193, %p194
      %p197 = scmp.ne.s32.totalorder %s182, %s196
      %p198 = scmp.eq.s32.totalorder %s25, 0
      %p199 = por %p197, %p198
      %s201 = sadd.s32 %s200, 1
      %p204 = scmp.eq.s32.totalorder %s19, 1
      %p205 = scmp.ne.s32.totalorder %s200, %s202
      %p206 = scmp.eq.s32.totalorder %s19, 0
      %p207 = por %p205, %p206
      %p208 = scmp.ne.s32.totalorder %s200, %s202
      %p209 = scmp.eq.s32.totalorder %s24, 1
      %p210 = por %p208, %p209
      %p211 = scmp.ne.s32.totalorder %s202, %s203
      %p212 = scmp.eq.s32.totalorder %s24, 0
      %p213 = por %p211, %p212
      %p214 = scmp.ne.s32.totalorder %s202, %s203
      %p215 = scmp.eq.s32.totalorder %s25, 1
      %p216 = por %p214, %p215
      %p218 = scmp.ne.s32.totalorder %s203, %s217
      %p219 = scmp.eq.s32.totalorder %s25, 0
      %p220 = por %p218, %p219
      %s222 = sadd.s32 %s221, 1
      %p225 = scmp.eq.s32.totalorder %s19, 1
      %p226 = scmp.ne.s32.totalorder %s221, %s223
      %p227 = scmp.eq.s32.totalorder %s19, 0
      %p228 = por %p226, %p227
      %p229 = scmp.ne.s32.totalorder %s221, %s223
      %p230 = scmp.eq.s32.totalorder %s24, 1
      %p231 = por %p229, %p230
      %p232 = scmp.ne.s32.totalorder %s223, %s224
      %p233 = scmp.eq.s32.totalorder %s24, 0
      %p234 = por %p232, %p233
      %p235 = scmp.ne.s32.totalorder %s223, %s224
      %p236 = scmp.eq.s32.totalorder %s25, 1
      %p237 = por %p235, %p236
      %p239 = scmp.ne.s32.totalorder %s224, %s238
      %p240 = scmp.eq.s32.totalorder %s25, 0
      %p241 = por %p239, %p240
      %s242 = ssub.s32 %s19, %s26
      %p243 = scmp.eq.s32.totalorder %s242, 0
      %s245 = sadd.s32 %s244, 1
      %s246 = scalar_select %p243, %s244, %s245
      %p249 = pneg %p243
      %p250 = scmp.eq.s32.totalorder %s19, 1
      %p251 = por %p249, %p250
      %p252 = scmp.ne.s32.totalorder %s244, %s247
      %p253 = scmp.eq.s32.totalorder %s19, 0
      %p254 = por %p252, %p253
      %p255 = scmp.ne.s32.totalorder %s244, %s247
      %p256 = scmp.eq.s32.totalorder %s24, 1
      %p257 = por %p255, %p256
      %p258 = scmp.ne.s32.totalorder %s247, %s248
      %p259 = scmp.eq.s32.totalorder %s24, 0
      %p260 = por %p258, %p259
      %p261 = scmp.ne.s32.totalorder %s247, %s248
      %p262 = scmp.eq.s32.totalorder %s25, 1
      %p263 = por %p261, %p262
      %p265 = scmp.ne.s32.totalorder %s248, %s264
      %p266 = scmp.eq.s32.totalorder %s25, 0
      %p267 = por %p265, %p266
      %p268 = scmp.le.s32.totalorder 1, %s19
      %p269 = scmp.lt.s32.totalorder %s19, 3
      %p270 = pnand %p268, %p269
      %p271 = pneg %p270
      // Predicated region
      $region9: #{trans_encoder_forward.1} parent=5 // pred_check
        _
      $region10: #{trans_encoder_forward.1} parent=5 // pred_check_branch
        %273 = sbr.rel (%p270) target = $region12
      $region11: #{trans_encoder_forward.1} parent=5 // pred_region
        %s274 = ssub.s32 %s19, 1
        // Predicated region
        $region13: #{trans_encoder_forward.1} parent=11 // pred_check
          %p275 = pneg %p66
        $region14: #{trans_encoder_forward.1} parent=11 // pred_check_branch
          %277 = sbr.rel (%p275) target = $region16
        $region15: #{trans_encoder_forward.1} parent=11 // pred_region
          _
        $region16: #{trans_encoder_forward.1} parent=11 // pred_fallthru
          _
        // Predicated region
        $region17: #{trans_encoder_forward.1} parent=11 // pred_check
          %p278 = pneg %p87
        $region18: #{trans_encoder_forward.1} parent=11 // pred_check_branch
          %280 = sbr.rel (%p278) target = $region20
        $region19: #{trans_encoder_forward.1} parent=11 // pred_region
          _
        $region20: #{trans_encoder_forward.1} parent=11 // pred_fallthru
          _
        // Predicated region
        $region21: #{trans_encoder_forward.1} parent=11 // pred_check
          %p281 = pneg %p108
        $region22: #{trans_encoder_forward.1} parent=11 // pred_check_branch
          %283 = sbr.rel (%p281) target = $region24
        $region23: #{trans_encoder_forward.1} parent=11 // pred_region
          _
        $region24: #{trans_encoder_forward.1} parent=11 // pred_fallthru
          _
        // Predicated region
        $region25: #{trans_encoder_forward.1} parent=11 // pred_check
          %p284 = pneg %p129
        $region26: #{trans_encoder_forward.1} parent=11 // pred_check_branch
          %286 = sbr.rel (%p284) target = $region28
        $region27: #{trans_encoder_forward.1} parent=11 // pred_region
          _
        $region28: #{trans_encoder_forward.1} parent=11 // pred_fallthru
          _
        // Predicated region
        $region29: #{trans_encoder_forward.1} parent=11 // pred_check
          %p287 = pneg %p150
        $region30: #{trans_encoder_forward.1} parent=11 // pred_check_branch
          %289 = sbr.rel (%p287) target = $region32
        $region31: #{trans_encoder_forward.1} parent=11 // pred_region
          _
        $region32: #{trans_encoder_forward.1} parent=11 // pred_fallthru
          _
        // Predicated region
        $region33: #{trans_encoder_forward.1} parent=11 // pred_check
          %p290 = pneg %p171
        $region34: #{trans_encoder_forward.1} parent=11 // pred_check_branch
          %292 = sbr.rel (%p290) target = $region36
        $region35: #{trans_encoder_forward.1} parent=11 // pred_region
          _
        $region36: #{trans_encoder_forward.1} parent=11 // pred_fallthru
          _
        // Predicated region
        $region37: #{trans_encoder_forward.1} parent=11 // pred_check
          %p293 = pneg %p192
        $region38: #{trans_encoder_forward.1} parent=11 // pred_check_branch
          %295 = sbr.rel (%p293) target = $region40
        $region39: #{trans_encoder_forward.1} parent=11 // pred_region
          _
        $region40: #{trans_encoder_forward.1} parent=11 // pred_fallthru
          _
        // Predicated region
        $region41: #{trans_encoder_forward.1} parent=11 // pred_check
          %p296 = pneg %p213
        $region42: #{trans_encoder_forward.1} parent=11 // pred_check_branch
          %298 = sbr.rel (%p296) target = $region44
        $region43: #{trans_encoder_forward.1} parent=11 // pred_region
          _
        $region44: #{trans_encoder_forward.1} parent=11 // pred_fallthru
          _
        // Predicated region
        $region45: #{trans_encoder_forward.1} parent=11 // pred_check
          %p299 = pneg %p234
        $region46: #{trans_encoder_forward.1} parent=11 // pred_check_branch
          %301 = sbr.rel (%p299) target = $region48
        $region47: #{trans_encoder_forward.1} parent=11 // pred_region
          _
        $region48: #{trans_encoder_forward.1} parent=11 // pred_fallthru
          _
      $region12: #{trans_encoder_forward.1} parent=5 // pred_fallthru
        _
      %p302 = scmp.lt.s32.totalorder %s19, 2
      // Predicated region
      $region49: #{trans_encoder_forward.1} parent=5 // pred_check
        %p303 = pneg %p302
      $region50: #{trans_encoder_forward.1} parent=5 // pred_check_branch
        %305 = sbr.rel (%p303) target = $region52
      $region51: #{trans_encoder_forward.1} parent=5 // pred_region
        // Predicated region
        $region53: #{trans_encoder_forward.1} parent=51 // pred_check
          %p306 = pneg %p39
        $region54: #{trans_encoder_forward.1} parent=51 // pred_check_branch
          %308 = sbr.rel (%p306) target = $region56
        $region55: #{trans_encoder_forward.1} parent=51 // pred_region
          %p309 = scmp.lt.s32.totalorder %s19, 1
          %s310 = scalar_select %p309, %s19, 1
          %s311 = smul.addr %s310, 2
          %s312 = smul.addr %s311, 8
          %s313 = scalar_lea.vmem %s0, %s312
        $region56: #{trans_encoder_forward.1} parent=51 // pred_fallthru
          _
      $region52: #{trans_encoder_forward.1} parent=5 // pred_fallthru
        _
      %p314 = scmp.le.s32.totalorder 1, %s19
      %p315 = scmp.lt.s32.totalorder %s19, 3
      %p316 = pnand %p314, %p315
      %p317 = pneg %p316
      // Predicated region
      $region57: #{trans_encoder_forward.1} parent=5 // pred_check
        _
      $region58: #{trans_encoder_forward.1} parent=5 // pred_check_branch
        %319 = sbr.rel (%p316) target = $region60
      $region59: #{trans_encoder_forward.1} parent=5 // pred_region
        %s320 = ssub.s32 %s19, 1
        %p321 = scmp.lt.s32.totalorder %s24, 1
        %s322 = scalar_select %p321, %s24, 1
        %s323 = smul.addr %s322, 2
        %s324 = smul.addr %s323, 8
        %s325 = scalar_lea.vmem %s0, %s324
        %p326 = pneg %p45
        %p327 = pneg %p42
        %p328 = pneg %p66
        %p329 = pneg %p63
        %p330 = pneg %p87
        %p331 = pneg %p84
        %p332 = pneg %p108
        %p333 = pneg %p105
        %p334 = pneg %p129
        %p335 = pneg %p126
        %p336 = pneg %p150
        %p337 = pneg %p147
        %p338 = pneg %p171
        %p339 = pneg %p168
        %p340 = pneg %p192
        %p341 = pneg %p189
        %p342 = pneg %p213
        %p343 = pneg %p210
        %p344 = pneg %p234
        %p345 = pneg %p231
        %p346 = pneg %p260
        %p347 = pneg %p257
        %s348 = sand.u32 %s247, 1
        %s349 = scalar_lea.sflag [#allocation3], %s348
        %s350 = sand.u32 %s247, 1
        %s351 = smul.addr %s350, 16
        %s352 = scalar_lea.vmem [#allocation2], %s351
        %p353 = scmp.lt.s32.totalorder %s24, 1
        %s354 = scalar_select %p353, %s24, 1
        %s355 = smul.addr %s354, 2
        %s356 = smul.addr %s355, 8
        %s357 = scalar_lea.vmem %s0, %s356
        %v359 = vld [vmem:[%s357] sm:$0xff]
        %v360 = vld [vmem:[%s357 + $0x8] sm:$0xff]
        %v361 = vpack.c.bf16 %v360, %v359
        %v362 = vld [vmem:[%s1] sm:$0xf]
        %v363 = vld [vmem:[%s1 + $0x4] sm:$0xf]
        %v364 = vld [vmem:[%s1 + $0x8] sm:$0xf]
        %v365 = vld [vmem:[%s1 + $0xc] sm:$0xf]
        %v366 = vld [vmem:[%s2] sm:$0x1]
        %v368 = vlaneseq
        %v369 = vshrl.u32 %v368, 7
        %v370 = vsub.s32 0, %v369
        %v371 = vrot.slane %v366, %v370
        %v377 = vunpack.c.l.b16 %v362
        %v378 = vunpack.c.l.b16 %v363
        %v379 = vunpack.c.l.b16 %v364
        %v380 = vunpack.c.l.b16 %v365
        %v381 = vpack.c.b16 %v378, %v377
        %v382 = vpack.c.b16 %v380, %v379
        %vm385 = vcmask 261120
        %v387 = vsel %vm385, %v361, 0
        %389 = vmatprep.subr.bf16.mxu0 0
        %390 = vmatpush1.bf16.msra.mxu0 %v381
        %391 = vmatprep.subr.bf16.mxu0 0
        %392 = vmatpush1.bf16.msra.mxu0 %v382
        %393 = vmatprep.subr.bf16.mxu0 0
        %394 = vmatpush1.bf16.msra.mxu0 0
        %395 = vmatprep.subr.bf16.mxu0 0
        %396 = vmatpush1.bf16.msra.mxu0 0
        %397 = vmatprep.subr.bf16.mxu0 0
        %398 = vmatpush1.bf16.msra.mxu0 0
        %399 = vmatprep.subr.bf16.mxu0 0
        %400 = vmatpush1.bf16.msra.mxu0 0
        %401 = vmatprep.subr.bf16.mxu0 0
        %402 = vmatpush1.bf16.msra.mxu0 0
        %403 = vmatprep.subr.bf16.mxu0 0
        %404 = vmatpush1.bf16.msra.mxu0 0
        %405 = vmatprep.subr.bf16.mxu0 0
        %406 = vmatpush1.bf16.msra.mxu0 0
        %407 = vmatprep.subr.bf16.mxu0 0
        %408 = vmatpush1.bf16.msra.mxu0 0
        %409 = vmatprep.subr.bf16.mxu0 0
        %410 = vmatpush1.bf16.msra.mxu0 0
        %411 = vmatprep.subr.bf16.mxu0 0
        %412 = vmatpush1.bf16.msra.mxu0 0
        %413 = vmatprep.subr.bf16.mxu0 0
        %414 = vmatpush1.bf16.msra.mxu0 0
        %415 = vmatprep.subr.bf16.mxu0 0
        %416 = vmatpush1.bf16.msra.mxu0 0
        %417 = vmatprep.subr.bf16.mxu0 0
        %418 = vmatpush1.bf16.msra.mxu0 0
        %419 = vmatprep.subr.bf16.mxu0 0
        %420 = vmatpush1.bf16.msra.mxu0 0
        %421 = vmatprep.mubr.bf16.mxu0 0
        %422 = vmatmul.mubr.bf16.gmra.mrb[0].mxu0 %v387
        %v423 = vpop.f32.mrb[0].mxu0
        %v424 = vadd.f32 %v371, %v423
        %v425 = vpop.f32.mrb[0].mxu0
        %v426 = vpop.f32.mrb[0].mxu0
        %v427 = vadd.f32 %v371, %v426
        %v428 = vpop.f32.mrb[0].mxu0
        %429 = vdwg.mxu0
        %s430 = scalar_lea.vmem %s1, 64
        %v431 = vld [vmem:[%s430] sm:$0xf]
        %v432 = vld [vmem:[%s430 + $0x4] sm:$0xf]
        %v433 = vld [vmem:[%s430 + $0x8] sm:$0xf]
        %v434 = vld [vmem:[%s430 + $0xc] sm:$0xf]
        %s435 = scalar_lea.vmem %s2, 4
        %v436 = vld [vmem:[%s435] sm:$0x1]
        %v438 = vlaneseq
        %v439 = vshrl.u32 %v438, 7
        %v440 = vsub.s32 0, %v439
        %v441 = vrot.slane %v436, %v440
        %v447 = vunpack.c.l.b16 %v431
        %v448 = vunpack.c.l.b16 %v432
        %v449 = vunpack.c.l.b16 %v433
        %v450 = vunpack.c.l.b16 %v434
        %v451 = vpack.c.b16 %v448, %v447
        %v452 = vpack.c.b16 %v450, %v449
        %455 = vmatprep.subr.bf16.mxu0 0
        %456 = vmatpush1.bf16.msra.mxu0 %v451
        %457 = vmatprep.subr.bf16.mxu0 0
        %458 = vmatpush1.bf16.msra.mxu0 %v452
        %459 = vmatprep.subr.bf16.mxu0 0
        %460 = vmatpush1.bf16.msra.mxu0 0
        %461 = vmatprep.subr.bf16.mxu0 0
        %462 = vmatpush1.bf16.msra.mxu0 0
        %463 = vmatprep.subr.bf16.mxu0 0
        %464 = vmatpush1.bf16.msra.mxu0 0
        %465 = vmatprep.subr.bf16.mxu0 0
        %466 = vmatpush1.bf16.msra.mxu0 0
        %467 = vmatprep.subr.bf16.mxu0 0
        %468 = vmatpush1.bf16.msra.mxu0 0
        %469 = vmatprep.subr.bf16.mxu0 0
        %470 = vmatpush1.bf16.msra.mxu0 0
        %471 = vmatprep.subr.bf16.mxu0 0
        %472 = vmatpush1.bf16.msra.mxu0 0
        %473 = vmatprep.subr.bf16.mxu0 0
        %474 = vmatpush1.bf16.msra.mxu0 0
        %475 = vmatprep.subr.bf16.mxu0 0
        %476 = vmatpush1.bf16.msra.mxu0 0
        %477 = vmatprep.subr.bf16.mxu0 0
        %478 = vmatpush1.bf16.msra.mxu0 0
        %479 = vmatprep.subr.bf16.mxu0 0
        %480 = vmatpush1.bf16.msra.mxu0 0
        %481 = vmatprep.subr.bf16.mxu0 0
        %482 = vmatpush1.bf16.msra.mxu0 0
        %483 = vmatprep.subr.bf16.mxu0 0
        %484 = vmatpush1.bf16.msra.mxu0 0
        %485 = vmatprep.subr.bf16.mxu0 0
        %486 = vmatpush1.bf16.msra.mxu0 0
        %487 = vmatprep.mubr.bf16.mxu0 0
        %488 = vmatmul.mubr.bf16.gmra.mrb[0].mxu0 %v387
        %v489 = vpop.f32.mrb[0].mxu0
        %v490 = vadd.f32 %v441, %v489
        %v491 = vpop.f32.mrb[0].mxu0
        %v492 = vpop.f32.mrb[0].mxu0
        %v493 = vadd.f32 %v441, %v492
        %v494 = vpop.f32.mrb[0].mxu0
        %495 = vdwg.mxu0
        %s496 = scalar_lea.vmem %s1, 128
        %v497 = vld [vmem:[%s496] sm:$0xf]
        %v498 = vld [vmem:[%s496 + $0x4] sm:$0xf]
        %v499 = vld [vmem:[%s496 + $0x8] sm:$0xf]
        %v500 = vld [vmem:[%s496 + $0xc] sm:$0xf]
        %s501 = scalar_lea.vmem %s2, 8
        %v502 = vld [vmem:[%s501] sm:$0x1]
        %v504 = vlaneseq
        %v505 = vshrl.u32 %v504, 7
        %v506 = vsub.s32 0, %v505
        %v507 = vrot.slane %v502, %v506
        %v513 = vunpack.c.l.b16 %v497
        %v514 = vunpack.c.l.b16 %v498
        %v515 = vunpack.c.l.b16 %v499
        %v516 = vunpack.c.l.b16 %v500
        %v517 = vpack.c.b16 %v514, %v513
        %v518 = vpack.c.b16 %v516, %v515
        %521 = vmatprep.subr.bf16.mxu0 0
        %522 = vmatpush1.bf16.msra.mxu0 %v517
        %523 = vmatprep.subr.bf16.mxu0 0
        %524 = vmatpush1.bf16.msra.mxu0 %v518
        %525 = vmatprep.subr.bf16.mxu0 0
        %526 = vmatpush1.bf16.msra.mxu0 0
        %527 = vmatprep.subr.bf16.mxu0 0
        %528 = vmatpush1.bf16.msra.mxu0 0
        %529 = vmatprep.subr.bf16.mxu0 0
        %530 = vmatpush1.bf16.msra.mxu0 0
        %531 = vmatprep.subr.bf16.mxu0 0
        %532 = vmatpush1.bf16.msra.mxu0 0
        %533 = vmatprep.subr.bf16.mxu0 0
        %534 = vmatpush1.bf16.msra.mxu0 0
        %535 = vmatprep.subr.bf16.mxu0 0
        %536 = vmatpush1.bf16.msra.mxu0 0
        %537 = vmatprep.subr.bf16.mxu0 0
        %538 = vmatpush1.bf16.msra.mxu0 0
        %539 = vmatprep.subr.bf16.mxu0 0
        %540 = vmatpush1.bf16.msra.mxu0 0
        %541 = vmatprep.subr.bf16.mxu0 0
        %542 = vmatpush1.bf16.msra.mxu0 0
        %543 = vmatprep.subr.bf16.mxu0 0
        %544 = vmatpush1.bf16.msra.mxu0 0
        %545 = vmatprep.subr.bf16.mxu0 0
        %546 = vmatpush1.bf16.msra.mxu0 0
        %547 = vmatprep.subr.bf16.mxu0 0
        %548 = vmatpush1.bf16.msra.mxu0 0
        %549 = vmatprep.subr.bf16.mxu0 0
        %550 = vmatpush1.bf16.msra.mxu0 0
        %551 = vmatprep.subr.bf16.mxu0 0
        %552 = vmatpush1.bf16.msra.mxu0 0
        %553 = vmatprep.mubr.bf16.mxu0 0
        %554 = vmatmul.mubr.bf16.gmra.mrb[0].mxu0 %v387
        %v555 = vpop.f32.mrb[0].mxu0
        %v556 = vadd.f32 %v507, %v555
        %v557 = vpop.f32.mrb[0].mxu0
        %v558 = vpop.f32.mrb[0].mxu0
        %v559 = vadd.f32 %v507, %v558
        %v560 = vpop.f32.mrb[0].mxu0
        %561 = vdwg.mxu0
        %vm562 = vcmask 64512
        %v564 = vsel %vm562, %v424, 0
        %v567 = vsel %vm562, %v427, 0
        %v570 = vsel %vm562, %v490, 0
        %v573 = vsel %vm562, %v493, 0
        %575 = vmatprep.subr.mxu0 0.0
        %576 = vmatpush1.xpose.msra.mxu0 %v570
        %577 = vmatprep.subr.mxu0 0.0
        %578 = vmatpush1.xpose.msra.mxu0 %v573
        %579 = vmatprep.subr.mxu0 0.0
        %580 = vmatpush1.xpose.msra.mxu0 0.0
        %581 = vmatprep.subr.mxu0 0.0
        %582 = vmatpush1.xpose.msra.mxu0 0.0
        %583 = vmatprep.subr.mxu0 0.0
        %584 = vmatpush1.xpose.msra.mxu0 0.0
        %585 = vmatprep.subr.mxu0 0.0
        %586 = vmatpush1.xpose.msra.mxu0 0.0
        %587 = vmatprep.subr.mxu0 0.0
        %588 = vmatpush1.xpose.msra.mxu0 0.0
        %589 = vmatprep.subr.mxu0 0.0
        %590 = vmatpush1.xpose.msra.mxu0 0.0
        %591 = vmatprep.subr.mxu0 0.0
        %592 = vmatpush1.xpose.msra.mxu0 0.0
        %593 = vmatprep.subr.mxu0 0.0
        %594 = vmatpush1.xpose.msra.mxu0 0.0
        %595 = vmatprep.subr.mxu0 0.0
        %596 = vmatpush1.xpose.msra.mxu0 0.0
        %597 = vmatprep.subr.mxu0 0.0
        %598 = vmatpush1.xpose.msra.mxu0 0.0
        %599 = vmatprep.subr.mxu0 0.0
        %600 = vmatpush1.xpose.msra.mxu0 0.0
        %601 = vmatprep.subr.mxu0 0.0
        %602 = vmatpush1.xpose.msra.mxu0 0.0
        %603 = vmatprep.subr.mxu0 0.0
        %604 = vmatpush1.xpose.msra.mxu0 0.0
        %605 = vmatprep.subr.mxu0 0.0
        %606 = vmatpush1.xpose.msra.mxu0 0.0
        %607 = vmatprep.subr.mxu0 0.0
        %608 = vmatpush1.xpose.msra.mxu0 0.0
        %609 = vmatprep.subr.mxu0 0.0
        %610 = vmatpush1.xpose.msra.mxu0 0.0
        %611 = vmatprep.subr.mxu0 0.0
        %612 = vmatpush1.xpose.msra.mxu0 0.0
        %613 = vmatprep.subr.mxu0 0.0
        %614 = vmatpush1.xpose.msra.mxu0 0.0
        %615 = vmatprep.subr.mxu0 0.0
        %616 = vmatpush1.xpose.msra.mxu0 0.0
        %617 = vmatprep.subr.mxu0 0.0
        %618 = vmatpush1.xpose.msra.mxu0 0.0
        %619 = vmatprep.subr.mxu0 0.0
        %620 = vmatpush1.xpose.msra.mxu0 0.0
        %621 = vmatprep.subr.mxu0 0.0
        %622 = vmatpush1.xpose.msra.mxu0 0.0
        %623 = vmatprep.subr.mxu0 0.0
        %624 = vmatpush1.xpose.msra.mxu0 0.0
        %625 = vmatprep.subr.mxu0 0.0
        %626 = vmatpush1.xpose.msra.mxu0 0.0
        %627 = vmatprep.subr.mxu0 0.0
        %628 = vmatpush1.xpose.msra.mxu0 0.0
        %629 = vmatprep.subr.mxu0 0.0
        %630 = vmatpush1.xpose.msra.mxu0 0.0
        %631 = vmatprep.subr.mxu0 0.0
        %632 = vmatpush1.xpose.msra.mxu0 0.0
        %633 = vmatprep.subr.mxu0 0.0
        %634 = vmatpush1.xpose.msra.mxu0 0.0
        %635 = vmatprep.subr.mxu0 0.0
        %636 = vmatpush1.xpose.msra.mxu0 0.0
        %637 = vmatprep.subr.mxu0 0.0
        %638 = vmatpush1.xpose.msra.mxu0 0.0
        %639 = vmatprep.mubr.f32.mxu0 0.0
        %640 = vmatmul.mubr.f32.gmra.mrb[0].mxu0 %v564
        %v641 = vpop.f32.mrb[0].mxu0
        %v642 = vadd.f32 0.0, %v641
        %v643 = vpop.f32.mrb[0].mxu0
        %644 = vmatprep.mubr.f32.mxu0 0.0
        %645 = vmatmul.mubr.f32.gmra.mrb[0].mxu0 %v567
        %v646 = vpop.f32.mrb[0].mxu0
        %v647 = vadd.f32 0.0, %v646
        %v648 = vpop.f32.mrb[0].mxu0
        %649 = vdwg.mxu0
        %vm650 = vcmask 130048
        %v651 = vsel %vm650, %v642, -inf
        %652 = vmax.xlane.f32.xlu0 %v651
        %v653 = vpop.xlane.xlu0 %652
        %v654 = vsel %vm650, %v647, -inf
        %655 = vmax.xlane.f32.xlu0 %v654
        %v656 = vpop.xlane.xlu0 %655
        %v657 = vsub.f32 %v642, %v653
        %v658 = vsub.f32 %v647, %v656
        %v659 = vmul.f32 %v657, 1.442695
        %v660 = vpow.pop %v659
        %v661 = vmul.f32 %v658, 1.442695
        %v662 = vpow.pop %v661
        %v663 = vsel %vm650, %v660, 0.0
        %664 = vadd.xlane.f32.xlu0 %v663
        %v665 = vpop.xlane.xlu0 %664
        %v666 = vsel %vm650, %v662, 0.0
        %667 = vadd.xlane.f32.xlu0 %v666
        %v668 = vpop.xlane.xlu0 %667
        %v669 = vrcp.pop %v665
        %v670 = vrcp.pop %v668
        %v671 = vmul.f32 %v660, %v669
        %v672 = vmul.f32 %v662, %v670
        %v674 = vsel %vm650, %v671, 0
        %v677 = vsel %vm650, %v672, 0
        %679 = vmatprep.subr.mxu0 0.0
        %680 = vmatpush1.msra.mxu0 %v556
        %681 = vmatprep.subr.mxu0 0.0
        %682 = vmatpush1.msra.mxu0 %v559
        %683 = vmatprep.subr.mxu0 0.0
        %684 = vmatpush1.msra.mxu0 0.0
        %685 = vmatprep.subr.mxu0 0.0
        %686 = vmatpush1.msra.mxu0 0.0
        %687 = vmatprep.subr.mxu0 0.0
        %688 = vmatpush1.msra.mxu0 0.0
        %689 = vmatprep.subr.mxu0 0.0
        %690 = vmatpush1.msra.mxu0 0.0
        %691 = vmatprep.subr.mxu0 0.0
        %692 = vmatpush1.msra.mxu0 0.0
        %693 = vmatprep.subr.mxu0 0.0
        %694 = vmatpush1.msra.mxu0 0.0
        %695 = vmatprep.subr.mxu0 0.0
        %696 = vmatpush1.msra.mxu0 0.0
        %697 = vmatprep.subr.mxu0 0.0
        %698 = vmatpush1.msra.mxu0 0.0
        %699 = vmatprep.subr.mxu0 0.0
        %700 = vmatpush1.msra.mxu0 0.0
        %701 = vmatprep.subr.mxu0 0.0
        %702 = vmatpush1.msra.mxu0 0.0
        %703 = vmatprep.subr.mxu0 0.0
        %704 = vmatpush1.msra.mxu0 0.0
        %705 = vmatprep.subr.mxu0 0.0
        %706 = vmatpush1.msra.mxu0 0.0
        %707 = vmatprep.subr.mxu0 0.0
        %708 = vmatpush1.msra.mxu0 0.0
        %709 = vmatprep.subr.mxu0 0.0
        %710 = vmatpush1.msra.mxu0 0.0
        %711 = vmatprep.subr.mxu0 0.0
        %712 = vmatpush1.msra.mxu0 0.0
        %713 = vmatprep.subr.mxu0 0.0
        %714 = vmatpush1.msra.mxu0 0.0
        %715 = vmatprep.subr.mxu0 0.0
        %716 = vmatpush1.msra.mxu0 0.0
        %717 = vmatprep.subr.mxu0 0.0
        %718 = vmatpush1.msra.mxu0 0.0
        %719 = vmatprep.subr.mxu0 0.0
        %720 = vmatpush1.msra.mxu0 0.0
        %721 = vmatprep.subr.mxu0 0.0
        %722 = vmatpush1.msra.mxu0 0.0
        %723 = vmatprep.subr.mxu0 0.0
        %724 = vmatpush1.msra.mxu0 0.0
        %725 = vmatprep.subr.mxu0 0.0
        %726 = vmatpush1.msra.mxu0 0.0
        %727 = vmatprep.subr.mxu0 0.0
        %728 = vmatpush1.msra.mxu0 0.0
        %729 = vmatprep.subr.mxu0 0.0
        %730 = vmatpush1.msra.mxu0 0.0
        %731 = vmatprep.subr.mxu0 0.0
        %732 = vmatpush1.msra.mxu0 0.0
        %733 = vmatprep.subr.mxu0 0.0
        %734 = vmatpush1.msra.mxu0 0.0
        %735 = vmatprep.subr.mxu0 0.0
        %736 = vmatpush1.msra.mxu0 0.0
        %737 = vmatprep.subr.mxu0 0.0
        %738 = vmatpush1.msra.mxu0 0.0
        %739 = vmatprep.subr.mxu0 0.0
        %740 = vmatpush1.msra.mxu0 0.0
        %741 = vmatprep.subr.mxu0 0.0
        %742 = vmatpush1.msra.mxu0 0.0
        %743 = vmatprep.mubr.f32.mxu0 0.0
        %744 = vmatmul.mubr.f32.gmra.mrb[0].mxu0 %v674
        %v745 = vpop.f32.mrb[0].mxu0
        %v746 = vadd.f32 0.0, %v745
        %v747 = vpop.f32.mrb[0].mxu0
        %748 = vmatprep.mubr.f32.mxu0 0.0
        %749 = vmatmul.mubr.f32.gmra.mrb[0].mxu0 %v677
        %v750 = vpop.f32.mrb[0].mxu0
        %v751 = vadd.f32 0.0, %v750
        %v752 = vpop.f32.mrb[0].mxu0
        %753 = vdwg.mxu0
        %v754 = vpack.c.bf16 %v751, %v746
        %v755 = vld [vmem:[%s3] sm:$0xf]
        %s756 = scalar_lea.vmem %s1, 16
        %v757 = vld [vmem:[%s756] sm:$0xf]
        %v758 = vld [vmem:[%s756 + $0x4] sm:$0xf]
        %v759 = vld [vmem:[%s756 + $0x8] sm:$0xf]
        %v760 = vld [vmem:[%s756 + $0xc] sm:$0xf]
        %s761 = scalar_lea.vmem %s2, 1
        %v762 = vld [vmem:[%s761] sm:$0x1]
        %v764 = vlaneseq
        %v765 = vshrl.u32 %v764, 7
        %v766 = vsub.s32 0, %v765
        %v767 = vrot.slane %v762, %v766
        %v773 = vunpack.c.l.b16 %v757
        %v774 = vunpack.c.l.b16 %v758
        %v775 = vunpack.c.l.b16 %v759
        %v776 = vunpack.c.l.b16 %v760
        %v777 = vpack.c.b16 %v774, %v773
        %v778 = vpack.c.b16 %v776, %v775
        %781 = vmatprep.subr.bf16.mxu0 0
        %782 = vmatpush1.bf16.msra.mxu0 %v777
        %783 = vmatprep.subr.bf16.mxu0 0
        %784 = vmatpush1.bf16.msra.mxu0 %v778
        %785 = vmatprep.subr.bf16.mxu0 0
        %786 = vmatpush1.bf16.msra.mxu0 0
        %787 = vmatprep.subr.bf16.mxu0 0
        %788 = vmatpush1.bf16.msra.mxu0 0
        %789 = vmatprep.subr.bf16.mxu0 0
        %790 = vmatpush1.bf16.msra.mxu0 0
        %791 = vmatprep.subr.bf16.mxu0 0
        %792 = vmatpush1.bf16.msra.mxu0 0
        %793 = vmatprep.subr.bf16.mxu0 0
        %794 = vmatpush1.bf16.msra.mxu0 0
        %795 = vmatprep.subr.bf16.mxu0 0
        %796 = vmatpush1.bf16.msra.mxu0 0
        %797 = vmatprep.subr.bf16.mxu0 0
        %798 = vmatpush1.bf16.msra.mxu0 0
        %799 = vmatprep.subr.bf16.mxu0 0
        %800 = vmatpush1.bf16.msra.mxu0 0
        %801 = vmatprep.subr.bf16.mxu0 0
        %802 = vmatpush1.bf16.msra.mxu0 0
        %803 = vmatprep.subr.bf16.mxu0 0
        %804 = vmatpush1.bf16.msra.mxu0 0
        %805 = vmatprep.subr.bf16.mxu0 0
        %806 = vmatpush1.bf16.msra.mxu0 0
        %807 = vmatprep.subr.bf16.mxu0 0
        %808 = vmatpush1.bf16.msra.mxu0 0
        %809 = vmatprep.subr.bf16.mxu0 0
        %810 = vmatpush1.bf16.msra.mxu0 0
        %811 = vmatprep.subr.bf16.mxu0 0
        %812 = vmatpush1.bf16.msra.mxu0 0
        %813 = vmatprep.mubr.bf16.mxu0 0
        %814 = vmatmul.mubr.bf16.gmra.mrb[0].mxu0 %v387
        %v815 = vpop.f32.mrb[0].mxu0
        %v816 = vadd.f32 %v767, %v815
        %v817 = vpop.f32.mrb[0].mxu0
        %v818 = vpop.f32.mrb[0].mxu0
        %v819 = vadd.f32 %v767, %v818
        %v820 = vpop.f32.mrb[0].mxu0
        %821 = vdwg.mxu0
        %s822 = scalar_lea.vmem %s1, 80
        %v823 = vld [vmem:[%s822] sm:$0xf]
        %v824 = vld [vmem:[%s822 + $0x4] sm:$0xf]
        %v825 = vld [vmem:[%s822 + $0x8] sm:$0xf]
        %v826 = vld [vmem:[%s822 + $0xc] sm:$0xf]
        %s827 = scalar_lea.vmem %s2, 5
        %v828 = vld [vmem:[%s827] sm:$0x1]
        %v830 = vlaneseq
        %v831 = vshrl.u32 %v830, 7
        %v832 = vsub.s32 0, %v831
        %v833 = vrot.slane %v828, %v832
        %v839 = vunpack.c.l.b16 %v823
        %v840 = vunpack.c.l.b16 %v824
        %v841 = vunpack.c.l.b16 %v825
        %v842 = vunpack.c.l.b16 %v826
        %v843 = vpack.c.b16 %v840, %v839
        %v844 = vpack.c.b16 %v842, %v841
        %847 = vmatprep.subr.bf16.mxu0 0
        %848 = vmatpush1.bf16.msra.mxu0 %v843
        %849 = vmatprep.subr.bf16.mxu0 0
        %850 = vmatpush1.bf16.msra.mxu0 %v844
        %851 = vmatprep.subr.bf16.mxu0 0
        %852 = vmatpush1.bf16.msra.mxu0 0
        %853 = vmatprep.subr.bf16.mxu0 0
        %854 = vmatpush1.bf16.msra.mxu0 0
        %855 = vmatprep.subr.bf16.mxu0 0
        %856 = vmatpush1.bf16.msra.mxu0 0
        %857 = vmatprep.subr.bf16.mxu0 0
        %858 = vmatpush1.bf16.msra.mxu0 0
        %859 = vmatprep.subr.bf16.mxu0 0
        %860 = vmatpush1.bf16.msra.mxu0 0
        %861 = vmatprep.subr.bf16.mxu0 0
        %862 = vmatpush1.bf16.msra.mxu0 0
        %863 = vmatprep.subr.bf16.mxu0 0
        %864 = vmatpush1.bf16.msra.mxu0 0
        %865 = vmatprep.subr.bf16.mxu0 0
        %866 = vmatpush1.bf16.msra.mxu0 0
        %867 = vmatprep.subr.bf16.mxu0 0
        %868 = vmatpush1.bf16.msra.mxu0 0
        %869 = vmatprep.subr.bf16.mxu0 0
        %870 = vmatpush1.bf16.msra.mxu0 0
        %871 = vmatprep.subr.bf16.mxu0 0
        %872 = vmatpush1.bf16.msra.mxu0 0
        %873 = vmatprep.subr.bf16.mxu0 0
        %874 = vmatpush1.bf16.msra.mxu0 0
        %875 = vmatprep.subr.bf16.mxu0 0
        %876 = vmatpush1.bf16.msra.mxu0 0
        %877 = vmatprep.subr.bf16.mxu0 0
        %878 = vmatpush1.bf16.msra.mxu0 0
        %879 = vmatprep.mubr.bf16.mxu0 0
        %880 = vmatmul.mubr.bf16.gmra.mrb[0].mxu0 %v387
        %v881 = vpop.f32.mrb[0].mxu0
        %v882 = vadd.f32 %v833, %v881
        %v883 = vpop.f32.mrb[0].mxu0
        %v884 = vpop.f32.mrb[0].mxu0
        %v885 = vadd.f32 %v833, %v884
        %v886 = vpop.f32.mrb[0].mxu0
        %887 = vdwg.mxu0
        %s888 = scalar_lea.vmem %s1, 144
        %v889 = vld [vmem:[%s888] sm:$0xf]
        %v890 = vld [vmem:[%s888 + $0x4] sm:$0xf]
        %v891 = vld [vmem:[%s888 + $0x8] sm:$0xf]
        %v892 = vld [vmem:[%s888 + $0xc] sm:$0xf]
        %s893 = scalar_lea.vmem %s2, 9
        %v894 = vld [vmem:[%s893] sm:$0x1]
        %v896 = vlaneseq
        %v897 = vshrl.u32 %v896, 7
        %v898 = vsub.s32 0, %v897
        %v899 = vrot.slane %v894, %v898
        %v905 = vunpack.c.l.b16 %v889
        %v906 = vunpack.c.l.b16 %v890
        %v907 = vunpack.c.l.b16 %v891
        %v908 = vunpack.c.l.b16 %v892
        %v909 = vpack.c.b16 %v906, %v905
        %v910 = vpack.c.b16 %v908, %v907
        %913 = vmatprep.subr.bf16.mxu0 0
        %914 = vmatpush1.bf16.msra.mxu0 %v909
        %915 = vmatprep.subr.bf16.mxu0 0
        %916 = vmatpush1.bf16.msra.mxu0 %v910
        %917 = vmatprep.subr.bf16.mxu0 0
        %918 = vmatpush1.bf16.msra.mxu0 0
        %919 = vmatprep.subr.bf16.mxu0 0
        %920 = vmatpush1.bf16.msra.mxu0 0
        %921 = vmatprep.subr.bf16.mxu0 0
        %922 = vmatpush1.bf16.msra.mxu0 0
        %923 = vmatprep.subr.bf16.mxu0 0
        %924 = vmatpush1.bf16.msra.mxu0 0
        %925 = vmatprep.subr.bf16.mxu0 0
        %926 = vmatpush1.bf16.msra.mxu0 0
        %927 = vmatprep.subr.bf16.mxu0 0
        %928 = vmatpush1.bf16.msra.mxu0 0
        %929 = vmatprep.subr.bf16.mxu0 0
        %930 = vmatpush1.bf16.msra.mxu0 0
        %931 = vmatprep.subr.bf16.mxu0 0
        %932 = vmatpush1.bf16.msra.mxu0 0
        %933 = vmatprep.subr.bf16.mxu0 0
        %934 = vmatpush1.bf16.msra.mxu0 0
        %935 = vmatprep.subr.bf16.mxu0 0
        %936 = vmatpush1.bf16.msra.mxu0 0
        %937 = vmatprep.subr.bf16.mxu0 0
        %938 = vmatpush1.bf16.msra.mxu0 0
        %939 = vmatprep.subr.bf16.mxu0 0
        %940 = vmatpush1.bf16.msra.mxu0 0
        %941 = vmatprep.subr.bf16.mxu0 0
        %942 = vmatpush1.bf16.msra.mxu0 0
        %943 = vmatprep.subr.bf16.mxu0 0
        %944 = vmatpush1.bf16.msra.mxu0 0
        %945 = vmatprep.mubr.bf16.mxu0 0
        %946 = vmatmul.mubr.bf16.gmra.mrb[0].mxu0 %v387
        %v947 = vpop.f32.mrb[0].mxu0
        %v948 = vadd.f32 %v899, %v947
        %v949 = vpop.f32.mrb[0].mxu0
        %v950 = vpop.f32.mrb[0].mxu0
        %v951 = vadd.f32 %v899, %v950
        %v952 = vpop.f32.mrb[0].mxu0
        %953 = vdwg.mxu0
        %v955 = vsel %vm562, %v816, 0
        %v958 = vsel %vm562, %v819, 0
        %v961 = vsel %vm562, %v882, 0
        %v964 = vsel %vm562, %v885, 0
        %966 = vmatprep.subr.mxu0 0.0
        %967 = vmatpush1.xpose.msra.mxu0 %v961
        %968 = vmatprep.subr.mxu0 0.0
        %969 = vmatpush1.xpose.msra.mxu0 %v964
        %970 = vmatprep.subr.mxu0 0.0
        %971 = vmatpush1.xpose.msra.mxu0 0.0
        %972 = vmatprep.subr.mxu0 0.0
        %973 = vmatpush1.xpose.msra.mxu0 0.0
        %974 = vmatprep.subr.mxu0 0.0
        %975 = vmatpush1.xpose.msra.mxu0 0.0
        %976 = vmatprep.subr.mxu0 0.0
        %977 = vmatpush1.xpose.msra.mxu0 0.0
        %978 = vmatprep.subr.mxu0 0.0
        %979 = vmatpush1.xpose.msra.mxu0 0.0
        %980 = vmatprep.subr.mxu0 0.0
        %981 = vmatpush1.xpose.msra.mxu0 0.0
        %982 = vmatprep.subr.mxu0 0.0
        %983 = vmatpush1.xpose.msra.mxu0 0.0
        %984 = vmatprep.subr.mxu0 0.0
        %985 = vmatpush1.xpose.msra.mxu0 0.0
        %986 = vmatprep.subr.mxu0 0.0
        %987 = vmatpush1.xpose.msra.mxu0 0.0
        %988 = vmatprep.subr.mxu0 0.0
        %989 = vmatpush1.xpose.msra.mxu0 0.0
        %990 = vmatprep.subr.mxu0 0.0
        %991 = vmatpush1.xpose.msra.mxu0 0.0
        %992 = vmatprep.subr.mxu0 0.0
        %993 = vmatpush1.xpose.msra.mxu0 0.0
        %994 = vmatprep.subr.mxu0 0.0
        %995 = vmatpush1.xpose.msra.mxu0 0.0
        %996 = vmatprep.subr.mxu0 0.0
        %997 = vmatpush1.xpose.msra.mxu0 0.0
        %998 = vmatprep.subr.mxu0 0.0
        %999 = vmatpush1.xpose.msra.mxu0 0.0
        %1000 = vmatprep.subr.mxu0 0.0
        %1001 = vmatpush1.xpose.msra.mxu0 0.0
        %1002 = vmatprep.subr.mxu0 0.0
        %1003 = vmatpush1.xpose.msra.mxu0 0.0
        %1004 = vmatprep.subr.mxu0 0.0
        %1005 = vmatpush1.xpose.msra.mxu0 0.0
        %1006 = vmatprep.subr.mxu0 0.0
        %1007 = vmatpush1.xpose.msra.mxu0 0.0
        %1008 = vmatprep.subr.mxu0 0.0
        %1009 = vmatpush1.xpose.msra.mxu0 0.0
        %1010 = vmatprep.subr.mxu0 0.0
        %1011 = vmatpush1.xpose.msra.mxu0 0.0
        %1012 = vmatprep.subr.mxu0 0.0
        %1013 = vmatpush1.xpose.msra.mxu0 0.0
        %1014 = vmatprep.subr.mxu0 0.0
        %1015 = vmatpush1.xpose.msra.mxu0 0.0
        %1016 = vmatprep.subr.mxu0 0.0
        %1017 = vmatpush1.xpose.msra.mxu0 0.0
        %1018 = vmatprep.subr.mxu0 0.0
        %1019 = vmatpush1.xpose.msra.mxu0 0.0
        %1020 = vmatprep.subr.mxu0 0.0
        %1021 = vmatpush1.xpose.msra.mxu0 0.0
        %1022 = vmatprep.subr.mxu0 0.0
        %1023 = vmatpush1.xpose.msra.mxu0 0.0
        %1024 = vmatprep.subr.mxu0 0.0
        %1025 = vmatpush1.xpose.msra.mxu0 0.0
        %1026 = vmatprep.subr.mxu0 0.0
        %1027 = vmatpush1.xpose.msra.mxu0 0.0
        %1028 = vmatprep.subr.mxu0 0.0
        %1029 = vmatpush1.xpose.msra.mxu0 0.0
        %1030 = vmatprep.mubr.f32.mxu0 0.0
        %1031 = vmatmul.mubr.f32.gmra.mrb[0].mxu0 %v955
        %v1032 = vpop.f32.mrb[0].mxu0
        %v1033 = vadd.f32 0.0, %v1032
        %v1034 = vpop.f32.mrb[0].mxu0
        %1035 = vmatprep.mubr.f32.mxu0 0.0
        %1036 = vmatmul.mubr.f32.gmra.mrb[0].mxu0 %v958
        %v1037 = vpop.f32.mrb[0].mxu0
        %v1038 = vadd.f32 0.0, %v1037
        %v1039 = vpop.f32.mrb[0].mxu0
        %1040 = vdwg.mxu0
        %v1041 = vsel %vm650, %v1033, -inf
        %1042 = vmax.xlane.f32.xlu0 %v1041
        %v1043 = vpop.xlane.xlu0 %1042
        %v1044 = vsel %vm650, %v1038, -inf
        %1045 = vmax.xlane.f32.xlu0 %v1044
        %v1046 = vpop.xlane.xlu0 %1045
        %v1047 = vsub.f32 %v1033, %v1043
        %v1048 = vsub.f32 %v1038, %v1046
        %v1049 = vmul.f32 %v1047, 1.442695
        %v1050 = vpow.pop %v1049
        %v1051 = vmul.f32 %v1048, 1.442695
        %v1052 = vpow.pop %v1051
        %v1053 = vsel %vm650, %v1050, 0.0
        %1054 = vadd.xlane.f32.xlu0 %v1053
        %v1055 = vpop.xlane.xlu0 %1054
        %v1056 = vsel %vm650, %v1052, 0.0
        %1057 = vadd.xlane.f32.xlu0 %v1056
        %v1058 = vpop.xlane.xlu0 %1057
        %v1059 = vrcp.pop %v1055
        %v1060 = vrcp.pop %v1058
        %v1061 = vmul.f32 %v1050, %v1059
        %v1062 = vmul.f32 %v1052, %v1060
        %v1064 = vsel %vm650, %v1061, 0
        %v1067 = vsel %vm650, %v1062, 0
        %1069 = vmatprep.subr.mxu0 0.0
        %1070 = vmatpush1.msra.mxu0 %v948
        %1071 = vmatprep.subr.mxu0 0.0
        %1072 = vmatpush1.msra.mxu0 %v951
        %1073 = vmatprep.subr.mxu0 0.0
        %1074 = vmatpush1.msra.mxu0 0.0
        %1075 = vmatprep.subr.mxu0 0.0
        %1076 = vmatpush1.msra.mxu0 0.0
        %1077 = vmatprep.subr.mxu0 0.0
        %1078 = vmatpush1.msra.mxu0 0.0
        %1079 = vmatprep.subr.mxu0 0.0
        %1080 = vmatpush1.msra.mxu0 0.0
        %1081 = vmatprep.subr.mxu0 0.0
        %1082 = vmatpush1.msra.mxu0 0.0
        %1083 = vmatprep.subr.mxu0 0.0
        %1084 = vmatpush1.msra.mxu0 0.0
        %1085 = vmatprep.subr.mxu0 0.0
        %1086 = vmatpush1.msra.mxu0 0.0
        %1087 = vmatprep.subr.mxu0 0.0
        %1088 = vmatpush1.msra.mxu0 0.0
        %1089 = vmatprep.subr.mxu0 0.0
        %1090 = vmatpush1.msra.mxu0 0.0
        %1091 = vmatprep.subr.mxu0 0.0
        %1092 = vmatpush1.msra.mxu0 0.0
        %1093 = vmatprep.subr.mxu0 0.0
        %1094 = vmatpush1.msra.mxu0 0.0
        %1095 = vmatprep.subr.mxu0 0.0
        %1096 = vmatpush1.msra.mxu0 0.0
        %1097 = vmatprep.subr.mxu0 0.0
        %1098 = vmatpush1.msra.mxu0 0.0
        %1099 = vmatprep.subr.mxu0 0.0
        %1100 = vmatpush1.msra.mxu0 0.0
        %1101 = vmatprep.subr.mxu0 0.0
        %1102 = vmatpush1.msra.mxu0 0.0
        %1103 = vmatprep.subr.mxu0 0.0
        %1104 = vmatpush1.msra.mxu0 0.0
        %1105 = vmatprep.subr.mxu0 0.0
        %1106 = vmatpush1.msra.mxu0 0.0
        %1107 = vmatprep.subr.mxu0 0.0
        %1108 = vmatpush1.msra.mxu0 0.0
        %1109 = vmatprep.subr.mxu0 0.0
        %1110 = vmatpush1.msra.mxu0 0.0
        %1111 = vmatprep.subr.mxu0 0.0
        %1112 = vmatpush1.msra.mxu0 0.0
        %1113 = vmatprep.subr.mxu0 0.0
        %1114 = vmatpush1.msra.mxu0 0.0
        %1115 = vmatprep.subr.mxu0 0.0
        %1116 = vmatpush1.msra.mxu0 0.0
        %1117 = vmatprep.subr.mxu0 0.0
        %1118 = vmatpush1.msra.mxu0 0.0
        %1119 = vmatprep.subr.mxu0 0.0
        %1120 = vmatpush1.msra.mxu0 0.0
        %1121 = vmatprep.subr.mxu0 0.0
        %1122 = vmatpush1.msra.mxu0 0.0
        %1123 = vmatprep.subr.mxu0 0.0
        %1124 = vmatpush1.msra.mxu0 0.0
        %1125 = vmatprep.subr.mxu0 0.0
        %1126 = vmatpush1.msra.mxu0 0.0
        %1127 = vmatprep.subr.mxu0 0.0
        %1128 = vmatpush1.msra.mxu0 0.0
        %1129 = vmatprep.subr.mxu0 0.0
        %1130 = vmatpush1.msra.mxu0 0.0
        %1131 = vmatprep.subr.mxu0 0.0
        %1132 = vmatpush1.msra.mxu0 0.0
        %1133 = vmatprep.mubr.f32.mxu0 0.0
        %1134 = vmatmul.mubr.f32.gmra.mrb[0].mxu0 %v1064
        %v1135 = vpop.f32.mrb[0].mxu0
        %v1136 = vadd.f32 0.0, %v1135
        %v1137 = vpop.f32.mrb[0].mxu0
        %1138 = vmatprep.mubr.f32.mxu0 0.0
        %1139 = vmatmul.mubr.f32.gmra.mrb[0].mxu0 %v1067
        %v1140 = vpop.f32.mrb[0].mxu0
        %v1141 = vadd.f32 0.0, %v1140
        %v1142 = vpop.f32.mrb[0].mxu0
        %1143 = vdwg.mxu0
        %v1144 = vpack.c.bf16 %v1141, %v1136
        %s1145 = scalar_lea.vmem %s3, 4
        %v1146 = vld [vmem:[%s1145] sm:$0xf]
        %v1148 = vsel %vm562, %v1144, 0
        %vm1150 = vcmask 1043456
        %v1152 = vsel %vm1150, %v1146, 0
        %1154 = vmatprep.subr.bf16.mxu0 0
        %1155 = vmatpush1.bf16.msra.mxu0 %v1152
        %1156 = vmatprep.subr.bf16.mxu0 0
        %1157 = vmatpush1.bf16.msra.mxu0 0
        %1158 = vmatprep.subr.bf16.mxu0 0
        %1159 = vmatpush1.bf16.msra.mxu0 0
        %1160 = vmatprep.subr.bf16.mxu0 0
        %1161 = vmatpush1.bf16.msra.mxu0 0
        %1162 = vmatprep.subr.bf16.mxu0 0
        %1163 = vmatpush1.bf16.msra.mxu0 0
        %1164 = vmatprep.subr.bf16.mxu0 0
        %1165 = vmatpush1.bf16.msra.mxu0 0
        %1166 = vmatprep.subr.bf16.mxu0 0
        %1167 = vmatpush1.bf16.msra.mxu0 0
        %1168 = vmatprep.subr.bf16.mxu0 0
        %1169 = vmatpush1.bf16.msra.mxu0 0
        %1170 = vmatprep.subr.bf16.mxu0 0
        %1171 = vmatpush1.bf16.msra.mxu0 0
        %1172 = vmatprep.subr.bf16.mxu0 0
        %1173 = vmatpush1.bf16.msra.mxu0 0
        %1174 = vmatprep.subr.bf16.mxu0 0
        %1175 = vmatpush1.bf16.msra.mxu0 0
        %1176 = vmatprep.subr.bf16.mxu0 0
        %1177 = vmatpush1.bf16.msra.mxu0 0
        %1178 = vmatprep.subr.bf16.mxu0 0
        %1179 = vmatpush1.bf16.msra.mxu0 0
        %1180 = vmatprep.subr.bf16.mxu0 0
        %1181 = vmatpush1.bf16.msra.mxu0 0
        %1182 = vmatprep.subr.bf16.mxu0 0
        %1183 = vmatpush1.bf16.msra.mxu0 0
        %1184 = vmatprep.subr.bf16.mxu0 0
        %1185 = vmatpush1.bf16.msra.mxu0 0
        %1186 = vmatprep.mubr.bf16.mxu0 0
        %1187 = vmatmul.mubr.bf16.gmra.mrb[0].mxu0 %v1148
        %v1188 = vpop.f32.mrb[0].mxu0
        %v1189 = vadd.f32 0.0, %v1188
        %v1190 = vpop.f32.mrb[0].mxu0
        %v1191 = vpop.f32.mrb[0].mxu0
        %v1192 = vadd.f32 0.0, %v1191
        %v1193 = vpop.f32.mrb[0].mxu0
        %1194 = vdwg.mxu0
        %v1196 = vsel %vm562, %v754, 0
        %v1199 = vsel %vm1150, %v755, 0
        %1201 = vmatprep.subr.bf16.mxu0 0
        %1202 = vmatpush1.bf16.msra.mxu0 %v1199
        %1203 = vmatprep.subr.bf16.mxu0 0
        %1204 = vmatpush1.bf16.msra.mxu0 0
        %1205 = vmatprep.subr.bf16.mxu0 0
        %1206 = vmatpush1.bf16.msra.mxu0 0
        %1207 = vmatprep.subr.bf16.mxu0 0
        %1208 = vmatpush1.bf16.msra.mxu0 0
        %1209 = vmatprep.subr.bf16.mxu0 0
        %1210 = vmatpush1.bf16.msra.mxu0 0
        %1211 = vmatprep.subr.bf16.mxu0 0
        %1212 = vmatpush1.bf16.msra.mxu0 0
        %1213 = vmatprep.subr.bf16.mxu0 0
        %1214 = vmatpush1.bf16.msra.mxu0 0
        %1215 = vmatprep.subr.bf16.mxu0 0
        %1216 = vmatpush1.bf16.msra.mxu0 0
        %1217 = vmatprep.subr.bf16.mxu0 0
        %1218 = vmatpush1.bf16.msra.mxu0 0
        %1219 = vmatprep.subr.bf16.mxu0 0
        %1220 = vmatpush1.bf16.msra.mxu0 0
        %1221 = vmatprep.subr.bf16.mxu0 0
        %1222 = vmatpush1.bf16.msra.mxu0 0
        %1223 = vmatprep.subr.bf16.mxu0 0
        %1224 = vmatpush1.bf16.msra.mxu0 0
        %1225 = vmatprep.subr.bf16.mxu0 0
        %1226 = vmatpush1.bf16.msra.mxu0 0
        %1227 = vmatprep.subr.bf16.mxu0 0
        %1228 = vmatpush1.bf16.msra.mxu0 0
        %1229 = vmatprep.subr.bf16.mxu0 0
        %1230 = vmatpush1.bf16.msra.mxu0 0
        %1231 = vmatprep.subr.bf16.mxu0 0
        %1232 = vmatpush1.bf16.msra.mxu0 0
        %1233 = vmatprep.mubr.bf16.mxu0 0
        %1234 = vmatmul.mubr.bf16.gmra.mrb[0].mxu0 %v1196
        %v1235 = vpop.f32.mrb[0].mxu0
        %v1236 = vadd.f32 %v1189, %v1235
        %v1237 = vpop.f32.mrb[0].mxu0
        %v1238 = vpop.f32.mrb[0].mxu0
        %v1239 = vadd.f32 %v1192, %v1238
        %v1240 = vpop.f32.mrb[0].mxu0
        %1241 = vdwg.mxu0
        %s1242 = scalar_lea.vmem %s1, 32
        %v1243 = vld [vmem:[%s1242] sm:$0xf]
        %v1244 = vld [vmem:[%s1242 + $0x4] sm:$0xf]
        %v1245 = vld [vmem:[%s1242 + $0x8] sm:$0xf]
        %v1246 = vld [vmem:[%s1242 + $0xc] sm:$0xf]
        %s1247 = scalar_lea.vmem %s2, 2
        %v1248 = vld [vmem:[%s1247] sm:$0x1]
        %v1250 = vlaneseq
        %v1251 = vshrl.u32 %v1250, 7
        %v1252 = vsub.s32 0, %v1251
        %v1253 = vrot.slane %v1248, %v1252
        %v1259 = vunpack.c.l.b16 %v1243
        %v1260 = vunpack.c.l.b16 %v1244
        %v1261 = vunpack.c.l.b16 %v1245
        %v1262 = vunpack.c.l.b16 %v1246
        %v1263 = vpack.c.b16 %v1260, %v1259
        %v1264 = vpack.c.b16 %v1262, %v1261
        %1267 = vmatprep.subr.bf16.mxu0 0
        %1268 = vmatpush1.bf16.msra.mxu0 %v1263
        %1269 = vmatprep.subr.bf16.mxu0 0
        %1270 = vmatpush1.bf16.msra.mxu0 %v1264
        %1271 = vmatprep.subr.bf16.mxu0 0
        %1272 = vmatpush1.bf16.msra.mxu0 0
        %1273 = vmatprep.subr.bf16.mxu0 0
        %1274 = vmatpush1.bf16.msra.mxu0 0
        %1275 = vmatprep.subr.bf16.mxu0 0
        %1276 = vmatpush1.bf16.msra.mxu0 0
        %1277 = vmatprep.subr.bf16.mxu0 0
        %1278 = vmatpush1.bf16.msra.mxu0 0
        %1279 = vmatprep.subr.bf16.mxu0 0
        %1280 = vmatpush1.bf16.msra.mxu0 0
        %1281 = vmatprep.subr.bf16.mxu0 0
        %1282 = vmatpush1.bf16.msra.mxu0 0
        %1283 = vmatprep.subr.bf16.mxu0 0
        %1284 = vmatpush1.bf16.msra.mxu0 0
        %1285 = vmatprep.subr.bf16.mxu0 0
        %1286 = vmatpush1.bf16.msra.mxu0 0
        %1287 = vmatprep.subr.bf16.mxu0 0
        %1288 = vmatpush1.bf16.msra.mxu0 0
        %1289 = vmatprep.subr.bf16.mxu0 0
        %1290 = vmatpush1.bf16.msra.mxu0 0
        %1291 = vmatprep.subr.bf16.mxu0 0
        %1292 = vmatpush1.bf16.msra.mxu0 0
        %1293 = vmatprep.subr.bf16.mxu0 0
        %1294 = vmatpush1.bf16.msra.mxu0 0
        %1295 = vmatprep.subr.bf16.mxu0 0
        %1296 = vmatpush1.bf16.msra.mxu0 0
        %1297 = vmatprep.subr.bf16.mxu0 0
        %1298 = vmatpush1.bf16.msra.mxu0 0
        %1299 = vmatprep.mubr.bf16.mxu0 0
        %1300 = vmatmul.mubr.bf16.gmra.mrb[0].mxu0 %v387
        %v1301 = vpop.f32.mrb[0].mxu0
        %v1302 = vadd.f32 %v1253, %v1301
        %v1303 = vpop.f32.mrb[0].mxu0
        %v1304 = vpop.f32.mrb[0].mxu0
        %v1305 = vadd.f32 %v1253, %v1304
        %v1306 = vpop.f32.mrb[0].mxu0
        %1307 = vdwg.mxu0
        %s1308 = scalar_lea.vmem %s1, 96
        %v1309 = vld [vmem:[%s1308] sm:$0xf]
        %v1310 = vld [vmem:[%s1308 + $0x4] sm:$0xf]
        %v1311 = vld [vmem:[%s1308 + $0x8] sm:$0xf]
        %v1312 = vld [vmem:[%s1308 + $0xc] sm:$0xf]
        %s1313 = scalar_lea.vmem %s2, 6
        %v1314 = vld [vmem:[%s1313] sm:$0x1]
        %v1316 = vlaneseq
        %v1317 = vshrl.u32 %v1316, 7
        %v1318 = vsub.s32 0, %v1317
        %v1319 = vrot.slane %v1314, %v1318
        %v1325 = vunpack.c.l.b16 %v1309
        %v1326 = vunpack.c.l.b16 %v1310
        %v1327 = vunpack.c.l.b16 %v1311
        %v1328 = vunpack.c.l.b16 %v1312
        %v1329 = vpack.c.b16 %v1326, %v1325
        %v1330 = vpack.c.b16 %v1328, %v1327
        %1333 = vmatprep.subr.bf16.mxu0 0
        %1334 = vmatpush1.bf16.msra.mxu0 %v1329
        %1335 = vmatprep.subr.bf16.mxu0 0
        %1336 = vmatpush1.bf16.msra.mxu0 %v1330
        %1337 = vmatprep.subr.bf16.mxu0 0
        %1338 = vmatpush1.bf16.msra.mxu0 0
        %1339 = vmatprep.subr.bf16.mxu0 0
        %1340 = vmatpush1.bf16.msra.mxu0 0
        %1341 = vmatprep.subr.bf16.mxu0 0
        %1342 = vmatpush1.bf16.msra.mxu0 0
        %1343 = vmatprep.subr.bf16.mxu0 0
        %1344 = vmatpush1.bf16.msra.mxu0 0
        %1345 = vmatprep.subr.bf16.mxu0 0
        %1346 = vmatpush1.bf16.msra.mxu0 0
        %1347 = vmatprep.subr.bf16.mxu0 0
        %1348 = vmatpush1.bf16.msra.mxu0 0
        %1349 = vmatprep.subr.bf16.mxu0 0
        %1350 = vmatpush1.bf16.msra.mxu0 0
        %1351 = vmatprep.subr.bf16.mxu0 0
        %1352 = vmatpush1.bf16.msra.mxu0 0
        %1353 = vmatprep.subr.bf16.mxu0 0
        %1354 = vmatpush1.bf16.msra.mxu0 0
        %1355 = vmatprep.subr.bf16.mxu0 0
        %1356 = vmatpush1.bf16.msra.mxu0 0
        %1357 = vmatprep.subr.bf16.mxu0 0
        %1358 = vmatpush1.bf16.msra.mxu0 0
        %1359 = vmatprep.subr.bf16.mxu0 0
        %1360 = vmatpush1.bf16.msra.mxu0 0
        %1361 = vmatprep.subr.bf16.mxu0 0
        %1362 = vmatpush1.bf16.msra.mxu0 0
        %1363 = vmatprep.subr.bf16.mxu0 0
        %1364 = vmatpush1.bf16.msra.mxu0 0
        %1365 = vmatprep.mubr.bf16.mxu0 0
        %1366 = vmatmul.mubr.bf16.gmra.mrb[0].mxu0 %v387
        %v1367 = vpop.f32.mrb[0].mxu0
        %v1368 = vadd.f32 %v1319, %v1367
        %v1369 = vpop.f32.mrb[0].mxu0
        %v1370 = vpop.f32.mrb[0].mxu0
        %v1371 = vadd.f32 %v1319, %v1370
        %v1372 = vpop.f32.mrb[0].mxu0
        %1373 = vdwg.mxu0
        %s1374 = scalar_lea.vmem %s1, 160
        %v1375 = vld [vmem:[%s1374] sm:$0xf]
        %v1376 = vld [vmem:[%s1374 + $0x4] sm:$0xf]
        %v1377 = vld [vmem:[%s1374 + $0x8] sm:$0xf]
        %v1378 = vld [vmem:[%s1374 + $0xc] sm:$0xf]
        %s1379 = scalar_lea.vmem %s2, 10
        %v1380 = vld [vmem:[%s1379] sm:$0x1]
        %v1382 = vlaneseq
        %v1383 = vshrl.u32 %v1382, 7
        %v1384 = vsub.s32 0, %v1383
        %v1385 = vrot.slane %v1380, %v1384
        %v1391 = vunpack.c.l.b16 %v1375
        %v1392 = vunpack.c.l.b16 %v1376
        %v1393 = vunpack.c.l.b16 %v1377
        %v1394 = vunpack.c.l.b16 %v1378
        %v1395 = vpack.c.b16 %v1392, %v1391
        %v1396 = vpack.c.b16 %v1394, %v1393
        %1399 = vmatprep.subr.bf16.mxu0 0
        %1400 = vmatpush1.bf16.msra.mxu0 %v1395
        %1401 = vmatprep.subr.bf16.mxu0 0
        %1402 = vmatpush1.bf16.msra.mxu0 %v1396
        %1403 = vmatprep.subr.bf16.mxu0 0
        %1404 = vmatpush1.bf16.msra.mxu0 0
        %1405 = vmatprep.subr.bf16.mxu0 0
        %1406 = vmatpush1.bf16.msra.mxu0 0
        %1407 = vmatprep.subr.bf16.mxu0 0
        %1408 = vmatpush1.bf16.msra.mxu0 0
        %1409 = vmatprep.subr.bf16.mxu0 0
        %1410 = vmatpush1.bf16.msra.mxu0 0
        %1411 = vmatprep.subr.bf16.mxu0 0
        %1412 = vmatpush1.bf16.msra.mxu0 0
        %1413 = vmatprep.subr.bf16.mxu0 0
        %1414 = vmatpush1.bf16.msra.mxu0 0
        %1415 = vmatprep.subr.bf16.mxu0 0
        %1416 = vmatpush1.bf16.msra.mxu0 0
        %1417 = vmatprep.subr.bf16.mxu0 0
        %1418 = vmatpush1.bf16.msra.mxu0 0
        %1419 = vmatprep.subr.bf16.mxu0 0
        %1420 = vmatpush1.bf16.msra.mxu0 0
        %1421 = vmatprep.subr.bf16.mxu0 0
        %1422 = vmatpush1.bf16.msra.mxu0 0
        %1423 = vmatprep.subr.bf16.mxu0 0
        %1424 = vmatpush1.bf16.msra.mxu0 0
        %1425 = vmatprep.subr.bf16.mxu0 0
        %1426 = vmatpush1.bf16.msra.mxu0 0
        %1427 = vmatprep.subr.bf16.mxu0 0
        %1428 = vmatpush1.bf16.msra.mxu0 0
        %1429 = vmatprep.subr.bf16.mxu0 0
        %1430 = vmatpush1.bf16.msra.mxu0 0
        %1431 = vmatprep.mubr.bf16.mxu0 0
        %1432 = vmatmul.mubr.bf16.gmra.mrb[0].mxu0 %v387
        %v1433 = vpop.f32.mrb[0].mxu0
        %v1434 = vadd.f32 %v1385, %v1433
        %v1435 = vpop.f32.mrb[0].mxu0
        %v1436 = vpop.f32.mrb[0].mxu0
        %v1437 = vadd.f32 %v1385, %v1436
        %v1438 = vpop.f32.mrb[0].mxu0
        %1439 = vdwg.mxu0
        %v1441 = vsel %vm562, %v1302, 0
        %v1444 = vsel %vm562, %v1305, 0
        %v1447 = vsel %vm562, %v1368, 0
        %v1450 = vsel %vm562, %v1371, 0
        %1452 = vmatprep.subr.mxu0 0.0
        %1453 = vmatpush1.xpose.msra.mxu0 %v1447
        %1454 = vmatprep.subr.mxu0 0.0
        %1455 = vmatpush1.xpose.msra.mxu0 %v1450
        %1456 = vmatprep.subr.mxu0 0.0
        %1457 = vmatpush1.xpose.msra.mxu0 0.0
        %1458 = vmatprep.subr.mxu0 0.0
        %1459 = vmatpush1.xpose.msra.mxu0 0.0
        %1460 = vmatprep.subr.mxu0 0.0
        %1461 = vmatpush1.xpose.msra.mxu0 0.0
        %1462 = vmatprep.subr.mxu0 0.0
        %1463 = vmatpush1.xpose.msra.mxu0 0.0
        %1464 = vmatprep.subr.mxu0 0.0
        %1465 = vmatpush1.xpose.msra.mxu0 0.0
        %1466 = vmatprep.subr.mxu0 0.0
        %1467 = vmatpush1.xpose.msra.mxu0 0.0
        %1468 = vmatprep.subr.mxu0 0.0
        %1469 = vmatpush1.xpose.msra.mxu0 0.0
        %1470 = vmatprep.subr.mxu0 0.0
        %1471 = vmatpush1.xpose.msra.mxu0 0.0
        %1472 = vmatprep.subr.mxu0 0.0
        %1473 = vmatpush1.xpose.msra.mxu0 0.0
        %1474 = vmatprep.subr.mxu0 0.0
        %1475 = vmatpush1.xpose.msra.mxu0 0.0
        %1476 = vmatprep.subr.mxu0 0.0
        %1477 = vmatpush1.xpose.msra.mxu0 0.0
        %1478 = vmatprep.subr.mxu0 0.0
        %1479 = vmatpush1.xpose.msra.mxu0 0.0
        %1480 = vmatprep.subr.mxu0 0.0
        %1481 = vmatpush1.xpose.msra.mxu0 0.0
        %1482 = vmatprep.subr.mxu0 0.0
        %1483 = vmatpush1.xpose.msra.mxu0 0.0
        %1484 = vmatprep.subr.mxu0 0.0
        %1485 = vmatpush1.xpose.msra.mxu0 0.0
        %1486 = vmatprep.subr.mxu0 0.0
        %1487 = vmatpush1.xpose.msra.mxu0 0.0
        %1488 = vmatprep.subr.mxu0 0.0
        %1489 = vmatpush1.xpose.msra.mxu0 0.0
        %1490 = vmatprep.subr.mxu0 0.0
        %1491 = vmatpush1.xpose.msra.mxu0 0.0
        %1492 = vmatprep.subr.mxu0 0.0
        %1493 = vmatpush1.xpose.msra.mxu0 0.0
        %1494 = vmatprep.subr.mxu0 0.0
        %1495 = vmatpush1.xpose.msra.mxu0 0.0
        %1496 = vmatprep.subr.mxu0 0.0
        %1497 = vmatpush1.xpose.msra.mxu0 0.0
        %1498 = vmatprep.subr.mxu0 0.0
        %1499 = vmatpush1.xpose.msra.mxu0 0.0
        %1500 = vmatprep.subr.mxu0 0.0
        %1501 = vmatpush1.xpose.msra.mxu0 0.0
        %1502 = vmatprep.subr.mxu0 0.0
        %1503 = vmatpush1.xpose.msra.mxu0 0.0
        %1504 = vmatprep.subr.mxu0 0.0
        %1505 = vmatpush1.xpose.msra.mxu0 0.0
        %1506 = vmatprep.subr.mxu0 0.0
        %1507 = vmatpush1.xpose.msra.mxu0 0.0
        %1508 = vmatprep.subr.mxu0 0.0
        %1509 = vmatpush1.xpose.msra.mxu0 0.0
        %1510 = vmatprep.subr.mxu0 0.0
        %1511 = vmatpush1.xpose.msra.mxu0 0.0
        %1512 = vmatprep.subr.mxu0 0.0
        %1513 = vmatpush1.xpose.msra.mxu0 0.0
        %1514 = vmatprep.subr.mxu0 0.0
        %1515 = vmatpush1.xpose.msra.mxu0 0.0
        %1516 = vmatprep.mubr.f32.mxu0 0.0
        %1517 = vmatmul.mubr.f32.gmra.mrb[0].mxu0 %v1441
        %v1518 = vpop.f32.mrb[0].mxu0
        %v1519 = vadd.f32 0.0, %v1518
        %v1520 = vpop.f32.mrb[0].mxu0
        %1521 = vmatprep.mubr.f32.mxu0 0.0
        %1522 = vmatmul.mubr.f32.gmra.mrb[0].mxu0 %v1444
        %v1523 = vpop.f32.mrb[0].mxu0
        %v1524 = vadd.f32 0.0, %v1523
        %v1525 = vpop.f32.mrb[0].mxu0
        %1526 = vdwg.mxu0
        %v1527 = vsel %vm650, %v1519, -inf
        %1528 = vmax.xlane.f32.xlu0 %v1527
        %v1529 = vpop.xlane.xlu0 %1528
        %v1530 = vsel %vm650, %v1524, -inf
        %1531 = vmax.xlane.f32.xlu0 %v1530
        %v1532 = vpop.xlane.xlu0 %1531
        %v1533 = vsub.f32 %v1519, %v1529
        %v1534 = vsub.f32 %v1524, %v1532
        %v1535 = vmul.f32 %v1533, 1.442695
        %v1536 = vpow.pop %v1535
        %v1537 = vmul.f32 %v1534, 1.442695
        %v1538 = vpow.pop %v1537
        %v1539 = vsel %vm650, %v1536, 0.0
        %1540 = vadd.xlane.f32.xlu0 %v1539
        %v1541 = vpop.xlane.xlu0 %1540
        %v1542 = vsel %vm650, %v1538, 0.0
        %1543 = vadd.xlane.f32.xlu0 %v1542
        %v1544 = vpop.xlane.xlu0 %1543
        %v1545 = vrcp.pop %v1541
        %v1546 = vrcp.pop %v1544
        %v1547 = vmul.f32 %v1536, %v1545
        %v1548 = vmul.f32 %v1538, %v1546
        %v1550 = vsel %vm650, %v1547, 0
        %v1553 = vsel %vm650, %v1548, 0
        %1555 = vmatprep.subr.mxu0 0.0
        %1556 = vmatpush1.msra.mxu0 %v1434
        %1557 = vmatprep.subr.mxu0 0.0
        %1558 = vmatpush1.msra.mxu0 %v1437
        %1559 = vmatprep.subr.mxu0 0.0
        %1560 = vmatpush1.msra.mxu0 0.0
        %1561 = vmatprep.subr.mxu0 0.0
        %1562 = vmatpush1.msra.mxu0 0.0
        %1563 = vmatprep.subr.mxu0 0.0
        %1564 = vmatpush1.msra.mxu0 0.0
        %1565 = vmatprep.subr.mxu0 0.0
        %1566 = vmatpush1.msra.mxu0 0.0
        %1567 = vmatprep.subr.mxu0 0.0
        %1568 = vmatpush1.msra.mxu0 0.0
        %1569 = vmatprep.subr.mxu0 0.0
        %1570 = vmatpush1.msra.mxu0 0.0
        %1571 = vmatprep.subr.mxu0 0.0
        %1572 = vmatpush1.msra.mxu0 0.0
        %1573 = vmatprep.subr.mxu0 0.0
        %1574 = vmatpush1.msra.mxu0 0.0
        %1575 = vmatprep.subr.mxu0 0.0
        %1576 = vmatpush1.msra.mxu0 0.0
        %1577 = vmatprep.subr.mxu0 0.0
        %1578 = vmatpush1.msra.mxu0 0.0
        %1579 = vmatprep.subr.mxu0 0.0
        %1580 = vmatpush1.msra.mxu0 0.0
        %1581 = vmatprep.subr.mxu0 0.0
        %1582 = vmatpush1.msra.mxu0 0.0
        %1583 = vmatprep.subr.mxu0 0.0
        %1584 = vmatpush1.msra.mxu0 0.0
        %1585 = vmatprep.subr.mxu0 0.0
        %1586 = vmatpush1.msra.mxu0 0.0
        %1587 = vmatprep.subr.mxu0 0.0
        %1588 = vmatpush1.msra.mxu0 0.0
        %1589 = vmatprep.subr.mxu0 0.0
        %1590 = vmatpush1.msra.mxu0 0.0
        %1591 = vmatprep.subr.mxu0 0.0
        %1592 = vmatpush1.msra.mxu0 0.0
        %1593 = vmatprep.subr.mxu0 0.0
        %1594 = vmatpush1.msra.mxu0 0.0
        %1595 = vmatprep.subr.mxu0 0.0
        %1596 = vmatpush1.msra.mxu0 0.0
        %1597 = vmatprep.subr.mxu0 0.0
        %1598 = vmatpush1.msra.mxu0 0.0
        %1599 = vmatprep.subr.mxu0 0.0
        %1600 = vmatpush1.msra.mxu0 0.0
        %1601 = vmatprep.subr.mxu0 0.0
        %1602 = vmatpush1.msra.mxu0 0.0
        %1603 = vmatprep.subr.mxu0 0.0
        %1604 = vmatpush1.msra.mxu0 0.0
        %1605 = vmatprep.subr.mxu0 0.0
        %1606 = vmatpush1.msra.mxu0 0.0
        %1607 = vmatprep.subr.mxu0 0.0
        %1608 = vmatpush1.msra.mxu0 0.0
        %1609 = vmatprep.subr.mxu0 0.0
        %1610 = vmatpush1.msra.mxu0 0.0
        %1611 = vmatprep.subr.mxu0 0.0
        %1612 = vmatpush1.msra.mxu0 0.0
        %1613 = vmatprep.subr.mxu0 0.0
        %1614 = vmatpush1.msra.mxu0 0.0
        %1615 = vmatprep.subr.mxu0 0.0
        %1616 = vmatpush1.msra.mxu0 0.0
        %1617 = vmatprep.subr.mxu0 0.0
        %1618 = vmatpush1.msra.mxu0 0.0
        %1619 = vmatprep.mubr.f32.mxu0 0.0
        %1620 = vmatmul.mubr.f32.gmra.mrb[0].mxu0 %v1550
        %v1621 = vpop.f32.mrb[0].mxu0
        %v1622 = vadd.f32 0.0, %v1621
        %v1623 = vpop.f32.mrb[0].mxu0
        %1624 = vmatprep.mubr.f32.mxu0 0.0
        %1625 = vmatmul.mubr.f32.gmra.mrb[0].mxu0 %v1553
        %v1626 = vpop.f32.mrb[0].mxu0
        %v1627 = vadd.f32 0.0, %v1626
        %v1628 = vpop.f32.mrb[0].mxu0
        %1629 = vdwg.mxu0
        %v1630 = vpack.c.bf16 %v1627, %v1622
        %s1631 = scalar_lea.vmem %s3, 8
        %v1632 = vld [vmem:[%s1631] sm:$0xf]
        %v1634 = vsel %vm562, %v1630, 0
        %v1637 = vsel %vm1150, %v1632, 0
        %1639 = vmatprep.subr.bf16.mxu0 0
        %1640 = vmatpush1.bf16.msra.mxu0 %v1637
        %1641 = vmatprep.subr.bf16.mxu0 0
        %1642 = vmatpush1.bf16.msra.mxu0 0
        %1643 = vmatprep.subr.bf16.mxu0 0
        %1644 = vmatpush1.bf16.msra.mxu0 0
        %1645 = vmatprep.subr.bf16.mxu0 0
        %1646 = vmatpush1.bf16.msra.mxu0 0
        %1647 = vmatprep.subr.bf16.mxu0 0
        %1648 = vmatpush1.bf16.msra.mxu0 0
        %1649 = vmatprep.subr.bf16.mxu0 0
        %1650 = vmatpush1.bf16.msra.mxu0 0
        %1651 = vmatprep.subr.bf16.mxu0 0
        %1652 = vmatpush1.bf16.msra.mxu0 0
        %1653 = vmatprep.subr.bf16.mxu0 0
        %1654 = vmatpush1.bf16.msra.mxu0 0
        %1655 = vmatprep.subr.bf16.mxu0 0
        %1656 = vmatpush1.bf16.msra.mxu0 0
        %1657 = vmatprep.subr.bf16.mxu0 0
        %1658 = vmatpush1.bf16.msra.mxu0 0
        %1659 = vmatprep.subr.bf16.mxu0 0
        %1660 = vmatpush1.bf16.msra.mxu0 0
        %1661 = vmatprep.subr.bf16.mxu0 0
        %1662 = vmatpush1.bf16.msra.mxu0 0
        %1663 = vmatprep.subr.bf16.mxu0 0
        %1664 = vmatpush1.bf16.msra.mxu0 0
        %1665 = vmatprep.subr.bf16.mxu0 0
        %1666 = vmatpush1.bf16.msra.mxu0 0
        %1667 = vmatprep.subr.bf16.mxu0 0
        %1668 = vmatpush1.bf16.msra.mxu0 0
        %1669 = vmatprep.subr.bf16.mxu0 0
        %1670 = vmatpush1.bf16.msra.mxu0 0
        %1671 = vmatprep.mubr.bf16.mxu0 0
        %1672 = vmatmul.mubr.bf16.gmra.mrb[0].mxu0 %v1634
        %v1673 = vpop.f32.mrb[0].mxu0
        %v1674 = vadd.f32 0.0, %v1673
        %v1675 = vpop.f32.mrb[0].mxu0
        %v1676 = vpop.f32.mrb[0].mxu0
        %v1677 = vadd.f32 0.0, %v1676
        %v1678 = vpop.f32.mrb[0].mxu0
        %1679 = vdwg.mxu0
        %v1680 = vadd.f32 %v1236, %v1674
        %v1681 = vadd.f32 %v1239, %v1677
        %s1682 = scalar_lea.vmem %s1, 48
        %v1683 = vld [vmem:[%s1682] sm:$0xf]
        %v1684 = vld [vmem:[%s1682 + $0x4] sm:$0xf]
        %v1685 = vld [vmem:[%s1682 + $0x8] sm:$0xf]
        %v1686 = vld [vmem:[%s1682 + $0xc] sm:$0xf]
        %s1687 = scalar_lea.vmem %s2, 3
        %v1688 = vld [vmem:[%s1687] sm:$0x1]
        %v1690 = vlaneseq
        %v1691 = vshrl.u32 %v1690, 7
        %v1692 = vsub.s32 0, %v1691
        %v1693 = vrot.slane %v1688, %v1692
        %v1699 = vunpack.c.l.b16 %v1683
        %v1700 = vunpack.c.l.b16 %v1684
        %v1701 = vunpack.c.l.b16 %v1685
        %v1702 = vunpack.c.l.b16 %v1686
        %v1703 = vpack.c.b16 %v1700, %v1699
        %v1704 = vpack.c.b16 %v1702, %v1701
        %1707 = vmatprep.subr.bf16.mxu0 0
        %1708 = vmatpush1.bf16.msra.mxu0 %v1703
        %1709 = vmatprep.subr.bf16.mxu0 0
        %1710 = vmatpush1.bf16.msra.mxu0 %v1704
        %1711 = vmatprep.subr.bf16.mxu0 0
        %1712 = vmatpush1.bf16.msra.mxu0 0
        %1713 = vmatprep.subr.bf16.mxu0 0
        %1714 = vmatpush1.bf16.msra.mxu0 0
        %1715 = vmatprep.subr.bf16.mxu0 0
        %1716 = vmatpush1.bf16.msra.mxu0 0
        %1717 = vmatprep.subr.bf16.mxu0 0
        %1718 = vmatpush1.bf16.msra.mxu0 0
        %1719 = vmatprep.subr.bf16.mxu0 0
        %1720 = vmatpush1.bf16.msra.mxu0 0
        %1721 = vmatprep.subr.bf16.mxu0 0
        %1722 = vmatpush1.bf16.msra.mxu0 0
        %1723 = vmatprep.subr.bf16.mxu0 0
        %1724 = vmatpush1.bf16.msra.mxu0 0
        %1725 = vmatprep.subr.bf16.mxu0 0
        %1726 = vmatpush1.bf16.msra.mxu0 0
        %1727 = vmatprep.subr.bf16.mxu0 0
        %1728 = vmatpush1.bf16.msra.mxu0 0
        %1729 = vmatprep.subr.bf16.mxu0 0
        %1730 = vmatpush1.bf16.msra.mxu0 0
        %1731 = vmatprep.subr.bf16.mxu0 0
        %1732 = vmatpush1.bf16.msra.mxu0 0
        %1733 = vmatprep.subr.bf16.mxu0 0
        %1734 = vmatpush1.bf16.msra.mxu0 0
        %1735 = vmatprep.subr.bf16.mxu0 0
        %1736 = vmatpush1.bf16.msra.mxu0 0
        %1737 = vmatprep.subr.bf16.mxu0 0
        %1738 = vmatpush1.bf16.msra.mxu0 0
        %1739 = vmatprep.mubr.bf16.mxu0 0
        %1740 = vmatmul.mubr.bf16.gmra.mrb[0].mxu0 %v387
        %v1741 = vpop.f32.mrb[0].mxu0
        %v1742 = vadd.f32 %v1693, %v1741
        %v1743 = vpop.f32.mrb[0].mxu0
        %v1744 = vpop.f32.mrb[0].mxu0
        %v1745 = vadd.f32 %v1693, %v1744
        %v1746 = vpop.f32.mrb[0].mxu0
        %1747 = vdwg.mxu0
        %s1748 = scalar_lea.vmem %s1, 112
        %v1749 = vld [vmem:[%s1748] sm:$0xf]
        %v1750 = vld [vmem:[%s1748 + $0x4] sm:$0xf]
        %v1751 = vld [vmem:[%s1748 + $0x8] sm:$0xf]
        %v1752 = vld [vmem:[%s1748 + $0xc] sm:$0xf]
        %s1753 = scalar_lea.vmem %s2, 7
        %v1754 = vld [vmem:[%s1753] sm:$0x1]
        %v1756 = vlaneseq
        %v1757 = vshrl.u32 %v1756, 7
        %v1758 = vsub.s32 0, %v1757
        %v1759 = vrot.slane %v1754, %v1758
        %v1765 = vunpack.c.l.b16 %v1749
        %v1766 = vunpack.c.l.b16 %v1750
        %v1767 = vunpack.c.l.b16 %v1751
        %v1768 = vunpack.c.l.b16 %v1752
        %v1769 = vpack.c.b16 %v1766, %v1765
        %v1770 = vpack.c.b16 %v1768, %v1767
        %1773 = vmatprep.subr.bf16.mxu0 0
        %1774 = vmatpush1.bf16.msra.mxu0 %v1769
        %1775 = vmatprep.subr.bf16.mxu0 0
        %1776 = vmatpush1.bf16.msra.mxu0 %v1770
        %1777 = vmatprep.subr.bf16.mxu0 0
        %1778 = vmatpush1.bf16.msra.mxu0 0
        %1779 = vmatprep.subr.bf16.mxu0 0
        %1780 = vmatpush1.bf16.msra.mxu0 0
        %1781 = vmatprep.subr.bf16.mxu0 0
        %1782 = vmatpush1.bf16.msra.mxu0 0
        %1783 = vmatprep.subr.bf16.mxu0 0
        %1784 = vmatpush1.bf16.msra.mxu0 0
        %1785 = vmatprep.subr.bf16.mxu0 0
        %1786 = vmatpush1.bf16.msra.mxu0 0
        %1787 = vmatprep.subr.bf16.mxu0 0
        %1788 = vmatpush1.bf16.msra.mxu0 0
        %1789 = vmatprep.subr.bf16.mxu0 0
        %1790 = vmatpush1.bf16.msra.mxu0 0
        %1791 = vmatprep.subr.bf16.mxu0 0
        %1792 = vmatpush1.bf16.msra.mxu0 0
        %1793 = vmatprep.subr.bf16.mxu0 0
        %1794 = vmatpush1.bf16.msra.mxu0 0
        %1795 = vmatprep.subr.bf16.mxu0 0
        %1796 = vmatpush1.bf16.msra.mxu0 0
        %1797 = vmatprep.subr.bf16.mxu0 0
        %1798 = vmatpush1.bf16.msra.mxu0 0
        %1799 = vmatprep.subr.bf16.mxu0 0
        %1800 = vmatpush1.bf16.msra.mxu0 0
        %1801 = vmatprep.subr.bf16.mxu0 0
        %1802 = vmatpush1.bf16.msra.mxu0 0
        %1803 = vmatprep.subr.bf16.mxu0 0
        %1804 = vmatpush1.bf16.msra.mxu0 0
        %1805 = vmatprep.mubr.bf16.mxu0 0
        %1806 = vmatmul.mubr.bf16.gmra.mrb[0].mxu0 %v387
        %v1807 = vpop.f32.mrb[0].mxu0
        %v1808 = vadd.f32 %v1759, %v1807
        %v1809 = vpop.f32.mrb[0].mxu0
        %v1810 = vpop.f32.mrb[0].mxu0
        %v1811 = vadd.f32 %v1759, %v1810
        %v1812 = vpop.f32.mrb[0].mxu0
        %1813 = vdwg.mxu0
        %s1814 = scalar_lea.vmem %s1, 176
        %v1815 = vld [vmem:[%s1814] sm:$0xf]
        %v1816 = vld [vmem:[%s1814 + $0x4] sm:$0xf]
        %v1817 = vld [vmem:[%s1814 + $0x8] sm:$0xf]
        %v1818 = vld [vmem:[%s1814 + $0xc] sm:$0xf]
        %s1819 = scalar_lea.vmem %s2, 11
        %v1820 = vld [vmem:[%s1819] sm:$0x1]
        %v1822 = vlaneseq
        %v1823 = vshrl.u32 %v1822, 7
        %v1824 = vsub.s32 0, %v1823
        %v1825 = vrot.slane %v1820, %v1824
        %v1831 = vunpack.c.l.b16 %v1815
        %v1832 = vunpack.c.l.b16 %v1816
        %v1833 = vunpack.c.l.b16 %v1817
        %v1834 = vunpack.c.l.b16 %v1818
        %v1835 = vpack.c.b16 %v1832, %v1831
        %v1836 = vpack.c.b16 %v1834, %v1833
        %1839 = vmatprep.subr.bf16.mxu0 0
        %1840 = vmatpush1.bf16.msra.mxu0 %v1835
        %1841 = vmatprep.subr.bf16.mxu0 0
        %1842 = vmatpush1.bf16.msra.mxu0 %v1836
        %1843 = vmatprep.subr.bf16.mxu0 0
        %1844 = vmatpush1.bf16.msra.mxu0 0
        %1845 = vmatprep.subr.bf16.mxu0 0
        %1846 = vmatpush1.bf16.msra.mxu0 0
        %1847 = vmatprep.subr.bf16.mxu0 0
        %1848 = vmatpush1.bf16.msra.mxu0 0
        %1849 = vmatprep.subr.bf16.mxu0 0
        %1850 = vmatpush1.bf16.msra.mxu0 0
        %1851 = vmatprep.subr.bf16.mxu0 0
        %1852 = vmatpush1.bf16.msra.mxu0 0
        %1853 = vmatprep.subr.bf16.mxu0 0
        %1854 = vmatpush1.bf16.msra.mxu0 0
        %1855 = vmatprep.subr.bf16.mxu0 0
        %1856 = vmatpush1.bf16.msra.mxu0 0
        %1857 = vmatprep.subr.bf16.mxu0 0
        %1858 = vmatpush1.bf16.msra.mxu0 0
        %1859 = vmatprep.subr.bf16.mxu0 0
        %1860 = vmatpush1.bf16.msra.mxu0 0
        %1861 = vmatprep.subr.bf16.mxu0 0
        %1862 = vmatpush1.bf16.msra.mxu0 0
        %1863 = vmatprep.subr.bf16.mxu0 0
        %1864 = vmatpush1.bf16.msra.mxu0 0
        %1865 = vmatprep.subr.bf16.mxu0 0
        %1866 = vmatpush1.bf16.msra.mxu0 0
        %1867 = vmatprep.subr.bf16.mxu0 0
        %1868 = vmatpush1.bf16.msra.mxu0 0
        %1869 = vmatprep.subr.bf16.mxu0 0
        %1870 = vmatpush1.bf16.msra.mxu0 0
        %1871 = vmatprep.mubr.bf16.mxu0 0
        %1872 = vmatmul.mubr.bf16.gmra.mrb[0].mxu0 %v387
        %v1873 = vpop.f32.mrb[0].mxu0
        %v1874 = vadd.f32 %v1825, %v1873
        %v1875 = vpop.f32.mrb[0].mxu0
        %v1876 = vpop.f32.mrb[0].mxu0
        %v1877 = vadd.f32 %v1825, %v1876
        %v1878 = vpop.f32.mrb[0].mxu0
        %1879 = vdwg.mxu0
        %v1881 = vsel %vm562, %v1742, 0
        %v1884 = vsel %vm562, %v1745, 0
        %v1887 = vsel %vm562, %v1808, 0
        %v1890 = vsel %vm562, %v1811, 0
        %1892 = vmatprep.subr.mxu0 0.0
        %1893 = vmatpush1.xpose.msra.mxu0 %v1887
        %1894 = vmatprep.subr.mxu0 0.0
        %1895 = vmatpush1.xpose.msra.mxu0 %v1890
        %1896 = vmatprep.subr.mxu0 0.0
        %1897 = vmatpush1.xpose.msra.mxu0 0.0
        %1898 = vmatprep.subr.mxu0 0.0
        %1899 = vmatpush1.xpose.msra.mxu0 0.0
        %1900 = vmatprep.subr.mxu0 0.0
        %1901 = vmatpush1.xpose.msra.mxu0 0.0
        %1902 = vmatprep.subr.mxu0 0.0
        %1903 = vmatpush1.xpose.msra.mxu0 0.0
        %1904 = vmatprep.subr.mxu0 0.0
        %1905 = vmatpush1.xpose.msra.mxu0 0.0
        %1906 = vmatprep.subr.mxu0 0.0
        %1907 = vmatpush1.xpose.msra.mxu0 0.0
        %1908 = vmatprep.subr.mxu0 0.0
        %1909 = vmatpush1.xpose.msra.mxu0 0.0
        %1910 = vmatprep.subr.mxu0 0.0
        %1911 = vmatpush1.xpose.msra.mxu0 0.0
        %1912 = vmatprep.subr.mxu0 0.0
        %1913 = vmatpush1.xpose.msra.mxu0 0.0
        %1914 = vmatprep.subr.mxu0 0.0
        %1915 = vmatpush1.xpose.msra.mxu0 0.0
        %1916 = vmatprep.subr.mxu0 0.0
        %1917 = vmatpush1.xpose.msra.mxu0 0.0
        %1918 = vmatprep.subr.mxu0 0.0
        %1919 = vmatpush1.xpose.msra.mxu0 0.0
        %1920 = vmatprep.subr.mxu0 0.0
        %1921 = vmatpush1.xpose.msra.mxu0 0.0
        %1922 = vmatprep.subr.mxu0 0.0
        %1923 = vmatpush1.xpose.msra.mxu0 0.0
        %1924 = vmatprep.subr.mxu0 0.0
        %1925 = vmatpush1.xpose.msra.mxu0 0.0
        %1926 = vmatprep.subr.mxu0 0.0
        %1927 = vmatpush1.xpose.msra.mxu0 0.0
        %1928 = vmatprep.subr.mxu0 0.0
        %1929 = vmatpush1.xpose.msra.mxu0 0.0
        %1930 = vmatprep.subr.mxu0 0.0
        %1931 = vmatpush1.xpose.msra.mxu0 0.0
        %1932 = vmatprep.subr.mxu0 0.0
        %1933 = vmatpush1.xpose.msra.mxu0 0.0
        %1934 = vmatprep.subr.mxu0 0.0
        %1935 = vmatpush1.xpose.msra.mxu0 0.0
        %1936 = vmatprep.subr.mxu0 0.0
        %1937 = vmatpush1.xpose.msra.mxu0 0.0
        %1938 = vmatprep.subr.mxu0 0.0
        %1939 = vmatpush1.xpose.msra.mxu0 0.0
        %1940 = vmatprep.subr.mxu0 0.0
        %1941 = vmatpush1.xpose.msra.mxu0 0.0
        %1942 = vmatprep.subr.mxu0 0.0
        %1943 = vmatpush1.xpose.msra.mxu0 0.0
        %1944 = vmatprep.subr.mxu0 0.0
        %1945 = vmatpush1.xpose.msra.mxu0 0.0
        %1946 = vmatprep.subr.mxu0 0.0
        %1947 = vmatpush1.xpose.msra.mxu0 0.0
        %1948 = vmatprep.subr.mxu0 0.0
        %1949 = vmatpush1.xpose.msra.mxu0 0.0
        %1950 = vmatprep.subr.mxu0 0.0
        %1951 = vmatpush1.xpose.msra.mxu0 0.0
        %1952 = vmatprep.subr.mxu0 0.0
        %1953 = vmatpush1.xpose.msra.mxu0 0.0
        %1954 = vmatprep.subr.mxu0 0.0
        %1955 = vmatpush1.xpose.msra.mxu0 0.0
        %1956 = vmatprep.mubr.f32.mxu0 0.0
        %1957 = vmatmul.mubr.f32.gmra.mrb[0].mxu0 %v1881
        %v1958 = vpop.f32.mrb[0].mxu0
        %v1959 = vadd.f32 0.0, %v1958
        %v1960 = vpop.f32.mrb[0].mxu0
        %1961 = vmatprep.mubr.f32.mxu0 0.0
        %1962 = vmatmul.mubr.f32.gmra.mrb[0].mxu0 %v1884
        %v1963 = vpop.f32.mrb[0].mxu0
        %v1964 = vadd.f32 0.0, %v1963
        %v1965 = vpop.f32.mrb[0].mxu0
        %1966 = vdwg.mxu0
        %v1967 = vsel %vm650, %v1959, -inf
        %1968 = vmax.xlane.f32.xlu0 %v1967
        %v1969 = vpop.xlane.xlu0 %1968
        %v1970 = vsel %vm650, %v1964, -inf
        %1971 = vmax.xlane.f32.xlu0 %v1970
        %v1972 = vpop.xlane.xlu0 %1971
        %v1973 = vsub.f32 %v1959, %v1969
        %v1974 = vsub.f32 %v1964, %v1972
        %v1975 = vmul.f32 %v1973, 1.442695
        %v1976 = vpow.pop %v1975
        %v1977 = vmul.f32 %v1974, 1.442695
        %v1978 = vpow.pop %v1977
        %v1979 = vsel %vm650, %v1976, 0.0
        %1980 = vadd.xlane.f32.xlu0 %v1979
        %v1981 = vpop.xlane.xlu0 %1980
        %v1982 = vsel %vm650, %v1978, 0.0
        %1983 = vadd.xlane.f32.xlu0 %v1982
        %v1984 = vpop.xlane.xlu0 %1983
        %v1985 = vrcp.pop %v1981
        %v1986 = vrcp.pop %v1984
        %v1987 = vmul.f32 %v1976, %v1985
        %v1988 = vmul.f32 %v1978, %v1986
        %v1990 = vsel %vm650, %v1987, 0
        %v1993 = vsel %vm650, %v1988, 0
        %1995 = vmatprep.subr.mxu0 0.0
        %1996 = vmatpush1.msra.mxu0 %v1874
        %1997 = vmatprep.subr.mxu0 0.0
        %1998 = vmatpush1.msra.mxu0 %v1877
        %1999 = vmatprep.subr.mxu0 0.0
        %2000 = vmatpush1.msra.mxu0 0.0
        %2001 = vmatprep.subr.mxu0 0.0
        %2002 = vmatpush1.msra.mxu0 0.0
        %2003 = vmatprep.subr.mxu0 0.0
        %2004 = vmatpush1.msra.mxu0 0.0
        %2005 = vmatprep.subr.mxu0 0.0
        %2006 = vmatpush1.msra.mxu0 0.0
        %2007 = vmatprep.subr.mxu0 0.0
        %2008 = vmatpush1.msra.mxu0 0.0
        %2009 = vmatprep.subr.mxu0 0.0
        %2010 = vmatpush1.msra.mxu0 0.0
        %2011 = vmatprep.subr.mxu0 0.0
        %2012 = vmatpush1.msra.mxu0 0.0
        %2013 = vmatprep.subr.mxu0 0.0
        %2014 = vmatpush1.msra.mxu0 0.0
        %2015 = vmatprep.subr.mxu0 0.0
        %2016 = vmatpush1.msra.mxu0 0.0
        %2017 = vmatprep.subr.mxu0 0.0
        %2018 = vmatpush1.msra.mxu0 0.0
        %2019 = vmatprep.subr.mxu0 0.0
        %2020 = vmatpush1.msra.mxu0 0.0
        %2021 = vmatprep.subr.mxu0 0.0
        %2022 = vmatpush1.msra.mxu0 0.0
        %2023 = vmatprep.subr.mxu0 0.0
        %2024 = vmatpush1.msra.mxu0 0.0
        %2025 = vmatprep.subr.mxu0 0.0
        %2026 = vmatpush1.msra.mxu0 0.0
        %2027 = vmatprep.subr.mxu0 0.0
        %2028 = vmatpush1.msra.mxu0 0.0
        %2029 = vmatprep.subr.mxu0 0.0
        %2030 = vmatpush1.msra.mxu0 0.0
        %2031 = vmatprep.subr.mxu0 0.0
        %2032 = vmatpush1.msra.mxu0 0.0
        %2033 = vmatprep.subr.mxu0 0.0
        %2034 = vmatpush1.msra.mxu0 0.0
        %2035 = vmatprep.subr.mxu0 0.0
        %2036 = vmatpush1.msra.mxu0 0.0
        %2037 = vmatprep.subr.mxu0 0.0
        %2038 = vmatpush1.msra.mxu0 0.0
        %2039 = vmatprep.subr.mxu0 0.0
        %2040 = vmatpush1.msra.mxu0 0.0
        %2041 = vmatprep.subr.mxu0 0.0
        %2042 = vmatpush1.msra.mxu0 0.0
        %2043 = vmatprep.subr.mxu0 0.0
        %2044 = vmatpush1.msra.mxu0 0.0
        %2045 = vmatprep.subr.mxu0 0.0
        %2046 = vmatpush1.msra.mxu0 0.0
        %2047 = vmatprep.subr.mxu0 0.0
        %2048 = vmatpush1.msra.mxu0 0.0
        %2049 = vmatprep.subr.mxu0 0.0
        %2050 = vmatpush1.msra.mxu0 0.0
        %2051 = vmatprep.subr.mxu0 0.0
        %2052 = vmatpush1.msra.mxu0 0.0
        %2053 = vmatprep.subr.mxu0 0.0
        %2054 = vmatpush1.msra.mxu0 0.0
        %2055 = vmatprep.subr.mxu0 0.0
        %2056 = vmatpush1.msra.mxu0 0.0
        %2057 = vmatprep.subr.mxu0 0.0
        %2058 = vmatpush1.msra.mxu0 0.0
        %2059 = vmatprep.mubr.f32.mxu0 0.0
        %2060 = vmatmul.mubr.f32.gmra.mrb[0].mxu0 %v1990
        %v2061 = vpop.f32.mrb[0].mxu0
        %v2062 = vadd.f32 0.0, %v2061
        %v2063 = vpop.f32.mrb[0].mxu0
        %2064 = vmatprep.mubr.f32.mxu0 0.0
        %2065 = vmatmul.mubr.f32.gmra.mrb[0].mxu0 %v1993
        %v2066 = vpop.f32.mrb[0].mxu0
        %v2067 = vadd.f32 0.0, %v2066
        %v2068 = vpop.f32.mrb[0].mxu0
        %2069 = vdwg.mxu0
        %v2070 = vpack.c.bf16 %v2067, %v2062
        %s2071 = scalar_lea.vmem %s3, 12
        %v2072 = vld [vmem:[%s2071] sm:$0xf]
        %v2074 = vsel %vm562, %v2070, 0
        %v2077 = vsel %vm1150, %v2072, 0
        %2079 = vmatprep.subr.bf16.mxu0 0
        %2080 = vmatpush1.bf16.msra.mxu0 %v2077
        %2081 = vmatprep.subr.bf16.mxu0 0
        %2082 = vmatpush1.bf16.msra.mxu0 0
        %2083 = vmatprep.subr.bf16.mxu0 0
        %2084 = vmatpush1.bf16.msra.mxu0 0
        %2085 = vmatprep.subr.bf16.mxu0 0
        %2086 = vmatpush1.bf16.msra.mxu0 0
        %2087 = vmatprep.subr.bf16.mxu0 0
        %2088 = vmatpush1.bf16.msra.mxu0 0
        %2089 = vmatprep.subr.bf16.mxu0 0
        %2090 = vmatpush1.bf16.msra.mxu0 0
        %2091 = vmatprep.subr.bf16.mxu0 0
        %2092 = vmatpush1.bf16.msra.mxu0 0
        %2093 = vmatprep.subr.bf16.mxu0 0
        %2094 = vmatpush1.bf16.msra.mxu0 0
        %2095 = vmatprep.subr.bf16.mxu0 0
        %2096 = vmatpush1.bf16.msra.mxu0 0
        %2097 = vmatprep.subr.bf16.mxu0 0
        %2098 = vmatpush1.bf16.msra.mxu0 0
        %2099 = vmatprep.subr.bf16.mxu0 0
        %2100 = vmatpush1.bf16.msra.mxu0 0
        %2101 = vmatprep.subr.bf16.mxu0 0
        %2102 = vmatpush1.bf16.msra.mxu0 0
        %2103 = vmatprep.subr.bf16.mxu0 0
        %2104 = vmatpush1.bf16.msra.mxu0 0
        %2105 = vmatprep.subr.bf16.mxu0 0
        %2106 = vmatpush1.bf16.msra.mxu0 0
        %2107 = vmatprep.subr.bf16.mxu0 0
        %2108 = vmatpush1.bf16.msra.mxu0 0
        %2109 = vmatprep.subr.bf16.mxu0 0
        %2110 = vmatpush1.bf16.msra.mxu0 0
        %2111 = vmatprep.mubr.bf16.mxu0 0
        %2112 = vmatmul.mubr.bf16.gmra.mrb[0].mxu0 %v2074
        %v2113 = vpop.f32.mrb[0].mxu0
        %v2114 = vadd.f32 0.0, %v2113
        %v2115 = vpop.f32.mrb[0].mxu0
        %v2116 = vpop.f32.mrb[0].mxu0
        %v2117 = vadd.f32 0.0, %v2116
        %v2118 = vpop.f32.mrb[0].mxu0
        %2119 = vdwg.mxu0
        %v2120 = vadd.f32 %v1680, %v2114
        %v2121 = vadd.f32 %v1681, %v2117
        %v2122 = vld [vmem:[%s4] sm:$0x1]
        %v2124 = vlaneseq
        %v2125 = vshrl.u32 %v2124, 7
        %v2126 = vsub.s32 0, %v2125
        %v2127 = vrot.slane %v2122, %v2126
        %v2129 = vadd.f32 %v2120, %v2127
        %v2130 = vadd.f32 %v2121, %v2127
        %v2131 = vld [vmem:[%s9] sm:$0x1]
        %s2132 = scalar_lea.vmem %s9, 1
        %v2133 = vld [vmem:[%s2132] sm:$0x1]
        %s2134 = scalar_lea.vmem %s9, 2
        %v2135 = vld [vmem:[%s2134] sm:$0x1]
        %s2136 = scalar_lea.vmem %s9, 3
        %v2137 = vld [vmem:[%s2136] sm:$0x1]
        %v2138 = vadd.f32 %v359, %v2129
        %v2139 = vadd.f32 %v360, %v2130
        %v2140 = vsel %vm385, %v2138, 0.0
        %2141 = vadd.xlane.f32.xlu0 %v2140
        %v2142 = vpop.xlane.xlu0 %2141
        %v2143 = vsel %vm385, %v2139, 0.0
        %2144 = vadd.xlane.f32.xlu0 %v2143
        %v2145 = vpop.xlane.xlu0 %2144
        %v2146 = vrcp.pop 32.0
        %v2147 = vmul.f32 %v2142, %v2146
        %v2148 = vmul.f32 %v2145, %v2146
        %v2149 = vsub.f32 %v2138, %v2147
        %v2150 = vsub.f32 %v2139, %v2148
        %v2151 = vmul.f32 %v2149, %v2149
        %v2152 = vmul.f32 %v2150, %v2150
        %v2153 = vsel %vm385, %v2151, 0.0
        %2154 = vadd.xlane.f32.xlu0 %v2153
        %v2155 = vpop.xlane.xlu0 %2154
        %v2156 = vsel %vm385, %v2152, 0.0
        %2157 = vadd.xlane.f32.xlu0 %v2156
        %v2158 = vpop.xlane.xlu0 %2157
        %v2159 = vmul.f32 %v2155, %v2146
        %v2160 = vmul.f32 %v2158, %v2146
        %v2161 = vadd.f32 %v2159, 1e-05
        %v2162 = vadd.f32 %v2160, 1e-05
        %v2163 = vrsqrt.pop %v2161
        %v2164 = vrsqrt.pop %v2162
        %v2165 = vmul.f32 %v2149, %v2163
        %v2166 = vmul.f32 %v2150, %v2164
        %v2168 = vlaneseq
        %v2169 = vshrl.u32 %v2168, 7
        %v2170 = vsub.s32 0, %v2169
        %v2171 = vrot.slane %v2131, %v2170
        %v2173 = vmul.f32 %v2165, %v2171
        %v2174 = vmul.f32 %v2166, %v2171
        %v2176 = vlaneseq
        %v2177 = vshrl.u32 %v2176, 7
        %v2178 = vsub.s32 0, %v2177
        %v2179 = vrot.slane %v2133, %v2178
        %v2181 = vadd.f32 %v2173, %v2179
        %v2182 = vadd.f32 %v2174, %v2179
        %v2183 = vpack.c.bf16 %v2182, %v2181
        %v2184 = vld [vmem:[%s5] sm:$0xff]
        %v2185 = vld [vmem:[%s5 + $0x8] sm:$0xff]
        %v2186 = vld [vmem:[%s5 + $0x10] sm:$0xff]
        %v2187 = vld [vmem:[%s5 + $0x18] sm:$0xff]
        %v2188 = vld [vmem:[%s5 + $0x20] sm:$0xff]
        %v2189 = vld [vmem:[%s5 + $0x28] sm:$0xff]
        %v2190 = vld [vmem:[%s5 + $0x30] sm:$0xff]
        %v2191 = vld [vmem:[%s5 + $0x38] sm:$0xff]
        %v2192 = vld [vmem:[%s5 + $0x40] sm:$0xff]
        %v2193 = vld [vmem:[%s5 + $0x48] sm:$0xff]
        %v2194 = vld [vmem:[%s5 + $0x50] sm:$0xff]
        %v2195 = vld [vmem:[%s5 + $0x58] sm:$0xff]
        %v2196 = vld [vmem:[%s5 + $0x60] sm:$0xff]
        %v2197 = vld [vmem:[%s5 + $0x68] sm:$0xff]
        %v2198 = vld [vmem:[%s5 + $0x70] sm:$0xff]
        %v2199 = vld [vmem:[%s5 + $0x78] sm:$0xff]
        %v2200 = vld [vmem:[%s5 + $0x80] sm:$0xff]
        %v2201 = vld [vmem:[%s5 + $0x88] sm:$0xff]
        %v2202 = vld [vmem:[%s5 + $0x90] sm:$0xff]
        %v2203 = vld [vmem:[%s5 + $0x98] sm:$0xff]
        %v2204 = vld [vmem:[%s5 + $0xa0] sm:$0xff]
        %v2205 = vld [vmem:[%s5 + $0xa8] sm:$0xff]
        %v2206 = vld [vmem:[%s5 + $0xb0] sm:$0xff]
        %v2207 = vld [vmem:[%s5 + $0xb8] sm:$0xff]
        %v2208 = vld [vmem:[%s5 + $0xc0] sm:$0xff]
        %v2209 = vld [vmem:[%s5 + $0xc8] sm:$0xff]
        %v2210 = vld [vmem:[%s5 + $0xd0] sm:$0xff]
        %v2211 = vld [vmem:[%s5 + $0xd8] sm:$0xff]
        %v2212 = vld [vmem:[%s5 + $0xe0] sm:$0xff]
        %v2213 = vld [vmem:[%s5 + $0xe8] sm:$0xff]
        %v2214 = vld [vmem:[%s5 + $0xf0] sm:$0xff]
        %v2215 = vld [vmem:[%s5 + $0xf8] sm:$0xff]
        %v2216 = vld [vmem:[%s6] sm:$0xff]
        %v2217 = vld [vmem:[%s6 + $0x8] sm:$0xff]
        %v2220 = vlaneseq
        %v2221 = vshrl.u32 %v2220, 7
        %v2222 = vsub.s32 0, %v2221
        %v2223 = vrot.slane %v2216, %v2222
        %v2224 = vlaneseq
        %v2225 = vshrl.u32 %v2224, 7
        %v2226 = vsub.s32 1, %v2225
        %v2227 = vrot.slane %v2216, %v2226
        %v2228 = vlaneseq
        %v2229 = vshrl.u32 %v2228, 7
        %v2230 = vsub.s32 2, %v2229
        %v2231 = vrot.slane %v2216, %v2230
        %v2232 = vlaneseq
        %v2233 = vshrl.u32 %v2232, 7
        %v2234 = vsub.s32 3, %v2233
        %v2235 = vrot.slane %v2216, %v2234
        %v2236 = vlaneseq
        %v2237 = vshrl.u32 %v2236, 7
        %v2238 = vsub.s32 4, %v2237
        %v2239 = vrot.slane %v2216, %v2238
        %v2240 = vlaneseq
        %v2241 = vshrl.u32 %v2240, 7
        %v2242 = vsub.s32 5, %v2241
        %v2243 = vrot.slane %v2216, %v2242
        %v2244 = vlaneseq
        %v2245 = vshrl.u32 %v2244, 7
        %v2246 = vsub.s32 6, %v2245
        %v2247 = vrot.slane %v2216, %v2246
        %v2248 = vlaneseq
        %v2249 = vshrl.u32 %v2248, 7
        %v2250 = vsub.s32 7, %v2249
        %v2251 = vrot.slane %v2216, %v2250
        %v2252 = vlaneseq
        %v2253 = vshrl.u32 %v2252, 7
        %v2254 = vsub.s32 0, %v2253
        %v2255 = vrot.slane %v2217, %v2254
        %v2256 = vlaneseq
        %v2257 = vshrl.u32 %v2256, 7
        %v2258 = vsub.s32 1, %v2257
        %v2259 = vrot.slane %v2217, %v2258
        %v2260 = vlaneseq
        %v2261 = vshrl.u32 %v2260, 7
        %v2262 = vsub.s32 2, %v2261
        %v2263 = vrot.slane %v2217, %v2262
        %v2264 = vlaneseq
        %v2265 = vshrl.u32 %v2264, 7
        %v2266 = vsub.s32 3, %v2265
        %v2267 = vrot.slane %v2217, %v2266
        %v2268 = vlaneseq
        %v2269 = vshrl.u32 %v2268, 7
        %v2270 = vsub.s32 4, %v2269
        %v2271 = vrot.slane %v2217, %v2270
        %v2272 = vlaneseq
        %v2273 = vshrl.u32 %v2272, 7
        %v2274 = vsub.s32 5, %v2273
        %v2275 = vrot.slane %v2217, %v2274
        %v2276 = vlaneseq
        %v2277 = vshrl.u32 %v2276, 7
        %v2278 = vsub.s32 6, %v2277
        %v2279 = vrot.slane %v2217, %v2278
        %v2280 = vlaneseq
        %v2281 = vshrl.u32 %v2280, 7
        %v2282 = vsub.s32 7, %v2281
        %v2283 = vrot.slane %v2217, %v2282
        %v2332 = vunpack.c.l.b16 %v2184
        %v2333 = vunpack.c.h.b16 %v2184
        %v2334 = vunpack.c.l.b16 %v2185
        %v2335 = vunpack.c.h.b16 %v2185
        %v2336 = vunpack.c.l.b16 %v2186
        %v2337 = vunpack.c.h.b16 %v2186
        %v2338 = vunpack.c.l.b16 %v2187
        %v2339 = vunpack.c.h.b16 %v2187
        %v2340 = vunpack.c.l.b16 %v2188
        %v2341 = vunpack.c.h.b16 %v2188
        %v2342 = vunpack.c.l.b16 %v2189
        %v2343 = vunpack.c.h.b16 %v2189
        %v2344 = vunpack.c.l.b16 %v2190
        %v2345 = vunpack.c.h.b16 %v2190
        %v2346 = vunpack.c.l.b16 %v2191
        %v2347 = vunpack.c.h.b16 %v2191
        %v2348 = vunpack.c.l.b16 %v2192
        %v2349 = vunpack.c.h.b16 %v2192
        %v2350 = vunpack.c.l.b16 %v2193
        %v2351 = vunpack.c.h.b16 %v2193
        %v2352 = vunpack.c.l.b16 %v2194
        %v2353 = vunpack.c.h.b16 %v2194
        %v2354 = vunpack.c.l.b16 %v2195
        %v2355 = vunpack.c.h.b16 %v2195
        %v2356 = vunpack.c.l.b16 %v2196
        %v2357 = vunpack.c.h.b16 %v2196
        %v2358 = vunpack.c.l.b16 %v2197
        %v2359 = vunpack.c.h.b16 %v2197
        %v2360 = vunpack.c.l.b16 %v2198
        %v2361 = vunpack.c.h.b16 %v2198
        %v2362 = vunpack.c.l.b16 %v2199
        %v2363 = vunpack.c.h.b16 %v2199
        %v2364 = vunpack.c.l.b16 %v2200
        %v2365 = vunpack.c.h.b16 %v2200
        %v2366 = vunpack.c.l.b16 %v2201
        %v2367 = vunpack.c.h.b16 %v2201
        %v2368 = vunpack.c.l.b16 %v2202
        %v2369 = vunpack.c.h.b16 %v2202
        %v2370 = vunpack.c.l.b16 %v2203
        %v2371 = vunpack.c.h.b16 %v2203
        %v2372 = vunpack.c.l.b16 %v2204
        %v2373 = vunpack.c.h.b16 %v2204
        %v2374 = vunpack.c.l.b16 %v2205
        %v2375 = vunpack.c.h.b16 %v2205
        %v2376 = vunpack.c.l.b16 %v2206
        %v2377 = vunpack.c.h.b16 %v2206
        %v2378 = vunpack.c.l.b16 %v2207
        %v2379 = vunpack.c.h.b16 %v2207
        %v2380 = vunpack.c.l.b16 %v2208
        %v2381 = vunpack.c.h.b16 %v2208
        %v2382 = vunpack.c.l.b16 %v2209
        %v2383 = vunpack.c.h.b16 %v2209
        %v2384 = vunpack.c.l.b16 %v2210
        %v2385 = vunpack.c.h.b16 %v2210
        %v2386 = vunpack.c.l.b16 %v2211
        %v2387 = vunpack.c.h.b16 %v2211
        %v2388 = vunpack.c.l.b16 %v2212
        %v2389 = vunpack.c.h.b16 %v2212
        %v2390 = vunpack.c.l.b16 %v2213
        %v2391 = vunpack.c.h.b16 %v2213
        %v2392 = vunpack.c.l.b16 %v2214
        %v2393 = vunpack.c.h.b16 %v2214
        %v2394 = vunpack.c.l.b16 %v2215
        %v2395 = vunpack.c.h.b16 %v2215
        %v2396 = vpack.c.b16 %v2348, %v2332
        %v2397 = vpack.c.b16 %v2349, %v2333
        %v2398 = vpack.c.b16 %v2350, %v2334
        %v2399 = vpack.c.b16 %v2351, %v2335
        %v2400 = vpack.c.b16 %v2352, %v2336
        %v2401 = vpack.c.b16 %v2353, %v2337
        %v2402 = vpack.c.b16 %v2354, %v2338
        %v2403 = vpack.c.b16 %v2355, %v2339
        %v2404 = vpack.c.b16 %v2356, %v2340
        %v2405 = vpack.c.b16 %v2357, %v2341
        %v2406 = vpack.c.b16 %v2358, %v2342
        %v2407 = vpack.c.b16 %v2359, %v2343
        %v2408 = vpack.c.b16 %v2360, %v2344
        %v2409 = vpack.c.b16 %v2361, %v2345
        %v2410 = vpack.c.b16 %v2362, %v2346
        %v2411 = vpack.c.b16 %v2363, %v2347
        %v2412 = vpack.c.b16 %v2380, %v2364
        %v2413 = vpack.c.b16 %v2381, %v2365
        %v2414 = vpack.c.b16 %v2382, %v2366
        %v2415 = vpack.c.b16 %v2383, %v2367
        %v2416 = vpack.c.b16 %v2384, %v2368
        %v2417 = vpack.c.b16 %v2385, %v2369
        %v2418 = vpack.c.b16 %v2386, %v2370
        %v2419 = vpack.c.b16 %v2387, %v2371
        %v2420 = vpack.c.b16 %v2388, %v2372
        %v2421 = vpack.c.b16 %v2389, %v2373
        %v2422 = vpack.c.b16 %v2390, %v2374
        %v2423 = vpack.c.b16 %v2391, %v2375
        %v2424 = vpack.c.b16 %v2392, %v2376
        %v2425 = vpack.c.b16 %v2393, %v2377
        %v2426 = vpack.c.b16 %v2394, %v2378
        %v2427 = vpack.c.b16 %v2395, %v2379
        %v2461 = vsel %vm385, %v2183, 0
        %2463 = vmatprep.subr.bf16.mxu0 %v2397
        %2464 = vmatpush1.bf16.msra.mxu0 %v2396
        %2465 = vmatprep.subr.bf16.mxu0 %v2413
        %2466 = vmatpush1.bf16.msra.mxu0 %v2412
        %2467 = vmatprep.subr.bf16.mxu0 0
        %2468 = vmatpush1.bf16.msra.mxu0 0
        %2469 = vmatprep.subr.bf16.mxu0 0
        %2470 = vmatpush1.bf16.msra.mxu0 0
        %2471 = vmatprep.subr.bf16.mxu0 0
        %2472 = vmatpush1.bf16.msra.mxu0 0
        %2473 = vmatprep.subr.bf16.mxu0 0
        %2474 = vmatpush1.bf16.msra.mxu0 0
        %2475 = vmatprep.subr.bf16.mxu0 0
        %2476 = vmatpush1.bf16.msra.mxu0 0
        %2477 = vmatprep.subr.bf16.mxu0 0
        %2478 = vmatpush1.bf16.msra.mxu0 0
        %2479 = vmatprep.subr.bf16.mxu0 0
        %2480 = vmatpush1.bf16.msra.mxu0 0
        %2481 = vmatprep.subr.bf16.mxu0 0
        %2482 = vmatpush1.bf16.msra.mxu0 0
        %2483 = vmatprep.subr.bf16.mxu0 0
        %2484 = vmatpush1.bf16.msra.mxu0 0
        %2485 = vmatprep.subr.bf16.mxu0 0
        %2486 = vmatpush1.bf16.msra.mxu0 0
        %2487 = vmatprep.subr.bf16.mxu0 0
        %2488 = vmatpush1.bf16.msra.mxu0 0
        %2489 = vmatprep.subr.bf16.mxu0 0
        %2490 = vmatpush1.bf16.msra.mxu0 0
        %2491 = vmatprep.subr.bf16.mxu0 0
        %2492 = vmatpush1.bf16.msra.mxu0 0
        %2493 = vmatprep.subr.bf16.mxu0 0
        %2494 = vmatpush1.bf16.msra.mxu0 0
        %2495 = vmatprep.mubr.bf16.mxu0 0
        %2496 = vmatmul.mubr.bf16.gmra.mrb[0].mxu0 %v2461
        %v2497 = vpop.f32.mrb[0].mxu0
        %v2498 = vadd.f32 %v2223, %v2497
        %v2499 = vpop.f32.mrb[0].mxu0
        %v2500 = vadd.f32 %v2227, %v2499
        %v2501 = vpop.f32.mrb[0].mxu0
        %v2502 = vadd.f32 %v2223, %v2501
        %v2503 = vpop.f32.mrb[0].mxu0
        %v2504 = vadd.f32 %v2227, %v2503
        %2505 = vdwg.mxu0
        %2506 = vmatprep.subr.bf16.mxu0 %v2399
        %2507 = vmatpush1.bf16.msra.mxu0 %v2398
        %2508 = vmatprep.subr.bf16.mxu0 %v2415
        %2509 = vmatpush1.bf16.msra.mxu0 %v2414
        %2510 = vmatprep.subr.bf16.mxu0 0
        %2511 = vmatpush1.bf16.msra.mxu0 0
        %2512 = vmatprep.subr.bf16.mxu0 0
        %2513 = vmatpush1.bf16.msra.mxu0 0
        %2514 = vmatprep.subr.bf16.mxu0 0
        %2515 = vmatpush1.bf16.msra.mxu0 0
        %2516 = vmatprep.subr.bf16.mxu0 0
        %2517 = vmatpush1.bf16.msra.mxu0 0
        %2518 = vmatprep.subr.bf16.mxu0 0
        %2519 = vmatpush1.bf16.msra.mxu0 0
        %2520 = vmatprep.subr.bf16.mxu0 0
        %2521 = vmatpush1.bf16.msra.mxu0 0
        %2522 = vmatprep.subr.bf16.mxu0 0
        %2523 = vmatpush1.bf16.msra.mxu0 0
        %2524 = vmatprep.subr.bf16.mxu0 0
        %2525 = vmatpush1.bf16.msra.mxu0 0
        %2526 = vmatprep.subr.bf16.mxu0 0
        %2527 = vmatpush1.bf16.msra.mxu0 0
        %2528 = vmatprep.subr.bf16.mxu0 0
        %2529 = vmatpush1.bf16.msra.mxu0 0
        %2530 = vmatprep.subr.bf16.mxu0 0
        %2531 = vmatpush1.bf16.msra.mxu0 0
        %2532 = vmatprep.subr.bf16.mxu0 0
        %2533 = vmatpush1.bf16.msra.mxu0 0
        %2534 = vmatprep.subr.bf16.mxu0 0
        %2535 = vmatpush1.bf16.msra.mxu0 0
        %2536 = vmatprep.subr.bf16.mxu0 0
        %2537 = vmatpush1.bf16.msra.mxu0 0
        %2538 = vmatprep.mubr.bf16.mxu0 0
        %2539 = vmatmul.mubr.bf16.gmra.mrb[0].mxu0 %v2461
        %v2540 = vpop.f32.mrb[0].mxu0
        %v2541 = vadd.f32 %v2231, %v2540
        %v2542 = vpop.f32.mrb[0].mxu0
        %v2543 = vadd.f32 %v2235, %v2542
        %v2544 = vpop.f32.mrb[0].mxu0
        %v2545 = vadd.f32 %v2231, %v2544
        %v2546 = vpop.f32.mrb[0].mxu0
        %v2547 = vadd.f32 %v2235, %v2546
        %2548 = vdwg.mxu0
        %2549 = vmatprep.subr.bf16.mxu0 %v2401
        %2550 = vmatpush1.bf16.msra.mxu0 %v2400
        %2551 = vmatprep.subr.bf16.mxu0 %v2417
        %2552 = vmatpush1.bf16.msra.mxu0 %v2416
        %2553 = vmatprep.subr.bf16.mxu0 0
        %2554 = vmatpush1.bf16.msra.mxu0 0
        %2555 = vmatprep.subr.bf16.mxu0 0
        %2556 = vmatpush1.bf16.msra.mxu0 0
        %2557 = vmatprep.subr.bf16.mxu0 0
        %2558 = vmatpush1.bf16.msra.mxu0 0
        %2559 = vmatprep.subr.bf16.mxu0 0
        %2560 = vmatpush1.bf16.msra.mxu0 0
        %2561 = vmatprep.subr.bf16.mxu0 0
        %2562 = vmatpush1.bf16.msra.mxu0 0
        %2563 = vmatprep.subr.bf16.mxu0 0
        %2564 = vmatpush1.bf16.msra.mxu0 0
        %2565 = vmatprep.subr.bf16.mxu0 0
        %2566 = vmatpush1.bf16.msra.mxu0 0
        %2567 = vmatprep.subr.bf16.mxu0 0
        %2568 = vmatpush1.bf16.msra.mxu0 0
        %2569 = vmatprep.subr.bf16.mxu0 0
        %2570 = vmatpush1.bf16.msra.mxu0 0
        %2571 = vmatprep.subr.bf16.mxu0 0
        %2572 = vmatpush1.bf16.msra.mxu0 0
        %2573 = vmatprep.subr.bf16.mxu0 0
        %2574 = vmatpush1.bf16.msra.mxu0 0
        %2575 = vmatprep.subr.bf16.mxu0 0
        %2576 = vmatpush1.bf16.msra.mxu0 0
        %2577 = vmatprep.subr.bf16.mxu0 0
        %2578 = vmatpush1.bf16.msra.mxu0 0
        %2579 = vmatprep.subr.bf16.mxu0 0
        %2580 = vmatpush1.bf16.msra.mxu0 0
        %2581 = vmatprep.mubr.bf16.mxu0 0
        %2582 = vmatmul.mubr.bf16.gmra.mrb[0].mxu0 %v2461
        %v2583 = vpop.f32.mrb[0].mxu0
        %v2584 = vadd.f32 %v2239, %v2583
        %v2585 = vpop.f32.mrb[0].mxu0
        %v2586 = vadd.f32 %v2243, %v2585
        %v2587 = vpop.f32.mrb[0].mxu0
        %v2588 = vadd.f32 %v2239, %v2587
        %v2589 = vpop.f32.mrb[0].mxu0
        %v2590 = vadd.f32 %v2243, %v2589
        %2591 = vdwg.mxu0
        %2592 = vmatprep.subr.bf16.mxu0 %v2403
        %2593 = vmatpush1.bf16.msra.mxu0 %v2402
        %2594 = vmatprep.subr.bf16.mxu0 %v2419
        %2595 = vmatpush1.bf16.msra.mxu0 %v2418
        %2596 = vmatprep.subr.bf16.mxu0 0
        %2597 = vmatpush1.bf16.msra.mxu0 0
        %2598 = vmatprep.subr.bf16.mxu0 0
        %2599 = vmatpush1.bf16.msra.mxu0 0
        %2600 = vmatprep.subr.bf16.mxu0 0
        %2601 = vmatpush1.bf16.msra.mxu0 0
        %2602 = vmatprep.subr.bf16.mxu0 0
        %2603 = vmatpush1.bf16.msra.mxu0 0
        %2604 = vmatprep.subr.bf16.mxu0 0
        %2605 = vmatpush1.bf16.msra.mxu0 0
        %2606 = vmatprep.subr.bf16.mxu0 0
        %2607 = vmatpush1.bf16.msra.mxu0 0
        %2608 = vmatprep.subr.bf16.mxu0 0
        %2609 = vmatpush1.bf16.msra.mxu0 0
        %2610 = vmatprep.subr.bf16.mxu0 0
        %2611 = vmatpush1.bf16.msra.mxu0 0
        %2612 = vmatprep.subr.bf16.mxu0 0
        %2613 = vmatpush1.bf16.msra.mxu0 0
        %2614 = vmatprep.subr.bf16.mxu0 0
        %2615 = vmatpush1.bf16.msra.mxu0 0
        %2616 = vmatprep.subr.bf16.mxu0 0
        %2617 = vmatpush1.bf16.msra.mxu0 0
        %2618 = vmatprep.subr.bf16.mxu0 0
        %2619 = vmatpush1.bf16.msra.mxu0 0
        %2620 = vmatprep.subr.bf16.mxu0 0
        %2621 = vmatpush1.bf16.msra.mxu0 0
        %2622 = vmatprep.subr.bf16.mxu0 0
        %2623 = vmatpush1.bf16.msra.mxu0 0
        %2624 = vmatprep.mubr.bf16.mxu0 0
        %2625 = vmatmul.mubr.bf16.gmra.mrb[0].mxu0 %v2461
        %v2626 = vpop.f32.mrb[0].mxu0
        %v2627 = vadd.f32 %v2247, %v2626
        %v2628 = vpop.f32.mrb[0].mxu0
        %v2629 = vadd.f32 %v2251, %v2628
        %v2630 = vpop.f32.mrb[0].mxu0
        %v2631 = vadd.f32 %v2247, %v2630
        %v2632 = vpop.f32.mrb[0].mxu0
        %v2633 = vadd.f32 %v2251, %v2632
        %2634 = vdwg.mxu0
        %2635 = vmatprep.subr.bf16.mxu0 %v2405
        %2636 = vmatpush1.bf16.msra.mxu0 %v2404
        %2637 = vmatprep.subr.bf16.mxu0 %v2421
        %2638 = vmatpush1.bf16.msra.mxu0 %v2420
        %2639 = vmatprep.subr.bf16.mxu0 0
        %2640 = vmatpush1.bf16.msra.mxu0 0
        %2641 = vmatprep.subr.bf16.mxu0 0
        %2642 = vmatpush1.bf16.msra.mxu0 0
        %2643 = vmatprep.subr.bf16.mxu0 0
        %2644 = vmatpush1.bf16.msra.mxu0 0
        %2645 = vmatprep.subr.bf16.mxu0 0
        %2646 = vmatpush1.bf16.msra.mxu0 0
        %2647 = vmatprep.subr.bf16.mxu0 0
        %2648 = vmatpush1.bf16.msra.mxu0 0
        %2649 = vmatprep.subr.bf16.mxu0 0
        %2650 = vmatpush1.bf16.msra.mxu0 0
        %2651 = vmatprep.subr.bf16.mxu0 0
        %2652 = vmatpush1.bf16.msra.mxu0 0
        %2653 = vmatprep.subr.bf16.mxu0 0
        %2654 = vmatpush1.bf16.msra.mxu0 0
        %2655 = vmatprep.subr.bf16.mxu0 0
        %2656 = vmatpush1.bf16.msra.mxu0 0
        %2657 = vmatprep.subr.bf16.mxu0 0
        %2658 = vmatpush1.bf16.msra.mxu0 0
        %2659 = vmatprep.subr.bf16.mxu0 0
        %2660 = vmatpush1.bf16.msra.mxu0 0
        %2661 = vmatprep.subr.bf16.mxu0 0
        %2662 = vmatpush1.bf16.msra.mxu0 0
        %2663 = vmatprep.subr.bf16.mxu0 0
        %2664 = vmatpush1.bf16.msra.mxu0 0
        %2665 = vmatprep.subr.bf16.mxu0 0
        %2666 = vmatpush1.bf16.msra.mxu0 0
        %2667 = vmatprep.mubr.bf16.mxu0 0
        %2668 = vmatmul.mubr.bf16.gmra.mrb[0].mxu0 %v2461
        %v2669 = vpop.f32.mrb[0].mxu0
        %v2670 = vadd.f32 %v2255, %v2669
        %v2671 = vpop.f32.mrb[0].mxu0
        %v2672 = vadd.f32 %v2259, %v2671
        %v2673 = vpop.f32.mrb[0].mxu0
        %v2674 = vadd.f32 %v2255, %v2673
        %v2675 = vpop.f32.mrb[0].mxu0
        %v2676 = vadd.f32 %v2259, %v2675
        %2677 = vdwg.mxu0
        %2678 = vmatprep.subr.bf16.mxu0 %v2407
        %2679 = vmatpush1.bf16.msra.mxu0 %v2406
        %2680 = vmatprep.subr.bf16.mxu0 %v2423
        %2681 = vmatpush1.bf16.msra.mxu0 %v2422
        %2682 = vmatprep.subr.bf16.mxu0 0
        %2683 = vmatpush1.bf16.msra.mxu0 0
        %2684 = vmatprep.subr.bf16.mxu0 0
        %2685 = vmatpush1.bf16.msra.mxu0 0
        %2686 = vmatprep.subr.bf16.mxu0 0
        %2687 = vmatpush1.bf16.msra.mxu0 0
        %2688 = vmatprep.subr.bf16.mxu0 0
        %2689 = vmatpush1.bf16.msra.mxu0 0
        %2690 = vmatprep.subr.bf16.mxu0 0
        %2691 = vmatpush1.bf16.msra.mxu0 0
        %2692 = vmatprep.subr.bf16.mxu0 0
        %2693 = vmatpush1.bf16.msra.mxu0 0
        %2694 = vmatprep.subr.bf16.mxu0 0
        %2695 = vmatpush1.bf16.msra.mxu0 0
        %2696 = vmatprep.subr.bf16.mxu0 0
        %2697 = vmatpush1.bf16.msra.mxu0 0
        %2698 = vmatprep.subr.bf16.mxu0 0
        %2699 = vmatpush1.bf16.msra.mxu0 0
        %2700 = vmatprep.subr.bf16.mxu0 0
        %2701 = vmatpush1.bf16.msra.mxu0 0
        %2702 = vmatprep.subr.bf16.mxu0 0
        %2703 = vmatpush1.bf16.msra.mxu0 0
        %2704 = vmatprep.subr.bf16.mxu0 0
        %2705 = vmatpush1.bf16.msra.mxu0 0
        %2706 = vmatprep.subr.bf16.mxu0 0
        %2707 = vmatpush1.bf16.msra.mxu0 0
        %2708 = vmatprep.subr.bf16.mxu0 0
        %2709 = vmatpush1.bf16.msra.mxu0 0
        %2710 = vmatprep.mubr.bf16.mxu0 0
        %2711 = vmatmul.mubr.bf16.gmra.mrb[0].mxu0 %v2461
        %v2712 = vpop.f32.mrb[0].mxu0
        %v2713 = vadd.f32 %v2263, %v2712
        %v2714 = vpop.f32.mrb[0].mxu0
        %v2715 = vadd.f32 %v2267, %v2714
        %v2716 = vpop.f32.mrb[0].mxu0
        %v2717 = vadd.f32 %v2263, %v2716
        %v2718 = vpop.f32.mrb[0].mxu0
        %v2719 = vadd.f32 %v2267, %v2718
        %2720 = vdwg.mxu0
        %2721 = vmatprep.subr.bf16.mxu0 %v2409
        %2722 = vmatpush1.bf16.msra.mxu0 %v2408
        %2723 = vmatprep.subr.bf16.mxu0 %v2425
        %2724 = vmatpush1.bf16.msra.mxu0 %v2424
        %2725 = vmatprep.subr.bf16.mxu0 0
        %2726 = vmatpush1.bf16.msra.mxu0 0
        %2727 = vmatprep.subr.bf16.mxu0 0
        %2728 = vmatpush1.bf16.msra.mxu0 0
        %2729 = vmatprep.subr.bf16.mxu0 0
        %2730 = vmatpush1.bf16.msra.mxu0 0
        %2731 = vmatprep.subr.bf16.mxu0 0
        %2732 = vmatpush1.bf16.msra.mxu0 0
        %2733 = vmatprep.subr.bf16.mxu0 0
        %2734 = vmatpush1.bf16.msra.mxu0 0
        %2735 = vmatprep.subr.bf16.mxu0 0
        %2736 = vmatpush1.bf16.msra.mxu0 0
        %2737 = vmatprep.subr.bf16.mxu0 0
        %2738 = vmatpush1.bf16.msra.mxu0 0
        %2739 = vmatprep.subr.bf16.mxu0 0
        %2740 = vmatpush1.bf16.msra.mxu0 0
        %2741 = vmatprep.subr.bf16.mxu0 0
        %2742 = vmatpush1.bf16.msra.mxu0 0
        %2743 = vmatprep.subr.bf16.mxu0 0
        %2744 = vmatpush1.bf16.msra.mxu0 0
        %2745 = vmatprep.subr.bf16.mxu0 0
        %2746 = vmatpush1.bf16.msra.mxu0 0
        %2747 = vmatprep.subr.bf16.mxu0 0
        %2748 = vmatpush1.bf16.msra.mxu0 0
        %2749 = vmatprep.subr.bf16.mxu0 0
        %2750 = vmatpush1.bf16.msra.mxu0 0
        %2751 = vmatprep.subr.bf16.mxu0 0
        %2752 = vmatpush1.bf16.msra.mxu0 0
        %2753 = vmatprep.mubr.bf16.mxu0 0
        %2754 = vmatmul.mubr.bf16.gmra.mrb[0].mxu0 %v2461
        %v2755 = vpop.f32.mrb[0].mxu0
        %v2756 = vadd.f32 %v2271, %v2755
        %v2757 = vpop.f32.mrb[0].mxu0
        %v2758 = vadd.f32 %v2275, %v2757
        %v2759 = vpop.f32.mrb[0].mxu0
        %v2760 = vadd.f32 %v2271, %v2759
        %v2761 = vpop.f32.mrb[0].mxu0
        %v2762 = vadd.f32 %v2275, %v2761
        %2763 = vdwg.mxu0
        %2764 = vmatprep.subr.bf16.mxu0 %v2411
        %2765 = vmatpush1.bf16.msra.mxu0 %v2410
        %2766 = vmatprep.subr.bf16.mxu0 %v2427
        %2767 = vmatpush1.bf16.msra.mxu0 %v2426
        %2768 = vmatprep.subr.bf16.mxu0 0
        %2769 = vmatpush1.bf16.msra.mxu0 0
        %2770 = vmatprep.subr.bf16.mxu0 0
        %2771 = vmatpush1.bf16.msra.mxu0 0
        %2772 = vmatprep.subr.bf16.mxu0 0
        %2773 = vmatpush1.bf16.msra.mxu0 0
        %2774 = vmatprep.subr.bf16.mxu0 0
        %2775 = vmatpush1.bf16.msra.mxu0 0
        %2776 = vmatprep.subr.bf16.mxu0 0
        %2777 = vmatpush1.bf16.msra.mxu0 0
        %2778 = vmatprep.subr.bf16.mxu0 0
        %2779 = vmatpush1.bf16.msra.mxu0 0
        %2780 = vmatprep.subr.bf16.mxu0 0
        %2781 = vmatpush1.bf16.msra.mxu0 0
        %2782 = vmatprep.subr.bf16.mxu0 0
        %2783 = vmatpush1.bf16.msra.mxu0 0
        %2784 = vmatprep.subr.bf16.mxu0 0
        %2785 = vmatpush1.bf16.msra.mxu0 0
        %2786 = vmatprep.subr.bf16.mxu0 0
        %2787 = vmatpush1.bf16.msra.mxu0 0
        %2788 = vmatprep.subr.bf16.mxu0 0
        %2789 = vmatpush1.bf16.msra.mxu0 0
        %2790 = vmatprep.subr.bf16.mxu0 0
        %2791 = vmatpush1.bf16.msra.mxu0 0
        %2792 = vmatprep.subr.bf16.mxu0 0
        %2793 = vmatpush1.bf16.msra.mxu0 0
        %2794 = vmatprep.subr.bf16.mxu0 0
        %2795 = vmatpush1.bf16.msra.mxu0 0
        %2796 = vmatprep.mubr.bf16.mxu0 0
        %2797 = vmatmul.mubr.bf16.gmra.mrb[0].mxu0 %v2461
        %v2798 = vpop.f32.mrb[0].mxu0
        %v2799 = vadd.f32 %v2279, %v2798
        %v2800 = vpop.f32.mrb[0].mxu0
        %v2801 = vadd.f32 %v2283, %v2800
        %v2802 = vpop.f32.mrb[0].mxu0
        %v2803 = vadd.f32 %v2279, %v2802
        %v2804 = vpop.f32.mrb[0].mxu0
        %v2805 = vadd.f32 %v2283, %v2804
        %2806 = vdwg.mxu0
        %v2807 = vmax.f32 %v2498, 0.0
        %v2808 = vmax.f32 %v2500, 0.0
        %v2809 = vmax.f32 %v2541, 0.0
        %v2810 = vmax.f32 %v2543, 0.0
        %v2811 = vmax.f32 %v2584, 0.0
        %v2812 = vmax.f32 %v2586, 0.0
        %v2813 = vmax.f32 %v2627, 0.0
        %v2814 = vmax.f32 %v2629, 0.0
        %v2815 = vmax.f32 %v2670, 0.0
        %v2816 = vmax.f32 %v2672, 0.0
        %v2817 = vmax.f32 %v2713, 0.0
        %v2818 = vmax.f32 %v2715, 0.0
        %v2819 = vmax.f32 %v2756, 0.0
        %v2820 = vmax.f32 %v2758, 0.0
        %v2821 = vmax.f32 %v2799, 0.0
        %v2822 = vmax.f32 %v2801, 0.0
        %v2823 = vmax.f32 %v2502, 0.0
        %v2824 = vmax.f32 %v2504, 0.0
        %v2825 = vmax.f32 %v2545, 0.0
        %v2826 = vmax.f32 %v2547, 0.0
        %v2827 = vmax.f32 %v2588, 0.0
        %v2828 = vmax.f32 %v2590, 0.0
        %v2829 = vmax.f32 %v2631, 0.0
        %v2830 = vmax.f32 %v2633, 0.0
        %v2831 = vmax.f32 %v2674, 0.0
        %v2832 = vmax.f32 %v2676, 0.0
        %v2833 = vmax.f32 %v2717, 0.0
        %v2834 = vmax.f32 %v2719, 0.0
        %v2835 = vmax.f32 %v2760, 0.0
        %v2836 = vmax.f32 %v2762, 0.0
        %v2837 = vmax.f32 %v2803, 0.0
        %v2838 = vmax.f32 %v2805, 0.0
        %v2839 = vpack.c.bf16 %v2823, %v2807
        %v2840 = vpack.c.bf16 %v2824, %v2808
        %v2841 = vpack.c.bf16 %v2825, %v2809
        %v2842 = vpack.c.bf16 %v2826, %v2810
        %v2843 = vpack.c.bf16 %v2827, %v2811
        %v2844 = vpack.c.bf16 %v2828, %v2812
        %v2845 = vpack.c.bf16 %v2829, %v2813
        %v2846 = vpack.c.bf16 %v2830, %v2814
        %v2847 = vpack.c.bf16 %v2831, %v2815
        %v2848 = vpack.c.bf16 %v2832, %v2816
        %v2849 = vpack.c.bf16 %v2833, %v2817
        %v2850 = vpack.c.bf16 %v2834, %v2818
        %v2851 = vpack.c.bf16 %v2835, %v2819
        %v2852 = vpack.c.bf16 %v2836, %v2820
        %v2853 = vpack.c.bf16 %v2837, %v2821
        %v2854 = vpack.c.bf16 %v2838, %v2822
        %v2855 = vld [vmem:[%s7] sm:$0xf]
        %v2856 = vld [vmem:[%s7 + $0x4] sm:$0xf]
        %v2857 = vld [vmem:[%s7 + $0x8] sm:$0xf]
        %v2858 = vld [vmem:[%s7 + $0xc] sm:$0xf]
        %v2859 = vld [vmem:[%s7 + $0x10] sm:$0xf]
        %v2860 = vld [vmem:[%s7 + $0x14] sm:$0xf]
        %v2861 = vld [vmem:[%s7 + $0x18] sm:$0xf]
        %v2862 = vld [vmem:[%s7 + $0x1c] sm:$0xf]
        %v2863 = vld [vmem:[%s7 + $0x20] sm:$0xf]
        %v2864 = vld [vmem:[%s7 + $0x24] sm:$0xf]
        %v2865 = vld [vmem:[%s7 + $0x28] sm:$0xf]
        %v2866 = vld [vmem:[%s7 + $0x2c] sm:$0xf]
        %v2867 = vld [vmem:[%s7 + $0x30] sm:$0xf]
        %v2868 = vld [vmem:[%s7 + $0x34] sm:$0xf]
        %v2869 = vld [vmem:[%s7 + $0x38] sm:$0xf]
        %v2870 = vld [vmem:[%s7 + $0x3c] sm:$0xf]
        %v2871 = vld [vmem:[%s7 + $0x40] sm:$0xf]
        %v2872 = vld [vmem:[%s7 + $0x44] sm:$0xf]
        %v2873 = vld [vmem:[%s7 + $0x48] sm:$0xf]
        %v2874 = vld [vmem:[%s7 + $0x4c] sm:$0xf]
        %v2875 = vld [vmem:[%s7 + $0x50] sm:$0xf]
        %v2876 = vld [vmem:[%s7 + $0x54] sm:$0xf]
        %v2877 = vld [vmem:[%s7 + $0x58] sm:$0xf]
        %v2878 = vld [vmem:[%s7 + $0x5c] sm:$0xf]
        %v2879 = vld [vmem:[%s7 + $0x60] sm:$0xf]
        %v2880 = vld [vmem:[%s7 + $0x64] sm:$0xf]
        %v2881 = vld [vmem:[%s7 + $0x68] sm:$0xf]
        %v2882 = vld [vmem:[%s7 + $0x6c] sm:$0xf]
        %v2883 = vld [vmem:[%s7 + $0x70] sm:$0xf]
        %v2884 = vld [vmem:[%s7 + $0x74] sm:$0xf]
        %v2885 = vld [vmem:[%s7 + $0x78] sm:$0xf]
        %v2886 = vld [vmem:[%s7 + $0x7c] sm:$0xf]
        %v2887 = vld [vmem:[%s7 + $0x80] sm:$0xf]
        %v2888 = vld [vmem:[%s7 + $0x84] sm:$0xf]
        %v2889 = vld [vmem:[%s7 + $0x88] sm:$0xf]
        %v2890 = vld [vmem:[%s7 + $0x8c] sm:$0xf]
        %v2891 = vld [vmem:[%s7 + $0x90] sm:$0xf]
        %v2892 = vld [vmem:[%s7 + $0x94] sm:$0xf]
        %v2893 = vld [vmem:[%s7 + $0x98] sm:$0xf]
        %v2894 = vld [vmem:[%s7 + $0x9c] sm:$0xf]
        %v2895 = vld [vmem:[%s7 + $0xa0] sm:$0xf]
        %v2896 = vld [vmem:[%s7 + $0xa4] sm:$0xf]
        %v2897 = vld [vmem:[%s7 + $0xa8] sm:$0xf]
        %v2898 = vld [vmem:[%s7 + $0xac] sm:$0xf]
        %v2899 = vld [vmem:[%s7 + $0xb0] sm:$0xf]
        %v2900 = vld [vmem:[%s7 + $0xb4] sm:$0xf]
        %v2901 = vld [vmem:[%s7 + $0xb8] sm:$0xf]
        %v2902 = vld [vmem:[%s7 + $0xbc] sm:$0xf]
        %v2903 = vld [vmem:[%s7 + $0xc0] sm:$0xf]
        %v2904 = vld [vmem:[%s7 + $0xc4] sm:$0xf]
        %v2905 = vld [vmem:[%s7 + $0xc8] sm:$0xf]
        %v2906 = vld [vmem:[%s7 + $0xcc] sm:$0xf]
        %v2907 = vld [vmem:[%s7 + $0xd0] sm:$0xf]
        %v2908 = vld [vmem:[%s7 + $0xd4] sm:$0xf]
        %v2909 = vld [vmem:[%s7 + $0xd8] sm:$0xf]
        %v2910 = vld [vmem:[%s7 + $0xdc] sm:$0xf]
        %v2911 = vld [vmem:[%s7 + $0xe0] sm:$0xf]
        %v2912 = vld [vmem:[%s7 + $0xe4] sm:$0xf]
        %v2913 = vld [vmem:[%s7 + $0xe8] sm:$0xf]
        %v2914 = vld [vmem:[%s7 + $0xec] sm:$0xf]
        %v2915 = vld [vmem:[%s7 + $0xf0] sm:$0xf]
        %v2916 = vld [vmem:[%s7 + $0xf4] sm:$0xf]
        %v2917 = vld [vmem:[%s7 + $0xf8] sm:$0xf]
        %v2918 = vld [vmem:[%s7 + $0xfc] sm:$0xf]
        %v2919 = vld [vmem:[%s7 + $0x100] sm:$0xf]
        %v2920 = vld [vmem:[%s7 + $0x104] sm:$0xf]
        %v2921 = vld [vmem:[%s7 + $0x108] sm:$0xf]
        %v2922 = vld [vmem:[%s7 + $0x10c] sm:$0xf]
        %v2923 = vld [vmem:[%s7 + $0x110] sm:$0xf]
        %v2924 = vld [vmem:[%s7 + $0x114] sm:$0xf]
        %v2925 = vld [vmem:[%s7 + $0x118] sm:$0xf]
        %v2926 = vld [vmem:[%s7 + $0x11c] sm:$0xf]
        %v2927 = vld [vmem:[%s7 + $0x120] sm:$0xf]
        %v2928 = vld [vmem:[%s7 + $0x124] sm:$0xf]
        %v2929 = vld [vmem:[%s7 + $0x128] sm:$0xf]
        %v2930 = vld [vmem:[%s7 + $0x12c] sm:$0xf]
        %v2931 = vld [vmem:[%s7 + $0x130] sm:$0xf]
        %v2932 = vld [vmem:[%s7 + $0x134] sm:$0xf]
        %v2933 = vld [vmem:[%s7 + $0x138] sm:$0xf]
        %v2934 = vld [vmem:[%s7 + $0x13c] sm:$0xf]
        %v2935 = vld [vmem:[%s7 + $0x140] sm:$0xf]
        %v2936 = vld [vmem:[%s7 + $0x144] sm:$0xf]
        %v2937 = vld [vmem:[%s7 + $0x148] sm:$0xf]
        %v2938 = vld [vmem:[%s7 + $0x14c] sm:$0xf]
        %v2939 = vld [vmem:[%s7 + $0x150] sm:$0xf]
        %v2940 = vld [vmem:[%s7 + $0x154] sm:$0xf]
        %v2941 = vld [vmem:[%s7 + $0x158] sm:$0xf]
        %v2942 = vld [vmem:[%s7 + $0x15c] sm:$0xf]
        %v2943 = vld [vmem:[%s7 + $0x160] sm:$0xf]
        %v2944 = vld [vmem:[%s7 + $0x164] sm:$0xf]
        %v2945 = vld [vmem:[%s7 + $0x168] sm:$0xf]
        %v2946 = vld [vmem:[%s7 + $0x16c] sm:$0xf]
        %v2947 = vld [vmem:[%s7 + $0x170] sm:$0xf]
        %v2948 = vld [vmem:[%s7 + $0x174] sm:$0xf]
        %v2949 = vld [vmem:[%s7 + $0x178] sm:$0xf]
        %v2950 = vld [vmem:[%s7 + $0x17c] sm:$0xf]
        %v2951 = vld [vmem:[%s7 + $0x180] sm:$0xf]
        %v2952 = vld [vmem:[%s7 + $0x184] sm:$0xf]
        %v2953 = vld [vmem:[%s7 + $0x188] sm:$0xf]
        %v2954 = vld [vmem:[%s7 + $0x18c] sm:$0xf]
        %v2955 = vld [vmem:[%s7 + $0x190] sm:$0xf]
        %v2956 = vld [vmem:[%s7 + $0x194] sm:$0xf]
        %v2957 = vld [vmem:[%s7 + $0x198] sm:$0xf]
        %v2958 = vld [vmem:[%s7 + $0x19c] sm:$0xf]
        %v2959 = vld [vmem:[%s7 + $0x1a0] sm:$0xf]
        %v2960 = vld [vmem:[%s7 + $0x1a4] sm:$0xf]
        %v2961 = vld [vmem:[%s7 + $0x1a8] sm:$0xf]
        %v2962 = vld [vmem:[%s7 + $0x1ac] sm:$0xf]
        %v2963 = vld [vmem:[%s7 + $0x1b0] sm:$0xf]
        %v2964 = vld [vmem:[%s7 + $0x1b4] sm:$0xf]
        %v2965 = vld [vmem:[%s7 + $0x1b8] sm:$0xf]
        %v2966 = vld [vmem:[%s7 + $0x1bc] sm:$0xf]
        %v2967 = vld [vmem:[%s7 + $0x1c0] sm:$0xf]
        %v2968 = vld [vmem:[%s7 + $0x1c4] sm:$0xf]
        %v2969 = vld [vmem:[%s7 + $0x1c8] sm:$0xf]
        %v2970 = vld [vmem:[%s7 + $0x1cc] sm:$0xf]
        %v2971 = vld [vmem:[%s7 + $0x1d0] sm:$0xf]
        %v2972 = vld [vmem:[%s7 + $0x1d4] sm:$0xf]
        %v2973 = vld [vmem:[%s7 + $0x1d8] sm:$0xf]
        %v2974 = vld [vmem:[%s7 + $0x1dc] sm:$0xf]
        %v2975 = vld [vmem:[%s7 + $0x1e0] sm:$0xf]
        %v2976 = vld [vmem:[%s7 + $0x1e4] sm:$0xf]
        %v2977 = vld [vmem:[%s7 + $0x1e8] sm:$0xf]
        %v2978 = vld [vmem:[%s7 + $0x1ec] sm:$0xf]
        %v2979 = vld [vmem:[%s7 + $0x1f0] sm:$0xf]
        %v2980 = vld [vmem:[%s7 + $0x1f4] sm:$0xf]
        %v2981 = vld [vmem:[%s7 + $0x1f8] sm:$0xf]
        %v2982 = vld [vmem:[%s7 + $0x1fc] sm:$0xf]
        %v2983 = vld [vmem:[%s7 + $0x200] sm:$0xf]
        %v2984 = vld [vmem:[%s7 + $0x204] sm:$0xf]
        %v2985 = vld [vmem:[%s7 + $0x208] sm:$0xf]
        %v2986 = vld [vmem:[%s7 + $0x20c] sm:$0xf]
        %v2987 = vld [vmem:[%s7 + $0x210] sm:$0xf]
        %v2988 = vld [vmem:[%s7 + $0x214] sm:$0xf]
        %v2989 = vld [vmem:[%s7 + $0x218] sm:$0xf]
        %v2990 = vld [vmem:[%s7 + $0x21c] sm:$0xf]
        %v2991 = vld [vmem:[%s7 + $0x220] sm:$0xf]
        %v2992 = vld [vmem:[%s7 + $0x224] sm:$0xf]
        %v2993 = vld [vmem:[%s7 + $0x228] sm:$0xf]
        %v2994 = vld [vmem:[%s7 + $0x22c] sm:$0xf]
        %v2995 = vld [vmem:[%s7 + $0x230] sm:$0xf]
        %v2996 = vld [vmem:[%s7 + $0x234] sm:$0xf]
        %v2997 = vld [vmem:[%s7 + $0x238] sm:$0xf]
        %v2998 = vld [vmem:[%s7 + $0x23c] sm:$0xf]
        %v2999 = vld [vmem:[%s7 + $0x240] sm:$0xf]
        %v3000 = vld [vmem:[%s7 + $0x244] sm:$0xf]
        %v3001 = vld [vmem:[%s7 + $0x248] sm:$0xf]
        %v3002 = vld [vmem:[%s7 + $0x24c] sm:$0xf]
        %v3003 = vld [vmem:[%s7 + $0x250] sm:$0xf]
        %v3004 = vld [vmem:[%s7 + $0x254] sm:$0xf]
        %v3005 = vld [vmem:[%s7 + $0x258] sm:$0xf]
        %v3006 = vld [vmem:[%s7 + $0x25c] sm:$0xf]
        %v3007 = vld [vmem:[%s7 + $0x260] sm:$0xf]
        %v3008 = vld [vmem:[%s7 + $0x264] sm:$0xf]
        %v3009 = vld [vmem:[%s7 + $0x268] sm:$0xf]
        %v3010 = vld [vmem:[%s7 + $0x26c] sm:$0xf]
        %v3011 = vld [vmem:[%s7 + $0x270] sm:$0xf]
        %v3012 = vld [vmem:[%s7 + $0x274] sm:$0xf]
        %v3013 = vld [vmem:[%s7 + $0x278] sm:$0xf]
        %v3014 = vld [vmem:[%s7 + $0x27c] sm:$0xf]
        %v3015 = vld [vmem:[%s7 + $0x280] sm:$0xf]
        %v3016 = vld [vmem:[%s7 + $0x284] sm:$0xf]
        %v3017 = vld [vmem:[%s7 + $0x288] sm:$0xf]
        %v3018 = vld [vmem:[%s7 + $0x28c] sm:$0xf]
        %v3019 = vld [vmem:[%s7 + $0x290] sm:$0xf]
        %v3020 = vld [vmem:[%s7 + $0x294] sm:$0xf]
        %v3021 = vld [vmem:[%s7 + $0x298] sm:$0xf]
        %v3022 = vld [vmem:[%s7 + $0x29c] sm:$0xf]
        %v3023 = vld [vmem:[%s7 + $0x2a0] sm:$0xf]
        %v3024 = vld [vmem:[%s7 + $0x2a4] sm:$0xf]
        %v3025 = vld [vmem:[%s7 + $0x2a8] sm:$0xf]
        %v3026 = vld [vmem:[%s7 + $0x2ac] sm:$0xf]
        %v3027 = vld [vmem:[%s7 + $0x2b0] sm:$0xf]
        %v3028 = vld [vmem:[%s7 + $0x2b4] sm:$0xf]
        %v3029 = vld [vmem:[%s7 + $0x2b8] sm:$0xf]
        %v3030 = vld [vmem:[%s7 + $0x2bc] sm:$0xf]
        %v3031 = vld [vmem:[%s7 + $0x2c0] sm:$0xf]
        %v3032 = vld [vmem:[%s7 + $0x2c4] sm:$0xf]
        %v3033 = vld [vmem:[%s7 + $0x2c8] sm:$0xf]
        %v3034 = vld [vmem:[%s7 + $0x2cc] sm:$0xf]
        %v3035 = vld [vmem:[%s7 + $0x2d0] sm:$0xf]
        %v3036 = vld [vmem:[%s7 + $0x2d4] sm:$0xf]
        %v3037 = vld [vmem:[%s7 + $0x2d8] sm:$0xf]
        %v3038 = vld [vmem:[%s7 + $0x2dc] sm:$0xf]
        %v3039 = vld [vmem:[%s7 + $0x2e0] sm:$0xf]
        %v3040 = vld [vmem:[%s7 + $0x2e4] sm:$0xf]
        %v3041 = vld [vmem:[%s7 + $0x2e8] sm:$0xf]
        %v3042 = vld [vmem:[%s7 + $0x2ec] sm:$0xf]
        %v3043 = vld [vmem:[%s7 + $0x2f0] sm:$0xf]
        %v3044 = vld [vmem:[%s7 + $0x2f4] sm:$0xf]
        %v3045 = vld [vmem:[%s7 + $0x2f8] sm:$0xf]
        %v3046 = vld [vmem:[%s7 + $0x2fc] sm:$0xf]
        %v3047 = vld [vmem:[%s7 + $0x300] sm:$0xf]
        %v3048 = vld [vmem:[%s7 + $0x304] sm:$0xf]
        %v3049 = vld [vmem:[%s7 + $0x308] sm:$0xf]
        %v3050 = vld [vmem:[%s7 + $0x30c] sm:$0xf]
        %v3051 = vld [vmem:[%s7 + $0x310] sm:$0xf]
        %v3052 = vld [vmem:[%s7 + $0x314] sm:$0xf]
        %v3053 = vld [vmem:[%s7 + $0x318] sm:$0xf]
        %v3054 = vld [vmem:[%s7 + $0x31c] sm:$0xf]
        %v3055 = vld [vmem:[%s7 + $0x320] sm:$0xf]
        %v3056 = vld [vmem:[%s7 + $0x324] sm:$0xf]
        %v3057 = vld [vmem:[%s7 + $0x328] sm:$0xf]
        %v3058 = vld [vmem:[%s7 + $0x32c] sm:$0xf]
        %v3059 = vld [vmem:[%s7 + $0x330] sm:$0xf]
        %v3060 = vld [vmem:[%s7 + $0x334] sm:$0xf]
        %v3061 = vld [vmem:[%s7 + $0x338] sm:$0xf]
        %v3062 = vld [vmem:[%s7 + $0x33c] sm:$0xf]
        %v3063 = vld [vmem:[%s7 + $0x340] sm:$0xf]
        %v3064 = vld [vmem:[%s7 + $0x344] sm:$0xf]
        %v3065 = vld [vmem:[%s7 + $0x348] sm:$0xf]
        %v3066 = vld [vmem:[%s7 + $0x34c] sm:$0xf]
        %v3067 = vld [vmem:[%s7 + $0x350] sm:$0xf]
        %v3068 = vld [vmem:[%s7 + $0x354] sm:$0xf]
        %v3069 = vld [vmem:[%s7 + $0x358] sm:$0xf]
        %v3070 = vld [vmem:[%s7 + $0x35c] sm:$0xf]
        %v3071 = vld [vmem:[%s7 + $0x360] sm:$0xf]
        %v3072 = vld [vmem:[%s7 + $0x364] sm:$0xf]
        %v3073 = vld [vmem:[%s7 + $0x368] sm:$0xf]
        %v3074 = vld [vmem:[%s7 + $0x36c] sm:$0xf]
        %v3075 = vld [vmem:[%s7 + $0x370] sm:$0xf]
        %v3076 = vld [vmem:[%s7 + $0x374] sm:$0xf]
        %v3077 = vld [vmem:[%s7 + $0x378] sm:$0xf]
        %v3078 = vld [vmem:[%s7 + $0x37c] sm:$0xf]
        %v3079 = vld [vmem:[%s7 + $0x380] sm:$0xf]
        %v3080 = vld [vmem:[%s7 + $0x384] sm:$0xf]
        %v3081 = vld [vmem:[%s7 + $0x388] sm:$0xf]
        %v3082 = vld [vmem:[%s7 + $0x38c] sm:$0xf]
        %v3083 = vld [vmem:[%s7 + $0x390] sm:$0xf]
        %v3084 = vld [vmem:[%s7 + $0x394] sm:$0xf]
        %v3085 = vld [vmem:[%s7 + $0x398] sm:$0xf]
        %v3086 = vld [vmem:[%s7 + $0x39c] sm:$0xf]
        %v3087 = vld [vmem:[%s7 + $0x3a0] sm:$0xf]
        %v3088 = vld [vmem:[%s7 + $0x3a4] sm:$0xf]
        %v3089 = vld [vmem:[%s7 + $0x3a8] sm:$0xf]
        %v3090 = vld [vmem:[%s7 + $0x3ac] sm:$0xf]
        %v3091 = vld [vmem:[%s7 + $0x3b0] sm:$0xf]
        %v3092 = vld [vmem:[%s7 + $0x3b4] sm:$0xf]
        %v3093 = vld [vmem:[%s7 + $0x3b8] sm:$0xf]
        %v3094 = vld [vmem:[%s7 + $0x3bc] sm:$0xf]
        %v3095 = vld [vmem:[%s7 + $0x3c0] sm:$0xf]
        %v3096 = vld [vmem:[%s7 + $0x3c4] sm:$0xf]
        %v3097 = vld [vmem:[%s7 + $0x3c8] sm:$0xf]
        %v3098 = vld [vmem:[%s7 + $0x3cc] sm:$0xf]
        %v3099 = vld [vmem:[%s7 + $0x3d0] sm:$0xf]
        %v3100 = vld [vmem:[%s7 + $0x3d4] sm:$0xf]
        %v3101 = vld [vmem:[%s7 + $0x3d8] sm:$0xf]
        %v3102 = vld [vmem:[%s7 + $0x3dc] sm:$0xf]
        %v3103 = vld [vmem:[%s7 + $0x3e0] sm:$0xf]
        %v3104 = vld [vmem:[%s7 + $0x3e4] sm:$0xf]
        %v3105 = vld [vmem:[%s7 + $0x3e8] sm:$0xf]
        %v3106 = vld [vmem:[%s7 + $0x3ec] sm:$0xf]
        %v3107 = vld [vmem:[%s7 + $0x3f0] sm:$0xf]
        %v3108 = vld [vmem:[%s7 + $0x3f4] sm:$0xf]
        %v3109 = vld [vmem:[%s7 + $0x3f8] sm:$0xf]
        %v3110 = vld [vmem:[%s7 + $0x3fc] sm:$0xf]
        %v3111 = vld [vmem:[%s8] sm:$0x1]
        %v3113 = vlaneseq
        %v3114 = vshrl.u32 %v3113, 7
        %v3115 = vsub.s32 0, %v3114
        %v3116 = vrot.slane %v3111, %v3115
        %v3374 = vunpack.c.l.b16 %v2855
        %v3375 = vunpack.c.l.b16 %v2856
        %v3376 = vunpack.c.l.b16 %v2857
        %v3377 = vunpack.c.l.b16 %v2858
        %v3378 = vunpack.c.l.b16 %v2859
        %v3379 = vunpack.c.l.b16 %v2860
        %v3380 = vunpack.c.l.b16 %v2861
        %v3381 = vunpack.c.l.b16 %v2862
        %v3382 = vunpack.c.l.b16 %v2863
        %v3383 = vunpack.c.l.b16 %v2864
        %v3384 = vunpack.c.l.b16 %v2865
        %v3385 = vunpack.c.l.b16 %v2866
        %v3386 = vunpack.c.l.b16 %v2867
        %v3387 = vunpack.c.l.b16 %v2868
        %v3388 = vunpack.c.l.b16 %v2869
        %v3389 = vunpack.c.l.b16 %v2870
        %v3390 = vunpack.c.l.b16 %v2871
        %v3391 = vunpack.c.l.b16 %v2872
        %v3392 = vunpack.c.l.b16 %v2873
        %v3393 = vunpack.c.l.b16 %v2874
        %v3394 = vunpack.c.l.b16 %v2875
        %v3395 = vunpack.c.l.b16 %v2876
        %v3396 = vunpack.c.l.b16 %v2877
        %v3397 = vunpack.c.l.b16 %v2878
        %v3398 = vunpack.c.l.b16 %v2879
        %v3399 = vunpack.c.l.b16 %v2880
        %v3400 = vunpack.c.l.b16 %v2881
        %v3401 = vunpack.c.l.b16 %v2882
        %v3402 = vunpack.c.l.b16 %v2883
        %v3403 = vunpack.c.l.b16 %v2884
        %v3404 = vunpack.c.l.b16 %v2885
        %v3405 = vunpack.c.l.b16 %v2886
        %v3406 = vunpack.c.l.b16 %v2887
        %v3407 = vunpack.c.l.b16 %v2888
        %v3408 = vunpack.c.l.b16 %v2889
        %v3409 = vunpack.c.l.b16 %v2890
        %v3410 = vunpack.c.l.b16 %v2891
        %v3411 = vunpack.c.l.b16 %v2892
        %v3412 = vunpack.c.l.b16 %v2893
        %v3413 = vunpack.c.l.b16 %v2894
        %v3414 = vunpack.c.l.b16 %v2895
        %v3415 = vunpack.c.l.b16 %v2896
        %v3416 = vunpack.c.l.b16 %v2897
        %v3417 = vunpack.c.l.b16 %v2898
        %v3418 = vunpack.c.l.b16 %v2899
        %v3419 = vunpack.c.l.b16 %v2900
        %v3420 = vunpack.c.l.b16 %v2901
        %v3421 = vunpack.c.l.b16 %v2902
        %v3422 = vunpack.c.l.b16 %v2903
        %v3423 = vunpack.c.l.b16 %v2904
        %v3424 = vunpack.c.l.b16 %v2905
        %v3425 = vunpack.c.l.b16 %v2906
        %v3426 = vunpack.c.l.b16 %v2907
        %v3427 = vunpack.c.l.b16 %v2908
        %v3428 = vunpack.c.l.b16 %v2909
        %v3429 = vunpack.c.l.b16 %v2910
        %v3430 = vunpack.c.l.b16 %v2911
        %v3431 = vunpack.c.l.b16 %v2912
        %v3432 = vunpack.c.l.b16 %v2913
        %v3433 = vunpack.c.l.b16 %v2914
        %v3434 = vunpack.c.l.b16 %v2915
        %v3435 = vunpack.c.l.b16 %v2916
        %v3436 = vunpack.c.l.b16 %v2917
        %v3437 = vunpack.c.l.b16 %v2918
        %v3438 = vunpack.c.l.b16 %v2919
        %v3439 = vunpack.c.l.b16 %v2920
        %v3440 = vunpack.c.l.b16 %v2921
        %v3441 = vunpack.c.l.b16 %v2922
        %v3442 = vunpack.c.l.b16 %v2923
        %v3443 = vunpack.c.l.b16 %v2924
        %v3444 = vunpack.c.l.b16 %v2925
        %v3445 = vunpack.c.l.b16 %v2926
        %v3446 = vunpack.c.l.b16 %v2927
        %v3447 = vunpack.c.l.b16 %v2928
        %v3448 = vunpack.c.l.b16 %v2929
        %v3449 = vunpack.c.l.b16 %v2930
        %v3450 = vunpack.c.l.b16 %v2931
        %v3451 = vunpack.c.l.b16 %v2932
        %v3452 = vunpack.c.l.b16 %v2933
        %v3453 = vunpack.c.l.b16 %v2934
        %v3454 = vunpack.c.l.b16 %v2935
        %v3455 = vunpack.c.l.b16 %v2936
        %v3456 = vunpack.c.l.b16 %v2937
        %v3457 = vunpack.c.l.b16 %v2938
        %v3458 = vunpack.c.l.b16 %v2939
        %v3459 = vunpack.c.l.b16 %v2940
        %v3460 = vunpack.c.l.b16 %v2941
        %v3461 = vunpack.c.l.b16 %v2942
        %v3462 = vunpack.c.l.b16 %v2943
        %v3463 = vunpack.c.l.b16 %v2944
        %v3464 = vunpack.c.l.b16 %v2945
        %v3465 = vunpack.c.l.b16 %v2946
        %v3466 = vunpack.c.l.b16 %v2947
        %v3467 = vunpack.c.l.b16 %v2948
        %v3468 = vunpack.c.l.b16 %v2949
        %v3469 = vunpack.c.l.b16 %v2950
        %v3470 = vunpack.c.l.b16 %v2951
        %v3471 = vunpack.c.l.b16 %v2952
        %v3472 = vunpack.c.l.b16 %v2953
        %v3473 = vunpack.c.l.b16 %v2954
        %v3474 = vunpack.c.l.b16 %v2955
        %v3475 = vunpack.c.l.b16 %v2956
        %v3476 = vunpack.c.l.b16 %v2957
        %v3477 = vunpack.c.l.b16 %v2958
        %v3478 = vunpack.c.l.b16 %v2959
        %v3479 = vunpack.c.l.b16 %v2960
        %v3480 = vunpack.c.l.b16 %v2961
        %v3481 = vunpack.c.l.b16 %v2962
        %v3482 = vunpack.c.l.b16 %v2963
        %v3483 = vunpack.c.l.b16 %v2964
        %v3484 = vunpack.c.l.b16 %v2965
        %v3485 = vunpack.c.l.b16 %v2966
        %v3486 = vunpack.c.l.b16 %v2967
        %v3487 = vunpack.c.l.b16 %v2968
        %v3488 = vunpack.c.l.b16 %v2969
        %v3489 = vunpack.c.l.b16 %v2970
        %v3490 = vunpack.c.l.b16 %v2971
        %v3491 = vunpack.c.l.b16 %v2972
        %v3492 = vunpack.c.l.b16 %v2973
        %v3493 = vunpack.c.l.b16 %v2974
        %v3494 = vunpack.c.l.b16 %v2975
        %v3495 = vunpack.c.l.b16 %v2976
        %v3496 = vunpack.c.l.b16 %v2977
        %v3497 = vunpack.c.l.b16 %v2978
        %v3498 = vunpack.c.l.b16 %v2979
        %v3499 = vunpack.c.l.b16 %v2980
        %v3500 = vunpack.c.l.b16 %v2981
        %v3501 = vunpack.c.l.b16 %v2982
        %v3502 = vunpack.c.l.b16 %v2983
        %v3503 = vunpack.c.l.b16 %v2984
        %v3504 = vunpack.c.l.b16 %v2985
        %v3505 = vunpack.c.l.b16 %v2986
        %v3506 = vunpack.c.l.b16 %v2987
        %v3507 = vunpack.c.l.b16 %v2988
        %v3508 = vunpack.c.l.b16 %v2989
        %v3509 = vunpack.c.l.b16 %v2990
        %v3510 = vunpack.c.l.b16 %v2991
        %v3511 = vunpack.c.l.b16 %v2992
        %v3512 = vunpack.c.l.b16 %v2993
        %v3513 = vunpack.c.l.b16 %v2994
        %v3514 = vunpack.c.l.b16 %v2995
        %v3515 = vunpack.c.l.b16 %v2996
        %v3516 = vunpack.c.l.b16 %v2997
        %v3517 = vunpack.c.l.b16 %v2998
        %v3518 = vunpack.c.l.b16 %v2999
        %v3519 = vunpack.c.l.b16 %v3000
        %v3520 = vunpack.c.l.b16 %v3001
        %v3521 = vunpack.c.l.b16 %v3002
        %v3522 = vunpack.c.l.b16 %v3003
        %v3523 = vunpack.c.l.b16 %v3004
        %v3524 = vunpack.c.l.b16 %v3005
        %v3525 = vunpack.c.l.b16 %v3006
        %v3526 = vunpack.c.l.b16 %v3007
        %v3527 = vunpack.c.l.b16 %v3008
        %v3528 = vunpack.c.l.b16 %v3009
        %v3529 = vunpack.c.l.b16 %v3010
        %v3530 = vunpack.c.l.b16 %v3011
        %v3531 = vunpack.c.l.b16 %v3012
        %v3532 = vunpack.c.l.b16 %v3013
        %v3533 = vunpack.c.l.b16 %v3014
        %v3534 = vunpack.c.l.b16 %v3015
        %v3535 = vunpack.c.l.b16 %v3016
        %v3536 = vunpack.c.l.b16 %v3017
        %v3537 = vunpack.c.l.b16 %v3018
        %v3538 = vunpack.c.l.b16 %v3019
        %v3539 = vunpack.c.l.b16 %v3020
        %v3540 = vunpack.c.l.b16 %v3021
        %v3541 = vunpack.c.l.b16 %v3022
        %v3542 = vunpack.c.l.b16 %v3023
        %v3543 = vunpack.c.l.b16 %v3024
        %v3544 = vunpack.c.l.b16 %v3025
        %v3545 = vunpack.c.l.b16 %v3026
        %v3546 = vunpack.c.l.b16 %v3027
        %v3547 = vunpack.c.l.b16 %v3028
        %v3548 = vunpack.c.l.b16 %v3029
        %v3549 = vunpack.c.l.b16 %v3030
        %v3550 = vunpack.c.l.b16 %v3031
        %v3551 = vunpack.c.l.b16 %v3032
        %v3552 = vunpack.c.l.b16 %v3033
        %v3553 = vunpack.c.l.b16 %v3034
        %v3554 = vunpack.c.l.b16 %v3035
        %v3555 = vunpack.c.l.b16 %v3036
        %v3556 = vunpack.c.l.b16 %v3037
        %v3557 = vunpack.c.l.b16 %v3038
        %v3558 = vunpack.c.l.b16 %v3039
        %v3559 = vunpack.c.l.b16 %v3040
        %v3560 = vunpack.c.l.b16 %v3041
        %v3561 = vunpack.c.l.b16 %v3042
        %v3562 = vunpack.c.l.b16 %v3043
        %v3563 = vunpack.c.l.b16 %v3044
        %v3564 = vunpack.c.l.b16 %v3045
        %v3565 = vunpack.c.l.b16 %v3046
        %v3566 = vunpack.c.l.b16 %v3047
        %v3567 = vunpack.c.l.b16 %v3048
        %v3568 = vunpack.c.l.b16 %v3049
        %v3569 = vunpack.c.l.b16 %v3050
        %v3570 = vunpack.c.l.b16 %v3051
        %v3571 = vunpack.c.l.b16 %v3052
        %v3572 = vunpack.c.l.b16 %v3053
        %v3573 = vunpack.c.l.b16 %v3054
        %v3574 = vunpack.c.l.b16 %v3055
        %v3575 = vunpack.c.l.b16 %v3056
        %v3576 = vunpack.c.l.b16 %v3057
        %v3577 = vunpack.c.l.b16 %v3058
        %v3578 = vunpack.c.l.b16 %v3059
        %v3579 = vunpack.c.l.b16 %v3060
        %v3580 = vunpack.c.l.b16 %v3061
        %v3581 = vunpack.c.l.b16 %v3062
        %v3582 = vunpack.c.l.b16 %v3063
        %v3583 = vunpack.c.l.b16 %v3064
        %v3584 = vunpack.c.l.b16 %v3065
        %v3585 = vunpack.c.l.b16 %v3066
        %v3586 = vunpack.c.l.b16 %v3067
        %v3587 = vunpack.c.l.b16 %v3068
        %v3588 = vunpack.c.l.b16 %v3069
        %v3589 = vunpack.c.l.b16 %v3070
        %v3590 = vunpack.c.l.b16 %v3071
        %v3591 = vunpack.c.l.b16 %v3072
        %v3592 = vunpack.c.l.b16 %v3073
        %v3593 = vunpack.c.l.b16 %v3074
        %v3594 = vunpack.c.l.b16 %v3075
        %v3595 = vunpack.c.l.b16 %v3076
        %v3596 = vunpack.c.l.b16 %v3077
        %v3597 = vunpack.c.l.b16 %v3078
        %v3598 = vunpack.c.l.b16 %v3079
        %v3599 = vunpack.c.l.b16 %v3080
        %v3600 = vunpack.c.l.b16 %v3081
        %v3601 = vunpack.c.l.b16 %v3082
        %v3602 = vunpack.c.l.b16 %v3083
        %v3603 = vunpack.c.l.b16 %v3084
        %v3604 = vunpack.c.l.b16 %v3085
        %v3605 = vunpack.c.l.b16 %v3086
        %v3606 = vunpack.c.l.b16 %v3087
        %v3607 = vunpack.c.l.b16 %v3088
        %v3608 = vunpack.c.l.b16 %v3089
        %v3609 = vunpack.c.l.b16 %v3090
        %v3610 = vunpack.c.l.b16 %v3091
        %v3611 = vunpack.c.l.b16 %v3092
        %v3612 = vunpack.c.l.b16 %v3093
        %v3613 = vunpack.c.l.b16 %v3094
        %v3614 = vunpack.c.l.b16 %v3095
        %v3615 = vunpack.c.l.b16 %v3096
        %v3616 = vunpack.c.l.b16 %v3097
        %v3617 = vunpack.c.l.b16 %v3098
        %v3618 = vunpack.c.l.b16 %v3099
        %v3619 = vunpack.c.l.b16 %v3100
        %v3620 = vunpack.c.l.b16 %v3101
        %v3621 = vunpack.c.l.b16 %v3102
        %v3622 = vunpack.c.l.b16 %v3103
        %v3623 = vunpack.c.l.b16 %v3104
        %v3624 = vunpack.c.l.b16 %v3105
        %v3625 = vunpack.c.l.b16 %v3106
        %v3626 = vunpack.c.l.b16 %v3107
        %v3627 = vunpack.c.l.b16 %v3108
        %v3628 = vunpack.c.l.b16 %v3109
        %v3629 = vunpack.c.l.b16 %v3110
        %v3630 = vpack.c.b16 %v3375, %v3374
        %v3631 = vpack.c.b16 %v3377, %v3376
        %v3632 = vpack.c.b16 %v3379, %v3378
        %v3633 = vpack.c.b16 %v3381, %v3380
        %v3634 = vpack.c.b16 %v3383, %v3382
        %v3635 = vpack.c.b16 %v3385, %v3384
        %v3636 = vpack.c.b16 %v3387, %v3386
        %v3637 = vpack.c.b16 %v3389, %v3388
        %v3638 = vpack.c.b16 %v3391, %v3390
        %v3639 = vpack.c.b16 %v3393, %v3392
        %v3640 = vpack.c.b16 %v3395, %v3394
        %v3641 = vpack.c.b16 %v3397, %v3396
        %v3642 = vpack.c.b16 %v3399, %v3398
        %v3643 = vpack.c.b16 %v3401, %v3400
        %v3644 = vpack.c.b16 %v3403, %v3402
        %v3645 = vpack.c.b16 %v3405, %v3404
        %v3646 = vpack.c.b16 %v3407, %v3406
        %v3647 = vpack.c.b16 %v3409, %v3408
        %v3648 = vpack.c.b16 %v3411, %v3410
        %v3649 = vpack.c.b16 %v3413, %v3412
        %v3650 = vpack.c.b16 %v3415, %v3414
        %v3651 = vpack.c.b16 %v3417, %v3416
        %v3652 = vpack.c.b16 %v3419, %v3418
        %v3653 = vpack.c.b16 %v3421, %v3420
        %v3654 = vpack.c.b16 %v3423, %v3422
        %v3655 = vpack.c.b16 %v3425, %v3424
        %v3656 = vpack.c.b16 %v3427, %v3426
        %v3657 = vpack.c.b16 %v3429, %v3428
        %v3658 = vpack.c.b16 %v3431, %v3430
        %v3659 = vpack.c.b16 %v3433, %v3432
        %v3660 = vpack.c.b16 %v3435, %v3434
        %v3661 = vpack.c.b16 %v3437, %v3436
        %v3662 = vpack.c.b16 %v3439, %v3438
        %v3663 = vpack.c.b16 %v3441, %v3440
        %v3664 = vpack.c.b16 %v3443, %v3442
        %v3665 = vpack.c.b16 %v3445, %v3444
        %v3666 = vpack.c.b16 %v3447, %v3446
        %v3667 = vpack.c.b16 %v3449, %v3448
        %v3668 = vpack.c.b16 %v3451, %v3450
        %v3669 = vpack.c.b16 %v3453, %v3452
        %v3670 = vpack.c.b16 %v3455, %v3454
        %v3671 = vpack.c.b16 %v3457, %v3456
        %v3672 = vpack.c.b16 %v3459, %v3458
        %v3673 = vpack.c.b16 %v3461, %v3460
        %v3674 = vpack.c.b16 %v3463, %v3462
        %v3675 = vpack.c.b16 %v3465, %v3464
        %v3676 = vpack.c.b16 %v3467, %v3466
        %v3677 = vpack.c.b16 %v3469, %v3468
        %v3678 = vpack.c.b16 %v3471, %v3470
        %v3679 = vpack.c.b16 %v3473, %v3472
        %v3680 = vpack.c.b16 %v3475, %v3474
        %v3681 = vpack.c.b16 %v3477, %v3476
        %v3682 = vpack.c.b16 %v3479, %v3478
        %v3683 = vpack.c.b16 %v3481, %v3480
        %v3684 = vpack.c.b16 %v3483, %v3482
        %v3685 = vpack.c.b16 %v3485, %v3484
        %v3686 = vpack.c.b16 %v3487, %v3486
        %v3687 = vpack.c.b16 %v3489, %v3488
        %v3688 = vpack.c.b16 %v3491, %v3490
        %v3689 = vpack.c.b16 %v3493, %v3492
        %v3690 = vpack.c.b16 %v3495, %v3494
        %v3691 = vpack.c.b16 %v3497, %v3496
        %v3692 = vpack.c.b16 %v3499, %v3498
        %v3693 = vpack.c.b16 %v3501, %v3500
        %v3694 = vpack.c.b16 %v3503, %v3502
        %v3695 = vpack.c.b16 %v3505, %v3504
        %v3696 = vpack.c.b16 %v3507, %v3506
        %v3697 = vpack.c.b16 %v3509, %v3508
        %v3698 = vpack.c.b16 %v3511, %v3510
        %v3699 = vpack.c.b16 %v3513, %v3512
        %v3700 = vpack.c.b16 %v3515, %v3514
        %v3701 = vpack.c.b16 %v3517, %v3516
        %v3702 = vpack.c.b16 %v3519, %v3518
        %v3703 = vpack.c.b16 %v3521, %v3520
        %v3704 = vpack.c.b16 %v3523, %v3522
        %v3705 = vpack.c.b16 %v3525, %v3524
        %v3706 = vpack.c.b16 %v3527, %v3526
        %v3707 = vpack.c.b16 %v3529, %v3528
        %v3708 = vpack.c.b16 %v3531, %v3530
        %v3709 = vpack.c.b16 %v3533, %v3532
        %v3710 = vpack.c.b16 %v3535, %v3534
        %v3711 = vpack.c.b16 %v3537, %v3536
        %v3712 = vpack.c.b16 %v3539, %v3538
        %v3713 = vpack.c.b16 %v3541, %v3540
        %v3714 = vpack.c.b16 %v3543, %v3542
        %v3715 = vpack.c.b16 %v3545, %v3544
        %v3716 = vpack.c.b16 %v3547, %v3546
        %v3717 = vpack.c.b16 %v3549, %v3548
        %v3718 = vpack.c.b16 %v3551, %v3550
        %v3719 = vpack.c.b16 %v3553, %v3552
        %v3720 = vpack.c.b16 %v3555, %v3554
        %v3721 = vpack.c.b16 %v3557, %v3556
        %v3722 = vpack.c.b16 %v3559, %v3558
        %v3723 = vpack.c.b16 %v3561, %v3560
        %v3724 = vpack.c.b16 %v3563, %v3562
        %v3725 = vpack.c.b16 %v3565, %v3564
        %v3726 = vpack.c.b16 %v3567, %v3566
        %v3727 = vpack.c.b16 %v3569, %v3568
        %v3728 = vpack.c.b16 %v3571, %v3570
        %v3729 = vpack.c.b16 %v3573, %v3572
        %v3730 = vpack.c.b16 %v3575, %v3574
        %v3731 = vpack.c.b16 %v3577, %v3576
        %v3732 = vpack.c.b16 %v3579, %v3578
        %v3733 = vpack.c.b16 %v3581, %v3580
        %v3734 = vpack.c.b16 %v3583, %v3582
        %v3735 = vpack.c.b16 %v3585, %v3584
        %v3736 = vpack.c.b16 %v3587, %v3586
        %v3737 = vpack.c.b16 %v3589, %v3588
        %v3738 = vpack.c.b16 %v3591, %v3590
        %v3739 = vpack.c.b16 %v3593, %v3592
        %v3740 = vpack.c.b16 %v3595, %v3594
        %v3741 = vpack.c.b16 %v3597, %v3596
        %v3742 = vpack.c.b16 %v3599, %v3598
        %v3743 = vpack.c.b16 %v3601, %v3600
        %v3744 = vpack.c.b16 %v3603, %v3602
        %v3745 = vpack.c.b16 %v3605, %v3604
        %v3746 = vpack.c.b16 %v3607, %v3606
        %v3747 = vpack.c.b16 %v3609, %v3608
        %v3748 = vpack.c.b16 %v3611, %v3610
        %v3749 = vpack.c.b16 %v3613, %v3612
        %v3750 = vpack.c.b16 %v3615, %v3614
        %v3751 = vpack.c.b16 %v3617, %v3616
        %v3752 = vpack.c.b16 %v3619, %v3618
        %v3753 = vpack.c.b16 %v3621, %v3620
        %v3754 = vpack.c.b16 %v3623, %v3622
        %v3755 = vpack.c.b16 %v3625, %v3624
        %v3756 = vpack.c.b16 %v3627, %v3626
        %v3757 = vpack.c.b16 %v3629, %v3628
        %3886 = vmatprep.subr.bf16.mxu0 0
        %3887 = vmatpush1.bf16.msra.mxu0 %v3630
        %3888 = vmatprep.subr.bf16.mxu0 0
        %3889 = vmatpush1.bf16.msra.mxu0 %v3631
        %3890 = vmatprep.subr.bf16.mxu0 0
        %3891 = vmatpush1.bf16.msra.mxu0 %v3632
        %3892 = vmatprep.subr.bf16.mxu0 0
        %3893 = vmatpush1.bf16.msra.mxu0 %v3633
        %3894 = vmatprep.subr.bf16.mxu0 0
        %3895 = vmatpush1.bf16.msra.mxu0 %v3634
        %3896 = vmatprep.subr.bf16.mxu0 0
        %3897 = vmatpush1.bf16.msra.mxu0 %v3635
        %3898 = vmatprep.subr.bf16.mxu0 0
        %3899 = vmatpush1.bf16.msra.mxu0 %v3636
        %3900 = vmatprep.subr.bf16.mxu0 0
        %3901 = vmatpush1.bf16.msra.mxu0 %v3637
        %3902 = vmatprep.subr.bf16.mxu0 0
        %3903 = vmatpush1.bf16.msra.mxu0 %v3638
        %3904 = vmatprep.subr.bf16.mxu0 0
        %3905 = vmatpush1.bf16.msra.mxu0 %v3639
        %3906 = vmatprep.subr.bf16.mxu0 0
        %3907 = vmatpush1.bf16.msra.mxu0 %v3640
        %3908 = vmatprep.subr.bf16.mxu0 0
        %3909 = vmatpush1.bf16.msra.mxu0 %v3641
        %3910 = vmatprep.subr.bf16.mxu0 0
        %3911 = vmatpush1.bf16.msra.mxu0 %v3642
        %3912 = vmatprep.subr.bf16.mxu0 0
        %3913 = vmatpush1.bf16.msra.mxu0 %v3643
        %3914 = vmatprep.subr.bf16.mxu0 0
        %3915 = vmatpush1.bf16.msra.mxu0 %v3644
        %3916 = vmatprep.subr.bf16.mxu0 0
        %3917 = vmatpush1.bf16.msra.mxu0 %v3645
        %3918 = vmatprep.mubr.bf16.mxu0 %v2840
        %3919 = vmatmul.mubr.bf16.gmra.mrb[0].mxu0 %v2839
        %v3920 = vpop.f32.mrb[0].mxu0
        %v3921 = vadd.f32 %v3116, %v3920
        %v3922 = vpop.f32.mrb[0].mxu0
        %v3923 = vpop.f32.mrb[0].mxu0
        %v3924 = vadd.f32 %v3116, %v3923
        %v3925 = vpop.f32.mrb[0].mxu0
        %3926 = vdwg.mxu0
        %3927 = vmatprep.subr.bf16.mxu0 0
        %3928 = vmatpush1.bf16.msra.mxu0 %v3646
        %3929 = vmatprep.subr.bf16.mxu0 0
        %3930 = vmatpush1.bf16.msra.mxu0 %v3647
        %3931 = vmatprep.subr.bf16.mxu0 0
        %3932 = vmatpush1.bf16.msra.mxu0 %v3648
        %3933 = vmatprep.subr.bf16.mxu0 0
        %3934 = vmatpush1.bf16.msra.mxu0 %v3649
        %3935 = vmatprep.subr.bf16.mxu0 0
        %3936 = vmatpush1.bf16.msra.mxu0 %v3650
        %3937 = vmatprep.subr.bf16.mxu0 0
        %3938 = vmatpush1.bf16.msra.mxu0 %v3651
        %3939 = vmatprep.subr.bf16.mxu0 0
        %3940 = vmatpush1.bf16.msra.mxu0 %v3652
        %3941 = vmatprep.subr.bf16.mxu0 0
        %3942 = vmatpush1.bf16.msra.mxu0 %v3653
        %3943 = vmatprep.subr.bf16.mxu0 0
        %3944 = vmatpush1.bf16.msra.mxu0 %v3654
        %3945 = vmatprep.subr.bf16.mxu0 0
        %3946 = vmatpush1.bf16.msra.mxu0 %v3655
        %3947 = vmatprep.subr.bf16.mxu0 0
        %3948 = vmatpush1.bf16.msra.mxu0 %v3656
        %3949 = vmatprep.subr.bf16.mxu0 0
        %3950 = vmatpush1.bf16.msra.mxu0 %v3657
        %3951 = vmatprep.subr.bf16.mxu0 0
        %3952 = vmatpush1.bf16.msra.mxu0 %v3658
        %3953 = vmatprep.subr.bf16.mxu0 0
        %3954 = vmatpush1.bf16.msra.mxu0 %v3659
        %3955 = vmatprep.subr.bf16.mxu0 0
        %3956 = vmatpush1.bf16.msra.mxu0 %v3660
        %3957 = vmatprep.subr.bf16.mxu0 0
        %3958 = vmatpush1.bf16.msra.mxu0 %v3661
        %3959 = vmatprep.mubr.bf16.mxu0 %v2842
        %3960 = vmatmul.mubr.bf16.gmra.mrb[0].mxu0 %v2841
        %v3961 = vpop.f32.mrb[0].mxu0
        %v3962 = vadd.f32 %v3921, %v3961
        %v3963 = vpop.f32.mrb[0].mxu0
        %v3964 = vpop.f32.mrb[0].mxu0
        %v3965 = vadd.f32 %v3924, %v3964
        %v3966 = vpop.f32.mrb[0].mxu0
        %3967 = vdwg.mxu0
        %3968 = vmatprep.subr.bf16.mxu0 0
        %3969 = vmatpush1.bf16.msra.mxu0 %v3662
        %3970 = vmatprep.subr.bf16.mxu0 0
        %3971 = vmatpush1.bf16.msra.mxu0 %v3663
        %3972 = vmatprep.subr.bf16.mxu0 0
        %3973 = vmatpush1.bf16.msra.mxu0 %v3664
        %3974 = vmatprep.subr.bf16.mxu0 0
        %3975 = vmatpush1.bf16.msra.mxu0 %v3665
        %3976 = vmatprep.subr.bf16.mxu0 0
        %3977 = vmatpush1.bf16.msra.mxu0 %v3666
        %3978 = vmatprep.subr.bf16.mxu0 0
        %3979 = vmatpush1.bf16.msra.mxu0 %v3667
        %3980 = vmatprep.subr.bf16.mxu0 0
        %3981 = vmatpush1.bf16.msra.mxu0 %v3668
        %3982 = vmatprep.subr.bf16.mxu0 0
        %3983 = vmatpush1.bf16.msra.mxu0 %v3669
        %3984 = vmatprep.subr.bf16.mxu0 0
        %3985 = vmatpush1.bf16.msra.mxu0 %v3670
        %3986 = vmatprep.subr.bf16.mxu0 0
        %3987 = vmatpush1.bf16.msra.mxu0 %v3671
        %3988 = vmatprep.subr.bf16.mxu0 0
        %3989 = vmatpush1.bf16.msra.mxu0 %v3672
        %3990 = vmatprep.subr.bf16.mxu0 0
        %3991 = vmatpush1.bf16.msra.mxu0 %v3673
        %3992 = vmatprep.subr.bf16.mxu0 0
        %3993 = vmatpush1.bf16.msra.mxu0 %v3674
        %3994 = vmatprep.subr.bf16.mxu0 0
        %3995 = vmatpush1.bf16.msra.mxu0 %v3675
        %3996 = vmatprep.subr.bf16.mxu0 0
        %3997 = vmatpush1.bf16.msra.mxu0 %v3676
        %3998 = vmatprep.subr.bf16.mxu0 0
        %3999 = vmatpush1.bf16.msra.mxu0 %v3677
        %4000 = vmatprep.mubr.bf16.mxu0 %v2844
        %4001 = vmatmul.mubr.bf16.gmra.mrb[0].mxu0 %v2843
        %v4002 = vpop.f32.mrb[0].mxu0
        %v4003 = vadd.f32 %v3962, %v4002
        %v4004 = vpop.f32.mrb[0].mxu0
        %v4005 = vpop.f32.mrb[0].mxu0
        %v4006 = vadd.f32 %v3965, %v4005
        %v4007 = vpop.f32.mrb[0].mxu0
        %4008 = vdwg.mxu0
        %4009 = vmatprep.subr.bf16.mxu0 0
        %4010 = vmatpush1.bf16.msra.mxu0 %v3678
        %4011 = vmatprep.subr.bf16.mxu0 0
        %4012 = vmatpush1.bf16.msra.mxu0 %v3679
        %4013 = vmatprep.subr.bf16.mxu0 0
        %4014 = vmatpush1.bf16.msra.mxu0 %v3680
        %4015 = vmatprep.subr.bf16.mxu0 0
        %4016 = vmatpush1.bf16.msra.mxu0 %v3681
        %4017 = vmatprep.subr.bf16.mxu0 0
        %4018 = vmatpush1.bf16.msra.mxu0 %v3682
        %4019 = vmatprep.subr.bf16.mxu0 0
        %4020 = vmatpush1.bf16.msra.mxu0 %v3683
        %4021 = vmatprep.subr.bf16.mxu0 0
        %4022 = vmatpush1.bf16.msra.mxu0 %v3684
        %4023 = vmatprep.subr.bf16.mxu0 0
        %4024 = vmatpush1.bf16.msra.mxu0 %v3685
        %4025 = vmatprep.subr.bf16.mxu0 0
        %4026 = vmatpush1.bf16.msra.mxu0 %v3686
        %4027 = vmatprep.subr.bf16.mxu0 0
        %4028 = vmatpush1.bf16.msra.mxu0 %v3687
        %4029 = vmatprep.subr.bf16.mxu0 0
        %4030 = vmatpush1.bf16.msra.mxu0 %v3688
        %4031 = vmatprep.subr.bf16.mxu0 0
        %4032 = vmatpush1.bf16.msra.mxu0 %v3689
        %4033 = vmatprep.subr.bf16.mxu0 0
        %4034 = vmatpush1.bf16.msra.mxu0 %v3690
        %4035 = vmatprep.subr.bf16.mxu0 0
        %4036 = vmatpush1.bf16.msra.mxu0 %v3691
        %4037 = vmatprep.subr.bf16.mxu0 0
        %4038 = vmatpush1.bf16.msra.mxu0 %v3692
        %4039 = vmatprep.subr.bf16.mxu0 0
        %4040 = vmatpush1.bf16.msra.mxu0 %v3693
        %4041 = vmatprep.mubr.bf16.mxu0 %v2846
        %4042 = vmatmul.mubr.bf16.gmra.mrb[0].mxu0 %v2845
        %v4043 = vpop.f32.mrb[0].mxu0
        %v4044 = vadd.f32 %v4003, %v4043
        %v4045 = vpop.f32.mrb[0].mxu0
        %v4046 = vpop.f32.mrb[0].mxu0
        %v4047 = vadd.f32 %v4006, %v4046
        %v4048 = vpop.f32.mrb[0].mxu0
        %4049 = vdwg.mxu0
        %4050 = vmatprep.subr.bf16.mxu0 0
        %4051 = vmatpush1.bf16.msra.mxu0 %v3694
        %4052 = vmatprep.subr.bf16.mxu0 0
        %4053 = vmatpush1.bf16.msra.mxu0 %v3695
        %4054 = vmatprep.subr.bf16.mxu0 0
        %4055 = vmatpush1.bf16.msra.mxu0 %v3696
        %4056 = vmatprep.subr.bf16.mxu0 0
        %4057 = vmatpush1.bf16.msra.mxu0 %v3697
        %4058 = vmatprep.subr.bf16.mxu0 0
        %4059 = vmatpush1.bf16.msra.mxu0 %v3698
        %4060 = vmatprep.subr.bf16.mxu0 0
        %4061 = vmatpush1.bf16.msra.mxu0 %v3699
        %4062 = vmatprep.subr.bf16.mxu0 0
        %4063 = vmatpush1.bf16.msra.mxu0 %v3700
        %4064 = vmatprep.subr.bf16.mxu0 0
        %4065 = vmatpush1.bf16.msra.mxu0 %v3701
        %4066 = vmatprep.subr.bf16.mxu0 0
        %4067 = vmatpush1.bf16.msra.mxu0 %v3702
        %4068 = vmatprep.subr.bf16.mxu0 0
        %4069 = vmatpush1.bf16.msra.mxu0 %v3703
        %4070 = vmatprep.subr.bf16.mxu0 0
        %4071 = vmatpush1.bf16.msra.mxu0 %v3704
        %4072 = vmatprep.subr.bf16.mxu0 0
        %4073 = vmatpush1.bf16.msra.mxu0 %v3705
        %4074 = vmatprep.subr.bf16.mxu0 0
        %4075 = vmatpush1.bf16.msra.mxu0 %v3706
        %4076 = vmatprep.subr.bf16.mxu0 0
        %4077 = vmatpush1.bf16.msra.mxu0 %v3707
        %4078 = vmatprep.subr.bf16.mxu0 0
        %4079 = vmatpush1.bf16.msra.mxu0 %v3708
        %4080 = vmatprep.subr.bf16.mxu0 0
        %4081 = vmatpush1.bf16.msra.mxu0 %v3709
        %4082 = vmatprep.mubr.bf16.mxu0 %v2848
        %4083 = vmatmul.mubr.bf16.gmra.mrb[0].mxu0 %v2847
        %v4084 = vpop.f32.mrb[0].mxu0
        %v4085 = vadd.f32 %v4044, %v4084
        %v4086 = vpop.f32.mrb[0].mxu0
        %v4087 = vpop.f32.mrb[0].mxu0
        %v4088 = vadd.f32 %v4047, %v4087
        %v4089 = vpop.f32.mrb[0].mxu0
        %4090 = vdwg.mxu0
        %4091 = vmatprep.subr.bf16.mxu0 0
        %4092 = vmatpush1.bf16.msra.mxu0 %v3710
        %4093 = vmatprep.subr.bf16.mxu0 0
        %4094 = vmatpush1.bf16.msra.mxu0 %v3711
        %4095 = vmatprep.subr.bf16.mxu0 0
        %4096 = vmatpush1.bf16.msra.mxu0 %v3712
        %4097 = vmatprep.subr.bf16.mxu0 0
        %4098 = vmatpush1.bf16.msra.mxu0 %v3713
        %4099 = vmatprep.subr.bf16.mxu0 0
        %4100 = vmatpush1.bf16.msra.mxu0 %v3714
        %4101 = vmatprep.subr.bf16.mxu0 0
        %4102 = vmatpush1.bf16.msra.mxu0 %v3715
        %4103 = vmatprep.subr.bf16.mxu0 0
        %4104 = vmatpush1.bf16.msra.mxu0 %v3716
        %4105 = vmatprep.subr.bf16.mxu0 0
        %4106 = vmatpush1.bf16.msra.mxu0 %v3717
        %4107 = vmatprep.subr.bf16.mxu0 0
        %4108 = vmatpush1.bf16.msra.mxu0 %v3718
        %4109 = vmatprep.subr.bf16.mxu0 0
        %4110 = vmatpush1.bf16.msra.mxu0 %v3719
        %4111 = vmatprep.subr.bf16.mxu0 0
        %4112 = vmatpush1.bf16.msra.mxu0 %v3720
        %4113 = vmatprep.subr.bf16.mxu0 0
        %4114 = vmatpush1.bf16.msra.mxu0 %v3721
        %4115 = vmatprep.subr.bf16.mxu0 0
        %4116 = vmatpush1.bf16.msra.mxu0 %v3722
        %4117 = vmatprep.subr.bf16.mxu0 0
        %4118 = vmatpush1.bf16.msra.mxu0 %v3723
        %4119 = vmatprep.subr.bf16.mxu0 0
        %4120 = vmatpush1.bf16.msra.mxu0 %v3724
        %4121 = vmatprep.subr.bf16.mxu0 0
        %4122 = vmatpush1.bf16.msra.mxu0 %v3725
        %4123 = vmatprep.mubr.bf16.mxu0 %v2850
        %4124 = vmatmul.mubr.bf16.gmra.mrb[0].mxu0 %v2849
        %v4125 = vpop.f32.mrb[0].mxu0
        %v4126 = vadd.f32 %v4085, %v4125
        %v4127 = vpop.f32.mrb[0].mxu0
        %v4128 = vpop.f32.mrb[0].mxu0
        %v4129 = vadd.f32 %v4088, %v4128
        %v4130 = vpop.f32.mrb[0].mxu0
        %4131 = vdwg.mxu0
        %4132 = vmatprep.subr.bf16.mxu0 0
        %4133 = vmatpush1.bf16.msra.mxu0 %v3726
        %4134 = vmatprep.subr.bf16.mxu0 0
        %4135 = vmatpush1.bf16.msra.mxu0 %v3727
        %4136 = vmatprep.subr.bf16.mxu0 0
        %4137 = vmatpush1.bf16.msra.mxu0 %v3728
        %4138 = vmatprep.subr.bf16.mxu0 0
        %4139 = vmatpush1.bf16.msra.mxu0 %v3729
        %4140 = vmatprep.subr.bf16.mxu0 0
        %4141 = vmatpush1.bf16.msra.mxu0 %v3730
        %4142 = vmatprep.subr.bf16.mxu0 0
        %4143 = vmatpush1.bf16.msra.mxu0 %v3731
        %4144 = vmatprep.subr.bf16.mxu0 0
        %4145 = vmatpush1.bf16.msra.mxu0 %v3732
        %4146 = vmatprep.subr.bf16.mxu0 0
        %4147 = vmatpush1.bf16.msra.mxu0 %v3733
        %4148 = vmatprep.subr.bf16.mxu0 0
        %4149 = vmatpush1.bf16.msra.mxu0 %v3734
        %4150 = vmatprep.subr.bf16.mxu0 0
        %4151 = vmatpush1.bf16.msra.mxu0 %v3735
        %4152 = vmatprep.subr.bf16.mxu0 0
        %4153 = vmatpush1.bf16.msra.mxu0 %v3736
        %4154 = vmatprep.subr.bf16.mxu0 0
        %4155 = vmatpush1.bf16.msra.mxu0 %v3737
        %4156 = vmatprep.subr.bf16.mxu0 0
        %4157 = vmatpush1.bf16.msra.mxu0 %v3738
        %4158 = vmatprep.subr.bf16.mxu0 0
        %4159 = vmatpush1.bf16.msra.mxu0 %v3739
        %4160 = vmatprep.subr.bf16.mxu0 0
        %4161 = vmatpush1.bf16.msra.mxu0 %v3740
        %4162 = vmatprep.subr.bf16.mxu0 0
        %4163 = vmatpush1.bf16.msra.mxu0 %v3741
        %4164 = vmatprep.mubr.bf16.mxu0 %v2852
        %4165 = vmatmul.mubr.bf16.gmra.mrb[0].mxu0 %v2851
        %v4166 = vpop.f32.mrb[0].mxu0
        %v4167 = vadd.f32 %v4126, %v4166
        %v4168 = vpop.f32.mrb[0].mxu0
        %v4169 = vpop.f32.mrb[0].mxu0
        %v4170 = vadd.f32 %v4129, %v4169
        %v4171 = vpop.f32.mrb[0].mxu0
        %4172 = vdwg.mxu0
        %4173 = vmatprep.subr.bf16.mxu0 0
        %4174 = vmatpush1.bf16.msra.mxu0 %v3742
        %4175 = vmatprep.subr.bf16.mxu0 0
        %4176 = vmatpush1.bf16.msra.mxu0 %v3743
        %4177 = vmatprep.subr.bf16.mxu0 0
        %4178 = vmatpush1.bf16.msra.mxu0 %v3744
        %4179 = vmatprep.subr.bf16.mxu0 0
        %4180 = vmatpush1.bf16.msra.mxu0 %v3745
        %4181 = vmatprep.subr.bf16.mxu0 0
        %4182 = vmatpush1.bf16.msra.mxu0 %v3746
        %4183 = vmatprep.subr.bf16.mxu0 0
        %4184 = vmatpush1.bf16.msra.mxu0 %v3747
        %4185 = vmatprep.subr.bf16.mxu0 0
        %4186 = vmatpush1.bf16.msra.mxu0 %v3748
        %4187 = vmatprep.subr.bf16.mxu0 0
        %4188 = vmatpush1.bf16.msra.mxu0 %v3749
        %4189 = vmatprep.subr.bf16.mxu0 0
        %4190 = vmatpush1.bf16.msra.mxu0 %v3750
        %4191 = vmatprep.subr.bf16.mxu0 0
        %4192 = vmatpush1.bf16.msra.mxu0 %v3751
        %4193 = vmatprep.subr.bf16.mxu0 0
        %4194 = vmatpush1.bf16.msra.mxu0 %v3752
        %4195 = vmatprep.subr.bf16.mxu0 0
        %4196 = vmatpush1.bf16.msra.mxu0 %v3753
        %4197 = vmatprep.subr.bf16.mxu0 0
        %4198 = vmatpush1.bf16.msra.mxu0 %v3754
        %4199 = vmatprep.subr.bf16.mxu0 0
        %4200 = vmatpush1.bf16.msra.mxu0 %v3755
        %4201 = vmatprep.subr.bf16.mxu0 0
        %4202 = vmatpush1.bf16.msra.mxu0 %v3756
        %4203 = vmatprep.subr.bf16.mxu0 0
        %4204 = vmatpush1.bf16.msra.mxu0 %v3757
        %4205 = vmatprep.mubr.bf16.mxu0 %v2854
        %4206 = vmatmul.mubr.bf16.gmra.mrb[0].mxu0 %v2853
        %v4207 = vpop.f32.mrb[0].mxu0
        %v4208 = vadd.f32 %v4167, %v4207
        %v4209 = vpop.f32.mrb[0].mxu0
        %v4210 = vpop.f32.mrb[0].mxu0
        %v4211 = vadd.f32 %v4170, %v4210
        %v4212 = vpop.f32.mrb[0].mxu0
        %4213 = vdwg.mxu0
        %v4214 = vadd.f32 %v2181, %v4208
        %v4215 = vadd.f32 %v2182, %v4211
        %v4216 = vsel %vm385, %v4214, 0.0
        %4217 = vadd.xlane.f32.xlu0 %v4216
        %v4218 = vpop.xlane.xlu0 %4217
        %v4219 = vsel %vm385, %v4215, 0.0
        %4220 = vadd.xlane.f32.xlu0 %v4219
        %v4221 = vpop.xlane.xlu0 %4220
        %v4222 = vmul.f32 %v4218, %v2146
        %v4223 = vmul.f32 %v4221, %v2146
        %v4224 = vsub.f32 %v4214, %v4222
        %v4225 = vsub.f32 %v4215, %v4223
        %v4226 = vmul.f32 %v4224, %v4224
        %v4227 = vmul.f32 %v4225, %v4225
        %v4228 = vsel %vm385, %v4226, 0.0
        %4229 = vadd.xlane.f32.xlu0 %v4228
        %v4230 = vpop.xlane.xlu0 %4229
        %v4231 = vsel %vm385, %v4227, 0.0
        %4232 = vadd.xlane.f32.xlu0 %v4231
        %v4233 = vpop.xlane.xlu0 %4232
        %v4234 = vmul.f32 %v4230, %v2146
        %v4235 = vmul.f32 %v4233, %v2146
        %v4236 = vadd.f32 %v4234, 1e-05
        %v4237 = vadd.f32 %v4235, 1e-05
        %v4238 = vrsqrt.pop %v4236
        %v4239 = vrsqrt.pop %v4237
        %v4240 = vmul.f32 %v4224, %v4238
        %v4241 = vmul.f32 %v4225, %v4239
        %v4243 = vlaneseq
        %v4244 = vshrl.u32 %v4243, 7
        %v4245 = vsub.s32 0, %v4244
        %v4246 = vrot.slane %v2135, %v4245
        %v4248 = vmul.f32 %v4240, %v4246
        %v4249 = vmul.f32 %v4241, %v4246
        %v4251 = vlaneseq
        %v4252 = vshrl.u32 %v4251, 7
        %v4253 = vsub.s32 0, %v4252
        %v4254 = vrot.slane %v2137, %v4253
        %v4256 = vadd.f32 %v4248, %v4254
        %v4257 = vadd.f32 %v4249, %v4254
        %v4258 = vpack.c.bf16 %v4257, %v4256
        %s4259 = scalar_lea.vmem %s1, 192
        %v4260 = vld [vmem:[%s4259] sm:$0xf]
        %v4261 = vld [vmem:[%s4259 + $0x4] sm:$0xf]
        %v4262 = vld [vmem:[%s4259 + $0x8] sm:$0xf]
        %v4263 = vld [vmem:[%s4259 + $0xc] sm:$0xf]
        %s4264 = scalar_lea.vmem %s2, 12
        %v4265 = vld [vmem:[%s4264] sm:$0x1]
        %v4267 = vlaneseq
        %v4268 = vshrl.u32 %v4267, 7
        %v4269 = vsub.s32 0, %v4268
        %v4270 = vrot.slane %v4265, %v4269
        %v4276 = vunpack.c.l.b16 %v4260
        %v4277 = vunpack.c.l.b16 %v4261
        %v4278 = vunpack.c.l.b16 %v4262
        %v4279 = vunpack.c.l.b16 %v4263
        %v4280 = vpack.c.b16 %v4277, %v4276
        %v4281 = vpack.c.b16 %v4279, %v4278
        %v4285 = vsel %vm385, %v4258, 0
        %4287 = vmatprep.subr.bf16.mxu0 0
        %4288 = vmatpush1.bf16.msra.mxu0 %v4280
        %4289 = vmatprep.subr.bf16.mxu0 0
        %4290 = vmatpush1.bf16.msra.mxu0 %v4281
        %4291 = vmatprep.subr.bf16.mxu0 0
        %4292 = vmatpush1.bf16.msra.mxu0 0
        %4293 = vmatprep.subr.bf16.mxu0 0
        %4294 = vmatpush1.bf16.msra.mxu0 0
        %4295 = vmatprep.subr.bf16.mxu0 0
        %4296 = vmatpush1.bf16.msra.mxu0 0
        %4297 = vmatprep.subr.bf16.mxu0 0
        %4298 = vmatpush1.bf16.msra.mxu0 0
        %4299 = vmatprep.subr.bf16.mxu0 0
        %4300 = vmatpush1.bf16.msra.mxu0 0
        %4301 = vmatprep.subr.bf16.mxu0 0
        %4302 = vmatpush1.bf16.msra.mxu0 0
        %4303 = vmatprep.subr.bf16.mxu0 0
        %4304 = vmatpush1.bf16.msra.mxu0 0
        %4305 = vmatprep.subr.bf16.mxu0 0
        %4306 = vmatpush1.bf16.msra.mxu0 0
        %4307 = vmatprep.subr.bf16.mxu0 0
        %4308 = vmatpush1.bf16.msra.mxu0 0
        %4309 = vmatprep.subr.bf16.mxu0 0
        %4310 = vmatpush1.bf16.msra.mxu0 0
        %4311 = vmatprep.subr.bf16.mxu0 0
        %4312 = vmatpush1.bf16.msra.mxu0 0
        %4313 = vmatprep.subr.bf16.mxu0 0
        %4314 = vmatpush1.bf16.msra.mxu0 0
        %4315 = vmatprep.subr.bf16.mxu0 0
        %4316 = vmatpush1.bf16.msra.mxu0 0
        %4317 = vmatprep.subr.bf16.mxu0 0
        %4318 = vmatpush1.bf16.msra.mxu0 0
        %4319 = vmatprep.mubr.bf16.mxu0 0
        %4320 = vmatmul.mubr.bf16.gmra.mrb[0].mxu0 %v4285
        %v4321 = vpop.f32.mrb[0].mxu0
        %v4322 = vadd.f32 %v4270, %v4321
        %v4323 = vpop.f32.mrb[0].mxu0
        %v4324 = vpop.f32.mrb[0].mxu0
        %v4325 = vadd.f32 %v4270, %v4324
        %v4326 = vpop.f32.mrb[0].mxu0
        %4327 = vdwg.mxu0
        %s4328 = scalar_lea.vmem %s1, 256
        %v4329 = vld [vmem:[%s4328] sm:$0xf]
        %v4330 = vld [vmem:[%s4328 + $0x4] sm:$0xf]
        %v4331 = vld [vmem:[%s4328 + $0x8] sm:$0xf]
        %v4332 = vld [vmem:[%s4328 + $0xc] sm:$0xf]
        %s4333 = scalar_lea.vmem %s2, 16
        %v4334 = vld [vmem:[%s4333] sm:$0x1]
        %v4336 = vlaneseq
        %v4337 = vshrl.u32 %v4336, 7
        %v4338 = vsub.s32 0, %v4337
        %v4339 = vrot.slane %v4334, %v4338
        %v4345 = vunpack.c.l.b16 %v4329
        %v4346 = vunpack.c.l.b16 %v4330
        %v4347 = vunpack.c.l.b16 %v4331
        %v4348 = vunpack.c.l.b16 %v4332
        %v4349 = vpack.c.b16 %v4346, %v4345
        %v4350 = vpack.c.b16 %v4348, %v4347
        %4353 = vmatprep.subr.bf16.mxu0 0
        %4354 = vmatpush1.bf16.msra.mxu0 %v4349
        %4355 = vmatprep.subr.bf16.mxu0 0
        %4356 = vmatpush1.bf16.msra.mxu0 %v4350
        %4357 = vmatprep.subr.bf16.mxu0 0
        %4358 = vmatpush1.bf16.msra.mxu0 0
        %4359 = vmatprep.subr.bf16.mxu0 0
        %4360 = vmatpush1.bf16.msra.mxu0 0
        %4361 = vmatprep.subr.bf16.mxu0 0
        %4362 = vmatpush1.bf16.msra.mxu0 0
        %4363 = vmatprep.subr.bf16.mxu0 0
        %4364 = vmatpush1.bf16.msra.mxu0 0
        %4365 = vmatprep.subr.bf16.mxu0 0
        %4366 = vmatpush1.bf16.msra.mxu0 0
        %4367 = vmatprep.subr.bf16.mxu0 0
        %4368 = vmatpush1.bf16.msra.mxu0 0
        %4369 = vmatprep.subr.bf16.mxu0 0
        %4370 = vmatpush1.bf16.msra.mxu0 0
        %4371 = vmatprep.subr.bf16.mxu0 0
        %4372 = vmatpush1.bf16.msra.mxu0 0
        %4373 = vmatprep.subr.bf16.mxu0 0
        %4374 = vmatpush1.bf16.msra.mxu0 0
        %4375 = vmatprep.subr.bf16.mxu0 0
        %4376 = vmatpush1.bf16.msra.mxu0 0
        %4377 = vmatprep.subr.bf16.mxu0 0
        %4378 = vmatpush1.bf16.msra.mxu0 0
        %4379 = vmatprep.subr.bf16.mxu0 0
        %4380 = vmatpush1.bf16.msra.mxu0 0
        %4381 = vmatprep.subr.bf16.mxu0 0
        %4382 = vmatpush1.bf16.msra.mxu0 0
        %4383 = vmatprep.subr.bf16.mxu0 0
        %4384 = vmatpush1.bf16.msra.mxu0 0
        %4385 = vmatprep.mubr.bf16.mxu0 0
        %4386 = vmatmul.mubr.bf16.gmra.mrb[0].mxu0 %v4285
        %v4387 = vpop.f32.mrb[0].mxu0
        %v4388 = vadd.f32 %v4339, %v4387
        %v4389 = vpop.f32.mrb[0].mxu0
        %v4390 = vpop.f32.mrb[0].mxu0
        %v4391 = vadd.f32 %v4339, %v4390
        %v4392 = vpop.f32.mrb[0].mxu0
        %4393 = vdwg.mxu0
        %s4394 = scalar_lea.vmem %s1, 320
        %v4395 = vld [vmem:[%s4394] sm:$0xf]
        %v4396 = vld [vmem:[%s4394 + $0x4] sm:$0xf]
        %v4397 = vld [vmem:[%s4394 + $0x8] sm:$0xf]
        %v4398 = vld [vmem:[%s4394 + $0xc] sm:$0xf]
        %s4399 = scalar_lea.vmem %s2, 20
        %v4400 = vld [vmem:[%s4399] sm:$0x1]
        %v4402 = vlaneseq
        %v4403 = vshrl.u32 %v4402, 7
        %v4404 = vsub.s32 0, %v4403
        %v4405 = vrot.slane %v4400, %v4404
        %v4411 = vunpack.c.l.b16 %v4395
        %v4412 = vunpack.c.l.b16 %v4396
        %v4413 = vunpack.c.l.b16 %v4397
        %v4414 = vunpack.c.l.b16 %v4398
        %v4415 = vpack.c.b16 %v4412, %v4411
        %v4416 = vpack.c.b16 %v4414, %v4413
        %4419 = vmatprep.subr.bf16.mxu0 0
        %4420 = vmatpush1.bf16.msra.mxu0 %v4415
        %4421 = vmatprep.subr.bf16.mxu0 0
        %4422 = vmatpush1.bf16.msra.mxu0 %v4416
        %4423 = vmatprep.subr.bf16.mxu0 0
        %4424 = vmatpush1.bf16.msra.mxu0 0
        %4425 = vmatprep.subr.bf16.mxu0 0
        %4426 = vmatpush1.bf16.msra.mxu0 0
        %4427 = vmatprep.subr.bf16.mxu0 0
        %4428 = vmatpush1.bf16.msra.mxu0 0
        %4429 = vmatprep.subr.bf16.mxu0 0
        %4430 = vmatpush1.bf16.msra.mxu0 0
        %4431 = vmatprep.subr.bf16.mxu0 0
        %4432 = vmatpush1.bf16.msra.mxu0 0
        %4433 = vmatprep.subr.bf16.mxu0 0
        %4434 = vmatpush1.bf16.msra.mxu0 0
        %4435 = vmatprep.subr.bf16.mxu0 0
        %4436 = vmatpush1.bf16.msra.mxu0 0
        %4437 = vmatprep.subr.bf16.mxu0 0
        %4438 = vmatpush1.bf16.msra.mxu0 0
        %4439 = vmatprep.subr.bf16.mxu0 0
        %4440 = vmatpush1.bf16.msra.mxu0 0
        %4441 = vmatprep.subr.bf16.mxu0 0
        %4442 = vmatpush1.bf16.msra.mxu0 0
        %4443 = vmatprep.subr.bf16.mxu0 0
        %4444 = vmatpush1.bf16.msra.mxu0 0
        %4445 = vmatprep.subr.bf16.mxu0 0
        %4446 = vmatpush1.bf16.msra.mxu0 0
        %4447 = vmatprep.subr.bf16.mxu0 0
        %4448 = vmatpush1.bf16.msra.mxu0 0
        %4449 = vmatprep.subr.bf16.mxu0 0
        %4450 = vmatpush1.bf16.msra.mxu0 0
        %4451 = vmatprep.mubr.bf16.mxu0 0
        %4452 = vmatmul.mubr.bf16.gmra.mrb[0].mxu0 %v4285
        %v4453 = vpop.f32.mrb[0].mxu0
        %v4454 = vadd.f32 %v4405, %v4453
        %v4455 = vpop.f32.mrb[0].mxu0
        %v4456 = vpop.f32.mrb[0].mxu0
        %v4457 = vadd.f32 %v4405, %v4456
        %v4458 = vpop.f32.mrb[0].mxu0
        %4459 = vdwg.mxu0
        %v4461 = vsel %vm562, %v4322, 0
        %v4464 = vsel %vm562, %v4325, 0
        %v4467 = vsel %vm562, %v4388, 0
        %v4470 = vsel %vm562, %v4391, 0
        %4472 = vmatprep.subr.mxu0 0.0
        %4473 = vmatpush1.xpose.msra.mxu0 %v4467
        %4474 = vmatprep.subr.mxu0 0.0
        %4475 = vmatpush1.xpose.msra.mxu0 %v4470
        %4476 = vmatprep.subr.mxu0 0.0
        %4477 = vmatpush1.xpose.msra.mxu0 0.0
        %4478 = vmatprep.subr.mxu0 0.0
        %4479 = vmatpush1.xpose.msra.mxu0 0.0
        %4480 = vmatprep.subr.mxu0 0.0
        %4481 = vmatpush1.xpose.msra.mxu0 0.0
        %4482 = vmatprep.subr.mxu0 0.0
        %4483 = vmatpush1.xpose.msra.mxu0 0.0
        %4484 = vmatprep.subr.mxu0 0.0
        %4485 = vmatpush1.xpose.msra.mxu0 0.0
        %4486 = vmatprep.subr.mxu0 0.0
        %4487 = vmatpush1.xpose.msra.mxu0 0.0
        %4488 = vmatprep.subr.mxu0 0.0
        %4489 = vmatpush1.xpose.msra.mxu0 0.0
        %4490 = vmatprep.subr.mxu0 0.0
        %4491 = vmatpush1.xpose.msra.mxu0 0.0
        %4492 = vmatprep.subr.mxu0 0.0
        %4493 = vmatpush1.xpose.msra.mxu0 0.0
        %4494 = vmatprep.subr.mxu0 0.0
        %4495 = vmatpush1.xpose.msra.mxu0 0.0
        %4496 = vmatprep.subr.mxu0 0.0
        %4497 = vmatpush1.xpose.msra.mxu0 0.0
        %4498 = vmatprep.subr.mxu0 0.0
        %4499 = vmatpush1.xpose.msra.mxu0 0.0
        %4500 = vmatprep.subr.mxu0 0.0
        %4501 = vmatpush1.xpose.msra.mxu0 0.0
        %4502 = vmatprep.subr.mxu0 0.0
        %4503 = vmatpush1.xpose.msra.mxu0 0.0
        %4504 = vmatprep.subr.mxu0 0.0
        %4505 = vmatpush1.xpose.msra.mxu0 0.0
        %4506 = vmatprep.subr.mxu0 0.0
        %4507 = vmatpush1.xpose.msra.mxu0 0.0
        %4508 = vmatprep.subr.mxu0 0.0
        %4509 = vmatpush1.xpose.msra.mxu0 0.0
        %4510 = vmatprep.subr.mxu0 0.0
        %4511 = vmatpush1.xpose.msra.mxu0 0.0
        %4512 = vmatprep.subr.mxu0 0.0
        %4513 = vmatpush1.xpose.msra.mxu0 0.0
        %4514 = vmatprep.subr.mxu0 0.0
        %4515 = vmatpush1.xpose.msra.mxu0 0.0
        %4516 = vmatprep.subr.mxu0 0.0
        %4517 = vmatpush1.xpose.msra.mxu0 0.0
        %4518 = vmatprep.subr.mxu0 0.0
        %4519 = vmatpush1.xpose.msra.mxu0 0.0
        %4520 = vmatprep.subr.mxu0 0.0
        %4521 = vmatpush1.xpose.msra.mxu0 0.0
        %4522 = vmatprep.subr.mxu0 0.0
        %4523 = vmatpush1.xpose.msra.mxu0 0.0
        %4524 = vmatprep.subr.mxu0 0.0
        %4525 = vmatpush1.xpose.msra.mxu0 0.0
        %4526 = vmatprep.subr.mxu0 0.0
        %4527 = vmatpush1.xpose.msra.mxu0 0.0
        %4528 = vmatprep.subr.mxu0 0.0
        %4529 = vmatpush1.xpose.msra.mxu0 0.0
        %4530 = vmatprep.subr.mxu0 0.0
        %4531 = vmatpush1.xpose.msra.mxu0 0.0
        %4532 = vmatprep.subr.mxu0 0.0
        %4533 = vmatpush1.xpose.msra.mxu0 0.0
        %4534 = vmatprep.subr.mxu0 0.0
        %4535 = vmatpush1.xpose.msra.mxu0 0.0
        %4536 = vmatprep.mubr.f32.mxu0 0.0
        %4537 = vmatmul.mubr.f32.gmra.mrb[0].mxu0 %v4461
        %v4538 = vpop.f32.mrb[0].mxu0
        %v4539 = vadd.f32 0.0, %v4538
        %v4540 = vpop.f32.mrb[0].mxu0
        %4541 = vmatprep.mubr.f32.mxu0 0.0
        %4542 = vmatmul.mubr.f32.gmra.mrb[0].mxu0 %v4464
        %v4543 = vpop.f32.mrb[0].mxu0
        %v4544 = vadd.f32 0.0, %v4543
        %v4545 = vpop.f32.mrb[0].mxu0
        %4546 = vdwg.mxu0
        %v4547 = vsel %vm650, %v4539, -inf
        %4548 = vmax.xlane.f32.xlu0 %v4547
        %v4549 = vpop.xlane.xlu0 %4548
        %v4550 = vsel %vm650, %v4544, -inf
        %4551 = vmax.xlane.f32.xlu0 %v4550
        %v4552 = vpop.xlane.xlu0 %4551
        %v4553 = vsub.f32 %v4539, %v4549
        %v4554 = vsub.f32 %v4544, %v4552
        %v4555 = vmul.f32 %v4553, 1.442695
        %v4556 = vpow.pop %v4555
        %v4557 = vmul.f32 %v4554, 1.442695
        %v4558 = vpow.pop %v4557
        %v4559 = vsel %vm650, %v4556, 0.0
        %4560 = vadd.xlane.f32.xlu0 %v4559
        %v4561 = vpop.xlane.xlu0 %4560
        %v4562 = vsel %vm650, %v4558, 0.0
        %4563 = vadd.xlane.f32.xlu0 %v4562
        %v4564 = vpop.xlane.xlu0 %4563
        %v4565 = vrcp.pop %v4561
        %v4566 = vrcp.pop %v4564
        %v4567 = vmul.f32 %v4556, %v4565
        %v4568 = vmul.f32 %v4558, %v4566
        %v4570 = vsel %vm650, %v4567, 0
        %v4573 = vsel %vm650, %v4568, 0
        %4575 = vmatprep.subr.mxu0 0.0
        %4576 = vmatpush1.msra.mxu0 %v4454
        %4577 = vmatprep.subr.mxu0 0.0
        %4578 = vmatpush1.msra.mxu0 %v4457
        %4579 = vmatprep.subr.mxu0 0.0
        %4580 = vmatpush1.msra.mxu0 0.0
        %4581 = vmatprep.subr.mxu0 0.0
        %4582 = vmatpush1.msra.mxu0 0.0
        %4583 = vmatprep.subr.mxu0 0.0
        %4584 = vmatpush1.msra.mxu0 0.0
        %4585 = vmatprep.subr.mxu0 0.0
        %4586 = vmatpush1.msra.mxu0 0.0
        %4587 = vmatprep.subr.mxu0 0.0
        %4588 = vmatpush1.msra.mxu0 0.0
        %4589 = vmatprep.subr.mxu0 0.0
        %4590 = vmatpush1.msra.mxu0 0.0
        %4591 = vmatprep.subr.mxu0 0.0
        %4592 = vmatpush1.msra.mxu0 0.0
        %4593 = vmatprep.subr.mxu0 0.0
        %4594 = vmatpush1.msra.mxu0 0.0
        %4595 = vmatprep.subr.mxu0 0.0
        %4596 = vmatpush1.msra.mxu0 0.0
        %4597 = vmatprep.subr.mxu0 0.0
        %4598 = vmatpush1.msra.mxu0 0.0
        %4599 = vmatprep.subr.mxu0 0.0
        %4600 = vmatpush1.msra.mxu0 0.0
        %4601 = vmatprep.subr.mxu0 0.0
        %4602 = vmatpush1.msra.mxu0 0.0
        %4603 = vmatprep.subr.mxu0 0.0
        %4604 = vmatpush1.msra.mxu0 0.0
        %4605 = vmatprep.subr.mxu0 0.0
        %4606 = vmatpush1.msra.mxu0 0.0
        %4607 = vmatprep.subr.mxu0 0.0
        %4608 = vmatpush1.msra.mxu0 0.0
        %4609 = vmatprep.subr.mxu0 0.0
        %4610 = vmatpush1.msra.mxu0 0.0
        %4611 = vmatprep.subr.mxu0 0.0
        %4612 = vmatpush1.msra.mxu0 0.0
        %4613 = vmatprep.subr.mxu0 0.0
        %4614 = vmatpush1.msra.mxu0 0.0
        %4615 = vmatprep.subr.mxu0 0.0
        %4616 = vmatpush1.msra.mxu0 0.0
        %4617 = vmatprep.subr.mxu0 0.0
        %4618 = vmatpush1.msra.mxu0 0.0
        %4619 = vmatprep.subr.mxu0 0.0
        %4620 = vmatpush1.msra.mxu0 0.0
        %4621 = vmatprep.subr.mxu0 0.0
        %4622 = vmatpush1.msra.mxu0 0.0
        %4623 = vmatprep.subr.mxu0 0.0
        %4624 = vmatpush1.msra.mxu0 0.0
        %4625 = vmatprep.subr.mxu0 0.0
        %4626 = vmatpush1.msra.mxu0 0.0
        %4627 = vmatprep.subr.mxu0 0.0
        %4628 = vmatpush1.msra.mxu0 0.0
        %4629 = vmatprep.subr.mxu0 0.0
        %4630 = vmatpush1.msra.mxu0 0.0
        %4631 = vmatprep.subr.mxu0 0.0
        %4632 = vmatpush1.msra.mxu0 0.0
        %4633 = vmatprep.subr.mxu0 0.0
        %4634 = vmatpush1.msra.mxu0 0.0
        %4635 = vmatprep.subr.mxu0 0.0
        %4636 = vmatpush1.msra.mxu0 0.0
        %4637 = vmatprep.subr.mxu0 0.0
        %4638 = vmatpush1.msra.mxu0 0.0
        %4639 = vmatprep.mubr.f32.mxu0 0.0
        %4640 = vmatmul.mubr.f32.gmra.mrb[0].mxu0 %v4570
        %v4641 = vpop.f32.mrb[0].mxu0
        %v4642 = vadd.f32 0.0, %v4641
        %v4643 = vpop.f32.mrb[0].mxu0
        %4644 = vmatprep.mubr.f32.mxu0 0.0
        %4645 = vmatmul.mubr.f32.gmra.mrb[0].mxu0 %v4573
        %v4646 = vpop.f32.mrb[0].mxu0
        %v4647 = vadd.f32 0.0, %v4646
        %v4648 = vpop.f32.mrb[0].mxu0
        %4649 = vdwg.mxu0
        %v4650 = vpack.c.bf16 %v4647, %v4642
        %s4651 = scalar_lea.vmem %s3, 16
        %v4652 = vld [vmem:[%s4651] sm:$0xf]
        %s4653 = scalar_lea.vmem %s1, 208
        %v4654 = vld [vmem:[%s4653] sm:$0xf]
        %v4655 = vld [vmem:[%s4653 + $0x4] sm:$0xf]
        %v4656 = vld [vmem:[%s4653 + $0x8] sm:$0xf]
        %v4657 = vld [vmem:[%s4653 + $0xc] sm:$0xf]
        %s4658 = scalar_lea.vmem %s2, 13
        %v4659 = vld [vmem:[%s4658] sm:$0x1]
        %v4661 = vlaneseq
        %v4662 = vshrl.u32 %v4661, 7
        %v4663 = vsub.s32 0, %v4662
        %v4664 = vrot.slane %v4659, %v4663
        %v4670 = vunpack.c.l.b16 %v4654
        %v4671 = vunpack.c.l.b16 %v4655
        %v4672 = vunpack.c.l.b16 %v4656
        %v4673 = vunpack.c.l.b16 %v4657
        %v4674 = vpack.c.b16 %v4671, %v4670
        %v4675 = vpack.c.b16 %v4673, %v4672
        %4678 = vmatprep.subr.bf16.mxu0 0
        %4679 = vmatpush1.bf16.msra.mxu0 %v4674
        %4680 = vmatprep.subr.bf16.mxu0 0
        %4681 = vmatpush1.bf16.msra.mxu0 %v4675
        %4682 = vmatprep.subr.bf16.mxu0 0
        %4683 = vmatpush1.bf16.msra.mxu0 0
        %4684 = vmatprep.subr.bf16.mxu0 0
        %4685 = vmatpush1.bf16.msra.mxu0 0
        %4686 = vmatprep.subr.bf16.mxu0 0
        %4687 = vmatpush1.bf16.msra.mxu0 0
        %4688 = vmatprep.subr.bf16.mxu0 0
        %4689 = vmatpush1.bf16.msra.mxu0 0
        %4690 = vmatprep.subr.bf16.mxu0 0
        %4691 = vmatpush1.bf16.msra.mxu0 0
        %4692 = vmatprep.subr.bf16.mxu0 0
        %4693 = vmatpush1.bf16.msra.mxu0 0
        %4694 = vmatprep.subr.bf16.mxu0 0
        %4695 = vmatpush1.bf16.msra.mxu0 0
        %4696 = vmatprep.subr.bf16.mxu0 0
        %4697 = vmatpush1.bf16.msra.mxu0 0
        %4698 = vmatprep.subr.bf16.mxu0 0
        %4699 = vmatpush1.bf16.msra.mxu0 0
        %4700 = vmatprep.subr.bf16.mxu0 0
        %4701 = vmatpush1.bf16.msra.mxu0 0
        %4702 = vmatprep.subr.bf16.mxu0 0
        %4703 = vmatpush1.bf16.msra.mxu0 0
        %4704 = vmatprep.subr.bf16.mxu0 0
        %4705 = vmatpush1.bf16.msra.mxu0 0
        %4706 = vmatprep.subr.bf16.mxu0 0
        %4707 = vmatpush1.bf16.msra.mxu0 0
        %4708 = vmatprep.subr.bf16.mxu0 0
        %4709 = vmatpush1.bf16.msra.mxu0 0
        %4710 = vmatprep.mubr.bf16.mxu0 0
        %4711 = vmatmul.mubr.bf16.gmra.mrb[0].mxu0 %v4285
        %v4712 = vpop.f32.mrb[0].mxu0
        %v4713 = vadd.f32 %v4664, %v4712
        %v4714 = vpop.f32.mrb[0].mxu0
        %v4715 = vpop.f32.mrb[0].mxu0
        %v4716 = vadd.f32 %v4664, %v4715
        %v4717 = vpop.f32.mrb[0].mxu0
        %4718 = vdwg.mxu0
        %s4719 = scalar_lea.vmem %s1, 272
        %v4720 = vld [vmem:[%s4719] sm:$0xf]
        %v4721 = vld [vmem:[%s4719 + $0x4] sm:$0xf]
        %v4722 = vld [vmem:[%s4719 + $0x8] sm:$0xf]
        %v4723 = vld [vmem:[%s4719 + $0xc] sm:$0xf]
        %s4724 = scalar_lea.vmem %s2, 17
        %v4725 = vld [vmem:[%s4724] sm:$0x1]
        %v4727 = vlaneseq
        %v4728 = vshrl.u32 %v4727, 7
        %v4729 = vsub.s32 0, %v4728
        %v4730 = vrot.slane %v4725, %v4729
        %v4736 = vunpack.c.l.b16 %v4720
        %v4737 = vunpack.c.l.b16 %v4721
        %v4738 = vunpack.c.l.b16 %v4722
        %v4739 = vunpack.c.l.b16 %v4723
        %v4740 = vpack.c.b16 %v4737, %v4736
        %v4741 = vpack.c.b16 %v4739, %v4738
        %4744 = vmatprep.subr.bf16.mxu0 0
        %4745 = vmatpush1.bf16.msra.mxu0 %v4740
        %4746 = vmatprep.subr.bf16.mxu0 0
        %4747 = vmatpush1.bf16.msra.mxu0 %v4741
        %4748 = vmatprep.subr.bf16.mxu0 0
        %4749 = vmatpush1.bf16.msra.mxu0 0
        %4750 = vmatprep.subr.bf16.mxu0 0
        %4751 = vmatpush1.bf16.msra.mxu0 0
        %4752 = vmatprep.subr.bf16.mxu0 0
        %4753 = vmatpush1.bf16.msra.mxu0 0
        %4754 = vmatprep.subr.bf16.mxu0 0
        %4755 = vmatpush1.bf16.msra.mxu0 0
        %4756 = vmatprep.subr.bf16.mxu0 0
        %4757 = vmatpush1.bf16.msra.mxu0 0
        %4758 = vmatprep.subr.bf16.mxu0 0
        %4759 = vmatpush1.bf16.msra.mxu0 0
        %4760 = vmatprep.subr.bf16.mxu0 0
        %4761 = vmatpush1.bf16.msra.mxu0 0
        %4762 = vmatprep.subr.bf16.mxu0 0
        %4763 = vmatpush1.bf16.msra.mxu0 0
        %4764 = vmatprep.subr.bf16.mxu0 0
        %4765 = vmatpush1.bf16.msra.mxu0 0
        %4766 = vmatprep.subr.bf16.mxu0 0
        %4767 = vmatpush1.bf16.msra.mxu0 0
        %4768 = vmatprep.subr.bf16.mxu0 0
        %4769 = vmatpush1.bf16.msra.mxu0 0
        %4770 = vmatprep.subr.bf16.mxu0 0
        %4771 = vmatpush1.bf16.msra.mxu0 0
        %4772 = vmatprep.subr.bf16.mxu0 0
        %4773 = vmatpush1.bf16.msra.mxu0 0
        %4774 = vmatprep.subr.bf16.mxu0 0
        %4775 = vmatpush1.bf16.msra.mxu0 0
        %4776 = vmatprep.mubr.bf16.mxu0 0
        %4777 = vmatmul.mubr.bf16.gmra.mrb[0].mxu0 %v4285
        %v4778 = vpop.f32.mrb[0].mxu0
        %v4779 = vadd.f32 %v4730, %v4778
        %v4780 = vpop.f32.mrb[0].mxu0
        %v4781 = vpop.f32.mrb[0].mxu0
        %v4782 = vadd.f32 %v4730, %v4781
        %v4783 = vpop.f32.mrb[0].mxu0
        %4784 = vdwg.mxu0
        %s4785 = scalar_lea.vmem %s1, 336
        %v4786 = vld [vmem:[%s4785] sm:$0xf]
        %v4787 = vld [vmem:[%s4785 + $0x4] sm:$0xf]
        %v4788 = vld [vmem:[%s4785 + $0x8] sm:$0xf]
        %v4789 = vld [vmem:[%s4785 + $0xc] sm:$0xf]
        %s4790 = scalar_lea.vmem %s2, 21
        %v4791 = vld [vmem:[%s4790] sm:$0x1]
        %v4793 = vlaneseq
        %v4794 = vshrl.u32 %v4793, 7
        %v4795 = vsub.s32 0, %v4794
        %v4796 = vrot.slane %v4791, %v4795
        %v4802 = vunpack.c.l.b16 %v4786
        %v4803 = vunpack.c.l.b16 %v4787
        %v4804 = vunpack.c.l.b16 %v4788
        %v4805 = vunpack.c.l.b16 %v4789
        %v4806 = vpack.c.b16 %v4803, %v4802
        %v4807 = vpack.c.b16 %v4805, %v4804
        %4810 = vmatprep.subr.bf16.mxu0 0
        %4811 = vmatpush1.bf16.msra.mxu0 %v4806
        %4812 = vmatprep.subr.bf16.mxu0 0
        %4813 = vmatpush1.bf16.msra.mxu0 %v4807
        %4814 = vmatprep.subr.bf16.mxu0 0
        %4815 = vmatpush1.bf16.msra.mxu0 0
        %4816 = vmatprep.subr.bf16.mxu0 0
        %4817 = vmatpush1.bf16.msra.mxu0 0
        %4818 = vmatprep.subr.bf16.mxu0 0
        %4819 = vmatpush1.bf16.msra.mxu0 0
        %4820 = vmatprep.subr.bf16.mxu0 0
        %4821 = vmatpush1.bf16.msra.mxu0 0
        %4822 = vmatprep.subr.bf16.mxu0 0
        %4823 = vmatpush1.bf16.msra.mxu0 0
        %4824 = vmatprep.subr.bf16.mxu0 0
        %4825 = vmatpush1.bf16.msra.mxu0 0
        %4826 = vmatprep.subr.bf16.mxu0 0
        %4827 = vmatpush1.bf16.msra.mxu0 0
        %4828 = vmatprep.subr.bf16.mxu0 0
        %4829 = vmatpush1.bf16.msra.mxu0 0
        %4830 = vmatprep.subr.bf16.mxu0 0
        %4831 = vmatpush1.bf16.msra.mxu0 0
        %4832 = vmatprep.subr.bf16.mxu0 0
        %4833 = vmatpush1.bf16.msra.mxu0 0
        %4834 = vmatprep.subr.bf16.mxu0 0
        %4835 = vmatpush1.bf16.msra.mxu0 0
        %4836 = vmatprep.subr.bf16.mxu0 0
        %4837 = vmatpush1.bf16.msra.mxu0 0
        %4838 = vmatprep.subr.bf16.mxu0 0
        %4839 = vmatpush1.bf16.msra.mxu0 0
        %4840 = vmatprep.subr.bf16.mxu0 0
        %4841 = vmatpush1.bf16.msra.mxu0 0
        %4842 = vmatprep.mubr.bf16.mxu0 0
        %4843 = vmatmul.mubr.bf16.gmra.mrb[0].mxu0 %v4285
        %v4844 = vpop.f32.mrb[0].mxu0
        %v4845 = vadd.f32 %v4796, %v4844
        %v4846 = vpop.f32.mrb[0].mxu0
        %v4847 = vpop.f32.mrb[0].mxu0
        %v4848 = vadd.f32 %v4796, %v4847
        %v4849 = vpop.f32.mrb[0].mxu0
        %4850 = vdwg.mxu0
        %v4852 = vsel %vm562, %v4713, 0
        %v4855 = vsel %vm562, %v4716, 0
        %v4858 = vsel %vm562, %v4779, 0
        %v4861 = vsel %vm562, %v4782, 0
        %4863 = vmatprep.subr.mxu0 0.0
        %4864 = vmatpush1.xpose.msra.mxu0 %v4858
        %4865 = vmatprep.subr.mxu0 0.0
        %4866 = vmatpush1.xpose.msra.mxu0 %v4861
        %4867 = vmatprep.subr.mxu0 0.0
        %4868 = vmatpush1.xpose.msra.mxu0 0.0
        %4869 = vmatprep.subr.mxu0 0.0
        %4870 = vmatpush1.xpose.msra.mxu0 0.0
        %4871 = vmatprep.subr.mxu0 0.0
        %4872 = vmatpush1.xpose.msra.mxu0 0.0
        %4873 = vmatprep.subr.mxu0 0.0
        %4874 = vmatpush1.xpose.msra.mxu0 0.0
        %4875 = vmatprep.subr.mxu0 0.0
        %4876 = vmatpush1.xpose.msra.mxu0 0.0
        %4877 = vmatprep.subr.mxu0 0.0
        %4878 = vmatpush1.xpose.msra.mxu0 0.0
        %4879 = vmatprep.subr.mxu0 0.0
        %4880 = vmatpush1.xpose.msra.mxu0 0.0
        %4881 = vmatprep.subr.mxu0 0.0
        %4882 = vmatpush1.xpose.msra.mxu0 0.0
        %4883 = vmatprep.subr.mxu0 0.0
        %4884 = vmatpush1.xpose.msra.mxu0 0.0
        %4885 = vmatprep.subr.mxu0 0.0
        %4886 = vmatpush1.xpose.msra.mxu0 0.0
        %4887 = vmatprep.subr.mxu0 0.0
        %4888 = vmatpush1.xpose.msra.mxu0 0.0
        %4889 = vmatprep.subr.mxu0 0.0
        %4890 = vmatpush1.xpose.msra.mxu0 0.0
        %4891 = vmatprep.subr.mxu0 0.0
        %4892 = vmatpush1.xpose.msra.mxu0 0.0
        %4893 = vmatprep.subr.mxu0 0.0
        %4894 = vmatpush1.xpose.msra.mxu0 0.0
        %4895 = vmatprep.subr.mxu0 0.0
        %4896 = vmatpush1.xpose.msra.mxu0 0.0
        %4897 = vmatprep.subr.mxu0 0.0
        %4898 = vmatpush1.xpose.msra.mxu0 0.0
        %4899 = vmatprep.subr.mxu0 0.0
        %4900 = vmatpush1.xpose.msra.mxu0 0.0
        %4901 = vmatprep.subr.mxu0 0.0
        %4902 = vmatpush1.xpose.msra.mxu0 0.0
        %4903 = vmatprep.subr.mxu0 0.0
        %4904 = vmatpush1.xpose.msra.mxu0 0.0
        %4905 = vmatprep.subr.mxu0 0.0
        %4906 = vmatpush1.xpose.msra.mxu0 0.0
        %4907 = vmatprep.subr.mxu0 0.0
        %4908 = vmatpush1.xpose.msra.mxu0 0.0
        %4909 = vmatprep.subr.mxu0 0.0
        %4910 = vmatpush1.xpose.msra.mxu0 0.0
        %4911 = vmatprep.subr.mxu0 0.0
        %4912 = vmatpush1.xpose.msra.mxu0 0.0
        %4913 = vmatprep.subr.mxu0 0.0
        %4914 = vmatpush1.xpose.msra.mxu0 0.0
        %4915 = vmatprep.subr.mxu0 0.0
        %4916 = vmatpush1.xpose.msra.mxu0 0.0
        %4917 = vmatprep.subr.mxu0 0.0
        %4918 = vmatpush1.xpose.msra.mxu0 0.0
        %4919 = vmatprep.subr.mxu0 0.0
        %4920 = vmatpush1.xpose.msra.mxu0 0.0
        %4921 = vmatprep.subr.mxu0 0.0
        %4922 = vmatpush1.xpose.msra.mxu0 0.0
        %4923 = vmatprep.subr.mxu0 0.0
        %4924 = vmatpush1.xpose.msra.mxu0 0.0
        %4925 = vmatprep.subr.mxu0 0.0
        %4926 = vmatpush1.xpose.msra.mxu0 0.0
        %4927 = vmatprep.mubr.f32.mxu0 0.0
        %4928 = vmatmul.mubr.f32.gmra.mrb[0].mxu0 %v4852
        %v4929 = vpop.f32.mrb[0].mxu0
        %v4930 = vadd.f32 0.0, %v4929
        %v4931 = vpop.f32.mrb[0].mxu0
        %4932 = vmatprep.mubr.f32.mxu0 0.0
        %4933 = vmatmul.mubr.f32.gmra.mrb[0].mxu0 %v4855
        %v4934 = vpop.f32.mrb[0].mxu0
        %v4935 = vadd.f32 0.0, %v4934
        %v4936 = vpop.f32.mrb[0].mxu0
        %4937 = vdwg.mxu0
        %v4938 = vsel %vm650, %v4930, -inf
        %4939 = vmax.xlane.f32.xlu0 %v4938
        %v4940 = vpop.xlane.xlu0 %4939
        %v4941 = vsel %vm650, %v4935, -inf
        %4942 = vmax.xlane.f32.xlu0 %v4941
        %v4943 = vpop.xlane.xlu0 %4942
        %v4944 = vsub.f32 %v4930, %v4940
        %v4945 = vsub.f32 %v4935, %v4943
        %v4946 = vmul.f32 %v4944, 1.442695
        %v4947 = vpow.pop %v4946
        %v4948 = vmul.f32 %v4945, 1.442695
        %v4949 = vpow.pop %v4948
        %v4950 = vsel %vm650, %v4947, 0.0
        %4951 = vadd.xlane.f32.xlu0 %v4950
        %v4952 = vpop.xlane.xlu0 %4951
        %v4953 = vsel %vm650, %v4949, 0.0
        %4954 = vadd.xlane.f32.xlu0 %v4953
        %v4955 = vpop.xlane.xlu0 %4954
        %v4956 = vrcp.pop %v4952
        %v4957 = vrcp.pop %v4955
        %v4958 = vmul.f32 %v4947, %v4956
        %v4959 = vmul.f32 %v4949, %v4957
        %v4961 = vsel %vm650, %v4958, 0
        %v4964 = vsel %vm650, %v4959, 0
        %4966 = vmatprep.subr.mxu0 0.0
        %4967 = vmatpush1.msra.mxu0 %v4845
        %4968 = vmatprep.subr.mxu0 0.0
        %4969 = vmatpush1.msra.mxu0 %v4848
        %4970 = vmatprep.subr.mxu0 0.0
        %4971 = vmatpush1.msra.mxu0 0.0
        %4972 = vmatprep.subr.mxu0 0.0
        %4973 = vmatpush1.msra.mxu0 0.0
        %4974 = vmatprep.subr.mxu0 0.0
        %4975 = vmatpush1.msra.mxu0 0.0
        %4976 = vmatprep.subr.mxu0 0.0
        %4977 = vmatpush1.msra.mxu0 0.0
        %4978 = vmatprep.subr.mxu0 0.0
        %4979 = vmatpush1.msra.mxu0 0.0
        %4980 = vmatprep.subr.mxu0 0.0
        %4981 = vmatpush1.msra.mxu0 0.0
        %4982 = vmatprep.subr.mxu0 0.0
        %4983 = vmatpush1.msra.mxu0 0.0
        %4984 = vmatprep.subr.mxu0 0.0
        %4985 = vmatpush1.msra.mxu0 0.0
        %4986 = vmatprep.subr.mxu0 0.0
        %4987 = vmatpush1.msra.mxu0 0.0
        %4988 = vmatprep.subr.mxu0 0.0
        %4989 = vmatpush1.msra.mxu0 0.0
        %4990 = vmatprep.subr.mxu0 0.0
        %4991 = vmatpush1.msra.mxu0 0.0
        %4992 = vmatprep.subr.mxu0 0.0
        %4993 = vmatpush1.msra.mxu0 0.0
        %4994 = vmatprep.subr.mxu0 0.0
        %4995 = vmatpush1.msra.mxu0 0.0
        %4996 = vmatprep.subr.mxu0 0.0
        %4997 = vmatpush1.msra.mxu0 0.0
        %4998 = vmatprep.subr.mxu0 0.0
        %4999 = vmatpush1.msra.mxu0 0.0
        %5000 = vmatprep.subr.mxu0 0.0
        %5001 = vmatpush1.msra.mxu0 0.0
        %5002 = vmatprep.subr.mxu0 0.0
        %5003 = vmatpush1.msra.mxu0 0.0
        %5004 = vmatprep.subr.mxu0 0.0
        %5005 = vmatpush1.msra.mxu0 0.0
        %5006 = vmatprep.subr.mxu0 0.0
        %5007 = vmatpush1.msra.mxu0 0.0
        %5008 = vmatprep.subr.mxu0 0.0
        %5009 = vmatpush1.msra.mxu0 0.0
        %5010 = vmatprep.subr.mxu0 0.0
        %5011 = vmatpush1.msra.mxu0 0.0
        %5012 = vmatprep.subr.mxu0 0.0
        %5013 = vmatpush1.msra.mxu0 0.0
        %5014 = vmatprep.subr.mxu0 0.0
        %5015 = vmatpush1.msra.mxu0 0.0
        %5016 = vmatprep.subr.mxu0 0.0
        %5017 = vmatpush1.msra.mxu0 0.0
        %5018 = vmatprep.subr.mxu0 0.0
        %5019 = vmatpush1.msra.mxu0 0.0
        %5020 = vmatprep.subr.mxu0 0.0
        %5021 = vmatpush1.msra.mxu0 0.0
        %5022 = vmatprep.subr.mxu0 0.0
        %5023 = vmatpush1.msra.mxu0 0.0
        %5024 = vmatprep.subr.mxu0 0.0
        %5025 = vmatpush1.msra.mxu0 0.0
        %5026 = vmatprep.subr.mxu0 0.0
        %5027 = vmatpush1.msra.mxu0 0.0
        %5028 = vmatprep.subr.mxu0 0.0
        %5029 = vmatpush1.msra.mxu0 0.0
        %5030 = vmatprep.mubr.f32.mxu0 0.0
        %5031 = vmatmul.mubr.f32.gmra.mrb[0].mxu0 %v4961
        %v5032 = vpop.f32.mrb[0].mxu0
        %v5033 = vadd.f32 0.0, %v5032
        %v5034 = vpop.f32.mrb[0].mxu0
        %5035 = vmatprep.mubr.f32.mxu0 0.0
        %5036 = vmatmul.mubr.f32.gmra.mrb[0].mxu0 %v4964
        %v5037 = vpop.f32.mrb[0].mxu0
        %v5038 = vadd.f32 0.0, %v5037
        %v5039 = vpop.f32.mrb[0].mxu0
        %5040 = vdwg.mxu0
        %v5041 = vpack.c.bf16 %v5038, %v5033
        %s5042 = scalar_lea.vmem %s3, 20
        %v5043 = vld [vmem:[%s5042] sm:$0xf]
        %v5045 = vsel %vm562, %v5041, 0
        %v5048 = vsel %vm1150, %v5043, 0
        %5050 = vmatprep.subr.bf16.mxu0 0
        %5051 = vmatpush1.bf16.msra.mxu0 %v5048
        %5052 = vmatprep.subr.bf16.mxu0 0
        %5053 = vmatpush1.bf16.msra.mxu0 0
        %5054 = vmatprep.subr.bf16.mxu0 0
        %5055 = vmatpush1.bf16.msra.mxu0 0
        %5056 = vmatprep.subr.bf16.mxu0 0
        %5057 = vmatpush1.bf16.msra.mxu0 0
        %5058 = vmatprep.subr.bf16.mxu0 0
        %5059 = vmatpush1.bf16.msra.mxu0 0
        %5060 = vmatprep.subr.bf16.mxu0 0
        %5061 = vmatpush1.bf16.msra.mxu0 0
        %5062 = vmatprep.subr.bf16.mxu0 0
        %5063 = vmatpush1.bf16.msra.mxu0 0
        %5064 = vmatprep.subr.bf16.mxu0 0
        %5065 = vmatpush1.bf16.msra.mxu0 0
        %5066 = vmatprep.subr.bf16.mxu0 0
        %5067 = vmatpush1.bf16.msra.mxu0 0
        %5068 = vmatprep.subr.bf16.mxu0 0
        %5069 = vmatpush1.bf16.msra.mxu0 0
        %5070 = vmatprep.subr.bf16.mxu0 0
        %5071 = vmatpush1.bf16.msra.mxu0 0
        %5072 = vmatprep.subr.bf16.mxu0 0
        %5073 = vmatpush1.bf16.msra.mxu0 0
        %5074 = vmatprep.subr.bf16.mxu0 0
        %5075 = vmatpush1.bf16.msra.mxu0 0
        %5076 = vmatprep.subr.bf16.mxu0 0
        %5077 = vmatpush1.bf16.msra.mxu0 0
        %5078 = vmatprep.subr.bf16.mxu0 0
        %5079 = vmatpush1.bf16.msra.mxu0 0
        %5080 = vmatprep.subr.bf16.mxu0 0
        %5081 = vmatpush1.bf16.msra.mxu0 0
        %5082 = vmatprep.mubr.bf16.mxu0 0
        %5083 = vmatmul.mubr.bf16.gmra.mrb[0].mxu0 %v5045
        %v5084 = vpop.f32.mrb[0].mxu0
        %v5085 = vadd.f32 0.0, %v5084
        %v5086 = vpop.f32.mrb[0].mxu0
        %v5087 = vpop.f32.mrb[0].mxu0
        %v5088 = vadd.f32 0.0, %v5087
        %v5089 = vpop.f32.mrb[0].mxu0
        %5090 = vdwg.mxu0
        %v5092 = vsel %vm562, %v4650, 0
        %v5095 = vsel %vm1150, %v4652, 0
        %5097 = vmatprep.subr.bf16.mxu0 0
        %5098 = vmatpush1.bf16.msra.mxu0 %v5095
        %5099 = vmatprep.subr.bf16.mxu0 0
        %5100 = vmatpush1.bf16.msra.mxu0 0
        %5101 = vmatprep.subr.bf16.mxu0 0
        %5102 = vmatpush1.bf16.msra.mxu0 0
        %5103 = vmatprep.subr.bf16.mxu0 0
        %5104 = vmatpush1.bf16.msra.mxu0 0
        %5105 = vmatprep.subr.bf16.mxu0 0
        %5106 = vmatpush1.bf16.msra.mxu0 0
        %5107 = vmatprep.subr.bf16.mxu0 0
        %5108 = vmatpush1.bf16.msra.mxu0 0
        %5109 = vmatprep.subr.bf16.mxu0 0
        %5110 = vmatpush1.bf16.msra.mxu0 0
        %5111 = vmatprep.subr.bf16.mxu0 0
        %5112 = vmatpush1.bf16.msra.mxu0 0
        %5113 = vmatprep.subr.bf16.mxu0 0
        %5114 = vmatpush1.bf16.msra.mxu0 0
        %5115 = vmatprep.subr.bf16.mxu0 0
        %5116 = vmatpush1.bf16.msra.mxu0 0
        %5117 = vmatprep.subr.bf16.mxu0 0
        %5118 = vmatpush1.bf16.msra.mxu0 0
        %5119 = vmatprep.subr.bf16.mxu0 0
        %5120 = vmatpush1.bf16.msra.mxu0 0
        %5121 = vmatprep.subr.bf16.mxu0 0
        %5122 = vmatpush1.bf16.msra.mxu0 0
        %5123 = vmatprep.subr.bf16.mxu0 0
        %5124 = vmatpush1.bf16.msra.mxu0 0
        %5125 = vmatprep.subr.bf16.mxu0 0
        %5126 = vmatpush1.bf16.msra.mxu0 0
        %5127 = vmatprep.subr.bf16.mxu0 0
        %5128 = vmatpush1.bf16.msra.mxu0 0
        %5129 = vmatprep.mubr.bf16.mxu0 0
        %5130 = vmatmul.mubr.bf16.gmra.mrb[0].mxu0 %v5092
        %v5131 = vpop.f32.mrb[0].mxu0
        %v5132 = vadd.f32 %v5085, %v5131
        %v5133 = vpop.f32.mrb[0].mxu0
        %v5134 = vpop.f32.mrb[0].mxu0
        %v5135 = vadd.f32 %v5088, %v5134
        %v5136 = vpop.f32.mrb[0].mxu0
        %5137 = vdwg.mxu0
        %s5138 = scalar_lea.vmem %s1, 224
        %v5139 = vld [vmem:[%s5138] sm:$0xf]
        %v5140 = vld [vmem:[%s5138 + $0x4] sm:$0xf]
        %v5141 = vld [vmem:[%s5138 + $0x8] sm:$0xf]
        %v5142 = vld [vmem:[%s5138 + $0xc] sm:$0xf]
        %s5143 = scalar_lea.vmem %s2, 14
        %v5144 = vld [vmem:[%s5143] sm:$0x1]
        %v5146 = vlaneseq
        %v5147 = vshrl.u32 %v5146, 7
        %v5148 = vsub.s32 0, %v5147
        %v5149 = vrot.slane %v5144, %v5148
        %v5155 = vunpack.c.l.b16 %v5139
        %v5156 = vunpack.c.l.b16 %v5140
        %v5157 = vunpack.c.l.b16 %v5141
        %v5158 = vunpack.c.l.b16 %v5142
        %v5159 = vpack.c.b16 %v5156, %v5155
        %v5160 = vpack.c.b16 %v5158, %v5157
        %5163 = vmatprep.subr.bf16.mxu0 0
        %5164 = vmatpush1.bf16.msra.mxu0 %v5159
        %5165 = vmatprep.subr.bf16.mxu0 0
        %5166 = vmatpush1.bf16.msra.mxu0 %v5160
        %5167 = vmatprep.subr.bf16.mxu0 0
        %5168 = vmatpush1.bf16.msra.mxu0 0
        %5169 = vmatprep.subr.bf16.mxu0 0
        %5170 = vmatpush1.bf16.msra.mxu0 0
        %5171 = vmatprep.subr.bf16.mxu0 0
        %5172 = vmatpush1.bf16.msra.mxu0 0
        %5173 = vmatprep.subr.bf16.mxu0 0
        %5174 = vmatpush1.bf16.msra.mxu0 0
        %5175 = vmatprep.subr.bf16.mxu0 0
        %5176 = vmatpush1.bf16.msra.mxu0 0
        %5177 = vmatprep.subr.bf16.mxu0 0
        %5178 = vmatpush1.bf16.msra.mxu0 0
        %5179 = vmatprep.subr.bf16.mxu0 0
        %5180 = vmatpush1.bf16.msra.mxu0 0
        %5181 = vmatprep.subr.bf16.mxu0 0
        %5182 = vmatpush1.bf16.msra.mxu0 0
        %5183 = vmatprep.subr.bf16.mxu0 0
        %5184 = vmatpush1.bf16.msra.mxu0 0
        %5185 = vmatprep.subr.bf16.mxu0 0
        %5186 = vmatpush1.bf16.msra.mxu0 0
        %5187 = vmatprep.subr.bf16.mxu0 0
        %5188 = vmatpush1.bf16.msra.mxu0 0
        %5189 = vmatprep.subr.bf16.mxu0 0
        %5190 = vmatpush1.bf16.msra.mxu0 0
        %5191 = vmatprep.subr.bf16.mxu0 0
        %5192 = vmatpush1.bf16.msra.mxu0 0
        %5193 = vmatprep.subr.bf16.mxu0 0
        %5194 = vmatpush1.bf16.msra.mxu0 0
        %5195 = vmatprep.mubr.bf16.mxu0 0
        %5196 = vmatmul.mubr.bf16.gmra.mrb[0].mxu0 %v4285
        %v5197 = vpop.f32.mrb[0].mxu0
        %v5198 = vadd.f32 %v5149, %v5197
        %v5199 = vpop.f32.mrb[0].mxu0
        %v5200 = vpop.f32.mrb[0].mxu0
        %v5201 = vadd.f32 %v5149, %v5200
        %v5202 = vpop.f32.mrb[0].mxu0
        %5203 = vdwg.mxu0
        %s5204 = scalar_lea.vmem %s1, 288
        %v5205 = vld [vmem:[%s5204] sm:$0xf]
        %v5206 = vld [vmem:[%s5204 + $0x4] sm:$0xf]
        %v5207 = vld [vmem:[%s5204 + $0x8] sm:$0xf]
        %v5208 = vld [vmem:[%s5204 + $0xc] sm:$0xf]
        %s5209 = scalar_lea.vmem %s2, 18
        %v5210 = vld [vmem:[%s5209] sm:$0x1]
        %v5212 = vlaneseq
        %v5213 = vshrl.u32 %v5212, 7
        %v5214 = vsub.s32 0, %v5213
        %v5215 = vrot.slane %v5210, %v5214
        %v5221 = vunpack.c.l.b16 %v5205
        %v5222 = vunpack.c.l.b16 %v5206
        %v5223 = vunpack.c.l.b16 %v5207
        %v5224 = vunpack.c.l.b16 %v5208
        %v5225 = vpack.c.b16 %v5222, %v5221
        %v5226 = vpack.c.b16 %v5224, %v5223
        %5229 = vmatprep.subr.bf16.mxu0 0
        %5230 = vmatpush1.bf16.msra.mxu0 %v5225
        %5231 = vmatprep.subr.bf16.mxu0 0
        %5232 = vmatpush1.bf16.msra.mxu0 %v5226
        %5233 = vmatprep.subr.bf16.mxu0 0
        %5234 = vmatpush1.bf16.msra.mxu0 0
        %5235 = vmatprep.subr.bf16.mxu0 0
        %5236 = vmatpush1.bf16.msra.mxu0 0
        %5237 = vmatprep.subr.bf16.mxu0 0
        %5238 = vmatpush1.bf16.msra.mxu0 0
        %5239 = vmatprep.subr.bf16.mxu0 0
        %5240 = vmatpush1.bf16.msra.mxu0 0
        %5241 = vmatprep.subr.bf16.mxu0 0
        %5242 = vmatpush1.bf16.msra.mxu0 0
        %5243 = vmatprep.subr.bf16.mxu0 0
        %5244 = vmatpush1.bf16.msra.mxu0 0
        %5245 = vmatprep.subr.bf16.mxu0 0
        %5246 = vmatpush1.bf16.msra.mxu0 0
        %5247 = vmatprep.subr.bf16.mxu0 0
        %5248 = vmatpush1.bf16.msra.mxu0 0
        %5249 = vmatprep.subr.bf16.mxu0 0
        %5250 = vmatpush1.bf16.msra.mxu0 0
        %5251 = vmatprep.subr.bf16.mxu0 0
        %5252 = vmatpush1.bf16.msra.mxu0 0
        %5253 = vmatprep.subr.bf16.mxu0 0
        %5254 = vmatpush1.bf16.msra.mxu0 0
        %5255 = vmatprep.subr.bf16.mxu0 0
        %5256 = vmatpush1.bf16.msra.mxu0 0
        %5257 = vmatprep.subr.bf16.mxu0 0
        %5258 = vmatpush1.bf16.msra.mxu0 0
        %5259 = vmatprep.subr.bf16.mxu0 0
        %5260 = vmatpush1.bf16.msra.mxu0 0
        %5261 = vmatprep.mubr.bf16.mxu0 0
        %5262 = vmatmul.mubr.bf16.gmra.mrb[0].mxu0 %v4285
        %v5263 = vpop.f32.mrb[0].mxu0
        %v5264 = vadd.f32 %v5215, %v5263
        %v5265 = vpop.f32.mrb[0].mxu0
        %v5266 = vpop.f32.mrb[0].mxu0
        %v5267 = vadd.f32 %v5215, %v5266
        %v5268 = vpop.f32.mrb[0].mxu0
        %5269 = vdwg.mxu0
        %s5270 = scalar_lea.vmem %s1, 352
        %v5271 = vld [vmem:[%s5270] sm:$0xf]
        %v5272 = vld [vmem:[%s5270 + $0x4] sm:$0xf]
        %v5273 = vld [vmem:[%s5270 + $0x8] sm:$0xf]
        %v5274 = vld [vmem:[%s5270 + $0xc] sm:$0xf]
        %s5275 = scalar_lea.vmem %s2, 22
        %v5276 = vld [vmem:[%s5275] sm:$0x1]
        %v5278 = vlaneseq
        %v5279 = vshrl.u32 %v5278, 7
        %v5280 = vsub.s32 0, %v5279
        %v5281 = vrot.slane %v5276, %v5280
        %v5287 = vunpack.c.l.b16 %v5271
        %v5288 = vunpack.c.l.b16 %v5272
        %v5289 = vunpack.c.l.b16 %v5273
        %v5290 = vunpack.c.l.b16 %v5274
        %v5291 = vpack.c.b16 %v5288, %v5287
        %v5292 = vpack.c.b16 %v5290, %v5289
        %5295 = vmatprep.subr.bf16.mxu0 0
        %5296 = vmatpush1.bf16.msra.mxu0 %v5291
        %5297 = vmatprep.subr.bf16.mxu0 0
        %5298 = vmatpush1.bf16.msra.mxu0 %v5292
        %5299 = vmatprep.subr.bf16.mxu0 0
        %5300 = vmatpush1.bf16.msra.mxu0 0
        %5301 = vmatprep.subr.bf16.mxu0 0
        %5302 = vmatpush1.bf16.msra.mxu0 0
        %5303 = vmatprep.subr.bf16.mxu0 0
        %5304 = vmatpush1.bf16.msra.mxu0 0
        %5305 = vmatprep.subr.bf16.mxu0 0
        %5306 = vmatpush1.bf16.msra.mxu0 0
        %5307 = vmatprep.subr.bf16.mxu0 0
        %5308 = vmatpush1.bf16.msra.mxu0 0
        %5309 = vmatprep.subr.bf16.mxu0 0
        %5310 = vmatpush1.bf16.msra.mxu0 0
        %5311 = vmatprep.subr.bf16.mxu0 0
        %5312 = vmatpush1.bf16.msra.mxu0 0
        %5313 = vmatprep.subr.bf16.mxu0 0
        %5314 = vmatpush1.bf16.msra.mxu0 0
        %5315 = vmatprep.subr.bf16.mxu0 0
        %5316 = vmatpush1.bf16.msra.mxu0 0
        %5317 = vmatprep.subr.bf16.mxu0 0
        %5318 = vmatpush1.bf16.msra.mxu0 0
        %5319 = vmatprep.subr.bf16.mxu0 0
        %5320 = vmatpush1.bf16.msra.mxu0 0
        %5321 = vmatprep.subr.bf16.mxu0 0
        %5322 = vmatpush1.bf16.msra.mxu0 0
        %5323 = vmatprep.subr.bf16.mxu0 0
        %5324 = vmatpush1.bf16.msra.mxu0 0
        %5325 = vmatprep.subr.bf16.mxu0 0
        %5326 = vmatpush1.bf16.msra.mxu0 0
        %5327 = vmatprep.mubr.bf16.mxu0 0
        %5328 = vmatmul.mubr.bf16.gmra.mrb[0].mxu0 %v4285
        %v5329 = vpop.f32.mrb[0].mxu0
        %v5330 = vadd.f32 %v5281, %v5329
        %v5331 = vpop.f32.mrb[0].mxu0
        %v5332 = vpop.f32.mrb[0].mxu0
        %v5333 = vadd.f32 %v5281, %v5332
        %v5334 = vpop.f32.mrb[0].mxu0
        %5335 = vdwg.mxu0
        %v5337 = vsel %vm562, %v5198, 0
        %v5340 = vsel %vm562, %v5201, 0
        %v5343 = vsel %vm562, %v5264, 0
        %v5346 = vsel %vm562, %v5267, 0
        %5348 = vmatprep.subr.mxu0 0.0
        %5349 = vmatpush1.xpose.msra.mxu0 %v5343
        %5350 = vmatprep.subr.mxu0 0.0
        %5351 = vmatpush1.xpose.msra.mxu0 %v5346
        %5352 = vmatprep.subr.mxu0 0.0
        %5353 = vmatpush1.xpose.msra.mxu0 0.0
        %5354 = vmatprep.subr.mxu0 0.0
        %5355 = vmatpush1.xpose.msra.mxu0 0.0
        %5356 = vmatprep.subr.mxu0 0.0
        %5357 = vmatpush1.xpose.msra.mxu0 0.0
        %5358 = vmatprep.subr.mxu0 0.0
        %5359 = vmatpush1.xpose.msra.mxu0 0.0
        %5360 = vmatprep.subr.mxu0 0.0
        %5361 = vmatpush1.xpose.msra.mxu0 0.0
        %5362 = vmatprep.subr.mxu0 0.0
        %5363 = vmatpush1.xpose.msra.mxu0 0.0
        %5364 = vmatprep.subr.mxu0 0.0
        %5365 = vmatpush1.xpose.msra.mxu0 0.0
        %5366 = vmatprep.subr.mxu0 0.0
        %5367 = vmatpush1.xpose.msra.mxu0 0.0
        %5368 = vmatprep.subr.mxu0 0.0
        %5369 = vmatpush1.xpose.msra.mxu0 0.0
        %5370 = vmatprep.subr.mxu0 0.0
        %5371 = vmatpush1.xpose.msra.mxu0 0.0
        %5372 = vmatprep.subr.mxu0 0.0
        %5373 = vmatpush1.xpose.msra.mxu0 0.0
        %5374 = vmatprep.subr.mxu0 0.0
        %5375 = vmatpush1.xpose.msra.mxu0 0.0
        %5376 = vmatprep.subr.mxu0 0.0
        %5377 = vmatpush1.xpose.msra.mxu0 0.0
        %5378 = vmatprep.subr.mxu0 0.0
        %5379 = vmatpush1.xpose.msra.mxu0 0.0
        %5380 = vmatprep.subr.mxu0 0.0
        %5381 = vmatpush1.xpose.msra.mxu0 0.0
        %5382 = vmatprep.subr.mxu0 0.0
        %5383 = vmatpush1.xpose.msra.mxu0 0.0
        %5384 = vmatprep.subr.mxu0 0.0
        %5385 = vmatpush1.xpose.msra.mxu0 0.0
        %5386 = vmatprep.subr.mxu0 0.0
        %5387 = vmatpush1.xpose.msra.mxu0 0.0
        %5388 = vmatprep.subr.mxu0 0.0
        %5389 = vmatpush1.xpose.msra.mxu0 0.0
        %5390 = vmatprep.subr.mxu0 0.0
        %5391 = vmatpush1.xpose.msra.mxu0 0.0
        %5392 = vmatprep.subr.mxu0 0.0
        %5393 = vmatpush1.xpose.msra.mxu0 0.0
        %5394 = vmatprep.subr.mxu0 0.0
        %5395 = vmatpush1.xpose.msra.mxu0 0.0
        %5396 = vmatprep.subr.mxu0 0.0
        %5397 = vmatpush1.xpose.msra.mxu0 0.0
        %5398 = vmatprep.subr.mxu0 0.0
        %5399 = vmatpush1.xpose.msra.mxu0 0.0
        %5400 = vmatprep.subr.mxu0 0.0
        %5401 = vmatpush1.xpose.msra.mxu0 0.0
        %5402 = vmatprep.subr.mxu0 0.0
        %5403 = vmatpush1.xpose.msra.mxu0 0.0
        %5404 = vmatprep.subr.mxu0 0.0
        %5405 = vmatpush1.xpose.msra.mxu0 0.0
        %5406 = vmatprep.subr.mxu0 0.0
        %5407 = vmatpush1.xpose.msra.mxu0 0.0
        %5408 = vmatprep.subr.mxu0 0.0
        %5409 = vmatpush1.xpose.msra.mxu0 0.0
        %5410 = vmatprep.subr.mxu0 0.0
        %5411 = vmatpush1.xpose.msra.mxu0 0.0
        %5412 = vmatprep.mubr.f32.mxu0 0.0
        %5413 = vmatmul.mubr.f32.gmra.mrb[0].mxu0 %v5337
        %v5414 = vpop.f32.mrb[0].mxu0
        %v5415 = vadd.f32 0.0, %v5414
        %v5416 = vpop.f32.mrb[0].mxu0
        %5417 = vmatprep.mubr.f32.mxu0 0.0
        %5418 = vmatmul.mubr.f32.gmra.mrb[0].mxu0 %v5340
        %v5419 = vpop.f32.mrb[0].mxu0
        %v5420 = vadd.f32 0.0, %v5419
        %v5421 = vpop.f32.mrb[0].mxu0
        %5422 = vdwg.mxu0
        %v5423 = vsel %vm650, %v5415, -inf
        %5424 = vmax.xlane.f32.xlu0 %v5423
        %v5425 = vpop.xlane.xlu0 %5424
        %v5426 = vsel %vm650, %v5420, -inf
        %5427 = vmax.xlane.f32.xlu0 %v5426
        %v5428 = vpop.xlane.xlu0 %5427
        %v5429 = vsub.f32 %v5415, %v5425
        %v5430 = vsub.f32 %v5420, %v5428
        %v5431 = vmul.f32 %v5429, 1.442695
        %v5432 = vpow.pop %v5431
        %v5433 = vmul.f32 %v5430, 1.442695
        %v5434 = vpow.pop %v5433
        %v5435 = vsel %vm650, %v5432, 0.0
        %5436 = vadd.xlane.f32.xlu0 %v5435
        %v5437 = vpop.xlane.xlu0 %5436
        %v5438 = vsel %vm650, %v5434, 0.0
        %5439 = vadd.xlane.f32.xlu0 %v5438
        %v5440 = vpop.xlane.xlu0 %5439
        %v5441 = vrcp.pop %v5437
        %v5442 = vrcp.pop %v5440
        %v5443 = vmul.f32 %v5432, %v5441
        %v5444 = vmul.f32 %v5434, %v5442
        %v5446 = vsel %vm650, %v5443, 0
        %v5449 = vsel %vm650, %v5444, 0
        %5451 = vmatprep.subr.mxu0 0.0
        %5452 = vmatpush1.msra.mxu0 %v5330
        %5453 = vmatprep.subr.mxu0 0.0
        %5454 = vmatpush1.msra.mxu0 %v5333
        %5455 = vmatprep.subr.mxu0 0.0
        %5456 = vmatpush1.msra.mxu0 0.0
        %5457 = vmatprep.subr.mxu0 0.0
        %5458 = vmatpush1.msra.mxu0 0.0
        %5459 = vmatprep.subr.mxu0 0.0
        %5460 = vmatpush1.msra.mxu0 0.0
        %5461 = vmatprep.subr.mxu0 0.0
        %5462 = vmatpush1.msra.mxu0 0.0
        %5463 = vmatprep.subr.mxu0 0.0
        %5464 = vmatpush1.msra.mxu0 0.0
        %5465 = vmatprep.subr.mxu0 0.0
        %5466 = vmatpush1.msra.mxu0 0.0
        %5467 = vmatprep.subr.mxu0 0.0
        %5468 = vmatpush1.msra.mxu0 0.0
        %5469 = vmatprep.subr.mxu0 0.0
        %5470 = vmatpush1.msra.mxu0 0.0
        %5471 = vmatprep.subr.mxu0 0.0
        %5472 = vmatpush1.msra.mxu0 0.0
        %5473 = vmatprep.subr.mxu0 0.0
        %5474 = vmatpush1.msra.mxu0 0.0
        %5475 = vmatprep.subr.mxu0 0.0
        %5476 = vmatpush1.msra.mxu0 0.0
        %5477 = vmatprep.subr.mxu0 0.0
        %5478 = vmatpush1.msra.mxu0 0.0
        %5479 = vmatprep.subr.mxu0 0.0
        %5480 = vmatpush1.msra.mxu0 0.0
        %5481 = vmatprep.subr.mxu0 0.0
        %5482 = vmatpush1.msra.mxu0 0.0
        %5483 = vmatprep.subr.mxu0 0.0
        %5484 = vmatpush1.msra.mxu0 0.0
        %5485 = vmatprep.subr.mxu0 0.0
        %5486 = vmatpush1.msra.mxu0 0.0
        %5487 = vmatprep.subr.mxu0 0.0
        %5488 = vmatpush1.msra.mxu0 0.0
        %5489 = vmatprep.subr.mxu0 0.0
        %5490 = vmatpush1.msra.mxu0 0.0
        %5491 = vmatprep.subr.mxu0 0.0
        %5492 = vmatpush1.msra.mxu0 0.0
        %5493 = vmatprep.subr.mxu0 0.0
        %5494 = vmatpush1.msra.mxu0 0.0
        %5495 = vmatprep.subr.mxu0 0.0
        %5496 = vmatpush1.msra.mxu0 0.0
        %5497 = vmatprep.subr.mxu0 0.0
        %5498 = vmatpush1.msra.mxu0 0.0
        %5499 = vmatprep.subr.mxu0 0.0
        %5500 = vmatpush1.msra.mxu0 0.0
        %5501 = vmatprep.subr.mxu0 0.0
        %5502 = vmatpush1.msra.mxu0 0.0
        %5503 = vmatprep.subr.mxu0 0.0
        %5504 = vmatpush1.msra.mxu0 0.0
        %5505 = vmatprep.subr.mxu0 0.0
        %5506 = vmatpush1.msra.mxu0 0.0
        %5507 = vmatprep.subr.mxu0 0.0
        %5508 = vmatpush1.msra.mxu0 0.0
        %5509 = vmatprep.subr.mxu0 0.0
        %5510 = vmatpush1.msra.mxu0 0.0
        %5511 = vmatprep.subr.mxu0 0.0
        %5512 = vmatpush1.msra.mxu0 0.0
        %5513 = vmatprep.subr.mxu0 0.0
        %5514 = vmatpush1.msra.mxu0 0.0
        %5515 = vmatprep.mubr.f32.mxu0 0.0
        %5516 = vmatmul.mubr.f32.gmra.mrb[0].mxu0 %v5446
        %v5517 = vpop.f32.mrb[0].mxu0
        %v5518 = vadd.f32 0.0, %v5517
        %v5519 = vpop.f32.mrb[0].mxu0
        %5520 = vmatprep.mubr.f32.mxu0 0.0
        %5521 = vmatmul.mubr.f32.gmra.mrb[0].mxu0 %v5449
        %v5522 = vpop.f32.mrb[0].mxu0
        %v5523 = vadd.f32 0.0, %v5522
        %v5524 = vpop.f32.mrb[0].mxu0
        %5525 = vdwg.mxu0
        %v5526 = vpack.c.bf16 %v5523, %v5518
        %s5527 = scalar_lea.vmem %s3, 24
        %v5528 = vld [vmem:[%s5527] sm:$0xf]
        %v5530 = vsel %vm562, %v5526, 0
        %v5533 = vsel %vm1150, %v5528, 0
        %5535 = vmatprep.subr.bf16.mxu0 0
        %5536 = vmatpush1.bf16.msra.mxu0 %v5533
        %5537 = vmatprep.subr.bf16.mxu0 0
        %5538 = vmatpush1.bf16.msra.mxu0 0
        %5539 = vmatprep.subr.bf16.mxu0 0
        %5540 = vmatpush1.bf16.msra.mxu0 0
        %5541 = vmatprep.subr.bf16.mxu0 0
        %5542 = vmatpush1.bf16.msra.mxu0 0
        %5543 = vmatprep.subr.bf16.mxu0 0
        %5544 = vmatpush1.bf16.msra.mxu0 0
        %5545 = vmatprep.subr.bf16.mxu0 0
        %5546 = vmatpush1.bf16.msra.mxu0 0
        %5547 = vmatprep.subr.bf16.mxu0 0
        %5548 = vmatpush1.bf16.msra.mxu0 0
        %5549 = vmatprep.subr.bf16.mxu0 0
        %5550 = vmatpush1.bf16.msra.mxu0 0
        %5551 = vmatprep.subr.bf16.mxu0 0
        %5552 = vmatpush1.bf16.msra.mxu0 0
        %5553 = vmatprep.subr.bf16.mxu0 0
        %5554 = vmatpush1.bf16.msra.mxu0 0
        %5555 = vmatprep.subr.bf16.mxu0 0
        %5556 = vmatpush1.bf16.msra.mxu0 0
        %5557 = vmatprep.subr.bf16.mxu0 0
        %5558 = vmatpush1.bf16.msra.mxu0 0
        %5559 = vmatprep.subr.bf16.mxu0 0
        %5560 = vmatpush1.bf16.msra.mxu0 0
        %5561 = vmatprep.subr.bf16.mxu0 0
        %5562 = vmatpush1.bf16.msra.mxu0 0
        %5563 = vmatprep.subr.bf16.mxu0 0
        %5564 = vmatpush1.bf16.msra.mxu0 0
        %5565 = vmatprep.subr.bf16.mxu0 0
        %5566 = vmatpush1.bf16.msra.mxu0 0
        %5567 = vmatprep.mubr.bf16.mxu0 0
        %5568 = vmatmul.mubr.bf16.gmra.mrb[0].mxu0 %v5530
        %v5569 = vpop.f32.mrb[0].mxu0
        %v5570 = vadd.f32 0.0, %v5569
        %v5571 = vpop.f32.mrb[0].mxu0
        %v5572 = vpop.f32.mrb[0].mxu0
        %v5573 = vadd.f32 0.0, %v5572
        %v5574 = vpop.f32.mrb[0].mxu0
        %5575 = vdwg.mxu0
        %v5576 = vadd.f32 %v5132, %v5570
        %v5577 = vadd.f32 %v5135, %v5573
        %s5578 = scalar_lea.vmem %s1, 240
        %v5579 = vld [vmem:[%s5578] sm:$0xf]
        %v5580 = vld [vmem:[%s5578 + $0x4] sm:$0xf]
        %v5581 = vld [vmem:[%s5578 + $0x8] sm:$0xf]
        %v5582 = vld [vmem:[%s5578 + $0xc] sm:$0xf]
        %s5583 = scalar_lea.vmem %s2, 15
        %v5584 = vld [vmem:[%s5583] sm:$0x1]
        %v5586 = vlaneseq
        %v5587 = vshrl.u32 %v5586, 7
        %v5588 = vsub.s32 0, %v5587
        %v5589 = vrot.slane %v5584, %v5588
        %v5595 = vunpack.c.l.b16 %v5579
        %v5596 = vunpack.c.l.b16 %v5580
        %v5597 = vunpack.c.l.b16 %v5581
        %v5598 = vunpack.c.l.b16 %v5582
        %v5599 = vpack.c.b16 %v5596, %v5595
        %v5600 = vpack.c.b16 %v5598, %v5597
        %5603 = vmatprep.subr.bf16.mxu0 0
        %5604 = vmatpush1.bf16.msra.mxu0 %v5599
        %5605 = vmatprep.subr.bf16.mxu0 0
        %5606 = vmatpush1.bf16.msra.mxu0 %v5600
        %5607 = vmatprep.subr.bf16.mxu0 0
        %5608 = vmatpush1.bf16.msra.mxu0 0
        %5609 = vmatprep.subr.bf16.mxu0 0
        %5610 = vmatpush1.bf16.msra.mxu0 0
        %5611 = vmatprep.subr.bf16.mxu0 0
        %5612 = vmatpush1.bf16.msra.mxu0 0
        %5613 = vmatprep.subr.bf16.mxu0 0
        %5614 = vmatpush1.bf16.msra.mxu0 0
        %5615 = vmatprep.subr.bf16.mxu0 0
        %5616 = vmatpush1.bf16.msra.mxu0 0
        %5617 = vmatprep.subr.bf16.mxu0 0
        %5618 = vmatpush1.bf16.msra.mxu0 0
        %5619 = vmatprep.subr.bf16.mxu0 0
        %5620 = vmatpush1.bf16.msra.mxu0 0
        %5621 = vmatprep.subr.bf16.mxu0 0
        %5622 = vmatpush1.bf16.msra.mxu0 0
        %5623 = vmatprep.subr.bf16.mxu0 0
        %5624 = vmatpush1.bf16.msra.mxu0 0
        %5625 = vmatprep.subr.bf16.mxu0 0
        %5626 = vmatpush1.bf16.msra.mxu0 0
        %5627 = vmatprep.subr.bf16.mxu0 0
        %5628 = vmatpush1.bf16.msra.mxu0 0
        %5629 = vmatprep.subr.bf16.mxu0 0
        %5630 = vmatpush1.bf16.msra.mxu0 0
        %5631 = vmatprep.subr.bf16.mxu0 0
        %5632 = vmatpush1.bf16.msra.mxu0 0
        %5633 = vmatprep.subr.bf16.mxu0 0
        %5634 = vmatpush1.bf16.msra.mxu0 0
        %5635 = vmatprep.mubr.bf16.mxu0 0
        %5636 = vmatmul.mubr.bf16.gmra.mrb[0].mxu0 %v4285
        %v5637 = vpop.f32.mrb[0].mxu0
        %v5638 = vadd.f32 %v5589, %v5637
        %v5639 = vpop.f32.mrb[0].mxu0
        %v5640 = vpop.f32.mrb[0].mxu0
        %v5641 = vadd.f32 %v5589, %v5640
        %v5642 = vpop.f32.mrb[0].mxu0
        %5643 = vdwg.mxu0
        %s5644 = scalar_lea.vmem %s1, 304
        %v5645 = vld [vmem:[%s5644] sm:$0xf]
        %v5646 = vld [vmem:[%s5644 + $0x4] sm:$0xf]
        %v5647 = vld [vmem:[%s5644 + $0x8] sm:$0xf]
        %v5648 = vld [vmem:[%s5644 + $0xc] sm:$0xf]
        %s5649 = scalar_lea.vmem %s2, 19
        %v5650 = vld [vmem:[%s5649] sm:$0x1]
        %v5652 = vlaneseq
        %v5653 = vshrl.u32 %v5652, 7
        %v5654 = vsub.s32 0, %v5653
        %v5655 = vrot.slane %v5650, %v5654
        %v5661 = vunpack.c.l.b16 %v5645
        %v5662 = vunpack.c.l.b16 %v5646
        %v5663 = vunpack.c.l.b16 %v5647
        %v5664 = vunpack.c.l.b16 %v5648
        %v5665 = vpack.c.b16 %v5662, %v5661
        %v5666 = vpack.c.b16 %v5664, %v5663
        %5669 = vmatprep.subr.bf16.mxu0 0
        %5670 = vmatpush1.bf16.msra.mxu0 %v5665
        %5671 = vmatprep.subr.bf16.mxu0 0
        %5672 = vmatpush1.bf16.msra.mxu0 %v5666
        %5673 = vmatprep.subr.bf16.mxu0 0
        %5674 = vmatpush1.bf16.msra.mxu0 0
        %5675 = vmatprep.subr.bf16.mxu0 0
        %5676 = vmatpush1.bf16.msra.mxu0 0
        %5677 = vmatprep.subr.bf16.mxu0 0
        %5678 = vmatpush1.bf16.msra.mxu0 0
        %5679 = vmatprep.subr.bf16.mxu0 0
        %5680 = vmatpush1.bf16.msra.mxu0 0
        %5681 = vmatprep.subr.bf16.mxu0 0
        %5682 = vmatpush1.bf16.msra.mxu0 0
        %5683 = vmatprep.subr.bf16.mxu0 0
        %5684 = vmatpush1.bf16.msra.mxu0 0
        %5685 = vmatprep.subr.bf16.mxu0 0
        %5686 = vmatpush1.bf16.msra.mxu0 0
        %5687 = vmatprep.subr.bf16.mxu0 0
        %5688 = vmatpush1.bf16.msra.mxu0 0
        %5689 = vmatprep.subr.bf16.mxu0 0
        %5690 = vmatpush1.bf16.msra.mxu0 0
        %5691 = vmatprep.subr.bf16.mxu0 0
        %5692 = vmatpush1.bf16.msra.mxu0 0
        %5693 = vmatprep.subr.bf16.mxu0 0
        %5694 = vmatpush1.bf16.msra.mxu0 0
        %5695 = vmatprep.subr.bf16.mxu0 0
        %5696 = vmatpush1.bf16.msra.mxu0 0
        %5697 = vmatprep.subr.bf16.mxu0 0
        %5698 = vmatpush1.bf16.msra.mxu0 0
        %5699 = vmatprep.subr.bf16.mxu0 0
        %5700 = vmatpush1.bf16.msra.mxu0 0
        %5701 = vmatprep.mubr.bf16.mxu0 0
        %5702 = vmatmul.mubr.bf16.gmra.mrb[0].mxu0 %v4285
        %v5703 = vpop.f32.mrb[0].mxu0
        %v5704 = vadd.f32 %v5655, %v5703
        %v5705 = vpop.f32.mrb[0].mxu0
        %v5706 = vpop.f32.mrb[0].mxu0
        %v5707 = vadd.f32 %v5655, %v5706
        %v5708 = vpop.f32.mrb[0].mxu0
        %5709 = vdwg.mxu0
        %s5710 = scalar_lea.vmem %s1, 368
        %v5711 = vld [vmem:[%s5710] sm:$0xf]
        %v5712 = vld [vmem:[%s5710 + $0x4] sm:$0xf]
        %v5713 = vld [vmem:[%s5710 + $0x8] sm:$0xf]
        %v5714 = vld [vmem:[%s5710 + $0xc] sm:$0xf]
        %s5715 = scalar_lea.vmem %s2, 23
        %v5716 = vld [vmem:[%s5715] sm:$0x1]
        %v5718 = vlaneseq
        %v5719 = vshrl.u32 %v5718, 7
        %v5720 = vsub.s32 0, %v5719
        %v5721 = vrot.slane %v5716, %v5720
        %v5727 = vunpack.c.l.b16 %v5711
        %v5728 = vunpack.c.l.b16 %v5712
        %v5729 = vunpack.c.l.b16 %v5713
        %v5730 = vunpack.c.l.b16 %v5714
        %v5731 = vpack.c.b16 %v5728, %v5727
        %v5732 = vpack.c.b16 %v5730, %v5729
        %5735 = vmatprep.subr.bf16.mxu0 0
        %5736 = vmatpush1.bf16.msra.mxu0 %v5731
        %5737 = vmatprep.subr.bf16.mxu0 0
        %5738 = vmatpush1.bf16.msra.mxu0 %v5732
        %5739 = vmatprep.subr.bf16.mxu0 0
        %5740 = vmatpush1.bf16.msra.mxu0 0
        %5741 = vmatprep.subr.bf16.mxu0 0
        %5742 = vmatpush1.bf16.msra.mxu0 0
        %5743 = vmatprep.subr.bf16.mxu0 0
        %5744 = vmatpush1.bf16.msra.mxu0 0
        %5745 = vmatprep.subr.bf16.mxu0 0
        %5746 = vmatpush1.bf16.msra.mxu0 0
        %5747 = vmatprep.subr.bf16.mxu0 0
        %5748 = vmatpush1.bf16.msra.mxu0 0
        %5749 = vmatprep.subr.bf16.mxu0 0
        %5750 = vmatpush1.bf16.msra.mxu0 0
        %5751 = vmatprep.subr.bf16.mxu0 0
        %5752 = vmatpush1.bf16.msra.mxu0 0
        %5753 = vmatprep.subr.bf16.mxu0 0
        %5754 = vmatpush1.bf16.msra.mxu0 0
        %5755 = vmatprep.subr.bf16.mxu0 0
        %5756 = vmatpush1.bf16.msra.mxu0 0
        %5757 = vmatprep.subr.bf16.mxu0 0
        %5758 = vmatpush1.bf16.msra.mxu0 0
        %5759 = vmatprep.subr.bf16.mxu0 0
        %5760 = vmatpush1.bf16.msra.mxu0 0
        %5761 = vmatprep.subr.bf16.mxu0 0
        %5762 = vmatpush1.bf16.msra.mxu0 0
        %5763 = vmatprep.subr.bf16.mxu0 0
        %5764 = vmatpush1.bf16.msra.mxu0 0
        %5765 = vmatprep.subr.bf16.mxu0 0
        %5766 = vmatpush1.bf16.msra.mxu0 0
        %5767 = vmatprep.mubr.bf16.mxu0 0
        %5768 = vmatmul.mubr.bf16.gmra.mrb[0].mxu0 %v4285
        %v5769 = vpop.f32.mrb[0].mxu0
        %v5770 = vadd.f32 %v5721, %v5769
        %v5771 = vpop.f32.mrb[0].mxu0
        %v5772 = vpop.f32.mrb[0].mxu0
        %v5773 = vadd.f32 %v5721, %v5772
        %v5774 = vpop.f32.mrb[0].mxu0
        %5775 = vdwg.mxu0
        %v5777 = vsel %vm562, %v5638, 0
        %v5780 = vsel %vm562, %v5641, 0
        %v5783 = vsel %vm562, %v5704, 0
        %v5786 = vsel %vm562, %v5707, 0
        %5788 = vmatprep.subr.mxu0 0.0
        %5789 = vmatpush1.xpose.msra.mxu0 %v5783
        %5790 = vmatprep.subr.mxu0 0.0
        %5791 = vmatpush1.xpose.msra.mxu0 %v5786
        %5792 = vmatprep.subr.mxu0 0.0
        %5793 = vmatpush1.xpose.msra.mxu0 0.0
        %5794 = vmatprep.subr.mxu0 0.0
        %5795 = vmatpush1.xpose.msra.mxu0 0.0
        %5796 = vmatprep.subr.mxu0 0.0
        %5797 = vmatpush1.xpose.msra.mxu0 0.0
        %5798 = vmatprep.subr.mxu0 0.0
        %5799 = vmatpush1.xpose.msra.mxu0 0.0
        %5800 = vmatprep.subr.mxu0 0.0
        %5801 = vmatpush1.xpose.msra.mxu0 0.0
        %5802 = vmatprep.subr.mxu0 0.0
        %5803 = vmatpush1.xpose.msra.mxu0 0.0
        %5804 = vmatprep.subr.mxu0 0.0
        %5805 = vmatpush1.xpose.msra.mxu0 0.0
        %5806 = vmatprep.subr.mxu0 0.0
        %5807 = vmatpush1.xpose.msra.mxu0 0.0
        %5808 = vmatprep.subr.mxu0 0.0
        %5809 = vmatpush1.xpose.msra.mxu0 0.0
        %5810 = vmatprep.subr.mxu0 0.0
        %5811 = vmatpush1.xpose.msra.mxu0 0.0
        %5812 = vmatprep.subr.mxu0 0.0
        %5813 = vmatpush1.xpose.msra.mxu0 0.0
        %5814 = vmatprep.subr.mxu0 0.0
        %5815 = vmatpush1.xpose.msra.mxu0 0.0
        %5816 = vmatprep.subr.mxu0 0.0
        %5817 = vmatpush1.xpose.msra.mxu0 0.0
        %5818 = vmatprep.subr.mxu0 0.0
        %5819 = vmatpush1.xpose.msra.mxu0 0.0
        %5820 = vmatprep.subr.mxu0 0.0
        %5821 = vmatpush1.xpose.msra.mxu0 0.0
        %5822 = vmatprep.subr.mxu0 0.0
        %5823 = vmatpush1.xpose.msra.mxu0 0.0
        %5824 = vmatprep.subr.mxu0 0.0
        %5825 = vmatpush1.xpose.msra.mxu0 0.0
        %5826 = vmatprep.subr.mxu0 0.0
        %5827 = vmatpush1.xpose.msra.mxu0 0.0
        %5828 = vmatprep.subr.mxu0 0.0
        %5829 = vmatpush1.xpose.msra.mxu0 0.0
        %5830 = vmatprep.subr.mxu0 0.0
        %5831 = vmatpush1.xpose.msra.mxu0 0.0
        %5832 = vmatprep.subr.mxu0 0.0
        %5833 = vmatpush1.xpose.msra.mxu0 0.0
        %5834 = vmatprep.subr.mxu0 0.0
        %5835 = vmatpush1.xpose.msra.mxu0 0.0
        %5836 = vmatprep.subr.mxu0 0.0
        %5837 = vmatpush1.xpose.msra.mxu0 0.0
        %5838 = vmatprep.subr.mxu0 0.0
        %5839 = vmatpush1.xpose.msra.mxu0 0.0
        %5840 = vmatprep.subr.mxu0 0.0
        %5841 = vmatpush1.xpose.msra.mxu0 0.0
        %5842 = vmatprep.subr.mxu0 0.0
        %5843 = vmatpush1.xpose.msra.mxu0 0.0
        %5844 = vmatprep.subr.mxu0 0.0
        %5845 = vmatpush1.xpose.msra.mxu0 0.0
        %5846 = vmatprep.subr.mxu0 0.0
        %5847 = vmatpush1.xpose.msra.mxu0 0.0
        %5848 = vmatprep.subr.mxu0 0.0
        %5849 = vmatpush1.xpose.msra.mxu0 0.0
        %5850 = vmatprep.subr.mxu0 0.0
        %5851 = vmatpush1.xpose.msra.mxu0 0.0
        %5852 = vmatprep.mubr.f32.mxu0 0.0
        %5853 = vmatmul.mubr.f32.gmra.mrb[0].mxu0 %v5777
        %v5854 = vpop.f32.mrb[0].mxu0
        %v5855 = vadd.f32 0.0, %v5854
        %v5856 = vpop.f32.mrb[0].mxu0
        %5857 = vmatprep.mubr.f32.mxu0 0.0
        %5858 = vmatmul.mubr.f32.gmra.mrb[0].mxu0 %v5780
        %v5859 = vpop.f32.mrb[0].mxu0
        %v5860 = vadd.f32 0.0, %v5859
        %v5861 = vpop.f32.mrb[0].mxu0
        %5862 = vdwg.mxu0
        %v5863 = vsel %vm650, %v5855, -inf
        %5864 = vmax.xlane.f32.xlu0 %v5863
        %v5865 = vpop.xlane.xlu0 %5864
        %v5866 = vsel %vm650, %v5860, -inf
        %5867 = vmax.xlane.f32.xlu0 %v5866
        %v5868 = vpop.xlane.xlu0 %5867
        %v5869 = vsub.f32 %v5855, %v5865
        %v5870 = vsub.f32 %v5860, %v5868
        %v5871 = vmul.f32 %v5869, 1.442695
        %v5872 = vpow.pop %v5871
        %v5873 = vmul.f32 %v5870, 1.442695
        %v5874 = vpow.pop %v5873
        %v5875 = vsel %vm650, %v5872, 0.0
        %5876 = vadd.xlane.f32.xlu0 %v5875
        %v5877 = vpop.xlane.xlu0 %5876
        %v5878 = vsel %vm650, %v5874, 0.0
        %5879 = vadd.xlane.f32.xlu0 %v5878
        %v5880 = vpop.xlane.xlu0 %5879
        %v5881 = vrcp.pop %v5877
        %v5882 = vrcp.pop %v5880
        %v5883 = vmul.f32 %v5872, %v5881
        %v5884 = vmul.f32 %v5874, %v5882
        %v5886 = vsel %vm650, %v5883, 0
        %v5889 = vsel %vm650, %v5884, 0
        %5891 = vmatprep.subr.mxu0 0.0
        %5892 = vmatpush1.msra.mxu0 %v5770
        %5893 = vmatprep.subr.mxu0 0.0
        %5894 = vmatpush1.msra.mxu0 %v5773
        %5895 = vmatprep.subr.mxu0 0.0
        %5896 = vmatpush1.msra.mxu0 0.0
        %5897 = vmatprep.subr.mxu0 0.0
        %5898 = vmatpush1.msra.mxu0 0.0
        %5899 = vmatprep.subr.mxu0 0.0
        %5900 = vmatpush1.msra.mxu0 0.0
        %5901 = vmatprep.subr.mxu0 0.0
        %5902 = vmatpush1.msra.mxu0 0.0
        %5903 = vmatprep.subr.mxu0 0.0
        %5904 = vmatpush1.msra.mxu0 0.0
        %5905 = vmatprep.subr.mxu0 0.0
        %5906 = vmatpush1.msra.mxu0 0.0
        %5907 = vmatprep.subr.mxu0 0.0
        %5908 = vmatpush1.msra.mxu0 0.0
        %5909 = vmatprep.subr.mxu0 0.0
        %5910 = vmatpush1.msra.mxu0 0.0
        %5911 = vmatprep.subr.mxu0 0.0
        %5912 = vmatpush1.msra.mxu0 0.0
        %5913 = vmatprep.subr.mxu0 0.0
        %5914 = vmatpush1.msra.mxu0 0.0
        %5915 = vmatprep.subr.mxu0 0.0
        %5916 = vmatpush1.msra.mxu0 0.0
        %5917 = vmatprep.subr.mxu0 0.0
        %5918 = vmatpush1.msra.mxu0 0.0
        %5919 = vmatprep.subr.mxu0 0.0
        %5920 = vmatpush1.msra.mxu0 0.0
        %5921 = vmatprep.subr.mxu0 0.0
        %5922 = vmatpush1.msra.mxu0 0.0
        %5923 = vmatprep.subr.mxu0 0.0
        %5924 = vmatpush1.msra.mxu0 0.0
        %5925 = vmatprep.subr.mxu0 0.0
        %5926 = vmatpush1.msra.mxu0 0.0
        %5927 = vmatprep.subr.mxu0 0.0
        %5928 = vmatpush1.msra.mxu0 0.0
        %5929 = vmatprep.subr.mxu0 0.0
        %5930 = vmatpush1.msra.mxu0 0.0
        %5931 = vmatprep.subr.mxu0 0.0
        %5932 = vmatpush1.msra.mxu0 0.0
        %5933 = vmatprep.subr.mxu0 0.0
        %5934 = vmatpush1.msra.mxu0 0.0
        %5935 = vmatprep.subr.mxu0 0.0
        %5936 = vmatpush1.msra.mxu0 0.0
        %5937 = vmatprep.subr.mxu0 0.0
        %5938 = vmatpush1.msra.mxu0 0.0
        %5939 = vmatprep.subr.mxu0 0.0
        %5940 = vmatpush1.msra.mxu0 0.0
        %5941 = vmatprep.subr.mxu0 0.0
        %5942 = vmatpush1.msra.mxu0 0.0
        %5943 = vmatprep.subr.mxu0 0.0
        %5944 = vmatpush1.msra.mxu0 0.0
        %5945 = vmatprep.subr.mxu0 0.0
        %5946 = vmatpush1.msra.mxu0 0.0
        %5947 = vmatprep.subr.mxu0 0.0
        %5948 = vmatpush1.msra.mxu0 0.0
        %5949 = vmatprep.subr.mxu0 0.0
        %5950 = vmatpush1.msra.mxu0 0.0
        %5951 = vmatprep.subr.mxu0 0.0
        %5952 = vmatpush1.msra.mxu0 0.0
        %5953 = vmatprep.subr.mxu0 0.0
        %5954 = vmatpush1.msra.mxu0 0.0
        %5955 = vmatprep.mubr.f32.mxu0 0.0
        %5956 = vmatmul.mubr.f32.gmra.mrb[0].mxu0 %v5886
        %v5957 = vpop.f32.mrb[0].mxu0
        %v5958 = vadd.f32 0.0, %v5957
        %v5959 = vpop.f32.mrb[0].mxu0
        %5960 = vmatprep.mubr.f32.mxu0 0.0
        %5961 = vmatmul.mubr.f32.gmra.mrb[0].mxu0 %v5889
        %v5962 = vpop.f32.mrb[0].mxu0
        %v5963 = vadd.f32 0.0, %v5962
        %v5964 = vpop.f32.mrb[0].mxu0
        %5965 = vdwg.mxu0
        %v5966 = vpack.c.bf16 %v5963, %v5958
        %s5967 = scalar_lea.vmem %s3, 28
        %v5968 = vld [vmem:[%s5967] sm:$0xf]
        %v5970 = vsel %vm562, %v5966, 0
        %v5973 = vsel %vm1150, %v5968, 0
        %5975 = vmatprep.subr.bf16.mxu0 0
        %5976 = vmatpush1.bf16.msra.mxu0 %v5973
        %5977 = vmatprep.subr.bf16.mxu0 0
        %5978 = vmatpush1.bf16.msra.mxu0 0
        %5979 = vmatprep.subr.bf16.mxu0 0
        %5980 = vmatpush1.bf16.msra.mxu0 0
        %5981 = vmatprep.subr.bf16.mxu0 0
        %5982 = vmatpush1.bf16.msra.mxu0 0
        %5983 = vmatprep.subr.bf16.mxu0 0
        %5984 = vmatpush1.bf16.msra.mxu0 0
        %5985 = vmatprep.subr.bf16.mxu0 0
        %5986 = vmatpush1.bf16.msra.mxu0 0
        %5987 = vmatprep.subr.bf16.mxu0 0
        %5988 = vmatpush1.bf16.msra.mxu0 0
        %5989 = vmatprep.subr.bf16.mxu0 0
        %5990 = vmatpush1.bf16.msra.mxu0 0
        %5991 = vmatprep.subr.bf16.mxu0 0
        %5992 = vmatpush1.bf16.msra.mxu0 0
        %5993 = vmatprep.subr.bf16.mxu0 0
        %5994 = vmatpush1.bf16.msra.mxu0 0
        %5995 = vmatprep.subr.bf16.mxu0 0
        %5996 = vmatpush1.bf16.msra.mxu0 0
        %5997 = vmatprep.subr.bf16.mxu0 0
        %5998 = vmatpush1.bf16.msra.mxu0 0
        %5999 = vmatprep.subr.bf16.mxu0 0
        %6000 = vmatpush1.bf16.msra.mxu0 0
        %6001 = vmatprep.subr.bf16.mxu0 0
        %6002 = vmatpush1.bf16.msra.mxu0 0
        %6003 = vmatprep.subr.bf16.mxu0 0
        %6004 = vmatpush1.bf16.msra.mxu0 0
        %6005 = vmatprep.subr.bf16.mxu0 0
        %6006 = vmatpush1.bf16.msra.mxu0 0
        %6007 = vmatprep.mubr.bf16.mxu0 0
        %6008 = vmatmul.mubr.bf16.gmra.mrb[0].mxu0 %v5970
        %v6009 = vpop.f32.mrb[0].mxu0
        %v6010 = vadd.f32 0.0, %v6009
        %v6011 = vpop.f32.mrb[0].mxu0
        %v6012 = vpop.f32.mrb[0].mxu0
        %v6013 = vadd.f32 0.0, %v6012
        %v6014 = vpop.f32.mrb[0].mxu0
        %6015 = vdwg.mxu0
        %v6016 = vadd.f32 %v5576, %v6010
        %v6017 = vadd.f32 %v5577, %v6013
        %s6018 = scalar_lea.vmem %s4, 1
        %v6019 = vld [vmem:[%s6018] sm:$0x1]
        %v6021 = vlaneseq
        %v6022 = vshrl.u32 %v6021, 7
        %v6023 = vsub.s32 0, %v6022
        %v6024 = vrot.slane %v6019, %v6023
        %v6026 = vadd.f32 %v6016, %v6024
        %v6027 = vadd.f32 %v6017, %v6024
        %s6028 = scalar_lea.vmem %s9, 4
        %v6029 = vld [vmem:[%s6028] sm:$0x1]
        %s6030 = scalar_lea.vmem %s9, 5
        %v6031 = vld [vmem:[%s6030] sm:$0x1]
        %s6032 = scalar_lea.vmem %s9, 6
        %v6033 = vld [vmem:[%s6032] sm:$0x1]
        %s6034 = scalar_lea.vmem %s9, 7
        %v6035 = vld [vmem:[%s6034] sm:$0x1]
        %v6036 = vadd.f32 %v4256, %v6026
        %v6037 = vadd.f32 %v4257, %v6027
        %v6038 = vsel %vm385, %v6036, 0.0
        %6039 = vadd.xlane.f32.xlu0 %v6038
        %v6040 = vpop.xlane.xlu0 %6039
        %v6041 = vsel %vm385, %v6037, 0.0
        %6042 = vadd.xlane.f32.xlu0 %v6041
        %v6043 = vpop.xlane.xlu0 %6042
        %v6044 = vmul.f32 %v6040, %v2146
        %v6045 = vmul.f32 %v6043, %v2146
        %v6046 = vsub.f32 %v6036, %v6044
        %v6047 = vsub.f32 %v6037, %v6045
        %v6048 = vmul.f32 %v6046, %v6046
        %v6049 = vmul.f32 %v6047, %v6047
        %v6050 = vsel %vm385, %v6048, 0.0
        %6051 = vadd.xlane.f32.xlu0 %v6050
        %v6052 = vpop.xlane.xlu0 %6051
        %v6053 = vsel %vm385, %v6049, 0.0
        %6054 = vadd.xlane.f32.xlu0 %v6053
        %v6055 = vpop.xlane.xlu0 %6054
        %v6056 = vmul.f32 %v6052, %v2146
        %v6057 = vmul.f32 %v6055, %v2146
        %v6058 = vadd.f32 %v6056, 1e-05
        %v6059 = vadd.f32 %v6057, 1e-05
        %v6060 = vrsqrt.pop %v6058
        %v6061 = vrsqrt.pop %v6059
        %v6062 = vmul.f32 %v6046, %v6060
        %v6063 = vmul.f32 %v6047, %v6061
        %v6065 = vlaneseq
        %v6066 = vshrl.u32 %v6065, 7
        %v6067 = vsub.s32 0, %v6066
        %v6068 = vrot.slane %v6029, %v6067
        %v6070 = vmul.f32 %v6062, %v6068
        %v6071 = vmul.f32 %v6063, %v6068
        %v6073 = vlaneseq
        %v6074 = vshrl.u32 %v6073, 7
        %v6075 = vsub.s32 0, %v6074
        %v6076 = vrot.slane %v6031, %v6075
        %v6078 = vadd.f32 %v6070, %v6076
        %v6079 = vadd.f32 %v6071, %v6076
        %v6080 = vpack.c.bf16 %v6079, %v6078
        %s6081 = scalar_lea.vmem %s5, 256
        %v6082 = vld [vmem:[%s6081] sm:$0xff]
        %v6083 = vld [vmem:[%s6081 + $0x8] sm:$0xff]
        %v6084 = vld [vmem:[%s6081 + $0x10] sm:$0xff]
        %v6085 = vld [vmem:[%s6081 + $0x18] sm:$0xff]
        %v6086 = vld [vmem:[%s6081 + $0x20] sm:$0xff]
        %v6087 = vld [vmem:[%s6081 + $0x28] sm:$0xff]
        %v6088 = vld [vmem:[%s6081 + $0x30] sm:$0xff]
        %v6089 = vld [vmem:[%s6081 + $0x38] sm:$0xff]
        %v6090 = vld [vmem:[%s6081 + $0x40] sm:$0xff]
        %v6091 = vld [vmem:[%s6081 + $0x48] sm:$0xff]
        %v6092 = vld [vmem:[%s6081 + $0x50] sm:$0xff]
        %v6093 = vld [vmem:[%s6081 + $0x58] sm:$0xff]
        %v6094 = vld [vmem:[%s6081 + $0x60] sm:$0xff]
        %v6095 = vld [vmem:[%s6081 + $0x68] sm:$0xff]
        %v6096 = vld [vmem:[%s6081 + $0x70] sm:$0xff]
        %v6097 = vld [vmem:[%s6081 + $0x78] sm:$0xff]
        %v6098 = vld [vmem:[%s6081 + $0x80] sm:$0xff]
        %v6099 = vld [vmem:[%s6081 + $0x88] sm:$0xff]
        %v6100 = vld [vmem:[%s6081 + $0x90] sm:$0xff]
        %v6101 = vld [vmem:[%s6081 + $0x98] sm:$0xff]
        %v6102 = vld [vmem:[%s6081 + $0xa0] sm:$0xff]
        %v6103 = vld [vmem:[%s6081 + $0xa8] sm:$0xff]
        %v6104 = vld [vmem:[%s6081 + $0xb0] sm:$0xff]
        %v6105 = vld [vmem:[%s6081 + $0xb8] sm:$0xff]
        %v6106 = vld [vmem:[%s6081 + $0xc0] sm:$0xff]
        %v6107 = vld [vmem:[%s6081 + $0xc8] sm:$0xff]
        %v6108 = vld [vmem:[%s6081 + $0xd0] sm:$0xff]
        %v6109 = vld [vmem:[%s6081 + $0xd8] sm:$0xff]
        %v6110 = vld [vmem:[%s6081 + $0xe0] sm:$0xff]
        %v6111 = vld [vmem:[%s6081 + $0xe8] sm:$0xff]
        %v6112 = vld [vmem:[%s6081 + $0xf0] sm:$0xff]
        %v6113 = vld [vmem:[%s6081 + $0xf8] sm:$0xff]
        %s6114 = scalar_lea.vmem %s6, 16
        %v6115 = vld [vmem:[%s6114] sm:$0xff]
        %v6116 = vld [vmem:[%s6114 + $0x8] sm:$0xff]
        %v6119 = vlaneseq
        %v6120 = vshrl.u32 %v6119, 7
        %v6121 = vsub.s32 0, %v6120
        %v6122 = vrot.slane %v6115, %v6121
        %v6123 = vlaneseq
        %v6124 = vshrl.u32 %v6123, 7
        %v6125 = vsub.s32 1, %v6124
        %v6126 = vrot.slane %v6115, %v6125
        %v6127 = vlaneseq
        %v6128 = vshrl.u32 %v6127, 7
        %v6129 = vsub.s32 2, %v6128
        %v6130 = vrot.slane %v6115, %v6129
        %v6131 = vlaneseq
        %v6132 = vshrl.u32 %v6131, 7
        %v6133 = vsub.s32 3, %v6132
        %v6134 = vrot.slane %v6115, %v6133
        %v6135 = vlaneseq
        %v6136 = vshrl.u32 %v6135, 7
        %v6137 = vsub.s32 4, %v6136
        %v6138 = vrot.slane %v6115, %v6137
        %v6139 = vlaneseq
        %v6140 = vshrl.u32 %v6139, 7
        %v6141 = vsub.s32 5, %v6140
        %v6142 = vrot.slane %v6115, %v6141
        %v6143 = vlaneseq
        %v6144 = vshrl.u32 %v6143, 7
        %v6145 = vsub.s32 6, %v6144
        %v6146 = vrot.slane %v6115, %v6145
        %v6147 = vlaneseq
        %v6148 = vshrl.u32 %v6147, 7
        %v6149 = vsub.s32 7, %v6148
        %v6150 = vrot.slane %v6115, %v6149
        %v6151 = vlaneseq
        %v6152 = vshrl.u32 %v6151, 7
        %v6153 = vsub.s32 0, %v6152
        %v6154 = vrot.slane %v6116, %v6153
        %v6155 = vlaneseq
        %v6156 = vshrl.u32 %v6155, 7
        %v6157 = vsub.s32 1, %v6156
        %v6158 = vrot.slane %v6116, %v6157
        %v6159 = vlaneseq
        %v6160 = vshrl.u32 %v6159, 7
        %v6161 = vsub.s32 2, %v6160
        %v6162 = vrot.slane %v6116, %v6161
        %v6163 = vlaneseq
        %v6164 = vshrl.u32 %v6163, 7
        %v6165 = vsub.s32 3, %v6164
        %v6166 = vrot.slane %v6116, %v6165
        %v6167 = vlaneseq
        %v6168 = vshrl.u32 %v6167, 7
        %v6169 = vsub.s32 4, %v6168
        %v6170 = vrot.slane %v6116, %v6169
        %v6171 = vlaneseq
        %v6172 = vshrl.u32 %v6171, 7
        %v6173 = vsub.s32 5, %v6172
        %v6174 = vrot.slane %v6116, %v6173
        %v6175 = vlaneseq
        %v6176 = vshrl.u32 %v6175, 7
        %v6177 = vsub.s32 6, %v6176
        %v6178 = vrot.slane %v6116, %v6177
        %v6179 = vlaneseq
        %v6180 = vshrl.u32 %v6179, 7
        %v6181 = vsub.s32 7, %v6180
        %v6182 = vrot.slane %v6116, %v6181
        %v6231 = vunpack.c.l.b16 %v6082
        %v6232 = vunpack.c.h.b16 %v6082
        %v6233 = vunpack.c.l.b16 %v6083
        %v6234 = vunpack.c.h.b16 %v6083
        %v6235 = vunpack.c.l.b16 %v6084
        %v6236 = vunpack.c.h.b16 %v6084
        %v6237 = vunpack.c.l.b16 %v6085
        %v6238 = vunpack.c.h.b16 %v6085
        %v6239 = vunpack.c.l.b16 %v6086
        %v6240 = vunpack.c.h.b16 %v6086
        %v6241 = vunpack.c.l.b16 %v6087
        %v6242 = vunpack.c.h.b16 %v6087
        %v6243 = vunpack.c.l.b16 %v6088
        %v6244 = vunpack.c.h.b16 %v6088
        %v6245 = vunpack.c.l.b16 %v6089
        %v6246 = vunpack.c.h.b16 %v6089
        %v6247 = vunpack.c.l.b16 %v6090
        %v6248 = vunpack.c.h.b16 %v6090
        %v6249 = vunpack.c.l.b16 %v6091
        %v6250 = vunpack.c.h.b16 %v6091
        %v6251 = vunpack.c.l.b16 %v6092
        %v6252 = vunpack.c.h.b16 %v6092
        %v6253 = vunpack.c.l.b16 %v6093
        %v6254 = vunpack.c.h.b16 %v6093
        %v6255 = vunpack.c.l.b16 %v6094
        %v6256 = vunpack.c.h.b16 %v6094
        %v6257 = vunpack.c.l.b16 %v6095
        %v6258 = vunpack.c.h.b16 %v6095
        %v6259 = vunpack.c.l.b16 %v6096
        %v6260 = vunpack.c.h.b16 %v6096
        %v6261 = vunpack.c.l.b16 %v6097
        %v6262 = vunpack.c.h.b16 %v6097
        %v6263 = vunpack.c.l.b16 %v6098
        %v6264 = vunpack.c.h.b16 %v6098
        %v6265 = vunpack.c.l.b16 %v6099
        %v6266 = vunpack.c.h.b16 %v6099
        %v6267 = vunpack.c.l.b16 %v6100
        %v6268 = vunpack.c.h.b16 %v6100
        %v6269 = vunpack.c.l.b16 %v6101
        %v6270 = vunpack.c.h.b16 %v6101
        %v6271 = vunpack.c.l.b16 %v6102
        %v6272 = vunpack.c.h.b16 %v6102
        %v6273 = vunpack.c.l.b16 %v6103
        %v6274 = vunpack.c.h.b16 %v6103
        %v6275 = vunpack.c.l.b16 %v6104
        %v6276 = vunpack.c.h.b16 %v6104
        %v6277 = vunpack.c.l.b16 %v6105
        %v6278 = vunpack.c.h.b16 %v6105
        %v6279 = vunpack.c.l.b16 %v6106
        %v6280 = vunpack.c.h.b16 %v6106
        %v6281 = vunpack.c.l.b16 %v6107
        %v6282 = vunpack.c.h.b16 %v6107
        %v6283 = vunpack.c.l.b16 %v6108
        %v6284 = vunpack.c.h.b16 %v6108
        %v6285 = vunpack.c.l.b16 %v6109
        %v6286 = vunpack.c.h.b16 %v6109
        %v6287 = vunpack.c.l.b16 %v6110
        %v6288 = vunpack.c.h.b16 %v6110
        %v6289 = vunpack.c.l.b16 %v6111
        %v6290 = vunpack.c.h.b16 %v6111
        %v6291 = vunpack.c.l.b16 %v6112
        %v6292 = vunpack.c.h.b16 %v6112
        %v6293 = vunpack.c.l.b16 %v6113
        %v6294 = vunpack.c.h.b16 %v6113
        %v6295 = vpack.c.b16 %v6247, %v6231
        %v6296 = vpack.c.b16 %v6248, %v6232
        %v6297 = vpack.c.b16 %v6249, %v6233
        %v6298 = vpack.c.b16 %v6250, %v6234
        %v6299 = vpack.c.b16 %v6251, %v6235
        %v6300 = vpack.c.b16 %v6252, %v6236
        %v6301 = vpack.c.b16 %v6253, %v6237
        %v6302 = vpack.c.b16 %v6254, %v6238
        %v6303 = vpack.c.b16 %v6255, %v6239
        %v6304 = vpack.c.b16 %v6256, %v6240
        %v6305 = vpack.c.b16 %v6257, %v6241
        %v6306 = vpack.c.b16 %v6258, %v6242
        %v6307 = vpack.c.b16 %v6259, %v6243
        %v6308 = vpack.c.b16 %v6260, %v6244
        %v6309 = vpack.c.b16 %v6261, %v6245
        %v6310 = vpack.c.b16 %v6262, %v6246
        %v6311 = vpack.c.b16 %v6279, %v6263
        %v6312 = vpack.c.b16 %v6280, %v6264
        %v6313 = vpack.c.b16 %v6281, %v6265
        %v6314 = vpack.c.b16 %v6282, %v6266
        %v6315 = vpack.c.b16 %v6283, %v6267
        %v6316 = vpack.c.b16 %v6284, %v6268
        %v6317 = vpack.c.b16 %v6285, %v6269
        %v6318 = vpack.c.b16 %v6286, %v6270
        %v6319 = vpack.c.b16 %v6287, %v6271
        %v6320 = vpack.c.b16 %v6288, %v6272
        %v6321 = vpack.c.b16 %v6289, %v6273
        %v6322 = vpack.c.b16 %v6290, %v6274
        %v6323 = vpack.c.b16 %v6291, %v6275
        %v6324 = vpack.c.b16 %v6292, %v6276
        %v6325 = vpack.c.b16 %v6293, %v6277
        %v6326 = vpack.c.b16 %v6294, %v6278
        %v6360 = vsel %vm385, %v6080, 0
        %6362 = vmatprep.subr.bf16.mxu0 %v6296
        %6363 = vmatpush1.bf16.msra.mxu0 %v6295
        %6364 = vmatprep.subr.bf16.mxu0 %v6312
        %6365 = vmatpush1.bf16.msra.mxu0 %v6311
        %6366 = vmatprep.subr.bf16.mxu0 0
        %6367 = vmatpush1.bf16.msra.mxu0 0
        %6368 = vmatprep.subr.bf16.mxu0 0
        %6369 = vmatpush1.bf16.msra.mxu0 0
        %6370 = vmatprep.subr.bf16.mxu0 0
        %6371 = vmatpush1.bf16.msra.mxu0 0
        %6372 = vmatprep.subr.bf16.mxu0 0
        %6373 = vmatpush1.bf16.msra.mxu0 0
        %6374 = vmatprep.subr.bf16.mxu0 0
        %6375 = vmatpush1.bf16.msra.mxu0 0
        %6376 = vmatprep.subr.bf16.mxu0 0
        %6377 = vmatpush1.bf16.msra.mxu0 0
        %6378 = vmatprep.subr.bf16.mxu0 0
        %6379 = vmatpush1.bf16.msra.mxu0 0
        %6380 = vmatprep.subr.bf16.mxu0 0
        %6381 = vmatpush1.bf16.msra.mxu0 0
        %6382 = vmatprep.subr.bf16.mxu0 0
        %6383 = vmatpush1.bf16.msra.mxu0 0
        %6384 = vmatprep.subr.bf16.mxu0 0
        %6385 = vmatpush1.bf16.msra.mxu0 0
        %6386 = vmatprep.subr.bf16.mxu0 0
        %6387 = vmatpush1.bf16.msra.mxu0 0
        %6388 = vmatprep.subr.bf16.mxu0 0
        %6389 = vmatpush1.bf16.msra.mxu0 0
        %6390 = vmatprep.subr.bf16.mxu0 0
        %6391 = vmatpush1.bf16.msra.mxu0 0
        %6392 = vmatprep.subr.bf16.mxu0 0
        %6393 = vmatpush1.bf16.msra.mxu0 0
        %6394 = vmatprep.mubr.bf16.mxu0 0
        %6395 = vmatmul.mubr.bf16.gmra.mrb[0].mxu0 %v6360
        %v6396 = vpop.f32.mrb[0].mxu0
        %v6397 = vadd.f32 %v6122, %v6396
        %v6398 = vpop.f32.mrb[0].mxu0
        %v6399 = vadd.f32 %v6126, %v6398
        %v6400 = vpop.f32.mrb[0].mxu0
        %v6401 = vadd.f32 %v6122, %v6400
        %v6402 = vpop.f32.mrb[0].mxu0
        %v6403 = vadd.f32 %v6126, %v6402
        %6404 = vdwg.mxu0
        %6405 = vmatprep.subr.bf16.mxu0 %v6298
        %6406 = vmatpush1.bf16.msra.mxu0 %v6297
        %6407 = vmatprep.subr.bf16.mxu0 %v6314
        %6408 = vmatpush1.bf16.msra.mxu0 %v6313
        %6409 = vmatprep.subr.bf16.mxu0 0
        %6410 = vmatpush1.bf16.msra.mxu0 0
        %6411 = vmatprep.subr.bf16.mxu0 0
        %6412 = vmatpush1.bf16.msra.mxu0 0
        %6413 = vmatprep.subr.bf16.mxu0 0
        %6414 = vmatpush1.bf16.msra.mxu0 0
        %6415 = vmatprep.subr.bf16.mxu0 0
        %6416 = vmatpush1.bf16.msra.mxu0 0
        %6417 = vmatprep.subr.bf16.mxu0 0
        %6418 = vmatpush1.bf16.msra.mxu0 0
        %6419 = vmatprep.subr.bf16.mxu0 0
        %6420 = vmatpush1.bf16.msra.mxu0 0
        %6421 = vmatprep.subr.bf16.mxu0 0
        %6422 = vmatpush1.bf16.msra.mxu0 0
        %6423 = vmatprep.subr.bf16.mxu0 0
        %6424 = vmatpush1.bf16.msra.mxu0 0
        %6425 = vmatprep.subr.bf16.mxu0 0
        %6426 = vmatpush1.bf16.msra.mxu0 0
        %6427 = vmatprep.subr.bf16.mxu0 0
        %6428 = vmatpush1.bf16.msra.mxu0 0
        %6429 = vmatprep.subr.bf16.mxu0 0
        %6430 = vmatpush1.bf16.msra.mxu0 0
        %6431 = vmatprep.subr.bf16.mxu0 0
        %6432 = vmatpush1.bf16.msra.mxu0 0
        %6433 = vmatprep.subr.bf16.mxu0 0
        %6434 = vmatpush1.bf16.msra.mxu0 0
        %6435 = vmatprep.subr.bf16.mxu0 0
        %6436 = vmatpush1.bf16.msra.mxu0 0
        %6437 = vmatprep.mubr.bf16.mxu0 0
        %6438 = vmatmul.mubr.bf16.gmra.mrb[0].mxu0 %v6360
        %v6439 = vpop.f32.mrb[0].mxu0
        %v6440 = vadd.f32 %v6130, %v6439
        %v6441 = vpop.f32.mrb[0].mxu0
        %v6442 = vadd.f32 %v6134, %v6441
        %v6443 = vpop.f32.mrb[0].mxu0
        %v6444 = vadd.f32 %v6130, %v6443
        %v6445 = vpop.f32.mrb[0].mxu0
        %v6446 = vadd.f32 %v6134, %v6445
        %6447 = vdwg.mxu0
        %6448 = vmatprep.subr.bf16.mxu0 %v6300
        %6449 = vmatpush1.bf16.msra.mxu0 %v6299
        %6450 = vmatprep.subr.bf16.mxu0 %v6316
        %6451 = vmatpush1.bf16.msra.mxu0 %v6315
        %6452 = vmatprep.subr.bf16.mxu0 0
        %6453 = vmatpush1.bf16.msra.mxu0 0
        %6454 = vmatprep.subr.bf16.mxu0 0
        %6455 = vmatpush1.bf16.msra.mxu0 0
        %6456 = vmatprep.subr.bf16.mxu0 0
        %6457 = vmatpush1.bf16.msra.mxu0 0
        %6458 = vmatprep.subr.bf16.mxu0 0
        %6459 = vmatpush1.bf16.msra.mxu0 0
        %6460 = vmatprep.subr.bf16.mxu0 0
        %6461 = vmatpush1.bf16.msra.mxu0 0
        %6462 = vmatprep.subr.bf16.mxu0 0
        %6463 = vmatpush1.bf16.msra.mxu0 0
        %6464 = vmatprep.subr.bf16.mxu0 0
        %6465 = vmatpush1.bf16.msra.mxu0 0
        %6466 = vmatprep.subr.bf16.mxu0 0
        %6467 = vmatpush1.bf16.msra.mxu0 0
        %6468 = vmatprep.subr.bf16.mxu0 0
        %6469 = vmatpush1.bf16.msra.mxu0 0
        %6470 = vmatprep.subr.bf16.mxu0 0
        %6471 = vmatpush1.bf16.msra.mxu0 0
        %6472 = vmatprep.subr.bf16.mxu0 0
        %6473 = vmatpush1.bf16.msra.mxu0 0
        %6474 = vmatprep.subr.bf16.mxu0 0
        %6475 = vmatpush1.bf16.msra.mxu0 0
        %6476 = vmatprep.subr.bf16.mxu0 0
        %6477 = vmatpush1.bf16.msra.mxu0 0
        %6478 = vmatprep.subr.bf16.mxu0 0
        %6479 = vmatpush1.bf16.msra.mxu0 0
        %6480 = vmatprep.mubr.bf16.mxu0 0
        %6481 = vmatmul.mubr.bf16.gmra.mrb[0].mxu0 %v6360
        %v6482 = vpop.f32.mrb[0].mxu0
        %v6483 = vadd.f32 %v6138, %v6482
        %v6484 = vpop.f32.mrb[0].mxu0
        %v6485 = vadd.f32 %v6142, %v6484
        %v6486 = vpop.f32.mrb[0].mxu0
        %v6487 = vadd.f32 %v6138, %v6486
        %v6488 = vpop.f32.mrb[0].mxu0
        %v6489 = vadd.f32 %v6142, %v6488
        %6490 = vdwg.mxu0
        %6491 = vmatprep.subr.bf16.mxu0 %v6302
        %6492 = vmatpush1.bf16.msra.mxu0 %v6301
        %6493 = vmatprep.subr.bf16.mxu0 %v6318
        %6494 = vmatpush1.bf16.msra.mxu0 %v6317
        %6495 = vmatprep.subr.bf16.mxu0 0
        %6496 = vmatpush1.bf16.msra.mxu0 0
        %6497 = vmatprep.subr.bf16.mxu0 0
        %6498 = vmatpush1.bf16.msra.mxu0 0
        %6499 = vmatprep.subr.bf16.mxu0 0
        %6500 = vmatpush1.bf16.msra.mxu0 0
        %6501 = vmatprep.subr.bf16.mxu0 0
        %6502 = vmatpush1.bf16.msra.mxu0 0
        %6503 = vmatprep.subr.bf16.mxu0 0
        %6504 = vmatpush1.bf16.msra.mxu0 0
        %6505 = vmatprep.subr.bf16.mxu0 0
        %6506 = vmatpush1.bf16.msra.mxu0 0
        %6507 = vmatprep.subr.bf16.mxu0 0
        %6508 = vmatpush1.bf16.msra.mxu0 0
        %6509 = vmatprep.subr.bf16.mxu0 0
        %6510 = vmatpush1.bf16.msra.mxu0 0
        %6511 = vmatprep.subr.bf16.mxu0 0
        %6512 = vmatpush1.bf16.msra.mxu0 0
        %6513 = vmatprep.subr.bf16.mxu0 0
        %6514 = vmatpush1.bf16.msra.mxu0 0
        %6515 = vmatprep.subr.bf16.mxu0 0
        %6516 = vmatpush1.bf16.msra.mxu0 0
        %6517 = vmatprep.subr.bf16.mxu0 0
        %6518 = vmatpush1.bf16.msra.mxu0 0
        %6519 = vmatprep.subr.bf16.mxu0 0
        %6520 = vmatpush1.bf16.msra.mxu0 0
        %6521 = vmatprep.subr.bf16.mxu0 0
        %6522 = vmatpush1.bf16.msra.mxu0 0
        %6523 = vmatprep.mubr.bf16.mxu0 0
        %6524 = vmatmul.mubr.bf16.gmra.mrb[0].mxu0 %v6360
        %v6525 = vpop.f32.mrb[0].mxu0
        %v6526 = vadd.f32 %v6146, %v6525
        %v6527 = vpop.f32.mrb[0].mxu0
        %v6528 = vadd.f32 %v6150, %v6527
        %v6529 = vpop.f32.mrb[0].mxu0
        %v6530 = vadd.f32 %v6146, %v6529
        %v6531 = vpop.f32.mrb[0].mxu0
        %v6532 = vadd.f32 %v6150, %v6531
        %6533 = vdwg.mxu0
        %6534 = vmatprep.subr.bf16.mxu0 %v6304
        %6535 = vmatpush1.bf16.msra.mxu0 %v6303
        %6536 = vmatprep.subr.bf16.mxu0 %v6320
        %6537 = vmatpush1.bf16.msra.mxu0 %v6319
        %6538 = vmatprep.subr.bf16.mxu0 0
        %6539 = vmatpush1.bf16.msra.mxu0 0
        %6540 = vmatprep.subr.bf16.mxu0 0
        %6541 = vmatpush1.bf16.msra.mxu0 0
        %6542 = vmatprep.subr.bf16.mxu0 0
        %6543 = vmatpush1.bf16.msra.mxu0 0
        %6544 = vmatprep.subr.bf16.mxu0 0
        %6545 = vmatpush1.bf16.msra.mxu0 0
        %6546 = vmatprep.subr.bf16.mxu0 0
        %6547 = vmatpush1.bf16.msra.mxu0 0
        %6548 = vmatprep.subr.bf16.mxu0 0
        %6549 = vmatpush1.bf16.msra.mxu0 0
        %6550 = vmatprep.subr.bf16.mxu0 0
        %6551 = vmatpush1.bf16.msra.mxu0 0
        %6552 = vmatprep.subr.bf16.mxu0 0
        %6553 = vmatpush1.bf16.msra.mxu0 0
        %6554 = vmatprep.subr.bf16.mxu0 0
        %6555 = vmatpush1.bf16.msra.mxu0 0
        %6556 = vmatprep.subr.bf16.mxu0 0
        %6557 = vmatpush1.bf16.msra.mxu0 0
        %6558 = vmatprep.subr.bf16.mxu0 0
        %6559 = vmatpush1.bf16.msra.mxu0 0
        %6560 = vmatprep.subr.bf16.mxu0 0
        %6561 = vmatpush1.bf16.msra.mxu0 0
        %6562 = vmatprep.subr.bf16.mxu0 0
        %6563 = vmatpush1.bf16.msra.mxu0 0
        %6564 = vmatprep.subr.bf16.mxu0 0
        %6565 = vmatpush1.bf16.msra.mxu0 0
        %6566 = vmatprep.mubr.bf16.mxu0 0
        %6567 = vmatmul.mubr.bf16.gmra.mrb[0].mxu0 %v6360
        %v6568 = vpop.f32.mrb[0].mxu0
        %v6569 = vadd.f32 %v6154, %v6568
        %v6570 = vpop.f32.mrb[0].mxu0
        %v6571 = vadd.f32 %v6158, %v6570
        %v6572 = vpop.f32.mrb[0].mxu0
        %v6573 = vadd.f32 %v6154, %v6572
        %v6574 = vpop.f32.mrb[0].mxu0
        %v6575 = vadd.f32 %v6158, %v6574
        %6576 = vdwg.mxu0
        %6577 = vmatprep.subr.bf16.mxu0 %v6306
        %6578 = vmatpush1.bf16.msra.mxu0 %v6305
        %6579 = vmatprep.subr.bf16.mxu0 %v6322
        %6580 = vmatpush1.bf16.msra.mxu0 %v6321
        %6581 = vmatprep.subr.bf16.mxu0 0
        %6582 = vmatpush1.bf16.msra.mxu0 0
        %6583 = vmatprep.subr.bf16.mxu0 0
        %6584 = vmatpush1.bf16.msra.mxu0 0
        %6585 = vmatprep.subr.bf16.mxu0 0
        %6586 = vmatpush1.bf16.msra.mxu0 0
        %6587 = vmatprep.subr.bf16.mxu0 0
        %6588 = vmatpush1.bf16.msra.mxu0 0
        %6589 = vmatprep.subr.bf16.mxu0 0
        %6590 = vmatpush1.bf16.msra.mxu0 0
        %6591 = vmatprep.subr.bf16.mxu0 0
        %6592 = vmatpush1.bf16.msra.mxu0 0
        %6593 = vmatprep.subr.bf16.mxu0 0
        %6594 = vmatpush1.bf16.msra.mxu0 0
        %6595 = vmatprep.subr.bf16.mxu0 0
        %6596 = vmatpush1.bf16.msra.mxu0 0
        %6597 = vmatprep.subr.bf16.mxu0 0
        %6598 = vmatpush1.bf16.msra.mxu0 0
        %6599 = vmatprep.subr.bf16.mxu0 0
        %6600 = vmatpush1.bf16.msra.mxu0 0
        %6601 = vmatprep.subr.bf16.mxu0 0
        %6602 = vmatpush1.bf16.msra.mxu0 0
        %6603 = vmatprep.subr.bf16.mxu0 0
        %6604 = vmatpush1.bf16.msra.mxu0 0
        %6605 = vmatprep.subr.bf16.mxu0 0
        %6606 = vmatpush1.bf16.msra.mxu0 0
        %6607 = vmatprep.subr.bf16.mxu0 0
        %6608 = vmatpush1.bf16.msra.mxu0 0
        %6609 = vmatprep.mubr.bf16.mxu0 0
        %6610 = vmatmul.mubr.bf16.gmra.mrb[0].mxu0 %v6360
        %v6611 = vpop.f32.mrb[0].mxu0
        %v6612 = vadd.f32 %v6162, %v6611
        %v6613 = vpop.f32.mrb[0].mxu0
        %v6614 = vadd.f32 %v6166, %v6613
        %v6615 = vpop.f32.mrb[0].mxu0
        %v6616 = vadd.f32 %v6162, %v6615
        %v6617 = vpop.f32.mrb[0].mxu0
        %v6618 = vadd.f32 %v6166, %v6617
        %6619 = vdwg.mxu0
        %6620 = vmatprep.subr.bf16.mxu0 %v6308
        %6621 = vmatpush1.bf16.msra.mxu0 %v6307
        %6622 = vmatprep.subr.bf16.mxu0 %v6324
        %6623 = vmatpush1.bf16.msra.mxu0 %v6323
        %6624 = vmatprep.subr.bf16.mxu0 0
        %6625 = vmatpush1.bf16.msra.mxu0 0
        %6626 = vmatprep.subr.bf16.mxu0 0
        %6627 = vmatpush1.bf16.msra.mxu0 0
        %6628 = vmatprep.subr.bf16.mxu0 0
        %6629 = vmatpush1.bf16.msra.mxu0 0
        %6630 = vmatprep.subr.bf16.mxu0 0
        %6631 = vmatpush1.bf16.msra.mxu0 0
        %6632 = vmatprep.subr.bf16.mxu0 0
        %6633 = vmatpush1.bf16.msra.mxu0 0
        %6634 = vmatprep.subr.bf16.mxu0 0
        %6635 = vmatpush1.bf16.msra.mxu0 0
        %6636 = vmatprep.subr.bf16.mxu0 0
        %6637 = vmatpush1.bf16.msra.mxu0 0
        %6638 = vmatprep.subr.bf16.mxu0 0
        %6639 = vmatpush1.bf16.msra.mxu0 0
        %6640 = vmatprep.subr.bf16.mxu0 0
        %6641 = vmatpush1.bf16.msra.mxu0 0
        %6642 = vmatprep.subr.bf16.mxu0 0
        %6643 = vmatpush1.bf16.msra.mxu0 0
        %6644 = vmatprep.subr.bf16.mxu0 0
        %6645 = vmatpush1.bf16.msra.mxu0 0
        %6646 = vmatprep.subr.bf16.mxu0 0
        %6647 = vmatpush1.bf16.msra.mxu0 0
        %6648 = vmatprep.subr.bf16.mxu0 0
        %6649 = vmatpush1.bf16.msra.mxu0 0
        %6650 = vmatprep.subr.bf16.mxu0 0
        %6651 = vmatpush1.bf16.msra.mxu0 0
        %6652 = vmatprep.mubr.bf16.mxu0 0
        %6653 = vmatmul.mubr.bf16.gmra.mrb[0].mxu0 %v6360
        %v6654 = vpop.f32.mrb[0].mxu0
        %v6655 = vadd.f32 %v6170, %v6654
        %v6656 = vpop.f32.mrb[0].mxu0
        %v6657 = vadd.f32 %v6174, %v6656
        %v6658 = vpop.f32.mrb[0].mxu0
        %v6659 = vadd.f32 %v6170, %v6658
        %v6660 = vpop.f32.mrb[0].mxu0
        %v6661 = vadd.f32 %v6174, %v6660
        %6662 = vdwg.mxu0
        %6663 = vmatprep.subr.bf16.mxu0 %v6310
        %6664 = vmatpush1.bf16.msra.mxu0 %v6309
        %6665 = vmatprep.subr.bf16.mxu0 %v6326
        %6666 = vmatpush1.bf16.msra.mxu0 %v6325
        %6667 = vmatprep.subr.bf16.mxu0 0
        %6668 = vmatpush1.bf16.msra.mxu0 0
        %6669 = vmatprep.subr.bf16.mxu0 0
        %6670 = vmatpush1.bf16.msra.mxu0 0
        %6671 = vmatprep.subr.bf16.mxu0 0
        %6672 = vmatpush1.bf16.msra.mxu0 0
        %6673 = vmatprep.subr.bf16.mxu0 0
        %6674 = vmatpush1.bf16.msra.mxu0 0
        %6675 = vmatprep.subr.bf16.mxu0 0
        %6676 = vmatpush1.bf16.msra.mxu0 0
        %6677 = vmatprep.subr.bf16.mxu0 0
        %6678 = vmatpush1.bf16.msra.mxu0 0
        %6679 = vmatprep.subr.bf16.mxu0 0
        %6680 = vmatpush1.bf16.msra.mxu0 0
        %6681 = vmatprep.subr.bf16.mxu0 0
        %6682 = vmatpush1.bf16.msra.mxu0 0
        %6683 = vmatprep.subr.bf16.mxu0 0
        %6684 = vmatpush1.bf16.msra.mxu0 0
        %6685 = vmatprep.subr.bf16.mxu0 0
        %6686 = vmatpush1.bf16.msra.mxu0 0
        %6687 = vmatprep.subr.bf16.mxu0 0
        %6688 = vmatpush1.bf16.msra.mxu0 0
        %6689 = vmatprep.subr.bf16.mxu0 0
        %6690 = vmatpush1.bf16.msra.mxu0 0
        %6691 = vmatprep.subr.bf16.mxu0 0
        %6692 = vmatpush1.bf16.msra.mxu0 0
        %6693 = vmatprep.subr.bf16.mxu0 0
        %6694 = vmatpush1.bf16.msra.mxu0 0
        %6695 = vmatprep.mubr.bf16.mxu0 0
        %6696 = vmatmul.mubr.bf16.gmra.mrb[0].mxu0 %v6360
        %v6697 = vpop.f32.mrb[0].mxu0
        %v6698 = vadd.f32 %v6178, %v6697
        %v6699 = vpop.f32.mrb[0].mxu0
        %v6700 = vadd.f32 %v6182, %v6699
        %v6701 = vpop.f32.mrb[0].mxu0
        %v6702 = vadd.f32 %v6178, %v6701
        %v6703 = vpop.f32.mrb[0].mxu0
        %v6704 = vadd.f32 %v6182, %v6703
        %6705 = vdwg.mxu0
        %v6706 = vmax.f32 %v6397, 0.0
        %v6707 = vmax.f32 %v6399, 0.0
        %v6708 = vmax.f32 %v6440, 0.0
        %v6709 = vmax.f32 %v6442, 0.0
        %v6710 = vmax.f32 %v6483, 0.0
        %v6711 = vmax.f32 %v6485, 0.0
        %v6712 = vmax.f32 %v6526, 0.0
        %v6713 = vmax.f32 %v6528, 0.0
        %v6714 = vmax.f32 %v6569, 0.0
        %v6715 = vmax.f32 %v6571, 0.0
        %v6716 = vmax.f32 %v6612, 0.0
        %v6717 = vmax.f32 %v6614, 0.0
        %v6718 = vmax.f32 %v6655, 0.0
        %v6719 = vmax.f32 %v6657, 0.0
        %v6720 = vmax.f32 %v6698, 0.0
        %v6721 = vmax.f32 %v6700, 0.0
        %v6722 = vmax.f32 %v6401, 0.0
        %v6723 = vmax.f32 %v6403, 0.0
        %v6724 = vmax.f32 %v6444, 0.0
        %v6725 = vmax.f32 %v6446, 0.0
        %v6726 = vmax.f32 %v6487, 0.0
        %v6727 = vmax.f32 %v6489, 0.0
        %v6728 = vmax.f32 %v6530, 0.0
        %v6729 = vmax.f32 %v6532, 0.0
        %v6730 = vmax.f32 %v6573, 0.0
        %v6731 = vmax.f32 %v6575, 0.0
        %v6732 = vmax.f32 %v6616, 0.0
        %v6733 = vmax.f32 %v6618, 0.0
        %v6734 = vmax.f32 %v6659, 0.0
        %v6735 = vmax.f32 %v6661, 0.0
        %v6736 = vmax.f32 %v6702, 0.0
        %v6737 = vmax.f32 %v6704, 0.0
        %v6738 = vpack.c.bf16 %v6722, %v6706
        %v6739 = vpack.c.bf16 %v6723, %v6707
        %v6740 = vpack.c.bf16 %v6724, %v6708
        %v6741 = vpack.c.bf16 %v6725, %v6709
        %v6742 = vpack.c.bf16 %v6726, %v6710
        %v6743 = vpack.c.bf16 %v6727, %v6711
        %v6744 = vpack.c.bf16 %v6728, %v6712
        %v6745 = vpack.c.bf16 %v6729, %v6713
        %v6746 = vpack.c.bf16 %v6730, %v6714
        %v6747 = vpack.c.bf16 %v6731, %v6715
        %v6748 = vpack.c.bf16 %v6732, %v6716
        %v6749 = vpack.c.bf16 %v6733, %v6717
        %v6750 = vpack.c.bf16 %v6734, %v6718
        %v6751 = vpack.c.bf16 %v6735, %v6719
        %v6752 = vpack.c.bf16 %v6736, %v6720
        %v6753 = vpack.c.bf16 %v6737, %v6721
        %s6754 = scalar_lea.vmem %s7, 1024
        %v6755 = vld [vmem:[%s6754] sm:$0xf]
        %v6756 = vld [vmem:[%s6754 + $0x4] sm:$0xf]
        %v6757 = vld [vmem:[%s6754 + $0x8] sm:$0xf]
        %v6758 = vld [vmem:[%s6754 + $0xc] sm:$0xf]
        %v6759 = vld [vmem:[%s6754 + $0x10] sm:$0xf]
        %v6760 = vld [vmem:[%s6754 + $0x14] sm:$0xf]
        %v6761 = vld [vmem:[%s6754 + $0x18] sm:$0xf]
        %v6762 = vld [vmem:[%s6754 + $0x1c] sm:$0xf]
        %v6763 = vld [vmem:[%s6754 + $0x20] sm:$0xf]
        %v6764 = vld [vmem:[%s6754 + $0x24] sm:$0xf]
        %v6765 = vld [vmem:[%s6754 + $0x28] sm:$0xf]
        %v6766 = vld [vmem:[%s6754 + $0x2c] sm:$0xf]
        %v6767 = vld [vmem:[%s6754 + $0x30] sm:$0xf]
        %v6768 = vld [vmem:[%s6754 + $0x34] sm:$0xf]
        %v6769 = vld [vmem:[%s6754 + $0x38] sm:$0xf]
        %v6770 = vld [vmem:[%s6754 + $0x3c] sm:$0xf]
        %v6771 = vld [vmem:[%s6754 + $0x40] sm:$0xf]
        %v6772 = vld [vmem:[%s6754 + $0x44] sm:$0xf]
        %v6773 = vld [vmem:[%s6754 + $0x48] sm:$0xf]
        %v6774 = vld [vmem:[%s6754 + $0x4c] sm:$0xf]
        %v6775 = vld [vmem:[%s6754 + $0x50] sm:$0xf]
        %v6776 = vld [vmem:[%s6754 + $0x54] sm:$0xf]
        %v6777 = vld [vmem:[%s6754 + $0x58] sm:$0xf]
        %v6778 = vld [vmem:[%s6754 + $0x5c] sm:$0xf]
        %v6779 = vld [vmem:[%s6754 + $0x60] sm:$0xf]
        %v6780 = vld [vmem:[%s6754 + $0x64] sm:$0xf]
        %v6781 = vld [vmem:[%s6754 + $0x68] sm:$0xf]
        %v6782 = vld [vmem:[%s6754 + $0x6c] sm:$0xf]
        %v6783 = vld [vmem:[%s6754 + $0x70] sm:$0xf]
        %v6784 = vld [vmem:[%s6754 + $0x74] sm:$0xf]
        %v6785 = vld [vmem:[%s6754 + $0x78] sm:$0xf]
        %v6786 = vld [vmem:[%s6754 + $0x7c] sm:$0xf]
        %v6787 = vld [vmem:[%s6754 + $0x80] sm:$0xf]
        %v6788 = vld [vmem:[%s6754 + $0x84] sm:$0xf]
        %v6789 = vld [vmem:[%s6754 + $0x88] sm:$0xf]
        %v6790 = vld [vmem:[%s6754 + $0x8c] sm:$0xf]
        %v6791 = vld [vmem:[%s6754 + $0x90] sm:$0xf]
        %v6792 = vld [vmem:[%s6754 + $0x94] sm:$0xf]
        %v6793 = vld [vmem:[%s6754 + $0x98] sm:$0xf]
        %v6794 = vld [vmem:[%s6754 + $0x9c] sm:$0xf]
        %v6795 = vld [vmem:[%s6754 + $0xa0] sm:$0xf]
        %v6796 = vld [vmem:[%s6754 + $0xa4] sm:$0xf]
        %v6797 = vld [vmem:[%s6754 + $0xa8] sm:$0xf]
        %v6798 = vld [vmem:[%s6754 + $0xac] sm:$0xf]
        %v6799 = vld [vmem:[%s6754 + $0xb0] sm:$0xf]
        %v6800 = vld [vmem:[%s6754 + $0xb4] sm:$0xf]
        %v6801 = vld [vmem:[%s6754 + $0xb8] sm:$0xf]
        %v6802 = vld [vmem:[%s6754 + $0xbc] sm:$0xf]
        %v6803 = vld [vmem:[%s6754 + $0xc0] sm:$0xf]
        %v6804 = vld [vmem:[%s6754 + $0xc4] sm:$0xf]
        %v6805 = vld [vmem:[%s6754 + $0xc8] sm:$0xf]
        %v6806 = vld [vmem:[%s6754 + $0xcc] sm:$0xf]
        %v6807 = vld [vmem:[%s6754 + $0xd0] sm:$0xf]
        %v6808 = vld [vmem:[%s6754 + $0xd4] sm:$0xf]
        %v6809 = vld [vmem:[%s6754 + $0xd8] sm:$0xf]
        %v6810 = vld [vmem:[%s6754 + $0xdc] sm:$0xf]
        %v6811 = vld [vmem:[%s6754 + $0xe0] sm:$0xf]
        %v6812 = vld [vmem:[%s6754 + $0xe4] sm:$0xf]
        %v6813 = vld [vmem:[%s6754 + $0xe8] sm:$0xf]
        %v6814 = vld [vmem:[%s6754 + $0xec] sm:$0xf]
        %v6815 = vld [vmem:[%s6754 + $0xf0] sm:$0xf]
        %v6816 = vld [vmem:[%s6754 + $0xf4] sm:$0xf]
        %v6817 = vld [vmem:[%s6754 + $0xf8] sm:$0xf]
        %v6818 = vld [vmem:[%s6754 + $0xfc] sm:$0xf]
        %v6819 = vld [vmem:[%s6754 + $0x100] sm:$0xf]
        %v6820 = vld [vmem:[%s6754 + $0x104] sm:$0xf]
        %v6821 = vld [vmem:[%s6754 + $0x108] sm:$0xf]
        %v6822 = vld [vmem:[%s6754 + $0x10c] sm:$0xf]
        %v6823 = vld [vmem:[%s6754 + $0x110] sm:$0xf]
        %v6824 = vld [vmem:[%s6754 + $0x114] sm:$0xf]
        %v6825 = vld [vmem:[%s6754 + $0x118] sm:$0xf]
        %v6826 = vld [vmem:[%s6754 + $0x11c] sm:$0xf]
        %v6827 = vld [vmem:[%s6754 + $0x120] sm:$0xf]
        %v6828 = vld [vmem:[%s6754 + $0x124] sm:$0xf]
        %v6829 = vld [vmem:[%s6754 + $0x128] sm:$0xf]
        %v6830 = vld [vmem:[%s6754 + $0x12c] sm:$0xf]
        %v6831 = vld [vmem:[%s6754 + $0x130] sm:$0xf]
        %v6832 = vld [vmem:[%s6754 + $0x134] sm:$0xf]
        %v6833 = vld [vmem:[%s6754 + $0x138] sm:$0xf]
        %v6834 = vld [vmem:[%s6754 + $0x13c] sm:$0xf]
        %v6835 = vld [vmem:[%s6754 + $0x140] sm:$0xf]
        %v6836 = vld [vmem:[%s6754 + $0x144] sm:$0xf]
        %v6837 = vld [vmem:[%s6754 + $0x148] sm:$0xf]
        %v6838 = vld [vmem:[%s6754 + $0x14c] sm:$0xf]
        %v6839 = vld [vmem:[%s6754 + $0x150] sm:$0xf]
        %v6840 = vld [vmem:[%s6754 + $0x154] sm:$0xf]
        %v6841 = vld [vmem:[%s6754 + $0x158] sm:$0xf]
        %v6842 = vld [vmem:[%s6754 + $0x15c] sm:$0xf]
        %v6843 = vld [vmem:[%s6754 + $0x160] sm:$0xf]
        %v6844 = vld [vmem:[%s6754 + $0x164] sm:$0xf]
        %v6845 = vld [vmem:[%s6754 + $0x168] sm:$0xf]
        %v6846 = vld [vmem:[%s6754 + $0x16c] sm:$0xf]
        %v6847 = vld [vmem:[%s6754 + $0x170] sm:$0xf]
        %v6848 = vld [vmem:[%s6754 + $0x174] sm:$0xf]
        %v6849 = vld [vmem:[%s6754 + $0x178] sm:$0xf]
        %v6850 = vld [vmem:[%s6754 + $0x17c] sm:$0xf]
        %v6851 = vld [vmem:[%s6754 + $0x180] sm:$0xf]
        %v6852 = vld [vmem:[%s6754 + $0x184] sm:$0xf]
        %v6853 = vld [vmem:[%s6754 + $0x188] sm:$0xf]
        %v6854 = vld [vmem:[%s6754 + $0x18c] sm:$0xf]
        %v6855 = vld [vmem:[%s6754 + $0x190] sm:$0xf]
        %v6856 = vld [vmem:[%s6754 + $0x194] sm:$0xf]
        %v6857 = vld [vmem:[%s6754 + $0x198] sm:$0xf]
        %v6858 = vld [vmem:[%s6754 + $0x19c] sm:$0xf]
        %v6859 = vld [vmem:[%s6754 + $0x1a0] sm:$0xf]
        %v6860 = vld [vmem:[%s6754 + $0x1a4] sm:$0xf]
        %v6861 = vld [vmem:[%s6754 + $0x1a8] sm:$0xf]
        %v6862 = vld [vmem:[%s6754 + $0x1ac] sm:$0xf]
        %v6863 = vld [vmem:[%s6754 + $0x1b0] sm:$0xf]
        %v6864 = vld [vmem:[%s6754 + $0x1b4] sm:$0xf]
        %v6865 = vld [vmem:[%s6754 + $0x1b8] sm:$0xf]
        %v6866 = vld [vmem:[%s6754 + $0x1bc] sm:$0xf]
        %v6867 = vld [vmem:[%s6754 + $0x1c0] sm:$0xf]
        %v6868 = vld [vmem:[%s6754 + $0x1c4] sm:$0xf]
        %v6869 = vld [vmem:[%s6754 + $0x1c8] sm:$0xf]
        %v6870 = vld [vmem:[%s6754 + $0x1cc] sm:$0xf]
        %v6871 = vld [vmem:[%s6754 + $0x1d0] sm:$0xf]
        %v6872 = vld [vmem:[%s6754 + $0x1d4] sm:$0xf]
        %v6873 = vld [vmem:[%s6754 + $0x1d8] sm:$0xf]
        %v6874 = vld [vmem:[%s6754 + $0x1dc] sm:$0xf]
        %v6875 = vld [vmem:[%s6754 + $0x1e0] sm:$0xf]
        %v6876 = vld [vmem:[%s6754 + $0x1e4] sm:$0xf]
        %v6877 = vld [vmem:[%s6754 + $0x1e8] sm:$0xf]
        %v6878 = vld [vmem:[%s6754 + $0x1ec] sm:$0xf]
        %v6879 = vld [vmem:[%s6754 + $0x1f0] sm:$0xf]
        %v6880 = vld [vmem:[%s6754 + $0x1f4] sm:$0xf]
        %v6881 = vld [vmem:[%s6754 + $0x1f8] sm:$0xf]
        %v6882 = vld [vmem:[%s6754 + $0x1fc] sm:$0xf]
        %v6883 = vld [vmem:[%s6754 + $0x200] sm:$0xf]
        %v6884 = vld [vmem:[%s6754 + $0x204] sm:$0xf]
        %v6885 = vld [vmem:[%s6754 + $0x208] sm:$0xf]
        %v6886 = vld [vmem:[%s6754 + $0x20c] sm:$0xf]
        %v6887 = vld [vmem:[%s6754 + $0x210] sm:$0xf]
        %v6888 = vld [vmem:[%s6754 + $0x214] sm:$0xf]
        %v6889 = vld [vmem:[%s6754 + $0x218] sm:$0xf]
        %v6890 = vld [vmem:[%s6754 + $0x21c] sm:$0xf]
        %v6891 = vld [vmem:[%s6754 + $0x220] sm:$0xf]
        %v6892 = vld [vmem:[%s6754 + $0x224] sm:$0xf]
        %v6893 = vld [vmem:[%s6754 + $0x228] sm:$0xf]
        %v6894 = vld [vmem:[%s6754 + $0x22c] sm:$0xf]
        %v6895 = vld [vmem:[%s6754 + $0x230] sm:$0xf]
        %v6896 = vld [vmem:[%s6754 + $0x234] sm:$0xf]
        %v6897 = vld [vmem:[%s6754 + $0x238] sm:$0xf]
        %v6898 = vld [vmem:[%s6754 + $0x23c] sm:$0xf]
        %v6899 = vld [vmem:[%s6754 + $0x240] sm:$0xf]
        %v6900 = vld [vmem:[%s6754 + $0x244] sm:$0xf]
        %v6901 = vld [vmem:[%s6754 + $0x248] sm:$0xf]
        %v6902 = vld [vmem:[%s6754 + $0x24c] sm:$0xf]
        %v6903 = vld [vmem:[%s6754 + $0x250] sm:$0xf]
        %v6904 = vld [vmem:[%s6754 + $0x254] sm:$0xf]
        %v6905 = vld [vmem:[%s6754 + $0x258] sm:$0xf]
        %v6906 = vld [vmem:[%s6754 + $0x25c] sm:$0xf]
        %v6907 = vld [vmem:[%s6754 + $0x260] sm:$0xf]
        %v6908 = vld [vmem:[%s6754 + $0x264] sm:$0xf]
        %v6909 = vld [vmem:[%s6754 + $0x268] sm:$0xf]
        %v6910 = vld [vmem:[%s6754 + $0x26c] sm:$0xf]
        %v6911 = vld [vmem:[%s6754 + $0x270] sm:$0xf]
        %v6912 = vld [vmem:[%s6754 + $0x274] sm:$0xf]
        %v6913 = vld [vmem:[%s6754 + $0x278] sm:$0xf]
        %v6914 = vld [vmem:[%s6754 + $0x27c] sm:$0xf]
        %v6915 = vld [vmem:[%s6754 + $0x280] sm:$0xf]
        %v6916 = vld [vmem:[%s6754 + $0x284] sm:$0xf]
        %v6917 = vld [vmem:[%s6754 + $0x288] sm:$0xf]
        %v6918 = vld [vmem:[%s6754 + $0x28c] sm:$0xf]
        %v6919 = vld [vmem:[%s6754 + $0x290] sm:$0xf]
        %v6920 = vld [vmem:[%s6754 + $0x294] sm:$0xf]
        %v6921 = vld [vmem:[%s6754 + $0x298] sm:$0xf]
        %v6922 = vld [vmem:[%s6754 + $0x29c] sm:$0xf]
        %v6923 = vld [vmem:[%s6754 + $0x2a0] sm:$0xf]
        %v6924 = vld [vmem:[%s6754 + $0x2a4] sm:$0xf]
        %v6925 = vld [vmem:[%s6754 + $0x2a8] sm:$0xf]
        %v6926 = vld [vmem:[%s6754 + $0x2ac] sm:$0xf]
        %v6927 = vld [vmem:[%s6754 + $0x2b0] sm:$0xf]
        %v6928 = vld [vmem:[%s6754 + $0x2b4] sm:$0xf]
        %v6929 = vld [vmem:[%s6754 + $0x2b8] sm:$0xf]
        %v6930 = vld [vmem:[%s6754 + $0x2bc] sm:$0xf]
        %v6931 = vld [vmem:[%s6754 + $0x2c0] sm:$0xf]
        %v6932 = vld [vmem:[%s6754 + $0x2c4] sm:$0xf]
        %v6933 = vld [vmem:[%s6754 + $0x2c8] sm:$0xf]
        %v6934 = vld [vmem:[%s6754 + $0x2cc] sm:$0xf]
        %v6935 = vld [vmem:[%s6754 + $0x2d0] sm:$0xf]
        %v6936 = vld [vmem:[%s6754 + $0x2d4] sm:$0xf]
        %v6937 = vld [vmem:[%s6754 + $0x2d8] sm:$0xf]
        %v6938 = vld [vmem:[%s6754 + $0x2dc] sm:$0xf]
        %v6939 = vld [vmem:[%s6754 + $0x2e0] sm:$0xf]
        %v6940 = vld [vmem:[%s6754 + $0x2e4] sm:$0xf]
        %v6941 = vld [vmem:[%s6754 + $0x2e8] sm:$0xf]
        %v6942 = vld [vmem:[%s6754 + $0x2ec] sm:$0xf]
        %v6943 = vld [vmem:[%s6754 + $0x2f0] sm:$0xf]
        %v6944 = vld [vmem:[%s6754 + $0x2f4] sm:$0xf]
        %v6945 = vld [vmem:[%s6754 + $0x2f8] sm:$0xf]
        %v6946 = vld [vmem:[%s6754 + $0x2fc] sm:$0xf]
        %v6947 = vld [vmem:[%s6754 + $0x300] sm:$0xf]
        %v6948 = vld [vmem:[%s6754 + $0x304] sm:$0xf]
        %v6949 = vld [vmem:[%s6754 + $0x308] sm:$0xf]
        %v6950 = vld [vmem:[%s6754 + $0x30c] sm:$0xf]
        %v6951 = vld [vmem:[%s6754 + $0x310] sm:$0xf]
        %v6952 = vld [vmem:[%s6754 + $0x314] sm:$0xf]
        %v6953 = vld [vmem:[%s6754 + $0x318] sm:$0xf]
        %v6954 = vld [vmem:[%s6754 + $0x31c] sm:$0xf]
        %v6955 = vld [vmem:[%s6754 + $0x320] sm:$0xf]
        %v6956 = vld [vmem:[%s6754 + $0x324] sm:$0xf]
        %v6957 = vld [vmem:[%s6754 + $0x328] sm:$0xf]
        %v6958 = vld [vmem:[%s6754 + $0x32c] sm:$0xf]
        %v6959 = vld [vmem:[%s6754 + $0x330] sm:$0xf]
        %v6960 = vld [vmem:[%s6754 + $0x334] sm:$0xf]
        %v6961 = vld [vmem:[%s6754 + $0x338] sm:$0xf]
        %v6962 = vld [vmem:[%s6754 + $0x33c] sm:$0xf]
        %v6963 = vld [vmem:[%s6754 + $0x340] sm:$0xf]
        %v6964 = vld [vmem:[%s6754 + $0x344] sm:$0xf]
        %v6965 = vld [vmem:[%s6754 + $0x348] sm:$0xf]
        %v6966 = vld [vmem:[%s6754 + $0x34c] sm:$0xf]
        %v6967 = vld [vmem:[%s6754 + $0x350] sm:$0xf]
        %v6968 = vld [vmem:[%s6754 + $0x354] sm:$0xf]
        %v6969 = vld [vmem:[%s6754 + $0x358] sm:$0xf]
        %v6970 = vld [vmem:[%s6754 + $0x35c] sm:$0xf]
        %v6971 = vld [vmem:[%s6754 + $0x360] sm:$0xf]
        %v6972 = vld [vmem:[%s6754 + $0x364] sm:$0xf]
        %v6973 = vld [vmem:[%s6754 + $0x368] sm:$0xf]
        %v6974 = vld [vmem:[%s6754 + $0x36c] sm:$0xf]
        %v6975 = vld [vmem:[%s6754 + $0x370] sm:$0xf]
        %v6976 = vld [vmem:[%s6754 + $0x374] sm:$0xf]
        %v6977 = vld [vmem:[%s6754 + $0x378] sm:$0xf]
        %v6978 = vld [vmem:[%s6754 + $0x37c] sm:$0xf]
        %v6979 = vld [vmem:[%s6754 + $0x380] sm:$0xf]
        %v6980 = vld [vmem:[%s6754 + $0x384] sm:$0xf]
        %v6981 = vld [vmem:[%s6754 + $0x388] sm:$0xf]
        %v6982 = vld [vmem:[%s6754 + $0x38c] sm:$0xf]
        %v6983 = vld [vmem:[%s6754 + $0x390] sm:$0xf]
        %v6984 = vld [vmem:[%s6754 + $0x394] sm:$0xf]
        %v6985 = vld [vmem:[%s6754 + $0x398] sm:$0xf]
        %v6986 = vld [vmem:[%s6754 + $0x39c] sm:$0xf]
        %v6987 = vld [vmem:[%s6754 + $0x3a0] sm:$0xf]
        %v6988 = vld [vmem:[%s6754 + $0x3a4] sm:$0xf]
        %v6989 = vld [vmem:[%s6754 + $0x3a8] sm:$0xf]
        %v6990 = vld [vmem:[%s6754 + $0x3ac] sm:$0xf]
        %v6991 = vld [vmem:[%s6754 + $0x3b0] sm:$0xf]
        %v6992 = vld [vmem:[%s6754 + $0x3b4] sm:$0xf]
        %v6993 = vld [vmem:[%s6754 + $0x3b8] sm:$0xf]
        %v6994 = vld [vmem:[%s6754 + $0x3bc] sm:$0xf]
        %v6995 = vld [vmem:[%s6754 + $0x3c0] sm:$0xf]
        %v6996 = vld [vmem:[%s6754 + $0x3c4] sm:$0xf]
        %v6997 = vld [vmem:[%s6754 + $0x3c8] sm:$0xf]
        %v6998 = vld [vmem:[%s6754 + $0x3cc] sm:$0xf]
        %v6999 = vld [vmem:[%s6754 + $0x3d0] sm:$0xf]
        %v7000 = vld [vmem:[%s6754 + $0x3d4] sm:$0xf]
        %v7001 = vld [vmem:[%s6754 + $0x3d8] sm:$0xf]
        %v7002 = vld [vmem:[%s6754 + $0x3dc] sm:$0xf]
        %v7003 = vld [vmem:[%s6754 + $0x3e0] sm:$0xf]
        %v7004 = vld [vmem:[%s6754 + $0x3e4] sm:$0xf]
        %v7005 = vld [vmem:[%s6754 + $0x3e8] sm:$0xf]
        %v7006 = vld [vmem:[%s6754 + $0x3ec] sm:$0xf]
        %v7007 = vld [vmem:[%s6754 + $0x3f0] sm:$0xf]
        %v7008 = vld [vmem:[%s6754 + $0x3f4] sm:$0xf]
        %v7009 = vld [vmem:[%s6754 + $0x3f8] sm:$0xf]
        %v7010 = vld [vmem:[%s6754 + $0x3fc] sm:$0xf]
        %s7011 = scalar_lea.vmem %s8, 1
        %v7012 = vld [vmem:[%s7011] sm:$0x1]
        %v7014 = vlaneseq
        %v7015 = vshrl.u32 %v7014, 7
        %v7016 = vsub.s32 0, %v7015
        %v7017 = vrot.slane %v7012, %v7016
        %v7275 = vunpack.c.l.b16 %v6755
        %v7276 = vunpack.c.l.b16 %v6756
        %v7277 = vunpack.c.l.b16 %v6757
        %v7278 = vunpack.c.l.b16 %v6758
        %v7279 = vunpack.c.l.b16 %v6759
        %v7280 = vunpack.c.l.b16 %v6760
        %v7281 = vunpack.c.l.b16 %v6761
        %v7282 = vunpack.c.l.b16 %v6762
        %v7283 = vunpack.c.l.b16 %v6763
        %v7284 = vunpack.c.l.b16 %v6764
        %v7285 = vunpack.c.l.b16 %v6765
        %v7286 = vunpack.c.l.b16 %v6766
        %v7287 = vunpack.c.l.b16 %v6767
        %v7288 = vunpack.c.l.b16 %v6768
        %v7289 = vunpack.c.l.b16 %v6769
        %v7290 = vunpack.c.l.b16 %v6770
        %v7291 = vunpack.c.l.b16 %v6771
        %v7292 = vunpack.c.l.b16 %v6772
        %v7293 = vunpack.c.l.b16 %v6773
        %v7294 = vunpack.c.l.b16 %v6774
        %v7295 = vunpack.c.l.b16 %v6775
        %v7296 = vunpack.c.l.b16 %v6776
        %v7297 = vunpack.c.l.b16 %v6777
        %v7298 = vunpack.c.l.b16 %v6778
        %v7299 = vunpack.c.l.b16 %v6779
        %v7300 = vunpack.c.l.b16 %v6780
        %v7301 = vunpack.c.l.b16 %v6781
        %v7302 = vunpack.c.l.b16 %v6782
        %v7303 = vunpack.c.l.b16 %v6783
        %v7304 = vunpack.c.l.b16 %v6784
        %v7305 = vunpack.c.l.b16 %v6785
        %v7306 = vunpack.c.l.b16 %v6786
        %v7307 = vunpack.c.l.b16 %v6787
        %v7308 = vunpack.c.l.b16 %v6788
        %v7309 = vunpack.c.l.b16 %v6789
        %v7310 = vunpack.c.l.b16 %v6790
        %v7311 = vunpack.c.l.b16 %v6791
        %v7312 = vunpack.c.l.b16 %v6792
        %v7313 = vunpack.c.l.b16 %v6793
        %v7314 = vunpack.c.l.b16 %v6794
        %v7315 = vunpack.c.l.b16 %v6795
        %v7316 = vunpack.c.l.b16 %v6796
        %v7317 = vunpack.c.l.b16 %v6797
        %v7318 = vunpack.c.l.b16 %v6798
        %v7319 = vunpack.c.l.b16 %v6799
        %v7320 = vunpack.c.l.b16 %v6800
        %v7321 = vunpack.c.l.b16 %v6801
        %v7322 = vunpack.c.l.b16 %v6802
        %v7323 = vunpack.c.l.b16 %v6803
        %v7324 = vunpack.c.l.b16 %v6804
        %v7325 = vunpack.c.l.b16 %v6805
        %v7326 = vunpack.c.l.b16 %v6806
        %v7327 = vunpack.c.l.b16 %v6807
        %v7328 = vunpack.c.l.b16 %v6808
        %v7329 = vunpack.c.l.b16 %v6809
        %v7330 = vunpack.c.l.b16 %v6810
        %v7331 = vunpack.c.l.b16 %v6811
        %v7332 = vunpack.c.l.b16 %v6812
        %v7333 = vunpack.c.l.b16 %v6813
        %v7334 = vunpack.c.l.b16 %v6814
        %v7335 = vunpack.c.l.b16 %v6815
        %v7336 = vunpack.c.l.b16 %v6816
        %v7337 = vunpack.c.l.b16 %v6817
        %v7338 = vunpack.c.l.b16 %v6818
        %v7339 = vunpack.c.l.b16 %v6819
        %v7340 = vunpack.c.l.b16 %v6820
        %v7341 = vunpack.c.l.b16 %v6821
        %v7342 = vunpack.c.l.b16 %v6822
        %v7343 = vunpack.c.l.b16 %v6823
        %v7344 = vunpack.c.l.b16 %v6824
        %v7345 = vunpack.c.l.b16 %v6825
        %v7346 = vunpack.c.l.b16 %v6826
        %v7347 = vunpack.c.l.b16 %v6827
        %v7348 = vunpack.c.l.b16 %v6828
        %v7349 = vunpack.c.l.b16 %v6829
        %v7350 = vunpack.c.l.b16 %v6830
        %v7351 = vunpack.c.l.b16 %v6831
        %v7352 = vunpack.c.l.b16 %v6832
        %v7353 = vunpack.c.l.b16 %v6833
        %v7354 = vunpack.c.l.b16 %v6834
        %v7355 = vunpack.c.l.b16 %v6835
        %v7356 = vunpack.c.l.b16 %v6836
        %v7357 = vunpack.c.l.b16 %v6837
        %v7358 = vunpack.c.l.b16 %v6838
        %v7359 = vunpack.c.l.b16 %v6839
        %v7360 = vunpack.c.l.b16 %v6840
        %v7361 = vunpack.c.l.b16 %v6841
        %v7362 = vunpack.c.l.b16 %v6842
        %v7363 = vunpack.c.l.b16 %v6843
        %v7364 = vunpack.c.l.b16 %v6844
        %v7365 = vunpack.c.l.b16 %v6845
        %v7366 = vunpack.c.l.b16 %v6846
        %v7367 = vunpack.c.l.b16 %v6847
        %v7368 = vunpack.c.l.b16 %v6848
        %v7369 = vunpack.c.l.b16 %v6849
        %v7370 = vunpack.c.l.b16 %v6850
        %v7371 = vunpack.c.l.b16 %v6851
        %v7372 = vunpack.c.l.b16 %v6852
        %v7373 = vunpack.c.l.b16 %v6853
        %v7374 = vunpack.c.l.b16 %v6854
        %v7375 = vunpack.c.l.b16 %v6855
        %v7376 = vunpack.c.l.b16 %v6856
        %v7377 = vunpack.c.l.b16 %v6857
        %v7378 = vunpack.c.l.b16 %v6858
        %v7379 = vunpack.c.l.b16 %v6859
        %v7380 = vunpack.c.l.b16 %v6860
        %v7381 = vunpack.c.l.b16 %v6861
        %v7382 = vunpack.c.l.b16 %v6862
        %v7383 = vunpack.c.l.b16 %v6863
        %v7384 = vunpack.c.l.b16 %v6864
        %v7385 = vunpack.c.l.b16 %v6865
        %v7386 = vunpack.c.l.b16 %v6866
        %v7387 = vunpack.c.l.b16 %v6867
        %v7388 = vunpack.c.l.b16 %v6868
        %v7389 = vunpack.c.l.b16 %v6869
        %v7390 = vunpack.c.l.b16 %v6870
        %v7391 = vunpack.c.l.b16 %v6871
        %v7392 = vunpack.c.l.b16 %v6872
        %v7393 = vunpack.c.l.b16 %v6873
        %v7394 = vunpack.c.l.b16 %v6874
        %v7395 = vunpack.c.l.b16 %v6875
        %v7396 = vunpack.c.l.b16 %v6876
        %v7397 = vunpack.c.l.b16 %v6877
        %v7398 = vunpack.c.l.b16 %v6878
        %v7399 = vunpack.c.l.b16 %v6879
        %v7400 = vunpack.c.l.b16 %v6880
        %v7401 = vunpack.c.l.b16 %v6881
        %v7402 = vunpack.c.l.b16 %v6882
        %v7403 = vunpack.c.l.b16 %v6883
        %v7404 = vunpack.c.l.b16 %v6884
        %v7405 = vunpack.c.l.b16 %v6885
        %v7406 = vunpack.c.l.b16 %v6886
        %v7407 = vunpack.c.l.b16 %v6887
        %v7408 = vunpack.c.l.b16 %v6888
        %v7409 = vunpack.c.l.b16 %v6889
        %v7410 = vunpack.c.l.b16 %v6890
        %v7411 = vunpack.c.l.b16 %v6891
        %v7412 = vunpack.c.l.b16 %v6892
        %v7413 = vunpack.c.l.b16 %v6893
        %v7414 = vunpack.c.l.b16 %v6894
        %v7415 = vunpack.c.l.b16 %v6895
        %v7416 = vunpack.c.l.b16 %v6896
        %v7417 = vunpack.c.l.b16 %v6897
        %v7418 = vunpack.c.l.b16 %v6898
        %v7419 = vunpack.c.l.b16 %v6899
        %v7420 = vunpack.c.l.b16 %v6900
        %v7421 = vunpack.c.l.b16 %v6901
        %v7422 = vunpack.c.l.b16 %v6902
        %v7423 = vunpack.c.l.b16 %v6903
        %v7424 = vunpack.c.l.b16 %v6904
        %v7425 = vunpack.c.l.b16 %v6905
        %v7426 = vunpack.c.l.b16 %v6906
        %v7427 = vunpack.c.l.b16 %v6907
        %v7428 = vunpack.c.l.b16 %v6908
        %v7429 = vunpack.c.l.b16 %v6909
        %v7430 = vunpack.c.l.b16 %v6910
        %v7431 = vunpack.c.l.b16 %v6911
        %v7432 = vunpack.c.l.b16 %v6912
        %v7433 = vunpack.c.l.b16 %v6913
        %v7434 = vunpack.c.l.b16 %v6914
        %v7435 = vunpack.c.l.b16 %v6915
        %v7436 = vunpack.c.l.b16 %v6916
        %v7437 = vunpack.c.l.b16 %v6917
        %v7438 = vunpack.c.l.b16 %v6918
        %v7439 = vunpack.c.l.b16 %v6919
        %v7440 = vunpack.c.l.b16 %v6920
        %v7441 = vunpack.c.l.b16 %v6921
        %v7442 = vunpack.c.l.b16 %v6922
        %v7443 = vunpack.c.l.b16 %v6923
        %v7444 = vunpack.c.l.b16 %v6924
        %v7445 = vunpack.c.l.b16 %v6925
        %v7446 = vunpack.c.l.b16 %v6926
        %v7447 = vunpack.c.l.b16 %v6927
        %v7448 = vunpack.c.l.b16 %v6928
        %v7449 = vunpack.c.l.b16 %v6929
        %v7450 = vunpack.c.l.b16 %v6930
        %v7451 = vunpack.c.l.b16 %v6931
        %v7452 = vunpack.c.l.b16 %v6932
        %v7453 = vunpack.c.l.b16 %v6933
        %v7454 = vunpack.c.l.b16 %v6934
        %v7455 = vunpack.c.l.b16 %v6935
        %v7456 = vunpack.c.l.b16 %v6936
        %v7457 = vunpack.c.l.b16 %v6937
        %v7458 = vunpack.c.l.b16 %v6938
        %v7459 = vunpack.c.l.b16 %v6939
        %v7460 = vunpack.c.l.b16 %v6940
        %v7461 = vunpack.c.l.b16 %v6941
        %v7462 = vunpack.c.l.b16 %v6942
        %v7463 = vunpack.c.l.b16 %v6943
        %v7464 = vunpack.c.l.b16 %v6944
        %v7465 = vunpack.c.l.b16 %v6945
        %v7466 = vunpack.c.l.b16 %v6946
        %v7467 = vunpack.c.l.b16 %v6947
        %v7468 = vunpack.c.l.b16 %v6948
        %v7469 = vunpack.c.l.b16 %v6949
        %v7470 = vunpack.c.l.b16 %v6950
        %v7471 = vunpack.c.l.b16 %v6951
        %v7472 = vunpack.c.l.b16 %v6952
        %v7473 = vunpack.c.l.b16 %v6953
        %v7474 = vunpack.c.l.b16 %v6954
        %v7475 = vunpack.c.l.b16 %v6955
        %v7476 = vunpack.c.l.b16 %v6956
        %v7477 = vunpack.c.l.b16 %v6957
        %v7478 = vunpack.c.l.b16 %v6958
        %v7479 = vunpack.c.l.b16 %v6959
        %v7480 = vunpack.c.l.b16 %v6960
        %v7481 = vunpack.c.l.b16 %v6961
        %v7482 = vunpack.c.l.b16 %v6962
        %v7483 = vunpack.c.l.b16 %v6963
        %v7484 = vunpack.c.l.b16 %v6964
        %v7485 = vunpack.c.l.b16 %v6965
        %v7486 = vunpack.c.l.b16 %v6966
        %v7487 = vunpack.c.l.b16 %v6967
        %v7488 = vunpack.c.l.b16 %v6968
        %v7489 = vunpack.c.l.b16 %v6969
        %v7490 = vunpack.c.l.b16 %v6970
        %v7491 = vunpack.c.l.b16 %v6971
        %v7492 = vunpack.c.l.b16 %v6972
        %v7493 = vunpack.c.l.b16 %v6973
        %v7494 = vunpack.c.l.b16 %v6974
        %v7495 = vunpack.c.l.b16 %v6975
        %v7496 = vunpack.c.l.b16 %v6976
        %v7497 = vunpack.c.l.b16 %v6977
        %v7498 = vunpack.c.l.b16 %v6978
        %v7499 = vunpack.c.l.b16 %v6979
        %v7500 = vunpack.c.l.b16 %v6980
        %v7501 = vunpack.c.l.b16 %v6981
        %v7502 = vunpack.c.l.b16 %v6982
        %v7503 = vunpack.c.l.b16 %v6983
        %v7504 = vunpack.c.l.b16 %v6984
        %v7505 = vunpack.c.l.b16 %v6985
        %v7506 = vunpack.c.l.b16 %v6986
        %v7507 = vunpack.c.l.b16 %v6987
        %v7508 = vunpack.c.l.b16 %v6988
        %v7509 = vunpack.c.l.b16 %v6989
        %v7510 = vunpack.c.l.b16 %v6990
        %v7511 = vunpack.c.l.b16 %v6991
        %v7512 = vunpack.c.l.b16 %v6992
        %v7513 = vunpack.c.l.b16 %v6993
        %v7514 = vunpack.c.l.b16 %v6994
        %v7515 = vunpack.c.l.b16 %v6995
        %v7516 = vunpack.c.l.b16 %v6996
        %v7517 = vunpack.c.l.b16 %v6997
        %v7518 = vunpack.c.l.b16 %v6998
        %v7519 = vunpack.c.l.b16 %v6999
        %v7520 = vunpack.c.l.b16 %v7000
        %v7521 = vunpack.c.l.b16 %v7001
        %v7522 = vunpack.c.l.b16 %v7002
        %v7523 = vunpack.c.l.b16 %v7003
        %v7524 = vunpack.c.l.b16 %v7004
        %v7525 = vunpack.c.l.b16 %v7005
        %v7526 = vunpack.c.l.b16 %v7006
        %v7527 = vunpack.c.l.b16 %v7007
        %v7528 = vunpack.c.l.b16 %v7008
        %v7529 = vunpack.c.l.b16 %v7009
        %v7530 = vunpack.c.l.b16 %v7010
        %v7531 = vpack.c.b16 %v7276, %v7275
        %v7532 = vpack.c.b16 %v7278, %v7277
        %v7533 = vpack.c.b16 %v7280, %v7279
        %v7534 = vpack.c.b16 %v7282, %v7281
        %v7535 = vpack.c.b16 %v7284, %v7283
        %v7536 = vpack.c.b16 %v7286, %v7285
        %v7537 = vpack.c.b16 %v7288, %v7287
        %v7538 = vpack.c.b16 %v7290, %v7289
        %v7539 = vpack.c.b16 %v7292, %v7291
        %v7540 = vpack.c.b16 %v7294, %v7293
        %v7541 = vpack.c.b16 %v7296, %v7295
        %v7542 = vpack.c.b16 %v7298, %v7297
        %v7543 = vpack.c.b16 %v7300, %v7299
        %v7544 = vpack.c.b16 %v7302, %v7301
        %v7545 = vpack.c.b16 %v7304, %v7303
        %v7546 = vpack.c.b16 %v7306, %v7305
        %v7547 = vpack.c.b16 %v7308, %v7307
        %v7548 = vpack.c.b16 %v7310, %v7309
        %v7549 = vpack.c.b16 %v7312, %v7311
        %v7550 = vpack.c.b16 %v7314, %v7313
        %v7551 = vpack.c.b16 %v7316, %v7315
        %v7552 = vpack.c.b16 %v7318, %v7317
        %v7553 = vpack.c.b16 %v7320, %v7319
        %v7554 = vpack.c.b16 %v7322, %v7321
        %v7555 = vpack.c.b16 %v7324, %v7323
        %v7556 = vpack.c.b16 %v7326, %v7325
        %v7557 = vpack.c.b16 %v7328, %v7327
        %v7558 = vpack.c.b16 %v7330, %v7329
        %v7559 = vpack.c.b16 %v7332, %v7331
        %v7560 = vpack.c.b16 %v7334, %v7333
        %v7561 = vpack.c.b16 %v7336, %v7335
        %v7562 = vpack.c.b16 %v7338, %v7337
        %v7563 = vpack.c.b16 %v7340, %v7339
        %v7564 = vpack.c.b16 %v7342, %v7341
        %v7565 = vpack.c.b16 %v7344, %v7343
        %v7566 = vpack.c.b16 %v7346, %v7345
        %v7567 = vpack.c.b16 %v7348, %v7347
        %v7568 = vpack.c.b16 %v7350, %v7349
        %v7569 = vpack.c.b16 %v7352, %v7351
        %v7570 = vpack.c.b16 %v7354, %v7353
        %v7571 = vpack.c.b16 %v7356, %v7355
        %v7572 = vpack.c.b16 %v7358, %v7357
        %v7573 = vpack.c.b16 %v7360, %v7359
        %v7574 = vpack.c.b16 %v7362, %v7361
        %v7575 = vpack.c.b16 %v7364, %v7363
        %v7576 = vpack.c.b16 %v7366, %v7365
        %v7577 = vpack.c.b16 %v7368, %v7367
        %v7578 = vpack.c.b16 %v7370, %v7369
        %v7579 = vpack.c.b16 %v7372, %v7371
        %v7580 = vpack.c.b16 %v7374, %v7373
        %v7581 = vpack.c.b16 %v7376, %v7375
        %v7582 = vpack.c.b16 %v7378, %v7377
        %v7583 = vpack.c.b16 %v7380, %v7379
        %v7584 = vpack.c.b16 %v7382, %v7381
        %v7585 = vpack.c.b16 %v7384, %v7383
        %v7586 = vpack.c.b16 %v7386, %v7385
        %v7587 = vpack.c.b16 %v7388, %v7387
        %v7588 = vpack.c.b16 %v7390, %v7389
        %v7589 = vpack.c.b16 %v7392, %v7391
        %v7590 = vpack.c.b16 %v7394, %v7393
        %v7591 = vpack.c.b16 %v7396, %v7395
        %v7592 = vpack.c.b16 %v7398, %v7397
        %v7593 = vpack.c.b16 %v7400, %v7399
        %v7594 = vpack.c.b16 %v7402, %v7401
        %v7595 = vpack.c.b16 %v7404, %v7403
        %v7596 = vpack.c.b16 %v7406, %v7405
        %v7597 = vpack.c.b16 %v7408, %v7407
        %v7598 = vpack.c.b16 %v7410, %v7409
        %v7599 = vpack.c.b16 %v7412, %v7411
        %v7600 = vpack.c.b16 %v7414, %v7413
        %v7601 = vpack.c.b16 %v7416, %v7415
        %v7602 = vpack.c.b16 %v7418, %v7417
        %v7603 = vpack.c.b16 %v7420, %v7419
        %v7604 = vpack.c.b16 %v7422, %v7421
        %v7605 = vpack.c.b16 %v7424, %v7423
        %v7606 = vpack.c.b16 %v7426, %v7425
        %v7607 = vpack.c.b16 %v7428, %v7427
        %v7608 = vpack.c.b16 %v7430, %v7429
        %v7609 = vpack.c.b16 %v7432, %v7431
        %v7610 = vpack.c.b16 %v7434, %v7433
        %v7611 = vpack.c.b16 %v7436, %v7435
        %v7612 = vpack.c.b16 %v7438, %v7437
        %v7613 = vpack.c.b16 %v7440, %v7439
        %v7614 = vpack.c.b16 %v7442, %v7441
        %v7615 = vpack.c.b16 %v7444, %v7443
        %v7616 = vpack.c.b16 %v7446, %v7445
        %v7617 = vpack.c.b16 %v7448, %v7447
        %v7618 = vpack.c.b16 %v7450, %v7449
        %v7619 = vpack.c.b16 %v7452, %v7451
        %v7620 = vpack.c.b16 %v7454, %v7453
        %v7621 = vpack.c.b16 %v7456, %v7455
        %v7622 = vpack.c.b16 %v7458, %v7457
        %v7623 = vpack.c.b16 %v7460, %v7459
        %v7624 = vpack.c.b16 %v7462, %v7461
        %v7625 = vpack.c.b16 %v7464, %v7463
        %v7626 = vpack.c.b16 %v7466, %v7465
        %v7627 = vpack.c.b16 %v7468, %v7467
        %v7628 = vpack.c.b16 %v7470, %v7469
        %v7629 = vpack.c.b16 %v7472, %v7471
        %v7630 = vpack.c.b16 %v7474, %v7473
        %v7631 = vpack.c.b16 %v7476, %v7475
        %v7632 = vpack.c.b16 %v7478, %v7477
        %v7633 = vpack.c.b16 %v7480, %v7479
        %v7634 = vpack.c.b16 %v7482, %v7481
        %v7635 = vpack.c.b16 %v7484, %v7483
        %v7636 = vpack.c.b16 %v7486, %v7485
        %v7637 = vpack.c.b16 %v7488, %v7487
        %v7638 = vpack.c.b16 %v7490, %v7489
        %v7639 = vpack.c.b16 %v7492, %v7491
        %v7640 = vpack.c.b16 %v7494, %v7493
        %v7641 = vpack.c.b16 %v7496, %v7495
        %v7642 = vpack.c.b16 %v7498, %v7497
        %v7643 = vpack.c.b16 %v7500, %v7499
        %v7644 = vpack.c.b16 %v7502, %v7501
        %v7645 = vpack.c.b16 %v7504, %v7503
        %v7646 = vpack.c.b16 %v7506, %v7505
        %v7647 = vpack.c.b16 %v7508, %v7507
        %v7648 = vpack.c.b16 %v7510, %v7509
        %v7649 = vpack.c.b16 %v7512, %v7511
        %v7650 = vpack.c.b16 %v7514, %v7513
        %v7651 = vpack.c.b16 %v7516, %v7515
        %v7652 = vpack.c.b16 %v7518, %v7517
        %v7653 = vpack.c.b16 %v7520, %v7519
        %v7654 = vpack.c.b16 %v7522, %v7521
        %v7655 = vpack.c.b16 %v7524, %v7523
        %v7656 = vpack.c.b16 %v7526, %v7525
        %v7657 = vpack.c.b16 %v7528, %v7527
        %v7658 = vpack.c.b16 %v7530, %v7529
        %7787 = vmatprep.subr.bf16.mxu0 0
        %7788 = vmatpush1.bf16.msra.mxu0 %v7531
        %7789 = vmatprep.subr.bf16.mxu0 0
        %7790 = vmatpush1.bf16.msra.mxu0 %v7532
        %7791 = vmatprep.subr.bf16.mxu0 0
        %7792 = vmatpush1.bf16.msra.mxu0 %v7533
        %7793 = vmatprep.subr.bf16.mxu0 0
        %7794 = vmatpush1.bf16.msra.mxu0 %v7534
        %7795 = vmatprep.subr.bf16.mxu0 0
        %7796 = vmatpush1.bf16.msra.mxu0 %v7535
        %7797 = vmatprep.subr.bf16.mxu0 0
        %7798 = vmatpush1.bf16.msra.mxu0 %v7536
        %7799 = vmatprep.subr.bf16.mxu0 0
        %7800 = vmatpush1.bf16.msra.mxu0 %v7537
        %7801 = vmatprep.subr.bf16.mxu0 0
        %7802 = vmatpush1.bf16.msra.mxu0 %v7538
        %7803 = vmatprep.subr.bf16.mxu0 0
        %7804 = vmatpush1.bf16.msra.mxu0 %v7539
        %7805 = vmatprep.subr.bf16.mxu0 0
        %7806 = vmatpush1.bf16.msra.mxu0 %v7540
        %7807 = vmatprep.subr.bf16.mxu0 0
        %7808 = vmatpush1.bf16.msra.mxu0 %v7541
        %7809 = vmatprep.subr.bf16.mxu0 0
        %7810 = vmatpush1.bf16.msra.mxu0 %v7542
        %7811 = vmatprep.subr.bf16.mxu0 0
        %7812 = vmatpush1.bf16.msra.mxu0 %v7543
        %7813 = vmatprep.subr.bf16.mxu0 0
        %7814 = vmatpush1.bf16.msra.mxu0 %v7544
        %7815 = vmatprep.subr.bf16.mxu0 0
        %7816 = vmatpush1.bf16.msra.mxu0 %v7545
        %7817 = vmatprep.subr.bf16.mxu0 0
        %7818 = vmatpush1.bf16.msra.mxu0 %v7546
        %7819 = vmatprep.mubr.bf16.mxu0 %v6739
        %7820 = vmatmul.mubr.bf16.gmra.mrb[0].mxu0 %v6738
        %v7821 = vpop.f32.mrb[0].mxu0
        %v7822 = vadd.f32 %v7017, %v7821
        %v7823 = vpop.f32.mrb[0].mxu0
        %v7824 = vpop.f32.mrb[0].mxu0
        %v7825 = vadd.f32 %v7017, %v7824
        %v7826 = vpop.f32.mrb[0].mxu0
        %7827 = vdwg.mxu0
        %7828 = vmatprep.subr.bf16.mxu0 0
        %7829 = vmatpush1.bf16.msra.mxu0 %v7547
        %7830 = vmatprep.subr.bf16.mxu0 0
        %7831 = vmatpush1.bf16.msra.mxu0 %v7548
        %7832 = vmatprep.subr.bf16.mxu0 0
        %7833 = vmatpush1.bf16.msra.mxu0 %v7549
        %7834 = vmatprep.subr.bf16.mxu0 0
        %7835 = vmatpush1.bf16.msra.mxu0 %v7550
        %7836 = vmatprep.subr.bf16.mxu0 0
        %7837 = vmatpush1.bf16.msra.mxu0 %v7551
        %7838 = vmatprep.subr.bf16.mxu0 0
        %7839 = vmatpush1.bf16.msra.mxu0 %v7552
        %7840 = vmatprep.subr.bf16.mxu0 0
        %7841 = vmatpush1.bf16.msra.mxu0 %v7553
        %7842 = vmatprep.subr.bf16.mxu0 0
        %7843 = vmatpush1.bf16.msra.mxu0 %v7554
        %7844 = vmatprep.subr.bf16.mxu0 0
        %7845 = vmatpush1.bf16.msra.mxu0 %v7555
        %7846 = vmatprep.subr.bf16.mxu0 0
        %7847 = vmatpush1.bf16.msra.mxu0 %v7556
        %7848 = vmatprep.subr.bf16.mxu0 0
        %7849 = vmatpush1.bf16.msra.mxu0 %v7557
        %7850 = vmatprep.subr.bf16.mxu0 0
        %7851 = vmatpush1.bf16.msra.mxu0 %v7558
        %7852 = vmatprep.subr.bf16.mxu0 0
        %7853 = vmatpush1.bf16.msra.mxu0 %v7559
        %7854 = vmatprep.subr.bf16.mxu0 0
        %7855 = vmatpush1.bf16.msra.mxu0 %v7560
        %7856 = vmatprep.subr.bf16.mxu0 0
        %7857 = vmatpush1.bf16.msra.mxu0 %v7561
        %7858 = vmatprep.subr.bf16.mxu0 0
        %7859 = vmatpush1.bf16.msra.mxu0 %v7562
        %7860 = vmatprep.mubr.bf16.mxu0 %v6741
        %7861 = vmatmul.mubr.bf16.gmra.mrb[0].mxu0 %v6740
        %v7862 = vpop.f32.mrb[0].mxu0
        %v7863 = vadd.f32 %v7822, %v7862
        %v7864 = vpop.f32.mrb[0].mxu0
        %v7865 = vpop.f32.mrb[0].mxu0
        %v7866 = vadd.f32 %v7825, %v7865
        %v7867 = vpop.f32.mrb[0].mxu0
        %7868 = vdwg.mxu0
        %7869 = vmatprep.subr.bf16.mxu0 0
        %7870 = vmatpush1.bf16.msra.mxu0 %v7563
        %7871 = vmatprep.subr.bf16.mxu0 0
        %7872 = vmatpush1.bf16.msra.mxu0 %v7564
        %7873 = vmatprep.subr.bf16.mxu0 0
        %7874 = vmatpush1.bf16.msra.mxu0 %v7565
        %7875 = vmatprep.subr.bf16.mxu0 0
        %7876 = vmatpush1.bf16.msra.mxu0 %v7566
        %7877 = vmatprep.subr.bf16.mxu0 0
        %7878 = vmatpush1.bf16.msra.mxu0 %v7567
        %7879 = vmatprep.subr.bf16.mxu0 0
        %7880 = vmatpush1.bf16.msra.mxu0 %v7568
        %7881 = vmatprep.subr.bf16.mxu0 0
        %7882 = vmatpush1.bf16.msra.mxu0 %v7569
        %7883 = vmatprep.subr.bf16.mxu0 0
        %7884 = vmatpush1.bf16.msra.mxu0 %v7570
        %7885 = vmatprep.subr.bf16.mxu0 0
        %7886 = vmatpush1.bf16.msra.mxu0 %v7571
        %7887 = vmatprep.subr.bf16.mxu0 0
        %7888 = vmatpush1.bf16.msra.mxu0 %v7572
        %7889 = vmatprep.subr.bf16.mxu0 0
        %7890 = vmatpush1.bf16.msra.mxu0 %v7573
        %7891 = vmatprep.subr.bf16.mxu0 0
        %7892 = vmatpush1.bf16.msra.mxu0 %v7574
        %7893 = vmatprep.subr.bf16.mxu0 0
        %7894 = vmatpush1.bf16.msra.mxu0 %v7575
        %7895 = vmatprep.subr.bf16.mxu0 0
        %7896 = vmatpush1.bf16.msra.mxu0 %v7576
        %7897 = vmatprep.subr.bf16.mxu0 0
        %7898 = vmatpush1.bf16.msra.mxu0 %v7577
        %7899 = vmatprep.subr.bf16.mxu0 0
        %7900 = vmatpush1.bf16.msra.mxu0 %v7578
        %7901 = vmatprep.mubr.bf16.mxu0 %v6743
        %7902 = vmatmul.mubr.bf16.gmra.mrb[0].mxu0 %v6742
        %v7903 = vpop.f32.mrb[0].mxu0
        %v7904 = vadd.f32 %v7863, %v7903
        %v7905 = vpop.f32.mrb[0].mxu0
        %v7906 = vpop.f32.mrb[0].mxu0
        %v7907 = vadd.f32 %v7866, %v7906
        %v7908 = vpop.f32.mrb[0].mxu0
        %7909 = vdwg.mxu0
        %7910 = vmatprep.subr.bf16.mxu0 0
        %7911 = vmatpush1.bf16.msra.mxu0 %v7579
        %7912 = vmatprep.subr.bf16.mxu0 0
        %7913 = vmatpush1.bf16.msra.mxu0 %v7580
        %7914 = vmatprep.subr.bf16.mxu0 0
        %7915 = vmatpush1.bf16.msra.mxu0 %v7581
        %7916 = vmatprep.subr.bf16.mxu0 0
        %7917 = vmatpush1.bf16.msra.mxu0 %v7582
        %7918 = vmatprep.subr.bf16.mxu0 0
        %7919 = vmatpush1.bf16.msra.mxu0 %v7583
        %7920 = vmatprep.subr.bf16.mxu0 0
        %7921 = vmatpush1.bf16.msra.mxu0 %v7584
        %7922 = vmatprep.subr.bf16.mxu0 0
        %7923 = vmatpush1.bf16.msra.mxu0 %v7585
        %7924 = vmatprep.subr.bf16.mxu0 0
        %7925 = vmatpush1.bf16.msra.mxu0 %v7586
        %7926 = vmatprep.subr.bf16.mxu0 0
        %7927 = vmatpush1.bf16.msra.mxu0 %v7587
        %7928 = vmatprep.subr.bf16.mxu0 0
        %7929 = vmatpush1.bf16.msra.mxu0 %v7588
        %7930 = vmatprep.subr.bf16.mxu0 0
        %7931 = vmatpush1.bf16.msra.mxu0 %v7589
        %7932 = vmatprep.subr.bf16.mxu0 0
        %7933 = vmatpush1.bf16.msra.mxu0 %v7590
        %7934 = vmatprep.subr.bf16.mxu0 0
        %7935 = vmatpush1.bf16.msra.mxu0 %v7591
        %7936 = vmatprep.subr.bf16.mxu0 0
        %7937 = vmatpush1.bf16.msra.mxu0 %v7592
        %7938 = vmatprep.subr.bf16.mxu0 0
        %7939 = vmatpush1.bf16.msra.mxu0 %v7593
        %7940 = vmatprep.subr.bf16.mxu0 0
        %7941 = vmatpush1.bf16.msra.mxu0 %v7594
        %7942 = vmatprep.mubr.bf16.mxu0 %v6745
        %7943 = vmatmul.mubr.bf16.gmra.mrb[0].mxu0 %v6744
        %v7944 = vpop.f32.mrb[0].mxu0
        %v7945 = vadd.f32 %v7904, %v7944
        %v7946 = vpop.f32.mrb[0].mxu0
        %v7947 = vpop.f32.mrb[0].mxu0
        %v7948 = vadd.f32 %v7907, %v7947
        %v7949 = vpop.f32.mrb[0].mxu0
        %7950 = vdwg.mxu0
        %7951 = vmatprep.subr.bf16.mxu0 0
        %7952 = vmatpush1.bf16.msra.mxu0 %v7595
        %7953 = vmatprep.subr.bf16.mxu0 0
        %7954 = vmatpush1.bf16.msra.mxu0 %v7596
        %7955 = vmatprep.subr.bf16.mxu0 0
        %7956 = vmatpush1.bf16.msra.mxu0 %v7597
        %7957 = vmatprep.subr.bf16.mxu0 0
        %7958 = vmatpush1.bf16.msra.mxu0 %v7598
        %7959 = vmatprep.subr.bf16.mxu0 0
        %7960 = vmatpush1.bf16.msra.mxu0 %v7599
        %7961 = vmatprep.subr.bf16.mxu0 0
        %7962 = vmatpush1.bf16.msra.mxu0 %v7600
        %7963 = vmatprep.subr.bf16.mxu0 0
        %7964 = vmatpush1.bf16.msra.mxu0 %v7601
        %7965 = vmatprep.subr.bf16.mxu0 0
        %7966 = vmatpush1.bf16.msra.mxu0 %v7602
        %7967 = vmatprep.subr.bf16.mxu0 0
        %7968 = vmatpush1.bf16.msra.mxu0 %v7603
        %7969 = vmatprep.subr.bf16.mxu0 0
        %7970 = vmatpush1.bf16.msra.mxu0 %v7604
        %7971 = vmatprep.subr.bf16.mxu0 0
        %7972 = vmatpush1.bf16.msra.mxu0 %v7605
        %7973 = vmatprep.subr.bf16.mxu0 0
        %7974 = vmatpush1.bf16.msra.mxu0 %v7606
        %7975 = vmatprep.subr.bf16.mxu0 0
        %7976 = vmatpush1.bf16.msra.mxu0 %v7607
        %7977 = vmatprep.subr.bf16.mxu0 0
        %7978 = vmatpush1.bf16.msra.mxu0 %v7608
        %7979 = vmatprep.subr.bf16.mxu0 0
        %7980 = vmatpush1.bf16.msra.mxu0 %v7609
        %7981 = vmatprep.subr.bf16.mxu0 0
        %7982 = vmatpush1.bf16.msra.mxu0 %v7610
        %7983 = vmatprep.mubr.bf16.mxu0 %v6747
        %7984 = vmatmul.mubr.bf16.gmra.mrb[0].mxu0 %v6746
        %v7985 = vpop.f32.mrb[0].mxu0
        %v7986 = vadd.f32 %v7945, %v7985
        %v7987 = vpop.f32.mrb[0].mxu0
        %v7988 = vpop.f32.mrb[0].mxu0
        %v7989 = vadd.f32 %v7948, %v7988
        %v7990 = vpop.f32.mrb[0].mxu0
        %7991 = vdwg.mxu0
        %7992 = vmatprep.subr.bf16.mxu0 0
        %7993 = vmatpush1.bf16.msra.mxu0 %v7611
        %7994 = vmatprep.subr.bf16.mxu0 0
        %7995 = vmatpush1.bf16.msra.mxu0 %v7612
        %7996 = vmatprep.subr.bf16.mxu0 0
        %7997 = vmatpush1.bf16.msra.mxu0 %v7613
        %7998 = vmatprep.subr.bf16.mxu0 0
        %7999 = vmatpush1.bf16.msra.mxu0 %v7614
        %8000 = vmatprep.subr.bf16.mxu0 0
        %8001 = vmatpush1.bf16.msra.mxu0 %v7615
        %8002 = vmatprep.subr.bf16.mxu0 0
        %8003 = vmatpush1.bf16.msra.mxu0 %v7616
        %8004 = vmatprep.subr.bf16.mxu0 0
        %8005 = vmatpush1.bf16.msra.mxu0 %v7617
        %8006 = vmatprep.subr.bf16.mxu0 0
        %8007 = vmatpush1.bf16.msra.mxu0 %v7618
        %8008 = vmatprep.subr.bf16.mxu0 0
        %8009 = vmatpush1.bf16.msra.mxu0 %v7619
        %8010 = vmatprep.subr.bf16.mxu0 0
        %8011 = vmatpush1.bf16.msra.mxu0 %v7620
        %8012 = vmatprep.subr.bf16.mxu0 0
        %8013 = vmatpush1.bf16.msra.mxu0 %v7621
        %8014 = vmatprep.subr.bf16.mxu0 0
        %8015 = vmatpush1.bf16.msra.mxu0 %v7622
        %8016 = vmatprep.subr.bf16.mxu0 0
        %8017 = vmatpush1.bf16.msra.mxu0 %v7623
        %8018 = vmatprep.subr.bf16.mxu0 0
        %8019 = vmatpush1.bf16.msra.mxu0 %v7624
        %8020 = vmatprep.subr.bf16.mxu0 0
        %8021 = vmatpush1.bf16.msra.mxu0 %v7625
        %8022 = vmatprep.subr.bf16.mxu0 0
        %8023 = vmatpush1.bf16.msra.mxu0 %v7626
        %8024 = vmatprep.mubr.bf16.mxu0 %v6749
        %8025 = vmatmul.mubr.bf16.gmra.mrb[0].mxu0 %v6748
        %v8026 = vpop.f32.mrb[0].mxu0
        %v8027 = vadd.f32 %v7986, %v8026
        %v8028 = vpop.f32.mrb[0].mxu0
        %v8029 = vpop.f32.mrb[0].mxu0
        %v8030 = vadd.f32 %v7989, %v8029
        %v8031 = vpop.f32.mrb[0].mxu0
        %8032 = vdwg.mxu0
        %8033 = vmatprep.subr.bf16.mxu0 0
        %8034 = vmatpush1.bf16.msra.mxu0 %v7627
        %8035 = vmatprep.subr.bf16.mxu0 0
        %8036 = vmatpush1.bf16.msra.mxu0 %v7628
        %8037 = vmatprep.subr.bf16.mxu0 0
        %8038 = vmatpush1.bf16.msra.mxu0 %v7629
        %8039 = vmatprep.subr.bf16.mxu0 0
        %8040 = vmatpush1.bf16.msra.mxu0 %v7630
        %8041 = vmatprep.subr.bf16.mxu0 0
        %8042 = vmatpush1.bf16.msra.mxu0 %v7631
        %8043 = vmatprep.subr.bf16.mxu0 0
        %8044 = vmatpush1.bf16.msra.mxu0 %v7632
        %8045 = vmatprep.subr.bf16.mxu0 0
        %8046 = vmatpush1.bf16.msra.mxu0 %v7633
        %8047 = vmatprep.subr.bf16.mxu0 0
        %8048 = vmatpush1.bf16.msra.mxu0 %v7634
        %8049 = vmatprep.subr.bf16.mxu0 0
        %8050 = vmatpush1.bf16.msra.mxu0 %v7635
        %8051 = vmatprep.subr.bf16.mxu0 0
        %8052 = vmatpush1.bf16.msra.mxu0 %v7636
        %8053 = vmatprep.subr.bf16.mxu0 0
        %8054 = vmatpush1.bf16.msra.mxu0 %v7637
        %8055 = vmatprep.subr.bf16.mxu0 0
        %8056 = vmatpush1.bf16.msra.mxu0 %v7638
        %8057 = vmatprep.subr.bf16.mxu0 0
        %8058 = vmatpush1.bf16.msra.mxu0 %v7639
        %8059 = vmatprep.subr.bf16.mxu0 0
        %8060 = vmatpush1.bf16.msra.mxu0 %v7640
        %8061 = vmatprep.subr.bf16.mxu0 0
        %8062 = vmatpush1.bf16.msra.mxu0 %v7641
        %8063 = vmatprep.subr.bf16.mxu0 0
        %8064 = vmatpush1.bf16.msra.mxu0 %v7642
        %8065 = vmatprep.mubr.bf16.mxu0 %v6751
        %8066 = vmatmul.mubr.bf16.gmra.mrb[0].mxu0 %v6750
        %v8067 = vpop.f32.mrb[0].mxu0
        %v8068 = vadd.f32 %v8027, %v8067
        %v8069 = vpop.f32.mrb[0].mxu0
        %v8070 = vpop.f32.mrb[0].mxu0
        %v8071 = vadd.f32 %v8030, %v8070
        %v8072 = vpop.f32.mrb[0].mxu0
        %8073 = vdwg.mxu0
        %8074 = vmatprep.subr.bf16.mxu0 0
        %8075 = vmatpush1.bf16.msra.mxu0 %v7643
        %8076 = vmatprep.subr.bf16.mxu0 0
        %8077 = vmatpush1.bf16.msra.mxu0 %v7644
        %8078 = vmatprep.subr.bf16.mxu0 0
        %8079 = vmatpush1.bf16.msra.mxu0 %v7645
        %8080 = vmatprep.subr.bf16.mxu0 0
        %8081 = vmatpush1.bf16.msra.mxu0 %v7646
        %8082 = vmatprep.subr.bf16.mxu0 0
        %8083 = vmatpush1.bf16.msra.mxu0 %v7647
        %8084 = vmatprep.subr.bf16.mxu0 0
        %8085 = vmatpush1.bf16.msra.mxu0 %v7648
        %8086 = vmatprep.subr.bf16.mxu0 0
        %8087 = vmatpush1.bf16.msra.mxu0 %v7649
        %8088 = vmatprep.subr.bf16.mxu0 0
        %8089 = vmatpush1.bf16.msra.mxu0 %v7650
        %8090 = vmatprep.subr.bf16.mxu0 0
        %8091 = vmatpush1.bf16.msra.mxu0 %v7651
        %8092 = vmatprep.subr.bf16.mxu0 0
        %8093 = vmatpush1.bf16.msra.mxu0 %v7652
        %8094 = vmatprep.subr.bf16.mxu0 0
        %8095 = vmatpush1.bf16.msra.mxu0 %v7653
        %8096 = vmatprep.subr.bf16.mxu0 0
        %8097 = vmatpush1.bf16.msra.mxu0 %v7654
        %8098 = vmatprep.subr.bf16.mxu0 0
        %8099 = vmatpush1.bf16.msra.mxu0 %v7655
        %8100 = vmatprep.subr.bf16.mxu0 0
        %8101 = vmatpush1.bf16.msra.mxu0 %v7656
        %8102 = vmatprep.subr.bf16.mxu0 0
        %8103 = vmatpush1.bf16.msra.mxu0 %v7657
        %8104 = vmatprep.subr.bf16.mxu0 0
        %8105 = vmatpush1.bf16.msra.mxu0 %v7658
        %8106 = vmatprep.mubr.bf16.mxu0 %v6753
        %8107 = vmatmul.mubr.bf16.gmra.mrb[0].mxu0 %v6752
        %v8108 = vpop.f32.mrb[0].mxu0
        %v8109 = vadd.f32 %v8068, %v8108
        %v8110 = vpop.f32.mrb[0].mxu0
        %v8111 = vpop.f32.mrb[0].mxu0
        %v8112 = vadd.f32 %v8071, %v8111
        %v8113 = vpop.f32.mrb[0].mxu0
        %8114 = vdwg.mxu0
        %v8115 = vadd.f32 %v6078, %v8109
        %v8116 = vadd.f32 %v6079, %v8112
        %v8117 = vsel %vm385, %v8115, 0.0
        %8118 = vadd.xlane.f32.xlu0 %v8117
        %v8119 = vpop.xlane.xlu0 %8118
        %v8120 = vsel %vm385, %v8116, 0.0
        %8121 = vadd.xlane.f32.xlu0 %v8120
        %v8122 = vpop.xlane.xlu0 %8121
        %v8123 = vmul.f32 %v8119, %v2146
        %v8124 = vmul.f32 %v8122, %v2146
        %v8125 = vsub.f32 %v8115, %v8123
        %v8126 = vsub.f32 %v8116, %v8124
        %v8127 = vmul.f32 %v8125, %v8125
        %v8128 = vmul.f32 %v8126, %v8126
        %v8129 = vsel %vm385, %v8127, 0.0
        %8130 = vadd.xlane.f32.xlu0 %v8129
        %v8131 = vpop.xlane.xlu0 %8130
        %v8132 = vsel %vm385, %v8128, 0.0
        %8133 = vadd.xlane.f32.xlu0 %v8132
        %v8134 = vpop.xlane.xlu0 %8133
        %v8135 = vmul.f32 %v8131, %v2146
        %v8136 = vmul.f32 %v8134, %v2146
        %v8137 = vadd.f32 %v8135, 1e-05
        %v8138 = vadd.f32 %v8136, 1e-05
        %v8139 = vrsqrt.pop %v8137
        %v8140 = vrsqrt.pop %v8138
        %v8141 = vmul.f32 %v8125, %v8139
        %v8142 = vmul.f32 %v8126, %v8140
        %v8144 = vlaneseq
        %v8145 = vshrl.u32 %v8144, 7
        %v8146 = vsub.s32 0, %v8145
        %v8147 = vrot.slane %v6033, %v8146
        %v8149 = vmul.f32 %v8141, %v8147
        %v8150 = vmul.f32 %v8142, %v8147
        %v8152 = vlaneseq
        %v8153 = vshrl.u32 %v8152, 7
        %v8154 = vsub.s32 0, %v8153
        %v8155 = vrot.slane %v6035, %v8154
        %v8157 = vadd.f32 %v8149, %v8155
        %v8158 = vadd.f32 %v8150, %v8155
        %8159 = vst.msk [vmem:[%s352] sm:$0xff] %vm385, %v8157
        %8160 = vst.msk [vmem:[%s352 + $0x8] sm:$0xff] %vm385, %v8158
        %s8161 = sand.u32 %s247, 1
        %s8162 = scalar_lea.sflag [#allocation3], %s8161
        %s8163 = sand.u32 %s247, 1
        %s8164 = smul.addr %s8163, 16
        %s8165 = scalar_lea.vmem [#allocation2], %s8164
        // Predicated region
        $region61: #{trans_encoder_forward.1} parent=59 // pred_check
          %p8166 = pneg %p257
        $region62: #{trans_encoder_forward.1} parent=59 // pred_check_branch
          %8168 = sbr.rel (%p8166) target = $region64
        $region63: #{trans_encoder_forward.1} parent=59 // pred_region
          %s8170 = ssub.s32 256, 256
          %8171 = vsyncadd %s8162, %s8170
          %s8172 = smul.addr %s24, 2
          %s8173 = smul.addr %s8172, 128
          %s8174 = scalar_lea.hbm %s10, %s8173
          %s8175 = sshll.u32 %s8165, 4
          %s8176 = int_to_ptr.vmem [resolvable:$true] %s8175
          %8181 = dma.vmem_to_hbm [thread:$0]  %s8176, 256, %s8174, %s8162, 128, 128, 8
        $region64: #{trans_encoder_forward.1} parent=59 // pred_fallthru
          _
      $region60: #{trans_encoder_forward.1} parent=5 // pred_fallthru
        _
      %p8182 = scmp.le.s32.totalorder 2, %s19
      // Predicated region
      $region65: #{trans_encoder_forward.1} parent=5 // pred_check
        %p8183 = pneg %p8182
      $region66: #{trans_encoder_forward.1} parent=5 // pred_check_branch
        %8185 = sbr.rel (%p8183) target = $region68
      $region67: #{trans_encoder_forward.1} parent=5 // pred_region
        %s8186 = ssub.s32 %s19, 2
        // Predicated region
        $region69: #{trans_encoder_forward.1} parent=67 // pred_check
          %p8187 = pneg %p263
        $region70: #{trans_encoder_forward.1} parent=67 // pred_check_branch
          %8189 = sbr.rel (%p8187) target = $region72
        $region71: #{trans_encoder_forward.1} parent=67 // pred_region
          %s8190 = sand.u32 %s248, 1
          %s8191 = scalar_lea.sflag [#allocation3], %s8190
          %s8192 = sand.u32 %s248, 1
          %s8193 = smul.addr %s8192, 16
          %s8194 = scalar_lea.vmem [#allocation2], %s8193
          %8195 = dma.done %s8191, 256
        $region72: #{trans_encoder_forward.1} parent=67 // pred_fallthru
          _
      $region68: #{trans_encoder_forward.1} parent=5 // pred_fallthru
        _
    $region6: #{trans_encoder_forward.1} parent=1 // loop_footer
      %s23 = sadd.s32 1, %s19
    $region7: #{trans_encoder_forward.1} parent=1 // loop_footer_branch
      %18 = sbr.rel target = $region3
    $region8: #{trans_encoder_forward.1} parent=1 // loop_exit
      _
    %8196 = vsyncpa [#allocation3], 1
    %s8197 = scalar_lea.sflag [#allocation3], 1
    %8198 = vsyncpa %s8197, 1

</llo_original>
